<compile_context>
chip_gen: v6e
topology: v6e:2x2x1
jax: 0.10.0
libtpu: 0.0.40
codegen_flags: <defaults>
</compile_context>

<pallas_src>
import jax
import jax.numpy as jnp
import numpy as np
from jax.experimental import pallas as pl
from jax.experimental.pallas import tpu as pltpu


# ---------------------------------------------------------------------------
# Kernel 1 (hot): fused 1x1-conv stack + global max-pool over points.
# ---------------------------------------------------------------------------
def stnkd_pool_kernel(x_ref, w1_ref, b1_ref, w2_ref, b2_ref, w3_ref, gmax_ref):
    ni = pl.program_id(1)
    bt, nt, k = x_ref.shape

    # Output block = running-max accumulator (out BlockSpec ignores ni, so the
    # block stays resident in VMEM across the whole point reduction).
    # NOTE: relies on the point axis being the LAST, "arbitrary" grid axis.
    @pl.when(ni == 0)
    def _init():
        gmax_ref[...] = jnp.full(gmax_ref.shape, -jnp.inf, dtype=gmax_ref.dtype)

    # 1x1 conv == pointwise matmul over channels; flatten (Bt, Nt) -> rows so
    # the MXU sees one dense matmul per layer (BN already folded into W/B).
    x = x_ref[...].reshape(bt * nt, k)                                   # bf16
    h = jnp.maximum(
        jnp.dot(x, w1_ref[...], preferred_element_type=jnp.float32)
        + b1_ref[...], 0.0)                                              # (R, 64)   f32
    h = jnp.maximum(
        jnp.dot(h.astype(jnp.bfloat16), w2_ref[...],
                preferred_element_type=jnp.float32) + b2_ref[...], 0.0)  # (R, 128)  f32
    # Layer 3: bias + ReLU deferred past the max-pool -> no f32 epilogue here.
    # (K=128 contraction only half-fills v6e/v7x's 256-deep MXU; the headroom
    #  here is per-step overhead + VPU work, not MXU issue rate.)
    h3 = jnp.dot(h.astype(jnp.bfloat16), w3_ref[...],
                 preferred_element_type=jnp.float32)                     # (R, 1024) f32
    # bf16 reduction: cast is monotone, so the max is unchanged up to rounding.
    h3 = h3.astype(jnp.bfloat16)
    tile_max = jnp.max(h3.reshape(bt, nt, h3.shape[-1]), axis=1,
                       keepdims=True)                                    # (Bt,1,1024) bf16
    gmax_ref[...] = jnp.maximum(gmax_ref[...], tile_max)


# ---------------------------------------------------------------------------
# Kernel 2 (cold): deferred layer-3 bias/ReLU + FC head, once over all B rows.
# ---------------------------------------------------------------------------
def stnkd_head_kernel(g_ref, b3_ref, fw1_ref, fb1_ref, fw2_ref, fb2_ref,
                      fw3_ref, fb3_ref, out_ref):
    g = jnp.maximum(g_ref[...].astype(jnp.float32) + b3_ref[...], 0.0)   # (B, 1024)
    f = jnp.maximum(
        jnp.dot(g.astype(jnp.bfloat16), fw1_ref[...],
                preferred_element_type=jnp.float32) + fb1_ref[...], 0.0)  # (B, 512)
    f = jnp.maximum(
        jnp.dot(f.astype(jnp.bfloat16), fw2_ref[...],
                preferred_element_type=jnp.float32) + fb2_ref[...], 0.0)  # (B, 256)
    f = (jnp.dot(f.astype(jnp.bfloat16), fw3_ref[...],
                 preferred_element_type=jnp.float32)
         + fb3_ref[...])                         # (B, k*k); identity folded into fb3
    out_ref[...] = f.astype(out_ref.dtype)


# ---------------------------------------------------------------------------
# Wrapper
# ---------------------------------------------------------------------------
def _pad_edge(x, axis, multiple):
    """Pad `axis` up to a multiple by replicating the last slice.

    Duplicated points (or batches) cannot change a max over points, so no
    in-kernel masking is needed; padded batches are sliced off afterwards.
    """
    pad = (-x.shape[axis]) % multiple
    if pad:
        widths = [(0, 0)] * x.ndim
        widths[axis] = (0, pad)
        x = jnp.pad(x, widths, mode="edge")
    return x


def stnkd_forward(x_bnk, pool_params, head_params, k, *, block_b=2, block_n=512):
    """x_bnk: (B, N, k) float32/bf16. Returns (B, k, k) float32."""
    B, N, kk = x_bnk.shape
    assert kk == k

    W1, B1, W2, B2, W3 = pool_params

    x = x_bnk.astype(jnp.bfloat16)
    # Clamp the point tile to (a multiple-of-8 rounding of) N, then edge-pad.
    block_n = max(8, min(((block_n + 7) // 8) * 8, ((N + 7) // 8) * 8))
    x = _pad_edge(x, 1, block_n)
    x = _pad_edge(x, 0, block_b)
    Bp, Np, _ = x.shape

    # Keep the batch ("parallel") axis >= 2 when possible so v7x's two
    # TensorCores both get work; point/reduction axis is last ("arbitrary").
    grid = (Bp // block_b, Np // block_n)

    # Grid-invariant operands: constant index_map -> not re-fetched per step.
    # (With the FC head moved out, these total < 300 KiB, so default
    #  double-buffering is negligible; pl.Buffered(1) intentionally omitted.)
    def const_spec(arr):
        return pl.BlockSpec(arr.shape, lambda bi, ni: (0, 0))

    flops = 2 * Bp * Np * (k * 64 + 64 * 128 + 128 * 1024)
    bytes_accessed = int(x.nbytes + sum(int(a.nbytes) for a in pool_params)
                         + Bp * 1024 * 2)

    gmax = pl.pallas_call(
        stnkd_pool_kernel,
        grid=grid,
        in_specs=[pl.BlockSpec((block_b, block_n, k), lambda bi, ni: (bi, ni, 0))]
                 + [const_spec(a) for a in pool_params],
        # Output block index ignores ni -> VMEM-resident running-max accumulator.
        out_specs=pl.BlockSpec((block_b, 1, 1024), lambda bi, ni: (bi, 0, 0)),
        out_shape=jax.ShapeDtypeStruct((Bp, 1, 1024), jnp.bfloat16),
        compiler_params=pltpu.CompilerParams(
            dimension_semantics=("parallel", "arbitrary"),
            # Generation-safe cap (review: <= ~48-56 MiB on v7x; more on v5e/v6e).
            vmem_limit_bytes=48 * 1024 * 1024),
        cost_estimate=pl.CostEstimate(flops=flops, transcendentals=0,
                                      bytes_accessed=bytes_accessed),
    )(x, W1, B1, W2, B2, W3)

    gmax = gmax[:B].reshape(B, 1024)          # drop padded batches

    # FC head: one whole-array pallas_call over all B rows (<1% of FLOPs).
    out = pl.pallas_call(
        stnkd_head_kernel,
        out_shape=jax.ShapeDtypeStruct((B, k * k), jnp.float32),
    )(gmax, *head_params)

    return out.reshape(B, k, k)


# ---------------------------------------------------------------------------
# Parameter construction (synthetic, deterministic) + BN folding
# ---------------------------------------------------------------------------
def fold_bn(w, cb, gamma, beta, mean, var, eps=1e-5):
    """Fold eval-mode BatchNorm into a (Cin, Cout) weight + (1, Cout) bias.

    Weight is stored bf16 (MXU-native, half the DMA bytes); bias stays f32.
    """
    scale = gamma / jnp.sqrt(var + eps)
    w_f = (w * scale[None, :]).astype(jnp.bfloat16)
    b_f = ((cb - mean) * scale + beta).reshape(1, -1).astype(jnp.float32)
    return w_f, b_f


def make_params(key, k):
    """Deterministic synthetic parameters matching STNkd's shapes."""
    keys = iter(jax.random.split(key, 40))

    def lin(cin, cout, s=0.05):
        w = jax.random.normal(next(keys), (cin, cout), jnp.float32) * s
        b = jax.random.normal(next(keys), (cout,), jnp.float32) * s
        return w, b

    def bn(c):
        gamma = 1.0 + 0.1 * jax.random.normal(next(keys), (c,), jnp.float32)
        beta = 0.1 * jax.random.normal(next(keys), (c,), jnp.float32)
        mean = 0.1 * jax.random.normal(next(keys), (c,), jnp.float32)
        var = 1.0 + 0.1 * jax.random.uniform(next(keys), (c,), jnp.float32)
        return gamma, beta, mean, var

    w1, cb1 = lin(k, 64);       g1 = bn(64)
    w2, cb2 = lin(64, 128);     g2 = bn(128)
    w3, cb3 = lin(128, 1024);   g3 = bn(1024)
    fw1, fcb1 = lin(1024, 512); g4 = bn(512)
    fw2, fcb2 = lin(512, 256);  g5 = bn(256)
    fw3, fcb3 = lin(256, k * k)

    raw = dict(w1=w1, cb1=cb1, bn1=g1, w2=w2, cb2=cb2, bn2=g2,
               w3=w3, cb3=cb3, bn3=g3, fw1=fw1, fcb1=fcb1, bn4=g4,
               fw2=fw2, fcb2=fcb2, bn5=g5, fw3=fw3, fcb3=fcb3)

    # Folded (kernel-ready) params: bf16 weights, f32 biases.
    W1, B1 = fold_bn(w1, cb1, *g1)
    W2, B2 = fold_bn(w2, cb2, *g2)
    W3, B3 = fold_bn(w3, cb3, *g3)          # B3 is applied AFTER the max-pool (deferred)
    FW1, FB1 = fold_bn(fw1, fcb1, *g4)
    FW2, FB2 = fold_bn(fw2, fcb2, *g5)
    FW3 = fw3.astype(jnp.bfloat16)
    # Fold the identity matrix straight into fc3's bias (one fewer operand/DMA).
    FB3I = (fcb3.reshape(1, -1)
            + jnp.eye(k, dtype=jnp.float32).reshape(1, k * k)).astype(jnp.float32)

    pool_params = (W1, B1, W2, B2, W3)
    head_params = (B3, FW1, FB1, FW2, FB2, FW3, FB3I)
    return raw, pool_params, head_params


def reference_forward(x_bkn, raw, k, eps=1e-5):
    """Pure-JAX f32 reference mirroring PyTorch (eval-mode BN). x_bkn: (B, k, N)."""
    x = jnp.transpose(x_bkn, (0, 2, 1))  # (B, N, k)

    def bn(y, stats):
        gamma, beta, mean, var = stats
        return (y - mean) / jnp.sqrt(var + eps) * gamma + beta

    h = jax.nn.relu(bn(x @ raw["w1"] + raw["cb1"], raw["bn1"]))
    h = jax.nn.relu(bn(h @ raw["w2"] + raw["cb2"], raw["bn2"]))
    h = jax.nn.relu(bn(h @ raw["w3"] + raw["cb3"], raw["bn3"]))
    g = jnp.max(h, axis=1)                                   # (B, 1024)
    f = jax.nn.relu(bn(g @ raw["fw1"] + raw["fcb1"], raw["bn4"]))
    f = jax.nn.relu(bn(f @ raw["fw2"] + raw["fcb2"], raw["bn5"]))
    f = f @ raw["fw3"] + raw["fcb3"]
    f = f + jnp.eye(k, dtype=jnp.float32).reshape(1, k * k)
    return f.reshape(-1, k, k)


if __name__ == "__main__":
    K = 16    # STNkd(k=16); hidden sizes are fixed by the module (64/128/1024/512/256)
    B = 4     # batch
    N = 1024  # points: two 512-point tiles -> exercises the running-max accumulator

    key = jax.random.PRNGKey(0)
    kx, kp = jax.random.split(key)

    # PyTorch-layout input (B, k, N), as Conv1d expects.
    x_bkn = jax.random.normal(kx, (B, K, N), jnp.float32)
    raw, pool_p, head_p = make_params(kp, K)

    # Kernel layout: (B, N, k)
    x_bnk = jnp.transpose(x_bkn, (0, 2, 1))

    # block_b=2 keeps the parallel batch axis >= 2 (v7x megacore); block_n=512
    # -> 1024 rows per conv matmul so MXU work dominates per-step overhead.
    out = stnkd_forward(x_bnk, pool_p, head_p, K, block_b=2, block_n=512)
    out = jax.block_until_ready(out)

    ref = reference_forward(x_bkn, raw, K)
    # bf16 weights/activations and a bf16 pooled max (f32 accumulation) vs f32
    # reference -> ~1% level numerical differences are expected.
    np.testing.assert_allclose(np.asarray(out), np.asarray(ref), rtol=3e-2, atol=3e-2)

    assert out.shape == (B, K, K)
    print("KERNEL_OK")
</pallas_src>

<mosaic_0001>
module attributes {stable_mosaic.version = 11 : i64} {
  func.func @stnkd_pool_kernel(%arg0: i32, %arg1: i32, %arg2: memref<2x512x16xbf16, #tpu.memory_space<vmem>>, %arg3: memref<16x64xbf16, #tpu.memory_space<vmem>>, %arg4: memref<1x64xf32, #tpu.memory_space<vmem>>, %arg5: memref<64x128xbf16, #tpu.memory_space<vmem>>, %arg6: memref<1x128xf32, #tpu.memory_space<vmem>>, %arg7: memref<128x1024xbf16, #tpu.memory_space<vmem>>, %arg8: memref<2x1x1024xbf16, #tpu.memory_space<vmem>>) attributes {dimension_semantics = [#tpu.dimension_semantics<parallel>, #tpu.dimension_semantics<arbitrary>], iteration_bounds = array<i64: 2, 2>, scalar_prefetch = 0 : i64, scratch_operands = 0 : i64, tpu.core_type = #tpu.core_type<tc>, window_params = [{transform_indices = @transform_0, window_bounds = array<i64: 2, 512, 16>}, {pipeline_mode = #tpu.pipeline_mode<synchronous>, transform_indices = @transform_1, window_bounds = array<i64: 16, 64>}, {pipeline_mode = #tpu.pipeline_mode<synchronous>, transform_indices = @transform_2, window_bounds = array<i64: 1, 64>}, {pipeline_mode = #tpu.pipeline_mode<synchronous>, transform_indices = @transform_3, window_bounds = array<i64: 64, 128>}, {pipeline_mode = #tpu.pipeline_mode<synchronous>, transform_indices = @transform_4, window_bounds = array<i64: 1, 128>}, {pipeline_mode = #tpu.pipeline_mode<synchronous>, transform_indices = @transform_5, window_bounds = array<i64: 128, 1024>}, {transform_indices = @transform_6, window_bounds = array<i64: 2, 1, 1024>}]} {
    %c0_i32 = arith.constant 0 : i32
    %0 = arith.cmpi eq, %arg1, %c0_i32 : i32
    %1 = arith.extui %0 : i1 to i32
    %c0_i32_0 = arith.constant 0 : i32
    %2 = arith.cmpi ne, %1, %c0_i32_0 : i32
    scf.if %2 {
      %cst_24 = arith.constant 0xFF80 : bf16
      %30 = vector.broadcast %cst_24 : bf16 to vector<2x1x1024xbf16>
      %c0_25 = arith.constant 0 : index
      %c0_26 = arith.constant 0 : index
      %c0_27 = arith.constant 0 : index
      %31 = vector.load %arg8[%c0_25, %c0_26, %c0_27] : memref<2x1x1024xbf16, #tpu.memory_space<vmem>>, vector<2x1x1024xbf16>
      tpu.vector_store %arg8[%c0_25, %c0_26, %c0_27], %30 {strides = array<i32>} : memref<2x1x1024xbf16, #tpu.memory_space<vmem>>, vector<2x1x1024xbf16>,
    } else {
    }
    %c0 = arith.constant 0 : index
    %c0_1 = arith.constant 0 : index
    %c0_2 = arith.constant 0 : index
    %3 = vector.load %arg2[%c0, %c0_1, %c0_2] : memref<2x512x16xbf16, #tpu.memory_space<vmem>>, vector<2x512x16xbf16>
    %4 = vector.shape_cast %3 : vector<2x512x16xbf16> to vector<1024x16xbf16>
    %c0_3 = arith.constant 0 : index
    %c0_4 = arith.constant 0 : index
    %5 = vector.load %arg3[%c0_3, %c0_4] : memref<16x64xbf16, #tpu.memory_space<vmem>>, vector<16x64xbf16>
    %cst = arith.constant dense<0.000000e+00> : vector<1024x64xf32>
    %6 = tpu.matmul %4, %5, %cst {dimension_numbers = #tpu.dot_dimension_numbers<[1], [0], [0], [1], [0, 0, 1, 1], [], []>} : vector<1024x16xbf16>, vector<16x64xbf16>, vector<1024x64xf32> -> vector<1024x64xf32>
    %c0_5 = arith.constant 0 : index
    %c0_6 = arith.constant 0 : index
    %7 = vector.load %arg4[%c0_5, %c0_6] : memref<1x64xf32, #tpu.memory_space<vmem>>, vector<1x64xf32>
    %8 = vector.broadcast %7 : vector<1x64xf32> to vector<1024x64xf32>
    %9 = arith.addf %6, %8 : vector<1024x64xf32>
    %cst_7 = arith.constant 0.000000e+00 : f32
    %10 = vector.broadcast %cst_7 : f32 to vector<1024x64xf32>
    %11 = arith.maximumf %9, %10 : vector<1024x64xf32>
    %12 = arith.truncf %11 : vector<1024x64xf32> to vector<1024x64xbf16>
    %c0_8 = arith.constant 0 : index
    %c0_9 = arith.constant 0 : index
    %13 = vector.load %arg5[%c0_8, %c0_9] : memref<64x128xbf16, #tpu.memory_space<vmem>>, vector<64x128xbf16>
    %cst_10 = arith.constant dense<0.000000e+00> : vector<1024x128xf32>
    %14 = tpu.matmul %12, %13, %cst_10 {dimension_numbers = #tpu.dot_dimension_numbers<[1], [0], [0], [1], [0, 0, 1, 1], [], []>} : vector<1024x64xbf16>, vector<64x128xbf16>, vector<1024x128xf32> -> vector<1024x128xf32>
    %c0_11 = arith.constant 0 : index
    %c0_12 = arith.constant 0 : index
    %15 = vector.load %arg6[%c0_11, %c0_12] : memref<1x128xf32, #tpu.memory_space<vmem>>, vector<1x128xf32>
    %16 = vector.broadcast %15 : vector<1x128xf32> to vector<1024x128xf32>
    %17 = arith.addf %14, %16 : vector<1024x128xf32>
    %cst_13 = arith.constant 0.000000e+00 : f32
    %18 = vector.broadcast %cst_13 : f32 to vector<1024x128xf32>
    %19 = arith.maximumf %17, %18 : vector<1024x128xf32>
    %20 = arith.truncf %19 : vector<1024x128xf32> to vector<1024x128xbf16>
    %c0_14 = arith.constant 0 : index
    %c0_15 = arith.constant 0 : index
    %21 = vector.load %arg7[%c0_14, %c0_15] : memref<128x1024xbf16, #tpu.memory_space<vmem>>, vector<128x1024xbf16>
    %cst_16 = arith.constant dense<0.000000e+00> : vector<1024x1024xf32>
    %22 = tpu.matmul %20, %21, %cst_16 {dimension_numbers = #tpu.dot_dimension_numbers<[1], [0], [0], [1], [0, 0, 1, 1], [], []>} : vector<1024x128xbf16>, vector<128x1024xbf16>, vector<1024x1024xf32> -> vector<1024x1024xf32>
    %23 = arith.truncf %22 : vector<1024x1024xf32> to vector<1024x1024xbf16>
    %24 = vector.shape_cast %23 : vector<1024x1024xbf16> to vector<2x512x1024xbf16>
    %cst_17 = arith.constant dense<0xFF80> : vector<2x1024xbf16>
    %25 = vector.multi_reduction <maximumf>, %24, %cst_17 [1] : vector<2x512x1024xbf16> to vector<2x1024xbf16>
    %26 = vector.shape_cast %25 : vector<2x1024xbf16> to vector<2x1x1024xbf16>
    %c0_18 = arith.constant 0 : index
    %c0_19 = arith.constant 0 : index
    %c0_20 = arith.constant 0 : index
    %27 = vector.load %arg8[%c0_18, %c0_19, %c0_20] : memref<2x1x1024xbf16, #tpu.memory_space<vmem>>, vector<2x1x1024xbf16>
    %28 = arith.maximumf %27, %26 : vector<2x1x1024xbf16>
    %c0_21 = arith.constant 0 : index
    %c0_22 = arith.constant 0 : index
    %c0_23 = arith.constant 0 : index
    %29 = vector.load %arg8[%c0_21, %c0_22, %c0_23] : memref<2x1x1024xbf16, #tpu.memory_space<vmem>>, vector<2x1x1024xbf16>
    tpu.vector_store %arg8[%c0_21, %c0_22, %c0_23], %28 {strides = array<i32>} : memref<2x1x1024xbf16, #tpu.memory_space<vmem>>, vector<2x1x1024xbf16>,
    return
  }
  func.func @transform_0(%arg0: i32, %arg1: i32) -> (i32, i32, i32) {
    %c0_i32 = arith.constant 0 : i32
    %c0_i32_0 = arith.constant 0 : i32
    return %arg0, %arg1, %c0_i32 : i32, i32, i32
  }
  func.func @transform_1(%arg0: i32, %arg1: i32) -> (i32, i32) {
    %c0_i32 = arith.constant 0 : i32
    %c0_i32_0 = arith.constant 0 : i32
    %c0_i32_1 = arith.constant 0 : i32
    return %c0_i32, %c0_i32_0 : i32, i32
  }
  func.func @transform_2(%arg0: i32, %arg1: i32) -> (i32, i32) {
    %c0_i32 = arith.constant 0 : i32
    %c0_i32_0 = arith.constant 0 : i32
    %c0_i32_1 = arith.constant 0 : i32
    return %c0_i32, %c0_i32_0 : i32, i32
  }
  func.func @transform_3(%arg0: i32, %arg1: i32) -> (i32, i32) {
    %c0_i32 = arith.constant 0 : i32
    %c0_i32_0 = arith.constant 0 : i32
    %c0_i32_1 = arith.constant 0 : i32
    return %c0_i32, %c0_i32_0 : i32, i32
  }
  func.func @transform_4(%arg0: i32, %arg1: i32) -> (i32, i32) {
    %c0_i32 = arith.constant 0 : i32
    %c0_i32_0 = arith.constant 0 : i32
    %c0_i32_1 = arith.constant 0 : i32
    return %c0_i32, %c0_i32_0 : i32, i32
  }
  func.func @transform_5(%arg0: i32, %arg1: i32) -> (i32, i32) {
    %c0_i32 = arith.constant 0 : i32
    %c0_i32_0 = arith.constant 0 : i32
    %c0_i32_1 = arith.constant 0 : i32
    return %c0_i32, %c0_i32_0 : i32, i32
  }
  func.func @transform_6(%arg0: i32, %arg1: i32) -> (i32, i32, i32) {
    %c0_i32 = arith.constant 0 : i32
    %c0_i32_0 = arith.constant 0 : i32
    %c0_i32_1 = arith.constant 0 : i32
    return %arg0, %c0_i32, %c0_i32_0 : i32, i32, i32
  }
}

</mosaic_0001>

<llo_original>
// kernel: tpu_custom_call.1
$region0: #{tpu_custom_call.1}
  #allocation0 [shape = 'u32[]', space=smem, size = 0x4, offset = 0x4, fixed_abs, tag = 'smem constant byte address 0x4 - core index']
  #allocation1 [shape = 'u32[144,128]{1,0:T(1,128)}', space=vmem, size = 0x12000, scoped, tag = 'internal scratch']
  %s0 = inlined_call_operand.vmem [shape: bf16[4,1024,16], index: 0, kind: input, shape index: {}]
  %s1 = inlined_call_operand.vmem [shape: bf16[16,64], index: 1, kind: input, shape index: {}]
  %s2 = inlined_call_operand.vmem [shape: f32[1,64], index: 2, kind: input, shape index: {}]
  %s3 = inlined_call_operand.vmem [shape: bf16[64,128], index: 3, kind: input, shape index: {}]
  %s4 = inlined_call_operand.vmem [shape: f32[1,128], index: 4, kind: input, shape index: {}]
  %s5 = inlined_call_operand.vmem [shape: bf16[128,1024], index: 5, kind: input, shape index: {}]
  %s6 = inlined_call_operand.vmem [shape: bf16[4,1,1024], index: 6, kind: output, shape index: {}]
  %s7 = sld [smem:[#allocation0]]
  $region102: #{tpu_custom_call.1} parent=0
    _
  %s9 = ssub.s32 1, %s7
  %s10 = scalar_select 0, %s9, %s7
  $region1: #{tpu_custom_call.1} parent=0
    #allocation2 [shape = 'u8[524288]{0}', space=vmem, size = 0x80000, scoped, tag = 'input window, operand 0']
    loop: start=0, step=1, limit=6
    $region2: #{tpu_custom_call.1} parent=1 // loop_pre_header
      _
    $region3: #{tpu_custom_call.1} parent=1 // loop_header
      %s12 = sphi 0, %s16
      %p13 = scmp.ge.s32.totalorder %s12, 6
      %s19 = sphi 0, %s31
      %s20 = sphi 0, %s27
      %s21 = sphi 0, %s19
      %s22 = sphi 0, %s20
      %s23 = sphi 0, %s21
      %s24 = sphi 0, %s22
      %s36 = sphi 0, %s38
      %s39 = sphi 0, %s36
      %s40 = sphi 0, %s39
      %s56 = sphi 0, %s40
      %s60 = sphi 0, %s60
      %s62 = sphi 0, %s60
      %s63 = sphi 0, %s62
      %s77 = sphi 0, %s63
      %s81 = sphi 0, %s81
      %s83 = sphi 0, %s81
      %s84 = sphi 0, %s83
      %s98 = sphi 0, %s84
      %s102 = sphi 0, %s102
      %s104 = sphi 0, %s102
      %s105 = sphi 0, %s104
      %s119 = sphi 0, %s105
      %s123 = sphi 0, %s123
      %s125 = sphi 0, %s123
      %s126 = sphi 0, %s125
      %s140 = sphi 0, %s126
      %s144 = sphi 0, %s144
      %s146 = sphi 0, %s144
      %s147 = sphi 0, %s146
      %s161 = sphi 0, %s147
      %s167 = sphi 0, %s169
      %s170 = sphi 0, %s167
      %s171 = sphi 0, %s170
      %s187 = sphi 0, %s171
    $region4: #{tpu_custom_call.1} parent=1 // loop_header_branch
      %15 = sbr.rel (%p13) target = $region8
    $region5: #{tpu_custom_call.1} parent=1 // loop_body
      %s17 = ssub.s32 %s12, 1
      %s18 = ssub.s32 %s12, 2
      %s25 = sadd.s32 1, %s20
      %p26 = scmp.ge.s32.totalorder %s25, 2
      %s27 = scalar_select %p26, 0, %s25
      %s28 = sadd.s32 1, %s19
      %s29 = scalar_select %p26, %s28, %s19
      %p30 = scmp.ge.s32.totalorder %s29, 2
      %s31 = scalar_select %p30, 0, %s29
      %s32 = ssub.s32 %s19, %s31
      %s33 = ssub.s32 %s20, %s27
      %s34 = sor.u32 %s32, %s33
      %p35 = scmp.eq.s32.totalorder %s34, 0
      %s37 = sadd.s32 %s36, 1
      %s38 = scalar_select %p35, %s36, %s37
      %p41 = pneg %p35
      %p42 = scmp.eq.s32.totalorder %s12, 3
      %p43 = por %p41, %p42
      %p44 = scmp.ne.s32.totalorder %s36, %s39
      %p45 = scmp.eq.s32.totalorder %s12, 0
      %p46 = por %p44, %p45
      %p47 = scmp.ne.s32.totalorder %s36, %s39
      %p48 = scmp.eq.s32.totalorder %s17, 3
      %p49 = por %p47, %p48
      %p50 = scmp.ne.s32.totalorder %s39, %s40
      %p51 = scmp.eq.s32.totalorder %s17, 0
      %p52 = por %p50, %p51
      %p53 = scmp.ne.s32.totalorder %s39, %s40
      %p54 = scmp.eq.s32.totalorder %s18, 3
      %p55 = por %p53, %p54
      %p57 = scmp.ne.s32.totalorder %s40, %s56
      %p58 = scmp.eq.s32.totalorder %s18, 0
      %p59 = por %p57, %p58
      %s61 = sadd.s32 %s60, 1
      %p64 = scmp.eq.s32.totalorder %s12, 3
      %p65 = scmp.ne.s32.totalorder %s60, %s62
      %p66 = scmp.eq.s32.totalorder %s12, 0
      %p67 = por %p65, %p66
      %p68 = scmp.ne.s32.totalorder %s60, %s62
      %p69 = scmp.eq.s32.totalorder %s17, 3
      %p70 = por %p68, %p69
      %p71 = scmp.ne.s32.totalorder %s62, %s63
      %p72 = scmp.eq.s32.totalorder %s17, 0
      %p73 = por %p71, %p72
      %p74 = scmp.ne.s32.totalorder %s62, %s63
      %p75 = scmp.eq.s32.totalorder %s18, 3
      %p76 = por %p74, %p75
      %p78 = scmp.ne.s32.totalorder %s63, %s77
      %p79 = scmp.eq.s32.totalorder %s18, 0
      %p80 = por %p78, %p79
      %s82 = sadd.s32 %s81, 1
      %p85 = scmp.eq.s32.totalorder %s12, 3
      %p86 = scmp.ne.s32.totalorder %s81, %s83
      %p87 = scmp.eq.s32.totalorder %s12, 0
      %p88 = por %p86, %p87
      %p89 = scmp.ne.s32.totalorder %s81, %s83
      %p90 = scmp.eq.s32.totalorder %s17, 3
      %p91 = por %p89, %p90
      %p92 = scmp.ne.s32.totalorder %s83, %s84
      %p93 = scmp.eq.s32.totalorder %s17, 0
      %p94 = por %p92, %p93
      %p95 = scmp.ne.s32.totalorder %s83, %s84
      %p96 = scmp.eq.s32.totalorder %s18, 3
      %p97 = por %p95, %p96
      %p99 = scmp.ne.s32.totalorder %s84, %s98
      %p100 = scmp.eq.s32.totalorder %s18, 0
      %p101 = por %p99, %p100
      %s103 = sadd.s32 %s102, 1
      %p106 = scmp.eq.s32.totalorder %s12, 3
      %p107 = scmp.ne.s32.totalorder %s102, %s104
      %p108 = scmp.eq.s32.totalorder %s12, 0
      %p109 = por %p107, %p108
      %p110 = scmp.ne.s32.totalorder %s102, %s104
      %p111 = scmp.eq.s32.totalorder %s17, 3
      %p112 = por %p110, %p111
      %p113 = scmp.ne.s32.totalorder %s104, %s105
      %p114 = scmp.eq.s32.totalorder %s17, 0
      %p115 = por %p113, %p114
      %p116 = scmp.ne.s32.totalorder %s104, %s105
      %p117 = scmp.eq.s32.totalorder %s18, 3
      %p118 = por %p116, %p117
      %p120 = scmp.ne.s32.totalorder %s105, %s119
      %p121 = scmp.eq.s32.totalorder %s18, 0
      %p122 = por %p120, %p121
      %s124 = sadd.s32 %s123, 1
      %p127 = scmp.eq.s32.totalorder %s12, 3
      %p128 = scmp.ne.s32.totalorder %s123, %s125
      %p129 = scmp.eq.s32.totalorder %s12, 0
      %p130 = por %p128, %p129
      %p131 = scmp.ne.s32.totalorder %s123, %s125
      %p132 = scmp.eq.s32.totalorder %s17, 3
      %p133 = por %p131, %p132
      %p134 = scmp.ne.s32.totalorder %s125, %s126
      %p135 = scmp.eq.s32.totalorder %s17, 0
      %p136 = por %p134, %p135
      %p137 = scmp.ne.s32.totalorder %s125, %s126
      %p138 = scmp.eq.s32.totalorder %s18, 3
      %p139 = por %p137, %p138
      %p141 = scmp.ne.s32.totalorder %s126, %s140
      %p142 = scmp.eq.s32.totalorder %s18, 0
      %p143 = por %p141, %p142
      %s145 = sadd.s32 %s144, 1
      %p148 = scmp.eq.s32.totalorder %s12, 3
      %p149 = scmp.ne.s32.totalorder %s144, %s146
      %p150 = scmp.eq.s32.totalorder %s12, 0
      %p151 = por %p149, %p150
      %p152 = scmp.ne.s32.totalorder %s144, %s146
      %p153 = scmp.eq.s32.totalorder %s17, 3
      %p154 = por %p152, %p153
      %p155 = scmp.ne.s32.totalorder %s146, %s147
      %p156 = scmp.eq.s32.totalorder %s17, 0
      %p157 = por %p155, %p156
      %p158 = scmp.ne.s32.totalorder %s146, %s147
      %p159 = scmp.eq.s32.totalorder %s18, 3
      %p160 = por %p158, %p159
      %p162 = scmp.ne.s32.totalorder %s147, %s161
      %p163 = scmp.eq.s32.totalorder %s18, 0
      %p164 = por %p162, %p163
      %s165 = ssub.s32 %s19, %s31
      %p166 = scmp.eq.s32.totalorder %s165, 0
      %s168 = sadd.s32 %s167, 1
      %s169 = scalar_select %p166, %s167, %s168
      %p172 = pneg %p166
      %p173 = scmp.eq.s32.totalorder %s12, 3
      %p174 = por %p172, %p173
      %p175 = scmp.ne.s32.totalorder %s167, %s170
      %p176 = scmp.eq.s32.totalorder %s12, 0
      %p177 = por %p175, %p176
      %p178 = scmp.ne.s32.totalorder %s167, %s170
      %p179 = scmp.eq.s32.totalorder %s17, 3
      %p180 = por %p178, %p179
      %p181 = scmp.ne.s32.totalorder %s170, %s171
      %p182 = scmp.eq.s32.totalorder %s17, 0
      %p183 = por %p181, %p182
      %p184 = scmp.ne.s32.totalorder %s170, %s171
      %p185 = scmp.eq.s32.totalorder %s18, 3
      %p186 = por %p184, %p185
      %p188 = scmp.ne.s32.totalorder %s171, %s187
      %p189 = scmp.eq.s32.totalorder %s18, 0
      %p190 = por %p188, %p189
      %p191 = scmp.le.s32.totalorder 1, %s12
      %p192 = scmp.lt.s32.totalorder %s12, 5
      %p193 = pnand %p191, %p192
      %p194 = pneg %p193
      // Predicated region
      $region9: #{tpu_custom_call.1} parent=5 // pred_check
        _
      $region10: #{tpu_custom_call.1} parent=5 // pred_check_branch
        %196 = sbr.rel (%p193) target = $region12
      $region11: #{tpu_custom_call.1} parent=5 // pred_region
        %s197 = ssub.s32 %s12, 1
        // Predicated region
        $region13: #{tpu_custom_call.1} parent=11 // pred_check
          %p198 = pneg %p73
        $region14: #{tpu_custom_call.1} parent=11 // pred_check_branch
          %200 = sbr.rel (%p198) target = $region16
        $region15: #{tpu_custom_call.1} parent=11 // pred_region
          _
        $region16: #{tpu_custom_call.1} parent=11 // pred_fallthru
          _
        // Predicated region
        $region17: #{tpu_custom_call.1} parent=11 // pred_check
          %p201 = pneg %p94
        $region18: #{tpu_custom_call.1} parent=11 // pred_check_branch
          %203 = sbr.rel (%p201) target = $region20
        $region19: #{tpu_custom_call.1} parent=11 // pred_region
          _
        $region20: #{tpu_custom_call.1} parent=11 // pred_fallthru
          _
        // Predicated region
        $region21: #{tpu_custom_call.1} parent=11 // pred_check
          %p204 = pneg %p115
        $region22: #{tpu_custom_call.1} parent=11 // pred_check_branch
          %206 = sbr.rel (%p204) target = $region24
        $region23: #{tpu_custom_call.1} parent=11 // pred_region
          _
        $region24: #{tpu_custom_call.1} parent=11 // pred_fallthru
          _
        // Predicated region
        $region25: #{tpu_custom_call.1} parent=11 // pred_check
          %p207 = pneg %p136
        $region26: #{tpu_custom_call.1} parent=11 // pred_check_branch
          %209 = sbr.rel (%p207) target = $region28
        $region27: #{tpu_custom_call.1} parent=11 // pred_region
          _
        $region28: #{tpu_custom_call.1} parent=11 // pred_fallthru
          _
        // Predicated region
        $region29: #{tpu_custom_call.1} parent=11 // pred_check
          %p210 = pneg %p157
        $region30: #{tpu_custom_call.1} parent=11 // pred_check_branch
          %212 = sbr.rel (%p210) target = $region32
        $region31: #{tpu_custom_call.1} parent=11 // pred_region
          _
        $region32: #{tpu_custom_call.1} parent=11 // pred_fallthru
          _
      $region12: #{tpu_custom_call.1} parent=5 // pred_fallthru
        _
      %p213 = scmp.lt.s32.totalorder %s12, 4
      // Predicated region
      $region33: #{tpu_custom_call.1} parent=5 // pred_check
        %p214 = pneg %p213
      $region34: #{tpu_custom_call.1} parent=5 // pred_check_branch
        %216 = sbr.rel (%p214) target = $region36
      $region35: #{tpu_custom_call.1} parent=5 // pred_region
        // Predicated region
        $region37: #{tpu_custom_call.1} parent=35 // pred_check
          %p217 = pneg %p46
        $region38: #{tpu_custom_call.1} parent=35 // pred_check_branch
          %219 = sbr.rel (%p217) target = $region40
        $region39: #{tpu_custom_call.1} parent=35 // pred_region
          %s220 = sand.u32 %s36, 1
          %s221 = sand.u32 %s36, 1
          %s222 = smul.addr %s221, 512
          %s223 = scalar_lea.vmem [#allocation2], %s222
          %s224 = smul.u32 2, %s19
          %s225 = smul.u32 64, %s20
          %s226 = smul.addr %s224, 128
          %s227 = sadd.s32 %s225, %s226
          %s228 = smul.addr %s227, 4
          %s229 = scalar_lea.vmem %s0, %s228
          // Predicated region
          $region41: #{tpu_custom_call.1} parent=39 // pred_check
            _
          $region42: #{tpu_custom_call.1} parent=39 // pred_check_branch
            %231 = sbr.rel (0) target = $region44
          $region43: #{tpu_custom_call.1} parent=39 // pred_region
            // Predicated region
            $region45: #{tpu_custom_call.1} parent=43 // pred_check
              _
            $region46: #{tpu_custom_call.1} parent=43 // pred_check_branch
              %233 = sbr.rel target = $region48
            $region47: #{tpu_custom_call.1} parent=43 // pred_region
              // Predicated region
              $region60: #{tpu_custom_call.1} parent=47 // pred_check
                _
              $region61: #{tpu_custom_call.1} parent=47 // pred_check_branch
                %503 = sbr.rel (0) target = $region63
              $region62: #{tpu_custom_call.1} parent=47 // pred_region
                loop: start=0, step=1, limit=1
                $region64: #{tpu_custom_call.1} parent=62 // loop_pre_header
                  _
                $region65: #{tpu_custom_call.1} parent=62 // loop_header
                  %s505 = sphi 0, %s509
                  %p506 = scmp.ge.s32.totalorder %s505, 1
                  %s510 = sphi %s229, %s229
                  %s511 = sphi %s223, %s223
                $region66: #{tpu_custom_call.1} parent=62 // loop_header_branch
                  %508 = sbr.rel (%p506) target = $region70
                $region67: #{tpu_custom_call.1} parent=62 // loop_body
                  _
                $region68: #{tpu_custom_call.1} parent=62 // loop_footer
                  %s509 = sadd.s32 1, %s505
                $region69: #{tpu_custom_call.1} parent=62 // loop_footer_branch
                  %504 = sbr.rel target = $region65
                $region70: #{tpu_custom_call.1} parent=62 // loop_exit
                  _
                %s513 = ssub.s32 16, 1
                loop: start=0, step=1, limit=1
                $region71: #{tpu_custom_call.1} parent=62 // loop_pre_header
                  _
                $region72: #{tpu_custom_call.1} parent=62 // loop_header
                  %s515 = sphi 0, %s519
                  %p516 = scmp.ge.s32.totalorder %s515, 1
                  %s520 = sphi %s229, %s229
                  %s521 = sphi %s223, %s223
                $region73: #{tpu_custom_call.1} parent=62 // loop_header_branch
                  %518 = sbr.rel (%p516) target = $region77
                $region74: #{tpu_custom_call.1} parent=62 // loop_body
                  %v522 = vld [vmem:[%s520] sm:%s513]
                  %523 = vst [vmem:[%s521] sm:%s513] %v522
                  %v524 = vld [vmem:[%s520 + $0x4] sm:%s513]
                  %525 = vst [vmem:[%s521 + $0x4] sm:%s513] %v524
                  %v526 = vld [vmem:[%s520 + $0x8] sm:%s513]
                  %527 = vst [vmem:[%s521 + $0x8] sm:%s513] %v526
                  %v528 = vld [vmem:[%s520 + $0xc] sm:%s513]
                  %529 = vst [vmem:[%s521 + $0xc] sm:%s513] %v528
                  %v530 = vld [vmem:[%s520 + $0x10] sm:%s513]
                  %531 = vst [vmem:[%s521 + $0x10] sm:%s513] %v530
                  %v532 = vld [vmem:[%s520 + $0x14] sm:%s513]
                  %533 = vst [vmem:[%s521 + $0x14] sm:%s513] %v532
                  %v534 = vld [vmem:[%s520 + $0x18] sm:%s513]
                  %535 = vst [vmem:[%s521 + $0x18] sm:%s513] %v534
                  %v536 = vld [vmem:[%s520 + $0x1c] sm:%s513]
                  %537 = vst [vmem:[%s521 + $0x1c] sm:%s513] %v536
                  %v538 = vld [vmem:[%s520 + $0x20] sm:%s513]
                  %539 = vst [vmem:[%s521 + $0x20] sm:%s513] %v538
                  %v540 = vld [vmem:[%s520 + $0x24] sm:%s513]
                  %541 = vst [vmem:[%s521 + $0x24] sm:%s513] %v540
                  %v542 = vld [vmem:[%s520 + $0x28] sm:%s513]
                  %543 = vst [vmem:[%s521 + $0x28] sm:%s513] %v542
                  %v544 = vld [vmem:[%s520 + $0x2c] sm:%s513]
                  %545 = vst [vmem:[%s521 + $0x2c] sm:%s513] %v544
                  %v546 = vld [vmem:[%s520 + $0x30] sm:%s513]
                  %547 = vst [vmem:[%s521 + $0x30] sm:%s513] %v546
                  %v548 = vld [vmem:[%s520 + $0x34] sm:%s513]
                  %549 = vst [vmem:[%s521 + $0x34] sm:%s513] %v548
                  %v550 = vld [vmem:[%s520 + $0x38] sm:%s513]
                  %551 = vst [vmem:[%s521 + $0x38] sm:%s513] %v550
                  %v552 = vld [vmem:[%s520 + $0x3c] sm:%s513]
                  %553 = vst [vmem:[%s521 + $0x3c] sm:%s513] %v552
                  %v554 = vld [vmem:[%s520 + $0x40] sm:%s513]
                  %555 = vst [vmem:[%s521 + $0x40] sm:%s513] %v554
                  %v556 = vld [vmem:[%s520 + $0x44] sm:%s513]
                  %557 = vst [vmem:[%s521 + $0x44] sm:%s513] %v556
                  %v558 = vld [vmem:[%s520 + $0x48] sm:%s513]
                  %559 = vst [vmem:[%s521 + $0x48] sm:%s513] %v558
                  %v560 = vld [vmem:[%s520 + $0x4c] sm:%s513]
                  %561 = vst [vmem:[%s521 + $0x4c] sm:%s513] %v560
                  %v562 = vld [vmem:[%s520 + $0x50] sm:%s513]
                  %563 = vst [vmem:[%s521 + $0x50] sm:%s513] %v562
                  %v564 = vld [vmem:[%s520 + $0x54] sm:%s513]
                  %565 = vst [vmem:[%s521 + $0x54] sm:%s513] %v564
                  %v566 = vld [vmem:[%s520 + $0x58] sm:%s513]
                  %567 = vst [vmem:[%s521 + $0x58] sm:%s513] %v566
                  %v568 = vld [vmem:[%s520 + $0x5c] sm:%s513]
                  %569 = vst [vmem:[%s521 + $0x5c] sm:%s513] %v568
                  %v570 = vld [vmem:[%s520 + $0x60] sm:%s513]
                  %571 = vst [vmem:[%s521 + $0x60] sm:%s513] %v570
                  %v572 = vld [vmem:[%s520 + $0x64] sm:%s513]
                  %573 = vst [vmem:[%s521 + $0x64] sm:%s513] %v572
                  %v574 = vld [vmem:[%s520 + $0x68] sm:%s513]
                  %575 = vst [vmem:[%s521 + $0x68] sm:%s513] %v574
                  %v576 = vld [vmem:[%s520 + $0x6c] sm:%s513]
                  %577 = vst [vmem:[%s521 + $0x6c] sm:%s513] %v576
                  %v578 = vld [vmem:[%s520 + $0x70] sm:%s513]
                  %579 = vst [vmem:[%s521 + $0x70] sm:%s513] %v578
                  %v580 = vld [vmem:[%s520 + $0x74] sm:%s513]
                  %581 = vst [vmem:[%s521 + $0x74] sm:%s513] %v580
                  %v582 = vld [vmem:[%s520 + $0x78] sm:%s513]
                  %583 = vst [vmem:[%s521 + $0x78] sm:%s513] %v582
                  %v584 = vld [vmem:[%s520 + $0x7c] sm:%s513]
                  %585 = vst [vmem:[%s521 + $0x7c] sm:%s513] %v584
                  %v586 = vld [vmem:[%s520 + $0x80] sm:%s513]
                  %587 = vst [vmem:[%s521 + $0x80] sm:%s513] %v586
                  %v588 = vld [vmem:[%s520 + $0x84] sm:%s513]
                  %589 = vst [vmem:[%s521 + $0x84] sm:%s513] %v588
                  %v590 = vld [vmem:[%s520 + $0x88] sm:%s513]
                  %591 = vst [vmem:[%s521 + $0x88] sm:%s513] %v590
                  %v592 = vld [vmem:[%s520 + $0x8c] sm:%s513]
                  %593 = vst [vmem:[%s521 + $0x8c] sm:%s513] %v592
                  %v594 = vld [vmem:[%s520 + $0x90] sm:%s513]
                  %595 = vst [vmem:[%s521 + $0x90] sm:%s513] %v594
                  %v596 = vld [vmem:[%s520 + $0x94] sm:%s513]
                  %597 = vst [vmem:[%s521 + $0x94] sm:%s513] %v596
                  %v598 = vld [vmem:[%s520 + $0x98] sm:%s513]
                  %599 = vst [vmem:[%s521 + $0x98] sm:%s513] %v598
                  %v600 = vld [vmem:[%s520 + $0x9c] sm:%s513]
                  %601 = vst [vmem:[%s521 + $0x9c] sm:%s513] %v600
                  %v602 = vld [vmem:[%s520 + $0xa0] sm:%s513]
                  %603 = vst [vmem:[%s521 + $0xa0] sm:%s513] %v602
                  %v604 = vld [vmem:[%s520 + $0xa4] sm:%s513]
                  %605 = vst [vmem:[%s521 + $0xa4] sm:%s513] %v604
                  %v606 = vld [vmem:[%s520 + $0xa8] sm:%s513]
                  %607 = vst [vmem:[%s521 + $0xa8] sm:%s513] %v606
                  %v608 = vld [vmem:[%s520 + $0xac] sm:%s513]
                  %609 = vst [vmem:[%s521 + $0xac] sm:%s513] %v608
                  %v610 = vld [vmem:[%s520 + $0xb0] sm:%s513]
                  %611 = vst [vmem:[%s521 + $0xb0] sm:%s513] %v610
                  %v612 = vld [vmem:[%s520 + $0xb4] sm:%s513]
                  %613 = vst [vmem:[%s521 + $0xb4] sm:%s513] %v612
                  %v614 = vld [vmem:[%s520 + $0xb8] sm:%s513]
                  %615 = vst [vmem:[%s521 + $0xb8] sm:%s513] %v614
                  %v616 = vld [vmem:[%s520 + $0xbc] sm:%s513]
                  %617 = vst [vmem:[%s521 + $0xbc] sm:%s513] %v616
                  %v618 = vld [vmem:[%s520 + $0xc0] sm:%s513]
                  %619 = vst [vmem:[%s521 + $0xc0] sm:%s513] %v618
                  %v620 = vld [vmem:[%s520 + $0xc4] sm:%s513]
                  %621 = vst [vmem:[%s521 + $0xc4] sm:%s513] %v620
                  %v622 = vld [vmem:[%s520 + $0xc8] sm:%s513]
                  %623 = vst [vmem:[%s521 + $0xc8] sm:%s513] %v622
                  %v624 = vld [vmem:[%s520 + $0xcc] sm:%s513]
                  %625 = vst [vmem:[%s521 + $0xcc] sm:%s513] %v624
                  %v626 = vld [vmem:[%s520 + $0xd0] sm:%s513]
                  %627 = vst [vmem:[%s521 + $0xd0] sm:%s513] %v626
                  %v628 = vld [vmem:[%s520 + $0xd4] sm:%s513]
                  %629 = vst [vmem:[%s521 + $0xd4] sm:%s513] %v628
                  %v630 = vld [vmem:[%s520 + $0xd8] sm:%s513]
                  %631 = vst [vmem:[%s521 + $0xd8] sm:%s513] %v630
                  %v632 = vld [vmem:[%s520 + $0xdc] sm:%s513]
                  %633 = vst [vmem:[%s521 + $0xdc] sm:%s513] %v632
                  %v634 = vld [vmem:[%s520 + $0xe0] sm:%s513]
                  %635 = vst [vmem:[%s521 + $0xe0] sm:%s513] %v634
                  %v636 = vld [vmem:[%s520 + $0xe4] sm:%s513]
                  %637 = vst [vmem:[%s521 + $0xe4] sm:%s513] %v636
                  %v638 = vld [vmem:[%s520 + $0xe8] sm:%s513]
                  %639 = vst [vmem:[%s521 + $0xe8] sm:%s513] %v638
                  %v640 = vld [vmem:[%s520 + $0xec] sm:%s513]
                  %641 = vst [vmem:[%s521 + $0xec] sm:%s513] %v640
                  %v642 = vld [vmem:[%s520 + $0xf0] sm:%s513]
                  %643 = vst [vmem:[%s521 + $0xf0] sm:%s513] %v642
                  %v644 = vld [vmem:[%s520 + $0xf4] sm:%s513]
                  %645 = vst [vmem:[%s521 + $0xf4] sm:%s513] %v644
                  %v646 = vld [vmem:[%s520 + $0xf8] sm:%s513]
                  %647 = vst [vmem:[%s521 + $0xf8] sm:%s513] %v646
                  %v648 = vld [vmem:[%s520 + $0xfc] sm:%s513]
                  %649 = vst [vmem:[%s521 + $0xfc] sm:%s513] %v648
                  %v650 = vld [vmem:[%s520 + $0x200] sm:%s513]
                  %651 = vst [vmem:[%s521 + $0x100] sm:%s513] %v650
                  %v652 = vld [vmem:[%s520 + $0x204] sm:%s513]
                  %653 = vst [vmem:[%s521 + $0x104] sm:%s513] %v652
                  %v654 = vld [vmem:[%s520 + $0x208] sm:%s513]
                  %655 = vst [vmem:[%s521 + $0x108] sm:%s513] %v654
                  %v656 = vld [vmem:[%s520 + $0x20c] sm:%s513]
                  %657 = vst [vmem:[%s521 + $0x10c] sm:%s513] %v656
                  %v658 = vld [vmem:[%s520 + $0x210] sm:%s513]
                  %659 = vst [vmem:[%s521 + $0x110] sm:%s513] %v658
                  %v660 = vld [vmem:[%s520 + $0x214] sm:%s513]
                  %661 = vst [vmem:[%s521 + $0x114] sm:%s513] %v660
                  %v662 = vld [vmem:[%s520 + $0x218] sm:%s513]
                  %663 = vst [vmem:[%s521 + $0x118] sm:%s513] %v662
                  %v664 = vld [vmem:[%s520 + $0x21c] sm:%s513]
                  %665 = vst [vmem:[%s521 + $0x11c] sm:%s513] %v664
                  %v666 = vld [vmem:[%s520 + $0x220] sm:%s513]
                  %667 = vst [vmem:[%s521 + $0x120] sm:%s513] %v666
                  %v668 = vld [vmem:[%s520 + $0x224] sm:%s513]
                  %669 = vst [vmem:[%s521 + $0x124] sm:%s513] %v668
                  %v670 = vld [vmem:[%s520 + $0x228] sm:%s513]
                  %671 = vst [vmem:[%s521 + $0x128] sm:%s513] %v670
                  %v672 = vld [vmem:[%s520 + $0x22c] sm:%s513]
                  %673 = vst [vmem:[%s521 + $0x12c] sm:%s513] %v672
                  %v674 = vld [vmem:[%s520 + $0x230] sm:%s513]
                  %675 = vst [vmem:[%s521 + $0x130] sm:%s513] %v674
                  %v676 = vld [vmem:[%s520 + $0x234] sm:%s513]
                  %677 = vst [vmem:[%s521 + $0x134] sm:%s513] %v676
                  %v678 = vld [vmem:[%s520 + $0x238] sm:%s513]
                  %679 = vst [vmem:[%s521 + $0x138] sm:%s513] %v678
                  %v680 = vld [vmem:[%s520 + $0x23c] sm:%s513]
                  %681 = vst [vmem:[%s521 + $0x13c] sm:%s513] %v680
                  %v682 = vld [vmem:[%s520 + $0x240] sm:%s513]
                  %683 = vst [vmem:[%s521 + $0x140] sm:%s513] %v682
                  %v684 = vld [vmem:[%s520 + $0x244] sm:%s513]
                  %685 = vst [vmem:[%s521 + $0x144] sm:%s513] %v684
                  %v686 = vld [vmem:[%s520 + $0x248] sm:%s513]
                  %687 = vst [vmem:[%s521 + $0x148] sm:%s513] %v686
                  %v688 = vld [vmem:[%s520 + $0x24c] sm:%s513]
                  %689 = vst [vmem:[%s521 + $0x14c] sm:%s513] %v688
                  %v690 = vld [vmem:[%s520 + $0x250] sm:%s513]
                  %691 = vst [vmem:[%s521 + $0x150] sm:%s513] %v690
                  %v692 = vld [vmem:[%s520 + $0x254] sm:%s513]
                  %693 = vst [vmem:[%s521 + $0x154] sm:%s513] %v692
                  %v694 = vld [vmem:[%s520 + $0x258] sm:%s513]
                  %695 = vst [vmem:[%s521 + $0x158] sm:%s513] %v694
                  %v696 = vld [vmem:[%s520 + $0x25c] sm:%s513]
                  %697 = vst [vmem:[%s521 + $0x15c] sm:%s513] %v696
                  %v698 = vld [vmem:[%s520 + $0x260] sm:%s513]
                  %699 = vst [vmem:[%s521 + $0x160] sm:%s513] %v698
                  %v700 = vld [vmem:[%s520 + $0x264] sm:%s513]
                  %701 = vst [vmem:[%s521 + $0x164] sm:%s513] %v700
                  %v702 = vld [vmem:[%s520 + $0x268] sm:%s513]
                  %703 = vst [vmem:[%s521 + $0x168] sm:%s513] %v702
                  %v704 = vld [vmem:[%s520 + $0x26c] sm:%s513]
                  %705 = vst [vmem:[%s521 + $0x16c] sm:%s513] %v704
                  %v706 = vld [vmem:[%s520 + $0x270] sm:%s513]
                  %707 = vst [vmem:[%s521 + $0x170] sm:%s513] %v706
                  %v708 = vld [vmem:[%s520 + $0x274] sm:%s513]
                  %709 = vst [vmem:[%s521 + $0x174] sm:%s513] %v708
                  %v710 = vld [vmem:[%s520 + $0x278] sm:%s513]
                  %711 = vst [vmem:[%s521 + $0x178] sm:%s513] %v710
                  %v712 = vld [vmem:[%s520 + $0x27c] sm:%s513]
                  %713 = vst [vmem:[%s521 + $0x17c] sm:%s513] %v712
                  %v714 = vld [vmem:[%s520 + $0x280] sm:%s513]
                  %715 = vst [vmem:[%s521 + $0x180] sm:%s513] %v714
                  %v716 = vld [vmem:[%s520 + $0x284] sm:%s513]
                  %717 = vst [vmem:[%s521 + $0x184] sm:%s513] %v716
                  %v718 = vld [vmem:[%s520 + $0x288] sm:%s513]
                  %719 = vst [vmem:[%s521 + $0x188] sm:%s513] %v718
                  %v720 = vld [vmem:[%s520 + $0x28c] sm:%s513]
                  %721 = vst [vmem:[%s521 + $0x18c] sm:%s513] %v720
                  %v722 = vld [vmem:[%s520 + $0x290] sm:%s513]
                  %723 = vst [vmem:[%s521 + $0x190] sm:%s513] %v722
                  %v724 = vld [vmem:[%s520 + $0x294] sm:%s513]
                  %725 = vst [vmem:[%s521 + $0x194] sm:%s513] %v724
                  %v726 = vld [vmem:[%s520 + $0x298] sm:%s513]
                  %727 = vst [vmem:[%s521 + $0x198] sm:%s513] %v726
                  %v728 = vld [vmem:[%s520 + $0x29c] sm:%s513]
                  %729 = vst [vmem:[%s521 + $0x19c] sm:%s513] %v728
                  %v730 = vld [vmem:[%s520 + $0x2a0] sm:%s513]
                  %731 = vst [vmem:[%s521 + $0x1a0] sm:%s513] %v730
                  %v732 = vld [vmem:[%s520 + $0x2a4] sm:%s513]
                  %733 = vst [vmem:[%s521 + $0x1a4] sm:%s513] %v732
                  %v734 = vld [vmem:[%s520 + $0x2a8] sm:%s513]
                  %735 = vst [vmem:[%s521 + $0x1a8] sm:%s513] %v734
                  %v736 = vld [vmem:[%s520 + $0x2ac] sm:%s513]
                  %737 = vst [vmem:[%s521 + $0x1ac] sm:%s513] %v736
                  %v738 = vld [vmem:[%s520 + $0x2b0] sm:%s513]
                  %739 = vst [vmem:[%s521 + $0x1b0] sm:%s513] %v738
                  %v740 = vld [vmem:[%s520 + $0x2b4] sm:%s513]
                  %741 = vst [vmem:[%s521 + $0x1b4] sm:%s513] %v740
                  %v742 = vld [vmem:[%s520 + $0x2b8] sm:%s513]
                  %743 = vst [vmem:[%s521 + $0x1b8] sm:%s513] %v742
                  %v744 = vld [vmem:[%s520 + $0x2bc] sm:%s513]
                  %745 = vst [vmem:[%s521 + $0x1bc] sm:%s513] %v744
                  %v746 = vld [vmem:[%s520 + $0x2c0] sm:%s513]
                  %747 = vst [vmem:[%s521 + $0x1c0] sm:%s513] %v746
                  %v748 = vld [vmem:[%s520 + $0x2c4] sm:%s513]
                  %749 = vst [vmem:[%s521 + $0x1c4] sm:%s513] %v748
                  %v750 = vld [vmem:[%s520 + $0x2c8] sm:%s513]
                  %751 = vst [vmem:[%s521 + $0x1c8] sm:%s513] %v750
                  %v752 = vld [vmem:[%s520 + $0x2cc] sm:%s513]
                  %753 = vst [vmem:[%s521 + $0x1cc] sm:%s513] %v752
                  %v754 = vld [vmem:[%s520 + $0x2d0] sm:%s513]
                  %755 = vst [vmem:[%s521 + $0x1d0] sm:%s513] %v754
                  %v756 = vld [vmem:[%s520 + $0x2d4] sm:%s513]
                  %757 = vst [vmem:[%s521 + $0x1d4] sm:%s513] %v756
                  %v758 = vld [vmem:[%s520 + $0x2d8] sm:%s513]
                  %759 = vst [vmem:[%s521 + $0x1d8] sm:%s513] %v758
                  %v760 = vld [vmem:[%s520 + $0x2dc] sm:%s513]
                  %761 = vst [vmem:[%s521 + $0x1dc] sm:%s513] %v760
                  %v762 = vld [vmem:[%s520 + $0x2e0] sm:%s513]
                  %763 = vst [vmem:[%s521 + $0x1e0] sm:%s513] %v762
                  %v764 = vld [vmem:[%s520 + $0x2e4] sm:%s513]
                  %765 = vst [vmem:[%s521 + $0x1e4] sm:%s513] %v764
                  %v766 = vld [vmem:[%s520 + $0x2e8] sm:%s513]
                  %767 = vst [vmem:[%s521 + $0x1e8] sm:%s513] %v766
                  %v768 = vld [vmem:[%s520 + $0x2ec] sm:%s513]
                  %769 = vst [vmem:[%s521 + $0x1ec] sm:%s513] %v768
                  %v770 = vld [vmem:[%s520 + $0x2f0] sm:%s513]
                  %771 = vst [vmem:[%s521 + $0x1f0] sm:%s513] %v770
                  %v772 = vld [vmem:[%s520 + $0x2f4] sm:%s513]
                  %773 = vst [vmem:[%s521 + $0x1f4] sm:%s513] %v772
                  %v774 = vld [vmem:[%s520 + $0x2f8] sm:%s513]
                  %775 = vst [vmem:[%s521 + $0x1f8] sm:%s513] %v774
                  %v776 = vld [vmem:[%s520 + $0x2fc] sm:%s513]
                  %777 = vst [vmem:[%s521 + $0x1fc] sm:%s513] %v776
                $region75: #{tpu_custom_call.1} parent=62 // loop_footer
                  %s519 = sadd.s32 1, %s515
                $region76: #{tpu_custom_call.1} parent=62 // loop_footer_branch
                  %514 = sbr.rel target = $region72
                $region77: #{tpu_custom_call.1} parent=62 // loop_exit
                  _
              $region63: #{tpu_custom_call.1} parent=47 // pred_fallthru
                _
            $region48: #{tpu_custom_call.1} parent=43 // pred_fallthru
              _
            // Predicated region
            $region49: #{tpu_custom_call.1} parent=43 // pred_check
              _
            $region50: #{tpu_custom_call.1} parent=43 // pred_check_branch
              %235 = sbr.rel (0) target = $region52
            $region51: #{tpu_custom_call.1} parent=43 // pred_region
              %s237 = ssub.s32 16, 1
              loop: start=0, step=1, limit=1
              $region53: #{tpu_custom_call.1} parent=51 // loop_pre_header
                _
              $region54: #{tpu_custom_call.1} parent=51 // loop_header
                %s239 = sphi 0, %s243
                %p240 = scmp.ge.s32.totalorder %s239, 1
                %s244 = sphi %s229, %s229
                %s245 = sphi %s223, %s223
              $region55: #{tpu_custom_call.1} parent=51 // loop_header_branch
                %242 = sbr.rel (%p240) target = $region59
              $region56: #{tpu_custom_call.1} parent=51 // loop_body
                %v246 = vld [vmem:[%s244] sm:%s237]
                %247 = vst [vmem:[%s245] sm:%s237] %v246
                %v248 = vld [vmem:[%s244 + $0x4] sm:%s237]
                %249 = vst [vmem:[%s245 + $0x4] sm:%s237] %v248
                %v250 = vld [vmem:[%s244 + $0x8] sm:%s237]
                %251 = vst [vmem:[%s245 + $0x8] sm:%s237] %v250
                %v252 = vld [vmem:[%s244 + $0xc] sm:%s237]
                %253 = vst [vmem:[%s245 + $0xc] sm:%s237] %v252
                %v254 = vld [vmem:[%s244 + $0x10] sm:%s237]
                %255 = vst [vmem:[%s245 + $0x10] sm:%s237] %v254
                %v256 = vld [vmem:[%s244 + $0x14] sm:%s237]
                %257 = vst [vmem:[%s245 + $0x14] sm:%s237] %v256
                %v258 = vld [vmem:[%s244 + $0x18] sm:%s237]
                %259 = vst [vmem:[%s245 + $0x18] sm:%s237] %v258
                %v260 = vld [vmem:[%s244 + $0x1c] sm:%s237]
                %261 = vst [vmem:[%s245 + $0x1c] sm:%s237] %v260
                %v262 = vld [vmem:[%s244 + $0x20] sm:%s237]
                %263 = vst [vmem:[%s245 + $0x20] sm:%s237] %v262
                %v264 = vld [vmem:[%s244 + $0x24] sm:%s237]
                %265 = vst [vmem:[%s245 + $0x24] sm:%s237] %v264
                %v266 = vld [vmem:[%s244 + $0x28] sm:%s237]
                %267 = vst [vmem:[%s245 + $0x28] sm:%s237] %v266
                %v268 = vld [vmem:[%s244 + $0x2c] sm:%s237]
                %269 = vst [vmem:[%s245 + $0x2c] sm:%s237] %v268
                %v270 = vld [vmem:[%s244 + $0x30] sm:%s237]
                %271 = vst [vmem:[%s245 + $0x30] sm:%s237] %v270
                %v272 = vld [vmem:[%s244 + $0x34] sm:%s237]
                %273 = vst [vmem:[%s245 + $0x34] sm:%s237] %v272
                %v274 = vld [vmem:[%s244 + $0x38] sm:%s237]
                %275 = vst [vmem:[%s245 + $0x38] sm:%s237] %v274
                %v276 = vld [vmem:[%s244 + $0x3c] sm:%s237]
                %277 = vst [vmem:[%s245 + $0x3c] sm:%s237] %v276
                %v278 = vld [vmem:[%s244 + $0x40] sm:%s237]
                %279 = vst [vmem:[%s245 + $0x40] sm:%s237] %v278
                %v280 = vld [vmem:[%s244 + $0x44] sm:%s237]
                %281 = vst [vmem:[%s245 + $0x44] sm:%s237] %v280
                %v282 = vld [vmem:[%s244 + $0x48] sm:%s237]
                %283 = vst [vmem:[%s245 + $0x48] sm:%s237] %v282
                %v284 = vld [vmem:[%s244 + $0x4c] sm:%s237]
                %285 = vst [vmem:[%s245 + $0x4c] sm:%s237] %v284
                %v286 = vld [vmem:[%s244 + $0x50] sm:%s237]
                %287 = vst [vmem:[%s245 + $0x50] sm:%s237] %v286
                %v288 = vld [vmem:[%s244 + $0x54] sm:%s237]
                %289 = vst [vmem:[%s245 + $0x54] sm:%s237] %v288
                %v290 = vld [vmem:[%s244 + $0x58] sm:%s237]
                %291 = vst [vmem:[%s245 + $0x58] sm:%s237] %v290
                %v292 = vld [vmem:[%s244 + $0x5c] sm:%s237]
                %293 = vst [vmem:[%s245 + $0x5c] sm:%s237] %v292
                %v294 = vld [vmem:[%s244 + $0x60] sm:%s237]
                %295 = vst [vmem:[%s245 + $0x60] sm:%s237] %v294
                %v296 = vld [vmem:[%s244 + $0x64] sm:%s237]
                %297 = vst [vmem:[%s245 + $0x64] sm:%s237] %v296
                %v298 = vld [vmem:[%s244 + $0x68] sm:%s237]
                %299 = vst [vmem:[%s245 + $0x68] sm:%s237] %v298
                %v300 = vld [vmem:[%s244 + $0x6c] sm:%s237]
                %301 = vst [vmem:[%s245 + $0x6c] sm:%s237] %v300
                %v302 = vld [vmem:[%s244 + $0x70] sm:%s237]
                %303 = vst [vmem:[%s245 + $0x70] sm:%s237] %v302
                %v304 = vld [vmem:[%s244 + $0x74] sm:%s237]
                %305 = vst [vmem:[%s245 + $0x74] sm:%s237] %v304
                %v306 = vld [vmem:[%s244 + $0x78] sm:%s237]
                %307 = vst [vmem:[%s245 + $0x78] sm:%s237] %v306
                %v308 = vld [vmem:[%s244 + $0x7c] sm:%s237]
                %309 = vst [vmem:[%s245 + $0x7c] sm:%s237] %v308
                %v310 = vld [vmem:[%s244 + $0x80] sm:%s237]
                %311 = vst [vmem:[%s245 + $0x80] sm:%s237] %v310
                %v312 = vld [vmem:[%s244 + $0x84] sm:%s237]
                %313 = vst [vmem:[%s245 + $0x84] sm:%s237] %v312
                %v314 = vld [vmem:[%s244 + $0x88] sm:%s237]
                %315 = vst [vmem:[%s245 + $0x88] sm:%s237] %v314
                %v316 = vld [vmem:[%s244 + $0x8c] sm:%s237]
                %317 = vst [vmem:[%s245 + $0x8c] sm:%s237] %v316
                %v318 = vld [vmem:[%s244 + $0x90] sm:%s237]
                %319 = vst [vmem:[%s245 + $0x90] sm:%s237] %v318
                %v320 = vld [vmem:[%s244 + $0x94] sm:%s237]
                %321 = vst [vmem:[%s245 + $0x94] sm:%s237] %v320
                %v322 = vld [vmem:[%s244 + $0x98] sm:%s237]
                %323 = vst [vmem:[%s245 + $0x98] sm:%s237] %v322
                %v324 = vld [vmem:[%s244 + $0x9c] sm:%s237]
                %325 = vst [vmem:[%s245 + $0x9c] sm:%s237] %v324
                %v326 = vld [vmem:[%s244 + $0xa0] sm:%s237]
                %327 = vst [vmem:[%s245 + $0xa0] sm:%s237] %v326
                %v328 = vld [vmem:[%s244 + $0xa4] sm:%s237]
                %329 = vst [vmem:[%s245 + $0xa4] sm:%s237] %v328
                %v330 = vld [vmem:[%s244 + $0xa8] sm:%s237]
                %331 = vst [vmem:[%s245 + $0xa8] sm:%s237] %v330
                %v332 = vld [vmem:[%s244 + $0xac] sm:%s237]
                %333 = vst [vmem:[%s245 + $0xac] sm:%s237] %v332
                %v334 = vld [vmem:[%s244 + $0xb0] sm:%s237]
                %335 = vst [vmem:[%s245 + $0xb0] sm:%s237] %v334
                %v336 = vld [vmem:[%s244 + $0xb4] sm:%s237]
                %337 = vst [vmem:[%s245 + $0xb4] sm:%s237] %v336
                %v338 = vld [vmem:[%s244 + $0xb8] sm:%s237]
                %339 = vst [vmem:[%s245 + $0xb8] sm:%s237] %v338
                %v340 = vld [vmem:[%s244 + $0xbc] sm:%s237]
                %341 = vst [vmem:[%s245 + $0xbc] sm:%s237] %v340
                %v342 = vld [vmem:[%s244 + $0xc0] sm:%s237]
                %343 = vst [vmem:[%s245 + $0xc0] sm:%s237] %v342
                %v344 = vld [vmem:[%s244 + $0xc4] sm:%s237]
                %345 = vst [vmem:[%s245 + $0xc4] sm:%s237] %v344
                %v346 = vld [vmem:[%s244 + $0xc8] sm:%s237]
                %347 = vst [vmem:[%s245 + $0xc8] sm:%s237] %v346
                %v348 = vld [vmem:[%s244 + $0xcc] sm:%s237]
                %349 = vst [vmem:[%s245 + $0xcc] sm:%s237] %v348
                %v350 = vld [vmem:[%s244 + $0xd0] sm:%s237]
                %351 = vst [vmem:[%s245 + $0xd0] sm:%s237] %v350
                %v352 = vld [vmem:[%s244 + $0xd4] sm:%s237]
                %353 = vst [vmem:[%s245 + $0xd4] sm:%s237] %v352
                %v354 = vld [vmem:[%s244 + $0xd8] sm:%s237]
                %355 = vst [vmem:[%s245 + $0xd8] sm:%s237] %v354
                %v356 = vld [vmem:[%s244 + $0xdc] sm:%s237]
                %357 = vst [vmem:[%s245 + $0xdc] sm:%s237] %v356
                %v358 = vld [vmem:[%s244 + $0xe0] sm:%s237]
                %359 = vst [vmem:[%s245 + $0xe0] sm:%s237] %v358
                %v360 = vld [vmem:[%s244 + $0xe4] sm:%s237]
                %361 = vst [vmem:[%s245 + $0xe4] sm:%s237] %v360
                %v362 = vld [vmem:[%s244 + $0xe8] sm:%s237]
                %363 = vst [vmem:[%s245 + $0xe8] sm:%s237] %v362
                %v364 = vld [vmem:[%s244 + $0xec] sm:%s237]
                %365 = vst [vmem:[%s245 + $0xec] sm:%s237] %v364
                %v366 = vld [vmem:[%s244 + $0xf0] sm:%s237]
                %367 = vst [vmem:[%s245 + $0xf0] sm:%s237] %v366
                %v368 = vld [vmem:[%s244 + $0xf4] sm:%s237]
                %369 = vst [vmem:[%s245 + $0xf4] sm:%s237] %v368
                %v370 = vld [vmem:[%s244 + $0xf8] sm:%s237]
                %371 = vst [vmem:[%s245 + $0xf8] sm:%s237] %v370
                %v372 = vld [vmem:[%s244 + $0xfc] sm:%s237]
                %373 = vst [vmem:[%s245 + $0xfc] sm:%s237] %v372
                %v374 = vld [vmem:[%s244 + $0x200] sm:%s237]
                %375 = vst [vmem:[%s245 + $0x100] sm:%s237] %v374
                %v376 = vld [vmem:[%s244 + $0x204] sm:%s237]
                %377 = vst [vmem:[%s245 + $0x104] sm:%s237] %v376
                %v378 = vld [vmem:[%s244 + $0x208] sm:%s237]
                %379 = vst [vmem:[%s245 + $0x108] sm:%s237] %v378
                %v380 = vld [vmem:[%s244 + $0x20c] sm:%s237]
                %381 = vst [vmem:[%s245 + $0x10c] sm:%s237] %v380
                %v382 = vld [vmem:[%s244 + $0x210] sm:%s237]
                %383 = vst [vmem:[%s245 + $0x110] sm:%s237] %v382
                %v384 = vld [vmem:[%s244 + $0x214] sm:%s237]
                %385 = vst [vmem:[%s245 + $0x114] sm:%s237] %v384
                %v386 = vld [vmem:[%s244 + $0x218] sm:%s237]
                %387 = vst [vmem:[%s245 + $0x118] sm:%s237] %v386
                %v388 = vld [vmem:[%s244 + $0x21c] sm:%s237]
                %389 = vst [vmem:[%s245 + $0x11c] sm:%s237] %v388
                %v390 = vld [vmem:[%s244 + $0x220] sm:%s237]
                %391 = vst [vmem:[%s245 + $0x120] sm:%s237] %v390
                %v392 = vld [vmem:[%s244 + $0x224] sm:%s237]
                %393 = vst [vmem:[%s245 + $0x124] sm:%s237] %v392
                %v394 = vld [vmem:[%s244 + $0x228] sm:%s237]
                %395 = vst [vmem:[%s245 + $0x128] sm:%s237] %v394
                %v396 = vld [vmem:[%s244 + $0x22c] sm:%s237]
                %397 = vst [vmem:[%s245 + $0x12c] sm:%s237] %v396
                %v398 = vld [vmem:[%s244 + $0x230] sm:%s237]
                %399 = vst [vmem:[%s245 + $0x130] sm:%s237] %v398
                %v400 = vld [vmem:[%s244 + $0x234] sm:%s237]
                %401 = vst [vmem:[%s245 + $0x134] sm:%s237] %v400
                %v402 = vld [vmem:[%s244 + $0x238] sm:%s237]
                %403 = vst [vmem:[%s245 + $0x138] sm:%s237] %v402
                %v404 = vld [vmem:[%s244 + $0x23c] sm:%s237]
                %405 = vst [vmem:[%s245 + $0x13c] sm:%s237] %v404
                %v406 = vld [vmem:[%s244 + $0x240] sm:%s237]
                %407 = vst [vmem:[%s245 + $0x140] sm:%s237] %v406
                %v408 = vld [vmem:[%s244 + $0x244] sm:%s237]
                %409 = vst [vmem:[%s245 + $0x144] sm:%s237] %v408
                %v410 = vld [vmem:[%s244 + $0x248] sm:%s237]
                %411 = vst [vmem:[%s245 + $0x148] sm:%s237] %v410
                %v412 = vld [vmem:[%s244 + $0x24c] sm:%s237]
                %413 = vst [vmem:[%s245 + $0x14c] sm:%s237] %v412
                %v414 = vld [vmem:[%s244 + $0x250] sm:%s237]
                %415 = vst [vmem:[%s245 + $0x150] sm:%s237] %v414
                %v416 = vld [vmem:[%s244 + $0x254] sm:%s237]
                %417 = vst [vmem:[%s245 + $0x154] sm:%s237] %v416
                %v418 = vld [vmem:[%s244 + $0x258] sm:%s237]
                %419 = vst [vmem:[%s245 + $0x158] sm:%s237] %v418
                %v420 = vld [vmem:[%s244 + $0x25c] sm:%s237]
                %421 = vst [vmem:[%s245 + $0x15c] sm:%s237] %v420
                %v422 = vld [vmem:[%s244 + $0x260] sm:%s237]
                %423 = vst [vmem:[%s245 + $0x160] sm:%s237] %v422
                %v424 = vld [vmem:[%s244 + $0x264] sm:%s237]
                %425 = vst [vmem:[%s245 + $0x164] sm:%s237] %v424
                %v426 = vld [vmem:[%s244 + $0x268] sm:%s237]
                %427 = vst [vmem:[%s245 + $0x168] sm:%s237] %v426
                %v428 = vld [vmem:[%s244 + $0x26c] sm:%s237]
                %429 = vst [vmem:[%s245 + $0x16c] sm:%s237] %v428
                %v430 = vld [vmem:[%s244 + $0x270] sm:%s237]
                %431 = vst [vmem:[%s245 + $0x170] sm:%s237] %v430
                %v432 = vld [vmem:[%s244 + $0x274] sm:%s237]
                %433 = vst [vmem:[%s245 + $0x174] sm:%s237] %v432
                %v434 = vld [vmem:[%s244 + $0x278] sm:%s237]
                %435 = vst [vmem:[%s245 + $0x178] sm:%s237] %v434
                %v436 = vld [vmem:[%s244 + $0x27c] sm:%s237]
                %437 = vst [vmem:[%s245 + $0x17c] sm:%s237] %v436
                %v438 = vld [vmem:[%s244 + $0x280] sm:%s237]
                %439 = vst [vmem:[%s245 + $0x180] sm:%s237] %v438
                %v440 = vld [vmem:[%s244 + $0x284] sm:%s237]
                %441 = vst [vmem:[%s245 + $0x184] sm:%s237] %v440
                %v442 = vld [vmem:[%s244 + $0x288] sm:%s237]
                %443 = vst [vmem:[%s245 + $0x188] sm:%s237] %v442
                %v444 = vld [vmem:[%s244 + $0x28c] sm:%s237]
                %445 = vst [vmem:[%s245 + $0x18c] sm:%s237] %v444
                %v446 = vld [vmem:[%s244 + $0x290] sm:%s237]
                %447 = vst [vmem:[%s245 + $0x190] sm:%s237] %v446
                %v448 = vld [vmem:[%s244 + $0x294] sm:%s237]
                %449 = vst [vmem:[%s245 + $0x194] sm:%s237] %v448
                %v450 = vld [vmem:[%s244 + $0x298] sm:%s237]
                %451 = vst [vmem:[%s245 + $0x198] sm:%s237] %v450
                %v452 = vld [vmem:[%s244 + $0x29c] sm:%s237]
                %453 = vst [vmem:[%s245 + $0x19c] sm:%s237] %v452
                %v454 = vld [vmem:[%s244 + $0x2a0] sm:%s237]
                %455 = vst [vmem:[%s245 + $0x1a0] sm:%s237] %v454
                %v456 = vld [vmem:[%s244 + $0x2a4] sm:%s237]
                %457 = vst [vmem:[%s245 + $0x1a4] sm:%s237] %v456
                %v458 = vld [vmem:[%s244 + $0x2a8] sm:%s237]
                %459 = vst [vmem:[%s245 + $0x1a8] sm:%s237] %v458
                %v460 = vld [vmem:[%s244 + $0x2ac] sm:%s237]
                %461 = vst [vmem:[%s245 + $0x1ac] sm:%s237] %v460
                %v462 = vld [vmem:[%s244 + $0x2b0] sm:%s237]
                %463 = vst [vmem:[%s245 + $0x1b0] sm:%s237] %v462
                %v464 = vld [vmem:[%s244 + $0x2b4] sm:%s237]
                %465 = vst [vmem:[%s245 + $0x1b4] sm:%s237] %v464
                %v466 = vld [vmem:[%s244 + $0x2b8] sm:%s237]
                %467 = vst [vmem:[%s245 + $0x1b8] sm:%s237] %v466
                %v468 = vld [vmem:[%s244 + $0x2bc] sm:%s237]
                %469 = vst [vmem:[%s245 + $0x1bc] sm:%s237] %v468
                %v470 = vld [vmem:[%s244 + $0x2c0] sm:%s237]
                %471 = vst [vmem:[%s245 + $0x1c0] sm:%s237] %v470
                %v472 = vld [vmem:[%s244 + $0x2c4] sm:%s237]
                %473 = vst [vmem:[%s245 + $0x1c4] sm:%s237] %v472
                %v474 = vld [vmem:[%s244 + $0x2c8] sm:%s237]
                %475 = vst [vmem:[%s245 + $0x1c8] sm:%s237] %v474
                %v476 = vld [vmem:[%s244 + $0x2cc] sm:%s237]
                %477 = vst [vmem:[%s245 + $0x1cc] sm:%s237] %v476
                %v478 = vld [vmem:[%s244 + $0x2d0] sm:%s237]
                %479 = vst [vmem:[%s245 + $0x1d0] sm:%s237] %v478
                %v480 = vld [vmem:[%s244 + $0x2d4] sm:%s237]
                %481 = vst [vmem:[%s245 + $0x1d4] sm:%s237] %v480
                %v482 = vld [vmem:[%s244 + $0x2d8] sm:%s237]
                %483 = vst [vmem:[%s245 + $0x1d8] sm:%s237] %v482
                %v484 = vld [vmem:[%s244 + $0x2dc] sm:%s237]
                %485 = vst [vmem:[%s245 + $0x1dc] sm:%s237] %v484
                %v486 = vld [vmem:[%s244 + $0x2e0] sm:%s237]
                %487 = vst [vmem:[%s245 + $0x1e0] sm:%s237] %v486
                %v488 = vld [vmem:[%s244 + $0x2e4] sm:%s237]
                %489 = vst [vmem:[%s245 + $0x1e4] sm:%s237] %v488
                %v490 = vld [vmem:[%s244 + $0x2e8] sm:%s237]
                %491 = vst [vmem:[%s245 + $0x1e8] sm:%s237] %v490
                %v492 = vld [vmem:[%s244 + $0x2ec] sm:%s237]
                %493 = vst [vmem:[%s245 + $0x1ec] sm:%s237] %v492
                %v494 = vld [vmem:[%s244 + $0x2f0] sm:%s237]
                %495 = vst [vmem:[%s245 + $0x1f0] sm:%s237] %v494
                %v496 = vld [vmem:[%s244 + $0x2f4] sm:%s237]
                %497 = vst [vmem:[%s245 + $0x1f4] sm:%s237] %v496
                %v498 = vld [vmem:[%s244 + $0x2f8] sm:%s237]
                %499 = vst [vmem:[%s245 + $0x1f8] sm:%s237] %v498
                %v500 = vld [vmem:[%s244 + $0x2fc] sm:%s237]
                %501 = vst [vmem:[%s245 + $0x1fc] sm:%s237] %v500
              $region57: #{tpu_custom_call.1} parent=51 // loop_footer
                %s243 = sadd.s32 1, %s239
              $region58: #{tpu_custom_call.1} parent=51 // loop_footer_branch
                %238 = sbr.rel target = $region54
              $region59: #{tpu_custom_call.1} parent=51 // loop_exit
                _
            $region52: #{tpu_custom_call.1} parent=43 // pred_fallthru
              _
          $region44: #{tpu_custom_call.1} parent=39 // pred_fallthru
            _
          %778 = vnop
        $region40: #{tpu_custom_call.1} parent=35 // pred_fallthru
          _
      $region36: #{tpu_custom_call.1} parent=5 // pred_fallthru
        _
      %p779 = scmp.le.s32.totalorder 1, %s12
      %p780 = scmp.lt.s32.totalorder %s12, 5
      %p781 = pnand %p779, %p780
      %p782 = pneg %p781
      // Predicated region
      $region78: #{tpu_custom_call.1} parent=5 // pred_check
        _
      $region79: #{tpu_custom_call.1} parent=5 // pred_check_branch
        %784 = sbr.rel (%p781) target = $region81
      $region80: #{tpu_custom_call.1} parent=5 // pred_region
        %s785 = ssub.s32 %s12, 1
        %s786 = sand.u32 %s39, 1
        %s787 = sand.u32 %s39, 1
        %s788 = smul.addr %s787, 512
        %s789 = scalar_lea.vmem [#allocation2], %s788
        // Predicated region
        $region82: #{tpu_custom_call.1} parent=80 // pred_check
          %p790 = pneg %p52
        $region83: #{tpu_custom_call.1} parent=80 // pred_check_branch
          %792 = sbr.rel (%p790) target = $region85
        $region84: #{tpu_custom_call.1} parent=80 // pred_region
          _
        $region85: #{tpu_custom_call.1} parent=80 // pred_fallthru
          _
        %s793 = sand.u32 %s39, 1
        %s794 = sand.u32 %s39, 1
        %s795 = smul.addr %s794, 512
        %s796 = scalar_lea.vmem [#allocation2], %s795
        %p797 = pneg %p52
        %p798 = pneg %p49
        %p799 = pneg %p73
        %p800 = pneg %p70
        %p801 = pneg %p94
        %p802 = pneg %p91
        %p803 = pneg %p115
        %p804 = pneg %p112
        %p805 = pneg %p136
        %p806 = pneg %p133
        %p807 = pneg %p157
        %p808 = pneg %p154
        %p809 = pneg %p183
        %p810 = pneg %p180
        %s811 = smul.u32 2, %s21
        %p812 = scmp.lt.s32.totalorder %s811, 3
        %s813 = scalar_select %p812, %s811, 3
        %s814 = smul.addr %s813, 8
        %s815 = scalar_lea.vmem %s6, %s814
        %s816 = smul.u32 2, %s21
        %s817 = smul.u32 64, %s22
        %s818 = smul.u32 2, %s21
        %p819 = scmp.lt.s32.totalorder %s818, 3
        %s820 = scalar_select %p819, %s818, 3
        %s821 = smul.addr %s820, 8
        %s822 = scalar_lea.vmem %s6, %s821
        %s823 = smul.u32 2, %s21
        %p826 = scmp.eq.s32.totalorder %s22, 0
        // Predicated region
        $region86: #{tpu_custom_call.1} parent=80 // pred_check
          %p827 = pneg %p826
        $region87: #{tpu_custom_call.1} parent=80 // pred_check_branch
          %829 = sbr.rel (%p827) target = $region89
        $region88: #{tpu_custom_call.1} parent=80 // pred_region
          %vm830 = vcmask 1040384
          %vm831 = vsmask.f32 256
          %vm832 = vmand %vm830, %vm831
          %vm833 = vcmask 1041409
          %vm834 = vsmask.f32 1280
          %vm835 = vmand %vm833, %vm834
          %vm836 = vmor %vm835, %vm832
          %vm837 = vcmask 1042434
          %vm838 = vsmask.f32 2304
          %vm839 = vmand %vm837, %vm838
          %vm840 = vmor %vm839, %vm836
          %vm841 = vcmask 1043459
          %vm842 = vsmask.f32 3328
          %vm843 = vmand %vm841, %vm842
          %vm844 = vmor %vm843, %vm840
          %vm845 = vcmask 1044484
          %vm846 = vsmask.f32 4352
          %vm847 = vmand %vm845, %vm846
          %vm848 = vmor %vm847, %vm844
          %vm849 = vcmask 1045509
          %vm850 = vsmask.f32 5376
          %vm851 = vmand %vm849, %vm850
          %vm852 = vmor %vm851, %vm848
          %vm853 = vcmask 1046534
          %vm854 = vsmask.f32 6400
          %vm855 = vmand %vm853, %vm854
          %vm856 = vmor %vm855, %vm852
          %vm857 = vcmask 1047559
          %vm858 = vsmask.f32 7424
          %vm859 = vmand %vm857, %vm858
          %vm860 = vmor %vm859, %vm856
          %v861 = vld [vmem:[%s822] sm:$0xff]
          %v862 = vsel %vm860, 4286644096, %v861
          %863 = vst [vmem:[%s822] sm:$0xff] %v862
          %v864 = vld [vmem:[%s822 + $0x8] sm:$0xff]
          %v865 = vsel %vm860, 4286644096, %v864
          %866 = vst [vmem:[%s822 + $0x8] sm:$0xff] %v865
        $region89: #{tpu_custom_call.1} parent=80 // pred_fallthru
          _
        %v867 = vld [vmem:[%s789] sm:$0xf]
        %v868 = vld [vmem:[%s789 + $0x4] sm:$0xf]
        %v869 = vld [vmem:[%s789 + $0x8] sm:$0xf]
        %v870 = vld [vmem:[%s789 + $0xc] sm:$0xf]
        %v871 = vld [vmem:[%s789 + $0x10] sm:$0xf]
        %v872 = vld [vmem:[%s789 + $0x14] sm:$0xf]
        %v873 = vld [vmem:[%s789 + $0x18] sm:$0xf]
        %v874 = vld [vmem:[%s789 + $0x1c] sm:$0xf]
        %v875 = vld [vmem:[%s789 + $0x20] sm:$0xf]
        %v876 = vld [vmem:[%s789 + $0x24] sm:$0xf]
        %v877 = vld [vmem:[%s789 + $0x28] sm:$0xf]
        %v878 = vld [vmem:[%s789 + $0x2c] sm:$0xf]
        %v879 = vld [vmem:[%s789 + $0x30] sm:$0xf]
        %v880 = vld [vmem:[%s789 + $0x34] sm:$0xf]
        %v881 = vld [vmem:[%s789 + $0x38] sm:$0xf]
        %v882 = vld [vmem:[%s789 + $0x3c] sm:$0xf]
        %v883 = vld [vmem:[%s789 + $0x40] sm:$0xf]
        %v884 = vld [vmem:[%s789 + $0x44] sm:$0xf]
        %v885 = vld [vmem:[%s789 + $0x48] sm:$0xf]
        %v886 = vld [vmem:[%s789 + $0x4c] sm:$0xf]
        %v887 = vld [vmem:[%s789 + $0x50] sm:$0xf]
        %v888 = vld [vmem:[%s789 + $0x54] sm:$0xf]
        %v889 = vld [vmem:[%s789 + $0x58] sm:$0xf]
        %v890 = vld [vmem:[%s789 + $0x5c] sm:$0xf]
        %v891 = vld [vmem:[%s789 + $0x60] sm:$0xf]
        %v892 = vld [vmem:[%s789 + $0x64] sm:$0xf]
        %v893 = vld [vmem:[%s789 + $0x68] sm:$0xf]
        %v894 = vld [vmem:[%s789 + $0x6c] sm:$0xf]
        %v895 = vld [vmem:[%s789 + $0x70] sm:$0xf]
        %v896 = vld [vmem:[%s789 + $0x74] sm:$0xf]
        %v897 = vld [vmem:[%s789 + $0x78] sm:$0xf]
        %v898 = vld [vmem:[%s789 + $0x7c] sm:$0xf]
        %v899 = vld [vmem:[%s789 + $0x80] sm:$0xf]
        %v900 = vld [vmem:[%s789 + $0x84] sm:$0xf]
        %v901 = vld [vmem:[%s789 + $0x88] sm:$0xf]
        %v902 = vld [vmem:[%s789 + $0x8c] sm:$0xf]
        %v903 = vld [vmem:[%s789 + $0x90] sm:$0xf]
        %v904 = vld [vmem:[%s789 + $0x94] sm:$0xf]
        %v905 = vld [vmem:[%s789 + $0x98] sm:$0xf]
        %v906 = vld [vmem:[%s789 + $0x9c] sm:$0xf]
        %v907 = vld [vmem:[%s789 + $0xa0] sm:$0xf]
        %v908 = vld [vmem:[%s789 + $0xa4] sm:$0xf]
        %v909 = vld [vmem:[%s789 + $0xa8] sm:$0xf]
        %v910 = vld [vmem:[%s789 + $0xac] sm:$0xf]
        %v911 = vld [vmem:[%s789 + $0xb0] sm:$0xf]
        %v912 = vld [vmem:[%s789 + $0xb4] sm:$0xf]
        %v913 = vld [vmem:[%s789 + $0xb8] sm:$0xf]
        %v914 = vld [vmem:[%s789 + $0xbc] sm:$0xf]
        %v915 = vld [vmem:[%s789 + $0xc0] sm:$0xf]
        %v916 = vld [vmem:[%s789 + $0xc4] sm:$0xf]
        %v917 = vld [vmem:[%s789 + $0xc8] sm:$0xf]
        %v918 = vld [vmem:[%s789 + $0xcc] sm:$0xf]
        %v919 = vld [vmem:[%s789 + $0xd0] sm:$0xf]
        %v920 = vld [vmem:[%s789 + $0xd4] sm:$0xf]
        %v921 = vld [vmem:[%s789 + $0xd8] sm:$0xf]
        %v922 = vld [vmem:[%s789 + $0xdc] sm:$0xf]
        %v923 = vld [vmem:[%s789 + $0xe0] sm:$0xf]
        %v924 = vld [vmem:[%s789 + $0xe4] sm:$0xf]
        %v925 = vld [vmem:[%s789 + $0xe8] sm:$0xf]
        %v926 = vld [vmem:[%s789 + $0xec] sm:$0xf]
        %v927 = vld [vmem:[%s789 + $0xf0] sm:$0xf]
        %v928 = vld [vmem:[%s789 + $0xf4] sm:$0xf]
        %v929 = vld [vmem:[%s789 + $0xf8] sm:$0xf]
        %v930 = vld [vmem:[%s789 + $0xfc] sm:$0xf]
        %v931 = vld [vmem:[%s789 + $0x100] sm:$0xf]
        %v932 = vld [vmem:[%s789 + $0x104] sm:$0xf]
        %v933 = vld [vmem:[%s789 + $0x108] sm:$0xf]
        %v934 = vld [vmem:[%s789 + $0x10c] sm:$0xf]
        %v935 = vld [vmem:[%s789 + $0x110] sm:$0xf]
        %v936 = vld [vmem:[%s789 + $0x114] sm:$0xf]
        %v937 = vld [vmem:[%s789 + $0x118] sm:$0xf]
        %v938 = vld [vmem:[%s789 + $0x11c] sm:$0xf]
        %v939 = vld [vmem:[%s789 + $0x120] sm:$0xf]
        %v940 = vld [vmem:[%s789 + $0x124] sm:$0xf]
        %v941 = vld [vmem:[%s789 + $0x128] sm:$0xf]
        %v942 = vld [vmem:[%s789 + $0x12c] sm:$0xf]
        %v943 = vld [vmem:[%s789 + $0x130] sm:$0xf]
        %v944 = vld [vmem:[%s789 + $0x134] sm:$0xf]
        %v945 = vld [vmem:[%s789 + $0x138] sm:$0xf]
        %v946 = vld [vmem:[%s789 + $0x13c] sm:$0xf]
        %v947 = vld [vmem:[%s789 + $0x140] sm:$0xf]
        %v948 = vld [vmem:[%s789 + $0x144] sm:$0xf]
        %v949 = vld [vmem:[%s789 + $0x148] sm:$0xf]
        %v950 = vld [vmem:[%s789 + $0x14c] sm:$0xf]
        %v951 = vld [vmem:[%s789 + $0x150] sm:$0xf]
        %v952 = vld [vmem:[%s789 + $0x154] sm:$0xf]
        %v953 = vld [vmem:[%s789 + $0x158] sm:$0xf]
        %v954 = vld [vmem:[%s789 + $0x15c] sm:$0xf]
        %v955 = vld [vmem:[%s789 + $0x160] sm:$0xf]
        %v956 = vld [vmem:[%s789 + $0x164] sm:$0xf]
        %v957 = vld [vmem:[%s789 + $0x168] sm:$0xf]
        %v958 = vld [vmem:[%s789 + $0x16c] sm:$0xf]
        %v959 = vld [vmem:[%s789 + $0x170] sm:$0xf]
        %v960 = vld [vmem:[%s789 + $0x174] sm:$0xf]
        %v961 = vld [vmem:[%s789 + $0x178] sm:$0xf]
        %v962 = vld [vmem:[%s789 + $0x17c] sm:$0xf]
        %v963 = vld [vmem:[%s789 + $0x180] sm:$0xf]
        %v964 = vld [vmem:[%s789 + $0x184] sm:$0xf]
        %v965 = vld [vmem:[%s789 + $0x188] sm:$0xf]
        %v966 = vld [vmem:[%s789 + $0x18c] sm:$0xf]
        %v967 = vld [vmem:[%s789 + $0x190] sm:$0xf]
        %v968 = vld [vmem:[%s789 + $0x194] sm:$0xf]
        %v969 = vld [vmem:[%s789 + $0x198] sm:$0xf]
        %v970 = vld [vmem:[%s789 + $0x19c] sm:$0xf]
        %v971 = vld [vmem:[%s789 + $0x1a0] sm:$0xf]
        %v972 = vld [vmem:[%s789 + $0x1a4] sm:$0xf]
        %v973 = vld [vmem:[%s789 + $0x1a8] sm:$0xf]
        %v974 = vld [vmem:[%s789 + $0x1ac] sm:$0xf]
        %v975 = vld [vmem:[%s789 + $0x1b0] sm:$0xf]
        %v976 = vld [vmem:[%s789 + $0x1b4] sm:$0xf]
        %v977 = vld [vmem:[%s789 + $0x1b8] sm:$0xf]
        %v978 = vld [vmem:[%s789 + $0x1bc] sm:$0xf]
        %v979 = vld [vmem:[%s789 + $0x1c0] sm:$0xf]
        %v980 = vld [vmem:[%s789 + $0x1c4] sm:$0xf]
        %v981 = vld [vmem:[%s789 + $0x1c8] sm:$0xf]
        %v982 = vld [vmem:[%s789 + $0x1cc] sm:$0xf]
        %v983 = vld [vmem:[%s789 + $0x1d0] sm:$0xf]
        %v984 = vld [vmem:[%s789 + $0x1d4] sm:$0xf]
        %v985 = vld [vmem:[%s789 + $0x1d8] sm:$0xf]
        %v986 = vld [vmem:[%s789 + $0x1dc] sm:$0xf]
        %v987 = vld [vmem:[%s789 + $0x1e0] sm:$0xf]
        %v988 = vld [vmem:[%s789 + $0x1e4] sm:$0xf]
        %v989 = vld [vmem:[%s789 + $0x1e8] sm:$0xf]
        %v990 = vld [vmem:[%s789 + $0x1ec] sm:$0xf]
        %v991 = vld [vmem:[%s789 + $0x1f0] sm:$0xf]
        %v992 = vld [vmem:[%s789 + $0x1f4] sm:$0xf]
        %v993 = vld [vmem:[%s789 + $0x1f8] sm:$0xf]
        %v994 = vld [vmem:[%s789 + $0x1fc] sm:$0xf]
        %v995 = vld [vmem:[%s1] sm:$0xf]
        %v996 = vld [vmem:[%s1 + $0x4] sm:$0xf]
        %v997 = vld [vmem:[%s2] sm:$0x1]
        %v999 = vlaneseq
        %v1000 = vshrl.u32 %v999, 7
        %v1001 = vsub.s32 0, %v1000
        %v1002 = vrot.slane %v997, %v1001
        %v1132 = vunpack.c.l.b16 %v867
        %v1133 = vunpack.c.l.b16 %v868
        %v1134 = vunpack.c.l.b16 %v869
        %v1135 = vunpack.c.l.b16 %v870
        %v1136 = vunpack.c.l.b16 %v871
        %v1137 = vunpack.c.l.b16 %v872
        %v1138 = vunpack.c.l.b16 %v873
        %v1139 = vunpack.c.l.b16 %v874
        %v1140 = vunpack.c.l.b16 %v875
        %v1141 = vunpack.c.l.b16 %v876
        %v1142 = vunpack.c.l.b16 %v877
        %v1143 = vunpack.c.l.b16 %v878
        %v1144 = vunpack.c.l.b16 %v879
        %v1145 = vunpack.c.l.b16 %v880
        %v1146 = vunpack.c.l.b16 %v881
        %v1147 = vunpack.c.l.b16 %v882
        %v1148 = vunpack.c.l.b16 %v883
        %v1149 = vunpack.c.l.b16 %v884
        %v1150 = vunpack.c.l.b16 %v885
        %v1151 = vunpack.c.l.b16 %v886
        %v1152 = vunpack.c.l.b16 %v887
        %v1153 = vunpack.c.l.b16 %v888
        %v1154 = vunpack.c.l.b16 %v889
        %v1155 = vunpack.c.l.b16 %v890
        %v1156 = vunpack.c.l.b16 %v891
        %v1157 = vunpack.c.l.b16 %v892
        %v1158 = vunpack.c.l.b16 %v893
        %v1159 = vunpack.c.l.b16 %v894
        %v1160 = vunpack.c.l.b16 %v895
        %v1161 = vunpack.c.l.b16 %v896
        %v1162 = vunpack.c.l.b16 %v897
        %v1163 = vunpack.c.l.b16 %v898
        %v1164 = vunpack.c.l.b16 %v899
        %v1165 = vunpack.c.l.b16 %v900
        %v1166 = vunpack.c.l.b16 %v901
        %v1167 = vunpack.c.l.b16 %v902
        %v1168 = vunpack.c.l.b16 %v903
        %v1169 = vunpack.c.l.b16 %v904
        %v1170 = vunpack.c.l.b16 %v905
        %v1171 = vunpack.c.l.b16 %v906
        %v1172 = vunpack.c.l.b16 %v907
        %v1173 = vunpack.c.l.b16 %v908
        %v1174 = vunpack.c.l.b16 %v909
        %v1175 = vunpack.c.l.b16 %v910
        %v1176 = vunpack.c.l.b16 %v911
        %v1177 = vunpack.c.l.b16 %v912
        %v1178 = vunpack.c.l.b16 %v913
        %v1179 = vunpack.c.l.b16 %v914
        %v1180 = vunpack.c.l.b16 %v915
        %v1181 = vunpack.c.l.b16 %v916
        %v1182 = vunpack.c.l.b16 %v917
        %v1183 = vunpack.c.l.b16 %v918
        %v1184 = vunpack.c.l.b16 %v919
        %v1185 = vunpack.c.l.b16 %v920
        %v1186 = vunpack.c.l.b16 %v921
        %v1187 = vunpack.c.l.b16 %v922
        %v1188 = vunpack.c.l.b16 %v923
        %v1189 = vunpack.c.l.b16 %v924
        %v1190 = vunpack.c.l.b16 %v925
        %v1191 = vunpack.c.l.b16 %v926
        %v1192 = vunpack.c.l.b16 %v927
        %v1193 = vunpack.c.l.b16 %v928
        %v1194 = vunpack.c.l.b16 %v929
        %v1195 = vunpack.c.l.b16 %v930
        %v1196 = vunpack.c.l.b16 %v931
        %v1197 = vunpack.c.l.b16 %v932
        %v1198 = vunpack.c.l.b16 %v933
        %v1199 = vunpack.c.l.b16 %v934
        %v1200 = vunpack.c.l.b16 %v935
        %v1201 = vunpack.c.l.b16 %v936
        %v1202 = vunpack.c.l.b16 %v937
        %v1203 = vunpack.c.l.b16 %v938
        %v1204 = vunpack.c.l.b16 %v939
        %v1205 = vunpack.c.l.b16 %v940
        %v1206 = vunpack.c.l.b16 %v941
        %v1207 = vunpack.c.l.b16 %v942
        %v1208 = vunpack.c.l.b16 %v943
        %v1209 = vunpack.c.l.b16 %v944
        %v1210 = vunpack.c.l.b16 %v945
        %v1211 = vunpack.c.l.b16 %v946
        %v1212 = vunpack.c.l.b16 %v947
        %v1213 = vunpack.c.l.b16 %v948
        %v1214 = vunpack.c.l.b16 %v949
        %v1215 = vunpack.c.l.b16 %v950
        %v1216 = vunpack.c.l.b16 %v951
        %v1217 = vunpack.c.l.b16 %v952
        %v1218 = vunpack.c.l.b16 %v953
        %v1219 = vunpack.c.l.b16 %v954
        %v1220 = vunpack.c.l.b16 %v955
        %v1221 = vunpack.c.l.b16 %v956
        %v1222 = vunpack.c.l.b16 %v957
        %v1223 = vunpack.c.l.b16 %v958
        %v1224 = vunpack.c.l.b16 %v959
        %v1225 = vunpack.c.l.b16 %v960
        %v1226 = vunpack.c.l.b16 %v961
        %v1227 = vunpack.c.l.b16 %v962
        %v1228 = vunpack.c.l.b16 %v963
        %v1229 = vunpack.c.l.b16 %v964
        %v1230 = vunpack.c.l.b16 %v965
        %v1231 = vunpack.c.l.b16 %v966
        %v1232 = vunpack.c.l.b16 %v967
        %v1233 = vunpack.c.l.b16 %v968
        %v1234 = vunpack.c.l.b16 %v969
        %v1235 = vunpack.c.l.b16 %v970
        %v1236 = vunpack.c.l.b16 %v971
        %v1237 = vunpack.c.l.b16 %v972
        %v1238 = vunpack.c.l.b16 %v973
        %v1239 = vunpack.c.l.b16 %v974
        %v1240 = vunpack.c.l.b16 %v975
        %v1241 = vunpack.c.l.b16 %v976
        %v1242 = vunpack.c.l.b16 %v977
        %v1243 = vunpack.c.l.b16 %v978
        %v1244 = vunpack.c.l.b16 %v979
        %v1245 = vunpack.c.l.b16 %v980
        %v1246 = vunpack.c.l.b16 %v981
        %v1247 = vunpack.c.l.b16 %v982
        %v1248 = vunpack.c.l.b16 %v983
        %v1249 = vunpack.c.l.b16 %v984
        %v1250 = vunpack.c.l.b16 %v985
        %v1251 = vunpack.c.l.b16 %v986
        %v1252 = vunpack.c.l.b16 %v987
        %v1253 = vunpack.c.l.b16 %v988
        %v1254 = vunpack.c.l.b16 %v989
        %v1255 = vunpack.c.l.b16 %v990
        %v1256 = vunpack.c.l.b16 %v991
        %v1257 = vunpack.c.l.b16 %v992
        %v1258 = vunpack.c.l.b16 %v993
        %v1259 = vunpack.c.l.b16 %v994
        %v1260 = vpack.c.b16 %v1133, %v1132
        %v1261 = vpack.c.b16 %v1135, %v1134
        %v1262 = vpack.c.b16 %v1137, %v1136
        %v1263 = vpack.c.b16 %v1139, %v1138
        %v1264 = vpack.c.b16 %v1141, %v1140
        %v1265 = vpack.c.b16 %v1143, %v1142
        %v1266 = vpack.c.b16 %v1145, %v1144
        %v1267 = vpack.c.b16 %v1147, %v1146
        %v1268 = vpack.c.b16 %v1149, %v1148
        %v1269 = vpack.c.b16 %v1151, %v1150
        %v1270 = vpack.c.b16 %v1153, %v1152
        %v1271 = vpack.c.b16 %v1155, %v1154
        %v1272 = vpack.c.b16 %v1157, %v1156
        %v1273 = vpack.c.b16 %v1159, %v1158
        %v1274 = vpack.c.b16 %v1161, %v1160
        %v1275 = vpack.c.b16 %v1163, %v1162
        %v1276 = vpack.c.b16 %v1165, %v1164
        %v1277 = vpack.c.b16 %v1167, %v1166
        %v1278 = vpack.c.b16 %v1169, %v1168
        %v1279 = vpack.c.b16 %v1171, %v1170
        %v1280 = vpack.c.b16 %v1173, %v1172
        %v1281 = vpack.c.b16 %v1175, %v1174
        %v1282 = vpack.c.b16 %v1177, %v1176
        %v1283 = vpack.c.b16 %v1179, %v1178
        %v1284 = vpack.c.b16 %v1181, %v1180
        %v1285 = vpack.c.b16 %v1183, %v1182
        %v1286 = vpack.c.b16 %v1185, %v1184
        %v1287 = vpack.c.b16 %v1187, %v1186
        %v1288 = vpack.c.b16 %v1189, %v1188
        %v1289 = vpack.c.b16 %v1191, %v1190
        %v1290 = vpack.c.b16 %v1193, %v1192
        %v1291 = vpack.c.b16 %v1195, %v1194
        %v1292 = vpack.c.b16 %v1197, %v1196
        %v1293 = vpack.c.b16 %v1199, %v1198
        %v1294 = vpack.c.b16 %v1201, %v1200
        %v1295 = vpack.c.b16 %v1203, %v1202
        %v1296 = vpack.c.b16 %v1205, %v1204
        %v1297 = vpack.c.b16 %v1207, %v1206
        %v1298 = vpack.c.b16 %v1209, %v1208
        %v1299 = vpack.c.b16 %v1211, %v1210
        %v1300 = vpack.c.b16 %v1213, %v1212
        %v1301 = vpack.c.b16 %v1215, %v1214
        %v1302 = vpack.c.b16 %v1217, %v1216
        %v1303 = vpack.c.b16 %v1219, %v1218
        %v1304 = vpack.c.b16 %v1221, %v1220
        %v1305 = vpack.c.b16 %v1223, %v1222
        %v1306 = vpack.c.b16 %v1225, %v1224
        %v1307 = vpack.c.b16 %v1227, %v1226
        %v1308 = vpack.c.b16 %v1229, %v1228
        %v1309 = vpack.c.b16 %v1231, %v1230
        %v1310 = vpack.c.b16 %v1233, %v1232
        %v1311 = vpack.c.b16 %v1235, %v1234
        %v1312 = vpack.c.b16 %v1237, %v1236
        %v1313 = vpack.c.b16 %v1239, %v1238
        %v1314 = vpack.c.b16 %v1241, %v1240
        %v1315 = vpack.c.b16 %v1243, %v1242
        %v1316 = vpack.c.b16 %v1245, %v1244
        %v1317 = vpack.c.b16 %v1247, %v1246
        %v1318 = vpack.c.b16 %v1249, %v1248
        %v1319 = vpack.c.b16 %v1251, %v1250
        %v1320 = vpack.c.b16 %v1253, %v1252
        %v1321 = vpack.c.b16 %v1255, %v1254
        %v1322 = vpack.c.b16 %v1257, %v1256
        %v1323 = vpack.c.b16 %v1259, %v1258
        %v1326 = vunpack.c.l.b16 %v995
        %v1327 = vunpack.c.l.b16 %v996
        %v1328 = vpack.c.b16 %v1327, %v1326
        %vm1330 = vcmask 130048
        %v1332 = vsel %vm1330, %v1260, 0
        %v1335 = vsel %vm1330, %v1261, 0
        %v1338 = vsel %vm1330, %v1262, 0
        %v1341 = vsel %vm1330, %v1263, 0
        %v1344 = vsel %vm1330, %v1264, 0
        %v1347 = vsel %vm1330, %v1265, 0
        %v1350 = vsel %vm1330, %v1266, 0
        %v1353 = vsel %vm1330, %v1267, 0
        %v1356 = vsel %vm1330, %v1268, 0
        %v1359 = vsel %vm1330, %v1269, 0
        %v1362 = vsel %vm1330, %v1270, 0
        %v1365 = vsel %vm1330, %v1271, 0
        %v1368 = vsel %vm1330, %v1272, 0
        %v1371 = vsel %vm1330, %v1273, 0
        %v1374 = vsel %vm1330, %v1274, 0
        %v1377 = vsel %vm1330, %v1275, 0
        %v1380 = vsel %vm1330, %v1276, 0
        %v1383 = vsel %vm1330, %v1277, 0
        %v1386 = vsel %vm1330, %v1278, 0
        %v1389 = vsel %vm1330, %v1279, 0
        %v1392 = vsel %vm1330, %v1280, 0
        %v1395 = vsel %vm1330, %v1281, 0
        %v1398 = vsel %vm1330, %v1282, 0
        %v1401 = vsel %vm1330, %v1283, 0
        %v1404 = vsel %vm1330, %v1284, 0
        %v1407 = vsel %vm1330, %v1285, 0
        %v1410 = vsel %vm1330, %v1286, 0
        %v1413 = vsel %vm1330, %v1287, 0
        %v1416 = vsel %vm1330, %v1288, 0
        %v1419 = vsel %vm1330, %v1289, 0
        %v1422 = vsel %vm1330, %v1290, 0
        %v1425 = vsel %vm1330, %v1291, 0
        %v1428 = vsel %vm1330, %v1292, 0
        %v1431 = vsel %vm1330, %v1293, 0
        %v1434 = vsel %vm1330, %v1294, 0
        %v1437 = vsel %vm1330, %v1295, 0
        %v1440 = vsel %vm1330, %v1296, 0
        %v1443 = vsel %vm1330, %v1297, 0
        %v1446 = vsel %vm1330, %v1298, 0
        %v1449 = vsel %vm1330, %v1299, 0
        %v1452 = vsel %vm1330, %v1300, 0
        %v1455 = vsel %vm1330, %v1301, 0
        %v1458 = vsel %vm1330, %v1302, 0
        %v1461 = vsel %vm1330, %v1303, 0
        %v1464 = vsel %vm1330, %v1304, 0
        %v1467 = vsel %vm1330, %v1305, 0
        %v1470 = vsel %vm1330, %v1306, 0
        %v1473 = vsel %vm1330, %v1307, 0
        %v1476 = vsel %vm1330, %v1308, 0
        %v1479 = vsel %vm1330, %v1309, 0
        %v1482 = vsel %vm1330, %v1310, 0
        %v1485 = vsel %vm1330, %v1311, 0
        %v1488 = vsel %vm1330, %v1312, 0
        %v1491 = vsel %vm1330, %v1313, 0
        %v1494 = vsel %vm1330, %v1314, 0
        %v1497 = vsel %vm1330, %v1315, 0
        %v1500 = vsel %vm1330, %v1316, 0
        %v1503 = vsel %vm1330, %v1317, 0
        %v1506 = vsel %vm1330, %v1318, 0
        %v1509 = vsel %vm1330, %v1319, 0
        %v1512 = vsel %vm1330, %v1320, 0
        %v1515 = vsel %vm1330, %v1321, 0
        %v1518 = vsel %vm1330, %v1322, 0
        %v1521 = vsel %vm1330, %v1323, 0
        %1523 = vmatprep.subr.bf16.mxu0 0
        %1524 = vmatpush1.bf16.msra.mxu0 0
        %1525 = vmatprep.subr.bf16.mxu0 0
        %1526 = vmatpush1.bf16.msra.mxu0 0
        %1527 = vmatprep.subr.bf16.mxu0 0
        %1528 = vmatpush1.bf16.msra.mxu0 0
        %1529 = vmatprep.subr.bf16.mxu0 0
        %1530 = vmatpush1.bf16.msra.mxu0 0
        %1531 = vmatprep.subr.bf16.mxu0 0
        %1532 = vmatpush1.bf16.msra.mxu0 0
        %1533 = vmatprep.subr.bf16.mxu0 0
        %1534 = vmatpush1.bf16.msra.mxu0 0
        %1535 = vmatprep.subr.bf16.mxu0 0
        %1536 = vmatpush1.bf16.msra.mxu0 0
        %1537 = vmatprep.subr.bf16.mxu0 0
        %1538 = vmatpush1.bf16.msra.mxu0 %v1328
        %1539 = vmatprep.subr.bf16.mxu0 0
        %1540 = vmatpush2.bf16.msra.mxu0 0
        %1541 = vmatprep.subr.bf16.mxu0 0
        %1542 = vmatpush2.bf16.msra.mxu0 0
        %1543 = vmatprep.subr.bf16.mxu0 0
        %1544 = vmatpush2.bf16.msra.mxu0 0
        %1545 = vmatprep.subr.bf16.mxu0 0
        %1546 = vmatpush2.bf16.msra.mxu0 0
        %1547 = vmatprep.subr.bf16.mxu0 0
        %1548 = vmatpush2.bf16.msra.mxu0 0
        %1549 = vmatprep.subr.bf16.mxu0 0
        %1550 = vmatpush2.bf16.msra.mxu0 0
        %1551 = vmatprep.subr.bf16.mxu0 0
        %1552 = vmatpush2.bf16.msra.mxu0 0
        %1553 = vmatprep.subr.bf16.mxu0 0
        %1554 = vmatpush2.bf16.msra.mxu0 0
        %1555 = vmatprep.mubr.bf16.mxu0 0
        %1556 = vmatmul.mubr.bf16.gmra.mxu0 %v1332
        %v1557 = vpop.f32.mrf.mxu0
        %v1558 = vadd.f32 %v1002, %v1557
        %v1559 = vpop.f32.mrf.mxu0
        %v1560 = vpop.f32.mrf.mxu0
        %v1561 = vadd.f32 %v1002, %v1560
        %v1562 = vpop.f32.mrf.mxu0
        %1563 = vmatprep.mubr.bf16.mxu0 0
        %1564 = vmatmul.mubr.bf16.gmra.mxu0 %v1335
        %v1565 = vpop.f32.mrf.mxu0
        %v1566 = vadd.f32 %v1002, %v1565
        %v1567 = vpop.f32.mrf.mxu0
        %v1568 = vpop.f32.mrf.mxu0
        %v1569 = vadd.f32 %v1002, %v1568
        %v1570 = vpop.f32.mrf.mxu0
        %1571 = vmatprep.mubr.bf16.mxu0 0
        %1572 = vmatmul.mubr.bf16.gmra.mxu0 %v1338
        %v1573 = vpop.f32.mrf.mxu0
        %v1574 = vadd.f32 %v1002, %v1573
        %v1575 = vpop.f32.mrf.mxu0
        %v1576 = vpop.f32.mrf.mxu0
        %v1577 = vadd.f32 %v1002, %v1576
        %v1578 = vpop.f32.mrf.mxu0
        %1579 = vmatprep.mubr.bf16.mxu0 0
        %1580 = vmatmul.mubr.bf16.gmra.mxu0 %v1341
        %v1581 = vpop.f32.mrf.mxu0
        %v1582 = vadd.f32 %v1002, %v1581
        %v1583 = vpop.f32.mrf.mxu0
        %v1584 = vpop.f32.mrf.mxu0
        %v1585 = vadd.f32 %v1002, %v1584
        %v1586 = vpop.f32.mrf.mxu0
        %1587 = vmatprep.mubr.bf16.mxu0 0
        %1588 = vmatmul.mubr.bf16.gmra.mxu0 %v1344
        %v1589 = vpop.f32.mrf.mxu0
        %v1590 = vadd.f32 %v1002, %v1589
        %v1591 = vpop.f32.mrf.mxu0
        %v1592 = vpop.f32.mrf.mxu0
        %v1593 = vadd.f32 %v1002, %v1592
        %v1594 = vpop.f32.mrf.mxu0
        %1595 = vmatprep.mubr.bf16.mxu0 0
        %1596 = vmatmul.mubr.bf16.gmra.mxu0 %v1347
        %v1597 = vpop.f32.mrf.mxu0
        %v1598 = vadd.f32 %v1002, %v1597
        %v1599 = vpop.f32.mrf.mxu0
        %v1600 = vpop.f32.mrf.mxu0
        %v1601 = vadd.f32 %v1002, %v1600
        %v1602 = vpop.f32.mrf.mxu0
        %1603 = vmatprep.mubr.bf16.mxu0 0
        %1604 = vmatmul.mubr.bf16.gmra.mxu0 %v1350
        %v1605 = vpop.f32.mrf.mxu0
        %v1606 = vadd.f32 %v1002, %v1605
        %v1607 = vpop.f32.mrf.mxu0
        %v1608 = vpop.f32.mrf.mxu0
        %v1609 = vadd.f32 %v1002, %v1608
        %v1610 = vpop.f32.mrf.mxu0
        %1611 = vmatprep.mubr.bf16.mxu0 0
        %1612 = vmatmul.mubr.bf16.gmra.mxu0 %v1353
        %v1613 = vpop.f32.mrf.mxu0
        %v1614 = vadd.f32 %v1002, %v1613
        %v1615 = vpop.f32.mrf.mxu0
        %v1616 = vpop.f32.mrf.mxu0
        %v1617 = vadd.f32 %v1002, %v1616
        %v1618 = vpop.f32.mrf.mxu0
        %1619 = vmatprep.mubr.bf16.mxu0 0
        %1620 = vmatmul.mubr.bf16.gmra.mxu0 %v1356
        %v1621 = vpop.f32.mrf.mxu0
        %v1622 = vadd.f32 %v1002, %v1621
        %v1623 = vpop.f32.mrf.mxu0
        %v1624 = vpop.f32.mrf.mxu0
        %v1625 = vadd.f32 %v1002, %v1624
        %v1626 = vpop.f32.mrf.mxu0
        %1627 = vmatprep.mubr.bf16.mxu0 0
        %1628 = vmatmul.mubr.bf16.gmra.mxu0 %v1359
        %v1629 = vpop.f32.mrf.mxu0
        %v1630 = vadd.f32 %v1002, %v1629
        %v1631 = vpop.f32.mrf.mxu0
        %v1632 = vpop.f32.mrf.mxu0
        %v1633 = vadd.f32 %v1002, %v1632
        %v1634 = vpop.f32.mrf.mxu0
        %1635 = vmatprep.mubr.bf16.mxu0 0
        %1636 = vmatmul.mubr.bf16.gmra.mxu0 %v1362
        %v1637 = vpop.f32.mrf.mxu0
        %v1638 = vadd.f32 %v1002, %v1637
        %v1639 = vpop.f32.mrf.mxu0
        %v1640 = vpop.f32.mrf.mxu0
        %v1641 = vadd.f32 %v1002, %v1640
        %v1642 = vpop.f32.mrf.mxu0
        %1643 = vmatprep.mubr.bf16.mxu0 0
        %1644 = vmatmul.mubr.bf16.gmra.mxu0 %v1365
        %v1645 = vpop.f32.mrf.mxu0
        %v1646 = vadd.f32 %v1002, %v1645
        %v1647 = vpop.f32.mrf.mxu0
        %v1648 = vpop.f32.mrf.mxu0
        %v1649 = vadd.f32 %v1002, %v1648
        %v1650 = vpop.f32.mrf.mxu0
        %1651 = vmatprep.mubr.bf16.mxu0 0
        %1652 = vmatmul.mubr.bf16.gmra.mxu0 %v1368
        %v1653 = vpop.f32.mrf.mxu0
        %v1654 = vadd.f32 %v1002, %v1653
        %v1655 = vpop.f32.mrf.mxu0
        %v1656 = vpop.f32.mrf.mxu0
        %v1657 = vadd.f32 %v1002, %v1656
        %v1658 = vpop.f32.mrf.mxu0
        %1659 = vmatprep.mubr.bf16.mxu0 0
        %1660 = vmatmul.mubr.bf16.gmra.mxu0 %v1371
        %v1661 = vpop.f32.mrf.mxu0
        %v1662 = vadd.f32 %v1002, %v1661
        %v1663 = vpop.f32.mrf.mxu0
        %v1664 = vpop.f32.mrf.mxu0
        %v1665 = vadd.f32 %v1002, %v1664
        %v1666 = vpop.f32.mrf.mxu0
        %1667 = vmatprep.mubr.bf16.mxu0 0
        %1668 = vmatmul.mubr.bf16.gmra.mxu0 %v1374
        %v1669 = vpop.f32.mrf.mxu0
        %v1670 = vadd.f32 %v1002, %v1669
        %v1671 = vpop.f32.mrf.mxu0
        %v1672 = vpop.f32.mrf.mxu0
        %v1673 = vadd.f32 %v1002, %v1672
        %v1674 = vpop.f32.mrf.mxu0
        %1675 = vmatprep.mubr.bf16.mxu0 0
        %1676 = vmatmul.mubr.bf16.gmra.mxu0 %v1377
        %v1677 = vpop.f32.mrf.mxu0
        %v1678 = vadd.f32 %v1002, %v1677
        %v1679 = vpop.f32.mrf.mxu0
        %v1680 = vpop.f32.mrf.mxu0
        %v1681 = vadd.f32 %v1002, %v1680
        %v1682 = vpop.f32.mrf.mxu0
        %1683 = vmatprep.mubr.bf16.mxu0 0
        %1684 = vmatmul.mubr.bf16.gmra.mxu0 %v1380
        %v1685 = vpop.f32.mrf.mxu0
        %v1686 = vadd.f32 %v1002, %v1685
        %v1687 = vpop.f32.mrf.mxu0
        %v1688 = vpop.f32.mrf.mxu0
        %v1689 = vadd.f32 %v1002, %v1688
        %v1690 = vpop.f32.mrf.mxu0
        %1691 = vmatprep.mubr.bf16.mxu0 0
        %1692 = vmatmul.mubr.bf16.gmra.mxu0 %v1383
        %v1693 = vpop.f32.mrf.mxu0
        %v1694 = vadd.f32 %v1002, %v1693
        %v1695 = vpop.f32.mrf.mxu0
        %v1696 = vpop.f32.mrf.mxu0
        %v1697 = vadd.f32 %v1002, %v1696
        %v1698 = vpop.f32.mrf.mxu0
        %1699 = vmatprep.mubr.bf16.mxu0 0
        %1700 = vmatmul.mubr.bf16.gmra.mxu0 %v1386
        %v1701 = vpop.f32.mrf.mxu0
        %v1702 = vadd.f32 %v1002, %v1701
        %v1703 = vpop.f32.mrf.mxu0
        %v1704 = vpop.f32.mrf.mxu0
        %v1705 = vadd.f32 %v1002, %v1704
        %v1706 = vpop.f32.mrf.mxu0
        %1707 = vmatprep.mubr.bf16.mxu0 0
        %1708 = vmatmul.mubr.bf16.gmra.mxu0 %v1389
        %v1709 = vpop.f32.mrf.mxu0
        %v1710 = vadd.f32 %v1002, %v1709
        %v1711 = vpop.f32.mrf.mxu0
        %v1712 = vpop.f32.mrf.mxu0
        %v1713 = vadd.f32 %v1002, %v1712
        %v1714 = vpop.f32.mrf.mxu0
        %1715 = vmatprep.mubr.bf16.mxu0 0
        %1716 = vmatmul.mubr.bf16.gmra.mxu0 %v1392
        %v1717 = vpop.f32.mrf.mxu0
        %v1718 = vadd.f32 %v1002, %v1717
        %v1719 = vpop.f32.mrf.mxu0
        %v1720 = vpop.f32.mrf.mxu0
        %v1721 = vadd.f32 %v1002, %v1720
        %v1722 = vpop.f32.mrf.mxu0
        %1723 = vmatprep.mubr.bf16.mxu0 0
        %1724 = vmatmul.mubr.bf16.gmra.mxu0 %v1395
        %v1725 = vpop.f32.mrf.mxu0
        %v1726 = vadd.f32 %v1002, %v1725
        %v1727 = vpop.f32.mrf.mxu0
        %v1728 = vpop.f32.mrf.mxu0
        %v1729 = vadd.f32 %v1002, %v1728
        %v1730 = vpop.f32.mrf.mxu0
        %1731 = vmatprep.mubr.bf16.mxu0 0
        %1732 = vmatmul.mubr.bf16.gmra.mxu0 %v1398
        %v1733 = vpop.f32.mrf.mxu0
        %v1734 = vadd.f32 %v1002, %v1733
        %v1735 = vpop.f32.mrf.mxu0
        %v1736 = vpop.f32.mrf.mxu0
        %v1737 = vadd.f32 %v1002, %v1736
        %v1738 = vpop.f32.mrf.mxu0
        %1739 = vmatprep.mubr.bf16.mxu0 0
        %1740 = vmatmul.mubr.bf16.gmra.mxu0 %v1401
        %v1741 = vpop.f32.mrf.mxu0
        %v1742 = vadd.f32 %v1002, %v1741
        %v1743 = vpop.f32.mrf.mxu0
        %v1744 = vpop.f32.mrf.mxu0
        %v1745 = vadd.f32 %v1002, %v1744
        %v1746 = vpop.f32.mrf.mxu0
        %1747 = vmatprep.mubr.bf16.mxu0 0
        %1748 = vmatmul.mubr.bf16.gmra.mxu0 %v1404
        %v1749 = vpop.f32.mrf.mxu0
        %v1750 = vadd.f32 %v1002, %v1749
        %v1751 = vpop.f32.mrf.mxu0
        %v1752 = vpop.f32.mrf.mxu0
        %v1753 = vadd.f32 %v1002, %v1752
        %v1754 = vpop.f32.mrf.mxu0
        %1755 = vmatprep.mubr.bf16.mxu0 0
        %1756 = vmatmul.mubr.bf16.gmra.mxu0 %v1407
        %v1757 = vpop.f32.mrf.mxu0
        %v1758 = vadd.f32 %v1002, %v1757
        %v1759 = vpop.f32.mrf.mxu0
        %v1760 = vpop.f32.mrf.mxu0
        %v1761 = vadd.f32 %v1002, %v1760
        %v1762 = vpop.f32.mrf.mxu0
        %1763 = vmatprep.mubr.bf16.mxu0 0
        %1764 = vmatmul.mubr.bf16.gmra.mxu0 %v1410
        %v1765 = vpop.f32.mrf.mxu0
        %v1766 = vadd.f32 %v1002, %v1765
        %v1767 = vpop.f32.mrf.mxu0
        %v1768 = vpop.f32.mrf.mxu0
        %v1769 = vadd.f32 %v1002, %v1768
        %v1770 = vpop.f32.mrf.mxu0
        %1771 = vmatprep.mubr.bf16.mxu0 0
        %1772 = vmatmul.mubr.bf16.gmra.mxu0 %v1413
        %v1773 = vpop.f32.mrf.mxu0
        %v1774 = vadd.f32 %v1002, %v1773
        %v1775 = vpop.f32.mrf.mxu0
        %v1776 = vpop.f32.mrf.mxu0
        %v1777 = vadd.f32 %v1002, %v1776
        %v1778 = vpop.f32.mrf.mxu0
        %1779 = vmatprep.mubr.bf16.mxu0 0
        %1780 = vmatmul.mubr.bf16.gmra.mxu0 %v1416
        %v1781 = vpop.f32.mrf.mxu0
        %v1782 = vadd.f32 %v1002, %v1781
        %v1783 = vpop.f32.mrf.mxu0
        %v1784 = vpop.f32.mrf.mxu0
        %v1785 = vadd.f32 %v1002, %v1784
        %v1786 = vpop.f32.mrf.mxu0
        %1787 = vmatprep.mubr.bf16.mxu0 0
        %1788 = vmatmul.mubr.bf16.gmra.mxu0 %v1419
        %v1789 = vpop.f32.mrf.mxu0
        %v1790 = vadd.f32 %v1002, %v1789
        %v1791 = vpop.f32.mrf.mxu0
        %v1792 = vpop.f32.mrf.mxu0
        %v1793 = vadd.f32 %v1002, %v1792
        %v1794 = vpop.f32.mrf.mxu0
        %1795 = vmatprep.mubr.bf16.mxu0 0
        %1796 = vmatmul.mubr.bf16.gmra.mxu0 %v1422
        %v1797 = vpop.f32.mrf.mxu0
        %v1798 = vadd.f32 %v1002, %v1797
        %v1799 = vpop.f32.mrf.mxu0
        %v1800 = vpop.f32.mrf.mxu0
        %v1801 = vadd.f32 %v1002, %v1800
        %v1802 = vpop.f32.mrf.mxu0
        %1803 = vmatprep.mubr.bf16.mxu0 0
        %1804 = vmatmul.mubr.bf16.gmra.mxu0 %v1425
        %v1805 = vpop.f32.mrf.mxu0
        %v1806 = vadd.f32 %v1002, %v1805
        %v1807 = vpop.f32.mrf.mxu0
        %v1808 = vpop.f32.mrf.mxu0
        %v1809 = vadd.f32 %v1002, %v1808
        %v1810 = vpop.f32.mrf.mxu0
        %1811 = vmatprep.mubr.bf16.mxu0 0
        %1812 = vmatmul.mubr.bf16.gmra.mxu0 %v1428
        %v1813 = vpop.f32.mrf.mxu0
        %v1814 = vadd.f32 %v1002, %v1813
        %v1815 = vpop.f32.mrf.mxu0
        %v1816 = vpop.f32.mrf.mxu0
        %v1817 = vadd.f32 %v1002, %v1816
        %v1818 = vpop.f32.mrf.mxu0
        %1819 = vmatprep.mubr.bf16.mxu0 0
        %1820 = vmatmul.mubr.bf16.gmra.mxu0 %v1431
        %v1821 = vpop.f32.mrf.mxu0
        %v1822 = vadd.f32 %v1002, %v1821
        %v1823 = vpop.f32.mrf.mxu0
        %v1824 = vpop.f32.mrf.mxu0
        %v1825 = vadd.f32 %v1002, %v1824
        %v1826 = vpop.f32.mrf.mxu0
        %1827 = vmatprep.mubr.bf16.mxu0 0
        %1828 = vmatmul.mubr.bf16.gmra.mxu0 %v1434
        %v1829 = vpop.f32.mrf.mxu0
        %v1830 = vadd.f32 %v1002, %v1829
        %v1831 = vpop.f32.mrf.mxu0
        %v1832 = vpop.f32.mrf.mxu0
        %v1833 = vadd.f32 %v1002, %v1832
        %v1834 = vpop.f32.mrf.mxu0
        %1835 = vmatprep.mubr.bf16.mxu0 0
        %1836 = vmatmul.mubr.bf16.gmra.mxu0 %v1437
        %v1837 = vpop.f32.mrf.mxu0
        %v1838 = vadd.f32 %v1002, %v1837
        %v1839 = vpop.f32.mrf.mxu0
        %v1840 = vpop.f32.mrf.mxu0
        %v1841 = vadd.f32 %v1002, %v1840
        %v1842 = vpop.f32.mrf.mxu0
        %1843 = vmatprep.mubr.bf16.mxu0 0
        %1844 = vmatmul.mubr.bf16.gmra.mxu0 %v1440
        %v1845 = vpop.f32.mrf.mxu0
        %v1846 = vadd.f32 %v1002, %v1845
        %v1847 = vpop.f32.mrf.mxu0
        %v1848 = vpop.f32.mrf.mxu0
        %v1849 = vadd.f32 %v1002, %v1848
        %v1850 = vpop.f32.mrf.mxu0
        %1851 = vmatprep.mubr.bf16.mxu0 0
        %1852 = vmatmul.mubr.bf16.gmra.mxu0 %v1443
        %v1853 = vpop.f32.mrf.mxu0
        %v1854 = vadd.f32 %v1002, %v1853
        %v1855 = vpop.f32.mrf.mxu0
        %v1856 = vpop.f32.mrf.mxu0
        %v1857 = vadd.f32 %v1002, %v1856
        %v1858 = vpop.f32.mrf.mxu0
        %1859 = vmatprep.mubr.bf16.mxu0 0
        %1860 = vmatmul.mubr.bf16.gmra.mxu0 %v1446
        %v1861 = vpop.f32.mrf.mxu0
        %v1862 = vadd.f32 %v1002, %v1861
        %v1863 = vpop.f32.mrf.mxu0
        %v1864 = vpop.f32.mrf.mxu0
        %v1865 = vadd.f32 %v1002, %v1864
        %v1866 = vpop.f32.mrf.mxu0
        %1867 = vmatprep.mubr.bf16.mxu0 0
        %1868 = vmatmul.mubr.bf16.gmra.mxu0 %v1449
        %v1869 = vpop.f32.mrf.mxu0
        %v1870 = vadd.f32 %v1002, %v1869
        %v1871 = vpop.f32.mrf.mxu0
        %v1872 = vpop.f32.mrf.mxu0
        %v1873 = vadd.f32 %v1002, %v1872
        %v1874 = vpop.f32.mrf.mxu0
        %1875 = vmatprep.mubr.bf16.mxu0 0
        %1876 = vmatmul.mubr.bf16.gmra.mxu0 %v1452
        %v1877 = vpop.f32.mrf.mxu0
        %v1878 = vadd.f32 %v1002, %v1877
        %v1879 = vpop.f32.mrf.mxu0
        %v1880 = vpop.f32.mrf.mxu0
        %v1881 = vadd.f32 %v1002, %v1880
        %v1882 = vpop.f32.mrf.mxu0
        %1883 = vmatprep.mubr.bf16.mxu0 0
        %1884 = vmatmul.mubr.bf16.gmra.mxu0 %v1455
        %v1885 = vpop.f32.mrf.mxu0
        %v1886 = vadd.f32 %v1002, %v1885
        %v1887 = vpop.f32.mrf.mxu0
        %v1888 = vpop.f32.mrf.mxu0
        %v1889 = vadd.f32 %v1002, %v1888
        %v1890 = vpop.f32.mrf.mxu0
        %1891 = vmatprep.mubr.bf16.mxu0 0
        %1892 = vmatmul.mubr.bf16.gmra.mxu0 %v1458
        %v1893 = vpop.f32.mrf.mxu0
        %v1894 = vadd.f32 %v1002, %v1893
        %v1895 = vpop.f32.mrf.mxu0
        %v1896 = vpop.f32.mrf.mxu0
        %v1897 = vadd.f32 %v1002, %v1896
        %v1898 = vpop.f32.mrf.mxu0
        %1899 = vmatprep.mubr.bf16.mxu0 0
        %1900 = vmatmul.mubr.bf16.gmra.mxu0 %v1461
        %v1901 = vpop.f32.mrf.mxu0
        %v1902 = vadd.f32 %v1002, %v1901
        %v1903 = vpop.f32.mrf.mxu0
        %v1904 = vpop.f32.mrf.mxu0
        %v1905 = vadd.f32 %v1002, %v1904
        %v1906 = vpop.f32.mrf.mxu0
        %1907 = vmatprep.mubr.bf16.mxu0 0
        %1908 = vmatmul.mubr.bf16.gmra.mxu0 %v1464
        %v1909 = vpop.f32.mrf.mxu0
        %v1910 = vadd.f32 %v1002, %v1909
        %v1911 = vpop.f32.mrf.mxu0
        %v1912 = vpop.f32.mrf.mxu0
        %v1913 = vadd.f32 %v1002, %v1912
        %v1914 = vpop.f32.mrf.mxu0
        %1915 = vmatprep.mubr.bf16.mxu0 0
        %1916 = vmatmul.mubr.bf16.gmra.mxu0 %v1467
        %v1917 = vpop.f32.mrf.mxu0
        %v1918 = vadd.f32 %v1002, %v1917
        %v1919 = vpop.f32.mrf.mxu0
        %v1920 = vpop.f32.mrf.mxu0
        %v1921 = vadd.f32 %v1002, %v1920
        %v1922 = vpop.f32.mrf.mxu0
        %1923 = vmatprep.mubr.bf16.mxu0 0
        %1924 = vmatmul.mubr.bf16.gmra.mxu0 %v1470
        %v1925 = vpop.f32.mrf.mxu0
        %v1926 = vadd.f32 %v1002, %v1925
        %v1927 = vpop.f32.mrf.mxu0
        %v1928 = vpop.f32.mrf.mxu0
        %v1929 = vadd.f32 %v1002, %v1928
        %v1930 = vpop.f32.mrf.mxu0
        %1931 = vmatprep.mubr.bf16.mxu0 0
        %1932 = vmatmul.mubr.bf16.gmra.mxu0 %v1473
        %v1933 = vpop.f32.mrf.mxu0
        %v1934 = vadd.f32 %v1002, %v1933
        %v1935 = vpop.f32.mrf.mxu0
        %v1936 = vpop.f32.mrf.mxu0
        %v1937 = vadd.f32 %v1002, %v1936
        %v1938 = vpop.f32.mrf.mxu0
        %1939 = vmatprep.mubr.bf16.mxu0 0
        %1940 = vmatmul.mubr.bf16.gmra.mxu0 %v1476
        %v1941 = vpop.f32.mrf.mxu0
        %v1942 = vadd.f32 %v1002, %v1941
        %v1943 = vpop.f32.mrf.mxu0
        %v1944 = vpop.f32.mrf.mxu0
        %v1945 = vadd.f32 %v1002, %v1944
        %v1946 = vpop.f32.mrf.mxu0
        %1947 = vmatprep.mubr.bf16.mxu0 0
        %1948 = vmatmul.mubr.bf16.gmra.mxu0 %v1479
        %v1949 = vpop.f32.mrf.mxu0
        %v1950 = vadd.f32 %v1002, %v1949
        %v1951 = vpop.f32.mrf.mxu0
        %v1952 = vpop.f32.mrf.mxu0
        %v1953 = vadd.f32 %v1002, %v1952
        %v1954 = vpop.f32.mrf.mxu0
        %1955 = vmatprep.mubr.bf16.mxu0 0
        %1956 = vmatmul.mubr.bf16.gmra.mxu0 %v1482
        %v1957 = vpop.f32.mrf.mxu0
        %v1958 = vadd.f32 %v1002, %v1957
        %v1959 = vpop.f32.mrf.mxu0
        %v1960 = vpop.f32.mrf.mxu0
        %v1961 = vadd.f32 %v1002, %v1960
        %v1962 = vpop.f32.mrf.mxu0
        %1963 = vmatprep.mubr.bf16.mxu0 0
        %1964 = vmatmul.mubr.bf16.gmra.mxu0 %v1485
        %v1965 = vpop.f32.mrf.mxu0
        %v1966 = vadd.f32 %v1002, %v1965
        %v1967 = vpop.f32.mrf.mxu0
        %v1968 = vpop.f32.mrf.mxu0
        %v1969 = vadd.f32 %v1002, %v1968
        %v1970 = vpop.f32.mrf.mxu0
        %1971 = vmatprep.mubr.bf16.mxu0 0
        %1972 = vmatmul.mubr.bf16.gmra.mxu0 %v1488
        %v1973 = vpop.f32.mrf.mxu0
        %v1974 = vadd.f32 %v1002, %v1973
        %v1975 = vpop.f32.mrf.mxu0
        %v1976 = vpop.f32.mrf.mxu0
        %v1977 = vadd.f32 %v1002, %v1976
        %v1978 = vpop.f32.mrf.mxu0
        %1979 = vmatprep.mubr.bf16.mxu0 0
        %1980 = vmatmul.mubr.bf16.gmra.mxu0 %v1491
        %v1981 = vpop.f32.mrf.mxu0
        %v1982 = vadd.f32 %v1002, %v1981
        %v1983 = vpop.f32.mrf.mxu0
        %v1984 = vpop.f32.mrf.mxu0
        %v1985 = vadd.f32 %v1002, %v1984
        %v1986 = vpop.f32.mrf.mxu0
        %1987 = vmatprep.mubr.bf16.mxu0 0
        %1988 = vmatmul.mubr.bf16.gmra.mxu0 %v1494
        %v1989 = vpop.f32.mrf.mxu0
        %v1990 = vadd.f32 %v1002, %v1989
        %v1991 = vpop.f32.mrf.mxu0
        %v1992 = vpop.f32.mrf.mxu0
        %v1993 = vadd.f32 %v1002, %v1992
        %v1994 = vpop.f32.mrf.mxu0
        %1995 = vmatprep.mubr.bf16.mxu0 0
        %1996 = vmatmul.mubr.bf16.gmra.mxu0 %v1497
        %v1997 = vpop.f32.mrf.mxu0
        %v1998 = vadd.f32 %v1002, %v1997
        %v1999 = vpop.f32.mrf.mxu0
        %v2000 = vpop.f32.mrf.mxu0
        %v2001 = vadd.f32 %v1002, %v2000
        %v2002 = vpop.f32.mrf.mxu0
        %2003 = vmatprep.mubr.bf16.mxu0 0
        %2004 = vmatmul.mubr.bf16.gmra.mxu0 %v1500
        %v2005 = vpop.f32.mrf.mxu0
        %v2006 = vadd.f32 %v1002, %v2005
        %v2007 = vpop.f32.mrf.mxu0
        %v2008 = vpop.f32.mrf.mxu0
        %v2009 = vadd.f32 %v1002, %v2008
        %v2010 = vpop.f32.mrf.mxu0
        %2011 = vmatprep.mubr.bf16.mxu0 0
        %2012 = vmatmul.mubr.bf16.gmra.mxu0 %v1503
        %v2013 = vpop.f32.mrf.mxu0
        %v2014 = vadd.f32 %v1002, %v2013
        %v2015 = vpop.f32.mrf.mxu0
        %v2016 = vpop.f32.mrf.mxu0
        %v2017 = vadd.f32 %v1002, %v2016
        %v2018 = vpop.f32.mrf.mxu0
        %2019 = vmatprep.mubr.bf16.mxu0 0
        %2020 = vmatmul.mubr.bf16.gmra.mxu0 %v1506
        %v2021 = vpop.f32.mrf.mxu0
        %v2022 = vadd.f32 %v1002, %v2021
        %v2023 = vpop.f32.mrf.mxu0
        %v2024 = vpop.f32.mrf.mxu0
        %v2025 = vadd.f32 %v1002, %v2024
        %v2026 = vpop.f32.mrf.mxu0
        %2027 = vmatprep.mubr.bf16.mxu0 0
        %2028 = vmatmul.mubr.bf16.gmra.mxu0 %v1509
        %v2029 = vpop.f32.mrf.mxu0
        %v2030 = vadd.f32 %v1002, %v2029
        %v2031 = vpop.f32.mrf.mxu0
        %v2032 = vpop.f32.mrf.mxu0
        %v2033 = vadd.f32 %v1002, %v2032
        %v2034 = vpop.f32.mrf.mxu0
        %2035 = vmatprep.mubr.bf16.mxu0 0
        %2036 = vmatmul.mubr.bf16.gmra.mxu0 %v1512
        %v2037 = vpop.f32.mrf.mxu0
        %v2038 = vadd.f32 %v1002, %v2037
        %v2039 = vpop.f32.mrf.mxu0
        %v2040 = vpop.f32.mrf.mxu0
        %v2041 = vadd.f32 %v1002, %v2040
        %v2042 = vpop.f32.mrf.mxu0
        %2043 = vmatprep.mubr.bf16.mxu0 0
        %2044 = vmatmul.mubr.bf16.gmra.mxu0 %v1515
        %v2045 = vpop.f32.mrf.mxu0
        %v2046 = vadd.f32 %v1002, %v2045
        %v2047 = vpop.f32.mrf.mxu0
        %v2048 = vpop.f32.mrf.mxu0
        %v2049 = vadd.f32 %v1002, %v2048
        %v2050 = vpop.f32.mrf.mxu0
        %2051 = vmatprep.mubr.bf16.mxu0 0
        %2052 = vmatmul.mubr.bf16.gmra.mxu0 %v1518
        %v2053 = vpop.f32.mrf.mxu0
        %v2054 = vadd.f32 %v1002, %v2053
        %v2055 = vpop.f32.mrf.mxu0
        %v2056 = vpop.f32.mrf.mxu0
        %v2057 = vadd.f32 %v1002, %v2056
        %v2058 = vpop.f32.mrf.mxu0
        %2059 = vmatprep.mubr.bf16.mxu0 0
        %2060 = vmatmul.mubr.bf16.gmra.mxu0 %v1521
        %v2061 = vpop.f32.mrf.mxu0
        %v2062 = vadd.f32 %v1002, %v2061
        %v2063 = vpop.f32.mrf.mxu0
        %v2064 = vpop.f32.mrf.mxu0
        %v2065 = vadd.f32 %v1002, %v2064
        %v2066 = vpop.f32.mrf.mxu0
        %2067 = vdwg.mxu0
        %v2068 = vmax.f32 %v1558, 0.0
        %v2069 = vmax.f32 %v1561, 0.0
        %v2070 = vmax.f32 %v1566, 0.0
        %v2071 = vmax.f32 %v1569, 0.0
        %v2072 = vmax.f32 %v1574, 0.0
        %v2073 = vmax.f32 %v1577, 0.0
        %v2074 = vmax.f32 %v1582, 0.0
        %v2075 = vmax.f32 %v1585, 0.0
        %v2076 = vmax.f32 %v1590, 0.0
        %v2077 = vmax.f32 %v1593, 0.0
        %v2078 = vmax.f32 %v1598, 0.0
        %v2079 = vmax.f32 %v1601, 0.0
        %v2080 = vmax.f32 %v1606, 0.0
        %v2081 = vmax.f32 %v1609, 0.0
        %v2082 = vmax.f32 %v1614, 0.0
        %v2083 = vmax.f32 %v1617, 0.0
        %v2084 = vmax.f32 %v1622, 0.0
        %v2085 = vmax.f32 %v1625, 0.0
        %v2086 = vmax.f32 %v1630, 0.0
        %v2087 = vmax.f32 %v1633, 0.0
        %v2088 = vmax.f32 %v1638, 0.0
        %v2089 = vmax.f32 %v1641, 0.0
        %v2090 = vmax.f32 %v1646, 0.0
        %v2091 = vmax.f32 %v1649, 0.0
        %v2092 = vmax.f32 %v1654, 0.0
        %v2093 = vmax.f32 %v1657, 0.0
        %v2094 = vmax.f32 %v1662, 0.0
        %v2095 = vmax.f32 %v1665, 0.0
        %v2096 = vmax.f32 %v1670, 0.0
        %v2097 = vmax.f32 %v1673, 0.0
        %v2098 = vmax.f32 %v1678, 0.0
        %v2099 = vmax.f32 %v1681, 0.0
        %v2100 = vmax.f32 %v1686, 0.0
        %v2101 = vmax.f32 %v1689, 0.0
        %v2102 = vmax.f32 %v1694, 0.0
        %v2103 = vmax.f32 %v1697, 0.0
        %v2104 = vmax.f32 %v1702, 0.0
        %v2105 = vmax.f32 %v1705, 0.0
        %v2106 = vmax.f32 %v1710, 0.0
        %v2107 = vmax.f32 %v1713, 0.0
        %v2108 = vmax.f32 %v1718, 0.0
        %v2109 = vmax.f32 %v1721, 0.0
        %v2110 = vmax.f32 %v1726, 0.0
        %v2111 = vmax.f32 %v1729, 0.0
        %v2112 = vmax.f32 %v1734, 0.0
        %v2113 = vmax.f32 %v1737, 0.0
        %v2114 = vmax.f32 %v1742, 0.0
        %v2115 = vmax.f32 %v1745, 0.0
        %v2116 = vmax.f32 %v1750, 0.0
        %v2117 = vmax.f32 %v1753, 0.0
        %v2118 = vmax.f32 %v1758, 0.0
        %v2119 = vmax.f32 %v1761, 0.0
        %v2120 = vmax.f32 %v1766, 0.0
        %v2121 = vmax.f32 %v1769, 0.0
        %v2122 = vmax.f32 %v1774, 0.0
        %v2123 = vmax.f32 %v1777, 0.0
        %v2124 = vmax.f32 %v1782, 0.0
        %v2125 = vmax.f32 %v1785, 0.0
        %v2126 = vmax.f32 %v1790, 0.0
        %v2127 = vmax.f32 %v1793, 0.0
        %v2128 = vmax.f32 %v1798, 0.0
        %v2129 = vmax.f32 %v1801, 0.0
        %v2130 = vmax.f32 %v1806, 0.0
        %v2131 = vmax.f32 %v1809, 0.0
        %v2132 = vmax.f32 %v1814, 0.0
        %v2133 = vmax.f32 %v1817, 0.0
        %v2134 = vmax.f32 %v1822, 0.0
        %v2135 = vmax.f32 %v1825, 0.0
        %v2136 = vmax.f32 %v1830, 0.0
        %v2137 = vmax.f32 %v1833, 0.0
        %v2138 = vmax.f32 %v1838, 0.0
        %v2139 = vmax.f32 %v1841, 0.0
        %v2140 = vmax.f32 %v1846, 0.0
        %v2141 = vmax.f32 %v1849, 0.0
        %v2142 = vmax.f32 %v1854, 0.0
        %v2143 = vmax.f32 %v1857, 0.0
        %v2144 = vmax.f32 %v1862, 0.0
        %v2145 = vmax.f32 %v1865, 0.0
        %v2146 = vmax.f32 %v1870, 0.0
        %v2147 = vmax.f32 %v1873, 0.0
        %v2148 = vmax.f32 %v1878, 0.0
        %v2149 = vmax.f32 %v1881, 0.0
        %v2150 = vmax.f32 %v1886, 0.0
        %v2151 = vmax.f32 %v1889, 0.0
        %v2152 = vmax.f32 %v1894, 0.0
        %v2153 = vmax.f32 %v1897, 0.0
        %v2154 = vmax.f32 %v1902, 0.0
        %v2155 = vmax.f32 %v1905, 0.0
        %v2156 = vmax.f32 %v1910, 0.0
        %v2157 = vmax.f32 %v1913, 0.0
        %v2158 = vmax.f32 %v1918, 0.0
        %v2159 = vmax.f32 %v1921, 0.0
        %v2160 = vmax.f32 %v1926, 0.0
        %v2161 = vmax.f32 %v1929, 0.0
        %v2162 = vmax.f32 %v1934, 0.0
        %v2163 = vmax.f32 %v1937, 0.0
        %v2164 = vmax.f32 %v1942, 0.0
        %v2165 = vmax.f32 %v1945, 0.0
        %v2166 = vmax.f32 %v1950, 0.0
        %v2167 = vmax.f32 %v1953, 0.0
        %v2168 = vmax.f32 %v1958, 0.0
        %v2169 = vmax.f32 %v1961, 0.0
        %v2170 = vmax.f32 %v1966, 0.0
        %v2171 = vmax.f32 %v1969, 0.0
        %v2172 = vmax.f32 %v1974, 0.0
        %v2173 = vmax.f32 %v1977, 0.0
        %v2174 = vmax.f32 %v1982, 0.0
        %v2175 = vmax.f32 %v1985, 0.0
        %v2176 = vmax.f32 %v1990, 0.0
        %v2177 = vmax.f32 %v1993, 0.0
        %v2178 = vmax.f32 %v1998, 0.0
        %v2179 = vmax.f32 %v2001, 0.0
        %v2180 = vmax.f32 %v2006, 0.0
        %v2181 = vmax.f32 %v2009, 0.0
        %v2182 = vmax.f32 %v2014, 0.0
        %v2183 = vmax.f32 %v2017, 0.0
        %v2184 = vmax.f32 %v2022, 0.0
        %v2185 = vmax.f32 %v2025, 0.0
        %v2186 = vmax.f32 %v2030, 0.0
        %v2187 = vmax.f32 %v2033, 0.0
        %v2188 = vmax.f32 %v2038, 0.0
        %v2189 = vmax.f32 %v2041, 0.0
        %v2190 = vmax.f32 %v2046, 0.0
        %v2191 = vmax.f32 %v2049, 0.0
        %v2192 = vmax.f32 %v2054, 0.0
        %v2193 = vmax.f32 %v2057, 0.0
        %v2194 = vmax.f32 %v2062, 0.0
        %v2195 = vmax.f32 %v2065, 0.0
        %v2196 = vpack.c.bf16 %v2069, %v2068
        %v2197 = vpack.c.bf16 %v2071, %v2070
        %v2198 = vpack.c.bf16 %v2073, %v2072
        %v2199 = vpack.c.bf16 %v2075, %v2074
        %v2200 = vpack.c.bf16 %v2077, %v2076
        %v2201 = vpack.c.bf16 %v2079, %v2078
        %v2202 = vpack.c.bf16 %v2081, %v2080
        %v2203 = vpack.c.bf16 %v2083, %v2082
        %v2204 = vpack.c.bf16 %v2085, %v2084
        %v2205 = vpack.c.bf16 %v2087, %v2086
        %v2206 = vpack.c.bf16 %v2089, %v2088
        %v2207 = vpack.c.bf16 %v2091, %v2090
        %v2208 = vpack.c.bf16 %v2093, %v2092
        %v2209 = vpack.c.bf16 %v2095, %v2094
        %v2210 = vpack.c.bf16 %v2097, %v2096
        %v2211 = vpack.c.bf16 %v2099, %v2098
        %v2212 = vpack.c.bf16 %v2101, %v2100
        %v2213 = vpack.c.bf16 %v2103, %v2102
        %v2214 = vpack.c.bf16 %v2105, %v2104
        %v2215 = vpack.c.bf16 %v2107, %v2106
        %v2216 = vpack.c.bf16 %v2109, %v2108
        %v2217 = vpack.c.bf16 %v2111, %v2110
        %v2218 = vpack.c.bf16 %v2113, %v2112
        %v2219 = vpack.c.bf16 %v2115, %v2114
        %v2220 = vpack.c.bf16 %v2117, %v2116
        %v2221 = vpack.c.bf16 %v2119, %v2118
        %v2222 = vpack.c.bf16 %v2121, %v2120
        %v2223 = vpack.c.bf16 %v2123, %v2122
        %v2224 = vpack.c.bf16 %v2125, %v2124
        %v2225 = vpack.c.bf16 %v2127, %v2126
        %v2226 = vpack.c.bf16 %v2129, %v2128
        %v2227 = vpack.c.bf16 %v2131, %v2130
        %v2228 = vpack.c.bf16 %v2133, %v2132
        %v2229 = vpack.c.bf16 %v2135, %v2134
        %v2230 = vpack.c.bf16 %v2137, %v2136
        %v2231 = vpack.c.bf16 %v2139, %v2138
        %v2232 = vpack.c.bf16 %v2141, %v2140
        %v2233 = vpack.c.bf16 %v2143, %v2142
        %v2234 = vpack.c.bf16 %v2145, %v2144
        %v2235 = vpack.c.bf16 %v2147, %v2146
        %v2236 = vpack.c.bf16 %v2149, %v2148
        %v2237 = vpack.c.bf16 %v2151, %v2150
        %v2238 = vpack.c.bf16 %v2153, %v2152
        %v2239 = vpack.c.bf16 %v2155, %v2154
        %v2240 = vpack.c.bf16 %v2157, %v2156
        %v2241 = vpack.c.bf16 %v2159, %v2158
        %v2242 = vpack.c.bf16 %v2161, %v2160
        %v2243 = vpack.c.bf16 %v2163, %v2162
        %v2244 = vpack.c.bf16 %v2165, %v2164
        %v2245 = vpack.c.bf16 %v2167, %v2166
        %v2246 = vpack.c.bf16 %v2169, %v2168
        %v2247 = vpack.c.bf16 %v2171, %v2170
        %v2248 = vpack.c.bf16 %v2173, %v2172
        %v2249 = vpack.c.bf16 %v2175, %v2174
        %v2250 = vpack.c.bf16 %v2177, %v2176
        %v2251 = vpack.c.bf16 %v2179, %v2178
        %v2252 = vpack.c.bf16 %v2181, %v2180
        %v2253 = vpack.c.bf16 %v2183, %v2182
        %v2254 = vpack.c.bf16 %v2185, %v2184
        %v2255 = vpack.c.bf16 %v2187, %v2186
        %v2256 = vpack.c.bf16 %v2189, %v2188
        %v2257 = vpack.c.bf16 %v2191, %v2190
        %v2258 = vpack.c.bf16 %v2193, %v2192
        %v2259 = vpack.c.bf16 %v2195, %v2194
        %v2260 = vld [vmem:[%s3] sm:$0xf]
        %v2261 = vld [vmem:[%s3 + $0x4] sm:$0xf]
        %v2262 = vld [vmem:[%s3 + $0x8] sm:$0xf]
        %v2263 = vld [vmem:[%s3 + $0xc] sm:$0xf]
        %v2264 = vld [vmem:[%s3 + $0x10] sm:$0xf]
        %v2265 = vld [vmem:[%s3 + $0x14] sm:$0xf]
        %v2266 = vld [vmem:[%s3 + $0x18] sm:$0xf]
        %v2267 = vld [vmem:[%s3 + $0x1c] sm:$0xf]
        %v2268 = vld [vmem:[%s4] sm:$0x1]
        %v2270 = vlaneseq
        %v2271 = vshrl.u32 %v2270, 7
        %v2272 = vsub.s32 0, %v2271
        %v2273 = vrot.slane %v2268, %v2272
        %v2283 = vunpack.c.l.b16 %v2260
        %v2284 = vunpack.c.l.b16 %v2261
        %v2285 = vunpack.c.l.b16 %v2262
        %v2286 = vunpack.c.l.b16 %v2263
        %v2287 = vunpack.c.l.b16 %v2264
        %v2288 = vunpack.c.l.b16 %v2265
        %v2289 = vunpack.c.l.b16 %v2266
        %v2290 = vunpack.c.l.b16 %v2267
        %v2291 = vpack.c.b16 %v2284, %v2283
        %v2292 = vpack.c.b16 %v2286, %v2285
        %v2293 = vpack.c.b16 %v2288, %v2287
        %v2294 = vpack.c.b16 %v2290, %v2289
        %vm2299 = vcmask 523264
        %v2301 = vsel %vm2299, %v2196, 0
        %v2304 = vsel %vm2299, %v2197, 0
        %v2307 = vsel %vm2299, %v2198, 0
        %v2310 = vsel %vm2299, %v2199, 0
        %v2313 = vsel %vm2299, %v2200, 0
        %v2316 = vsel %vm2299, %v2201, 0
        %v2319 = vsel %vm2299, %v2202, 0
        %v2322 = vsel %vm2299, %v2203, 0
        %v2325 = vsel %vm2299, %v2204, 0
        %v2328 = vsel %vm2299, %v2205, 0
        %v2331 = vsel %vm2299, %v2206, 0
        %v2334 = vsel %vm2299, %v2207, 0
        %v2337 = vsel %vm2299, %v2208, 0
        %v2340 = vsel %vm2299, %v2209, 0
        %v2343 = vsel %vm2299, %v2210, 0
        %v2346 = vsel %vm2299, %v2211, 0
        %v2349 = vsel %vm2299, %v2212, 0
        %v2352 = vsel %vm2299, %v2213, 0
        %v2355 = vsel %vm2299, %v2214, 0
        %v2358 = vsel %vm2299, %v2215, 0
        %v2361 = vsel %vm2299, %v2216, 0
        %v2364 = vsel %vm2299, %v2217, 0
        %v2367 = vsel %vm2299, %v2218, 0
        %v2370 = vsel %vm2299, %v2219, 0
        %v2373 = vsel %vm2299, %v2220, 0
        %v2376 = vsel %vm2299, %v2221, 0
        %v2379 = vsel %vm2299, %v2222, 0
        %v2382 = vsel %vm2299, %v2223, 0
        %v2385 = vsel %vm2299, %v2224, 0
        %v2388 = vsel %vm2299, %v2225, 0
        %v2391 = vsel %vm2299, %v2226, 0
        %v2394 = vsel %vm2299, %v2227, 0
        %v2397 = vsel %vm2299, %v2228, 0
        %v2400 = vsel %vm2299, %v2229, 0
        %v2403 = vsel %vm2299, %v2230, 0
        %v2406 = vsel %vm2299, %v2231, 0
        %v2409 = vsel %vm2299, %v2232, 0
        %v2412 = vsel %vm2299, %v2233, 0
        %v2415 = vsel %vm2299, %v2234, 0
        %v2418 = vsel %vm2299, %v2235, 0
        %v2421 = vsel %vm2299, %v2236, 0
        %v2424 = vsel %vm2299, %v2237, 0
        %v2427 = vsel %vm2299, %v2238, 0
        %v2430 = vsel %vm2299, %v2239, 0
        %v2433 = vsel %vm2299, %v2240, 0
        %v2436 = vsel %vm2299, %v2241, 0
        %v2439 = vsel %vm2299, %v2242, 0
        %v2442 = vsel %vm2299, %v2243, 0
        %v2445 = vsel %vm2299, %v2244, 0
        %v2448 = vsel %vm2299, %v2245, 0
        %v2451 = vsel %vm2299, %v2246, 0
        %v2454 = vsel %vm2299, %v2247, 0
        %v2457 = vsel %vm2299, %v2248, 0
        %v2460 = vsel %vm2299, %v2249, 0
        %v2463 = vsel %vm2299, %v2250, 0
        %v2466 = vsel %vm2299, %v2251, 0
        %v2469 = vsel %vm2299, %v2252, 0
        %v2472 = vsel %vm2299, %v2253, 0
        %v2475 = vsel %vm2299, %v2254, 0
        %v2478 = vsel %vm2299, %v2255, 0
        %v2481 = vsel %vm2299, %v2256, 0
        %v2484 = vsel %vm2299, %v2257, 0
        %v2487 = vsel %vm2299, %v2258, 0
        %v2490 = vsel %vm2299, %v2259, 0
        %2492 = vmatprep.subr.bf16.mxu0 0
        %2493 = vmatpush1.bf16.msra.mxu0 0
        %2494 = vmatprep.subr.bf16.mxu0 0
        %2495 = vmatpush1.bf16.msra.mxu0 0
        %2496 = vmatprep.subr.bf16.mxu0 0
        %2497 = vmatpush1.bf16.msra.mxu0 0
        %2498 = vmatprep.subr.bf16.mxu0 0
        %2499 = vmatpush1.bf16.msra.mxu0 0
        %2500 = vmatprep.subr.bf16.mxu0 0
        %2501 = vmatpush1.bf16.msra.mxu0 %v2294
        %2502 = vmatprep.subr.bf16.mxu0 0
        %2503 = vmatpush1.bf16.msra.mxu0 %v2293
        %2504 = vmatprep.subr.bf16.mxu0 0
        %2505 = vmatpush1.bf16.msra.mxu0 %v2292
        %2506 = vmatprep.subr.bf16.mxu0 0
        %2507 = vmatpush1.bf16.msra.mxu0 %v2291
        %2508 = vmatprep.subr.bf16.mxu0 0
        %2509 = vmatpush2.bf16.msra.mxu0 0
        %2510 = vmatprep.subr.bf16.mxu0 0
        %2511 = vmatpush2.bf16.msra.mxu0 0
        %2512 = vmatprep.subr.bf16.mxu0 0
        %2513 = vmatpush2.bf16.msra.mxu0 0
        %2514 = vmatprep.subr.bf16.mxu0 0
        %2515 = vmatpush2.bf16.msra.mxu0 0
        %2516 = vmatprep.subr.bf16.mxu0 0
        %2517 = vmatpush2.bf16.msra.mxu0 0
        %2518 = vmatprep.subr.bf16.mxu0 0
        %2519 = vmatpush2.bf16.msra.mxu0 0
        %2520 = vmatprep.subr.bf16.mxu0 0
        %2521 = vmatpush2.bf16.msra.mxu0 0
        %2522 = vmatprep.subr.bf16.mxu0 0
        %2523 = vmatpush2.bf16.msra.mxu0 0
        %2524 = vmatprep.mubr.bf16.mxu0 0
        %2525 = vmatmul.mubr.bf16.gmra.mxu0 %v2301
        %v2526 = vpop.f32.mrf.mxu0
        %v2527 = vadd.f32 %v2273, %v2526
        %v2528 = vpop.f32.mrf.mxu0
        %v2529 = vpop.f32.mrf.mxu0
        %v2530 = vadd.f32 %v2273, %v2529
        %v2531 = vpop.f32.mrf.mxu0
        %2532 = vmatprep.mubr.bf16.mxu0 0
        %2533 = vmatmul.mubr.bf16.gmra.mxu0 %v2304
        %v2534 = vpop.f32.mrf.mxu0
        %v2535 = vadd.f32 %v2273, %v2534
        %v2536 = vpop.f32.mrf.mxu0
        %v2537 = vpop.f32.mrf.mxu0
        %v2538 = vadd.f32 %v2273, %v2537
        %v2539 = vpop.f32.mrf.mxu0
        %2540 = vmatprep.mubr.bf16.mxu0 0
        %2541 = vmatmul.mubr.bf16.gmra.mxu0 %v2307
        %v2542 = vpop.f32.mrf.mxu0
        %v2543 = vadd.f32 %v2273, %v2542
        %v2544 = vpop.f32.mrf.mxu0
        %v2545 = vpop.f32.mrf.mxu0
        %v2546 = vadd.f32 %v2273, %v2545
        %v2547 = vpop.f32.mrf.mxu0
        %2548 = vmatprep.mubr.bf16.mxu0 0
        %2549 = vmatmul.mubr.bf16.gmra.mxu0 %v2310
        %v2550 = vpop.f32.mrf.mxu0
        %v2551 = vadd.f32 %v2273, %v2550
        %v2552 = vpop.f32.mrf.mxu0
        %v2553 = vpop.f32.mrf.mxu0
        %v2554 = vadd.f32 %v2273, %v2553
        %v2555 = vpop.f32.mrf.mxu0
        %2556 = vmatprep.mubr.bf16.mxu0 0
        %2557 = vmatmul.mubr.bf16.gmra.mxu0 %v2313
        %v2558 = vpop.f32.mrf.mxu0
        %v2559 = vadd.f32 %v2273, %v2558
        %v2560 = vpop.f32.mrf.mxu0
        %v2561 = vpop.f32.mrf.mxu0
        %v2562 = vadd.f32 %v2273, %v2561
        %v2563 = vpop.f32.mrf.mxu0
        %2564 = vmatprep.mubr.bf16.mxu0 0
        %2565 = vmatmul.mubr.bf16.gmra.mxu0 %v2316
        %v2566 = vpop.f32.mrf.mxu0
        %v2567 = vadd.f32 %v2273, %v2566
        %v2568 = vpop.f32.mrf.mxu0
        %v2569 = vpop.f32.mrf.mxu0
        %v2570 = vadd.f32 %v2273, %v2569
        %v2571 = vpop.f32.mrf.mxu0
        %2572 = vmatprep.mubr.bf16.mxu0 0
        %2573 = vmatmul.mubr.bf16.gmra.mxu0 %v2319
        %v2574 = vpop.f32.mrf.mxu0
        %v2575 = vadd.f32 %v2273, %v2574
        %v2576 = vpop.f32.mrf.mxu0
        %v2577 = vpop.f32.mrf.mxu0
        %v2578 = vadd.f32 %v2273, %v2577
        %v2579 = vpop.f32.mrf.mxu0
        %2580 = vmatprep.mubr.bf16.mxu0 0
        %2581 = vmatmul.mubr.bf16.gmra.mxu0 %v2322
        %v2582 = vpop.f32.mrf.mxu0
        %v2583 = vadd.f32 %v2273, %v2582
        %v2584 = vpop.f32.mrf.mxu0
        %v2585 = vpop.f32.mrf.mxu0
        %v2586 = vadd.f32 %v2273, %v2585
        %v2587 = vpop.f32.mrf.mxu0
        %2588 = vmatprep.mubr.bf16.mxu0 0
        %2589 = vmatmul.mubr.bf16.gmra.mxu0 %v2325
        %v2590 = vpop.f32.mrf.mxu0
        %v2591 = vadd.f32 %v2273, %v2590
        %v2592 = vpop.f32.mrf.mxu0
        %v2593 = vpop.f32.mrf.mxu0
        %v2594 = vadd.f32 %v2273, %v2593
        %v2595 = vpop.f32.mrf.mxu0
        %2596 = vmatprep.mubr.bf16.mxu0 0
        %2597 = vmatmul.mubr.bf16.gmra.mxu0 %v2328
        %v2598 = vpop.f32.mrf.mxu0
        %v2599 = vadd.f32 %v2273, %v2598
        %v2600 = vpop.f32.mrf.mxu0
        %v2601 = vpop.f32.mrf.mxu0
        %v2602 = vadd.f32 %v2273, %v2601
        %v2603 = vpop.f32.mrf.mxu0
        %2604 = vmatprep.mubr.bf16.mxu0 0
        %2605 = vmatmul.mubr.bf16.gmra.mxu0 %v2331
        %v2606 = vpop.f32.mrf.mxu0
        %v2607 = vadd.f32 %v2273, %v2606
        %v2608 = vpop.f32.mrf.mxu0
        %v2609 = vpop.f32.mrf.mxu0
        %v2610 = vadd.f32 %v2273, %v2609
        %v2611 = vpop.f32.mrf.mxu0
        %2612 = vmatprep.mubr.bf16.mxu0 0
        %2613 = vmatmul.mubr.bf16.gmra.mxu0 %v2334
        %v2614 = vpop.f32.mrf.mxu0
        %v2615 = vadd.f32 %v2273, %v2614
        %v2616 = vpop.f32.mrf.mxu0
        %v2617 = vpop.f32.mrf.mxu0
        %v2618 = vadd.f32 %v2273, %v2617
        %v2619 = vpop.f32.mrf.mxu0
        %2620 = vmatprep.mubr.bf16.mxu0 0
        %2621 = vmatmul.mubr.bf16.gmra.mxu0 %v2337
        %v2622 = vpop.f32.mrf.mxu0
        %v2623 = vadd.f32 %v2273, %v2622
        %v2624 = vpop.f32.mrf.mxu0
        %v2625 = vpop.f32.mrf.mxu0
        %v2626 = vadd.f32 %v2273, %v2625
        %v2627 = vpop.f32.mrf.mxu0
        %2628 = vmatprep.mubr.bf16.mxu0 0
        %2629 = vmatmul.mubr.bf16.gmra.mxu0 %v2340
        %v2630 = vpop.f32.mrf.mxu0
        %v2631 = vadd.f32 %v2273, %v2630
        %v2632 = vpop.f32.mrf.mxu0
        %v2633 = vpop.f32.mrf.mxu0
        %v2634 = vadd.f32 %v2273, %v2633
        %v2635 = vpop.f32.mrf.mxu0
        %2636 = vmatprep.mubr.bf16.mxu0 0
        %2637 = vmatmul.mubr.bf16.gmra.mxu0 %v2343
        %v2638 = vpop.f32.mrf.mxu0
        %v2639 = vadd.f32 %v2273, %v2638
        %v2640 = vpop.f32.mrf.mxu0
        %v2641 = vpop.f32.mrf.mxu0
        %v2642 = vadd.f32 %v2273, %v2641
        %v2643 = vpop.f32.mrf.mxu0
        %2644 = vmatprep.mubr.bf16.mxu0 0
        %2645 = vmatmul.mubr.bf16.gmra.mxu0 %v2346
        %v2646 = vpop.f32.mrf.mxu0
        %v2647 = vadd.f32 %v2273, %v2646
        %v2648 = vpop.f32.mrf.mxu0
        %v2649 = vpop.f32.mrf.mxu0
        %v2650 = vadd.f32 %v2273, %v2649
        %v2651 = vpop.f32.mrf.mxu0
        %2652 = vmatprep.mubr.bf16.mxu0 0
        %2653 = vmatmul.mubr.bf16.gmra.mxu0 %v2349
        %v2654 = vpop.f32.mrf.mxu0
        %v2655 = vadd.f32 %v2273, %v2654
        %v2656 = vpop.f32.mrf.mxu0
        %v2657 = vpop.f32.mrf.mxu0
        %v2658 = vadd.f32 %v2273, %v2657
        %v2659 = vpop.f32.mrf.mxu0
        %2660 = vmatprep.mubr.bf16.mxu0 0
        %2661 = vmatmul.mubr.bf16.gmra.mxu0 %v2352
        %v2662 = vpop.f32.mrf.mxu0
        %v2663 = vadd.f32 %v2273, %v2662
        %v2664 = vpop.f32.mrf.mxu0
        %v2665 = vpop.f32.mrf.mxu0
        %v2666 = vadd.f32 %v2273, %v2665
        %v2667 = vpop.f32.mrf.mxu0
        %2668 = vmatprep.mubr.bf16.mxu0 0
        %2669 = vmatmul.mubr.bf16.gmra.mxu0 %v2355
        %v2670 = vpop.f32.mrf.mxu0
        %v2671 = vadd.f32 %v2273, %v2670
        %v2672 = vpop.f32.mrf.mxu0
        %v2673 = vpop.f32.mrf.mxu0
        %v2674 = vadd.f32 %v2273, %v2673
        %v2675 = vpop.f32.mrf.mxu0
        %2676 = vmatprep.mubr.bf16.mxu0 0
        %2677 = vmatmul.mubr.bf16.gmra.mxu0 %v2358
        %v2678 = vpop.f32.mrf.mxu0
        %v2679 = vadd.f32 %v2273, %v2678
        %v2680 = vpop.f32.mrf.mxu0
        %v2681 = vpop.f32.mrf.mxu0
        %v2682 = vadd.f32 %v2273, %v2681
        %v2683 = vpop.f32.mrf.mxu0
        %2684 = vmatprep.mubr.bf16.mxu0 0
        %2685 = vmatmul.mubr.bf16.gmra.mxu0 %v2361
        %v2686 = vpop.f32.mrf.mxu0
        %v2687 = vadd.f32 %v2273, %v2686
        %v2688 = vpop.f32.mrf.mxu0
        %v2689 = vpop.f32.mrf.mxu0
        %v2690 = vadd.f32 %v2273, %v2689
        %v2691 = vpop.f32.mrf.mxu0
        %2692 = vmatprep.mubr.bf16.mxu0 0
        %2693 = vmatmul.mubr.bf16.gmra.mxu0 %v2364
        %v2694 = vpop.f32.mrf.mxu0
        %v2695 = vadd.f32 %v2273, %v2694
        %v2696 = vpop.f32.mrf.mxu0
        %v2697 = vpop.f32.mrf.mxu0
        %v2698 = vadd.f32 %v2273, %v2697
        %v2699 = vpop.f32.mrf.mxu0
        %2700 = vmatprep.mubr.bf16.mxu0 0
        %2701 = vmatmul.mubr.bf16.gmra.mxu0 %v2367
        %v2702 = vpop.f32.mrf.mxu0
        %v2703 = vadd.f32 %v2273, %v2702
        %v2704 = vpop.f32.mrf.mxu0
        %v2705 = vpop.f32.mrf.mxu0
        %v2706 = vadd.f32 %v2273, %v2705
        %v2707 = vpop.f32.mrf.mxu0
        %2708 = vmatprep.mubr.bf16.mxu0 0
        %2709 = vmatmul.mubr.bf16.gmra.mxu0 %v2370
        %v2710 = vpop.f32.mrf.mxu0
        %v2711 = vadd.f32 %v2273, %v2710
        %v2712 = vpop.f32.mrf.mxu0
        %v2713 = vpop.f32.mrf.mxu0
        %v2714 = vadd.f32 %v2273, %v2713
        %v2715 = vpop.f32.mrf.mxu0
        %2716 = vmatprep.mubr.bf16.mxu0 0
        %2717 = vmatmul.mubr.bf16.gmra.mxu0 %v2373
        %v2718 = vpop.f32.mrf.mxu0
        %v2719 = vadd.f32 %v2273, %v2718
        %v2720 = vpop.f32.mrf.mxu0
        %v2721 = vpop.f32.mrf.mxu0
        %v2722 = vadd.f32 %v2273, %v2721
        %v2723 = vpop.f32.mrf.mxu0
        %2724 = vmatprep.mubr.bf16.mxu0 0
        %2725 = vmatmul.mubr.bf16.gmra.mxu0 %v2376
        %v2726 = vpop.f32.mrf.mxu0
        %v2727 = vadd.f32 %v2273, %v2726
        %v2728 = vpop.f32.mrf.mxu0
        %v2729 = vpop.f32.mrf.mxu0
        %v2730 = vadd.f32 %v2273, %v2729
        %v2731 = vpop.f32.mrf.mxu0
        %2732 = vmatprep.mubr.bf16.mxu0 0
        %2733 = vmatmul.mubr.bf16.gmra.mxu0 %v2379
        %v2734 = vpop.f32.mrf.mxu0
        %v2735 = vadd.f32 %v2273, %v2734
        %v2736 = vpop.f32.mrf.mxu0
        %v2737 = vpop.f32.mrf.mxu0
        %v2738 = vadd.f32 %v2273, %v2737
        %v2739 = vpop.f32.mrf.mxu0
        %2740 = vmatprep.mubr.bf16.mxu0 0
        %2741 = vmatmul.mubr.bf16.gmra.mxu0 %v2382
        %v2742 = vpop.f32.mrf.mxu0
        %v2743 = vadd.f32 %v2273, %v2742
        %v2744 = vpop.f32.mrf.mxu0
        %v2745 = vpop.f32.mrf.mxu0
        %v2746 = vadd.f32 %v2273, %v2745
        %v2747 = vpop.f32.mrf.mxu0
        %2748 = vmatprep.mubr.bf16.mxu0 0
        %2749 = vmatmul.mubr.bf16.gmra.mxu0 %v2385
        %v2750 = vpop.f32.mrf.mxu0
        %v2751 = vadd.f32 %v2273, %v2750
        %v2752 = vpop.f32.mrf.mxu0
        %v2753 = vpop.f32.mrf.mxu0
        %v2754 = vadd.f32 %v2273, %v2753
        %v2755 = vpop.f32.mrf.mxu0
        %2756 = vmatprep.mubr.bf16.mxu0 0
        %2757 = vmatmul.mubr.bf16.gmra.mxu0 %v2388
        %v2758 = vpop.f32.mrf.mxu0
        %v2759 = vadd.f32 %v2273, %v2758
        %v2760 = vpop.f32.mrf.mxu0
        %v2761 = vpop.f32.mrf.mxu0
        %v2762 = vadd.f32 %v2273, %v2761
        %v2763 = vpop.f32.mrf.mxu0
        %2764 = vmatprep.mubr.bf16.mxu0 0
        %2765 = vmatmul.mubr.bf16.gmra.mxu0 %v2391
        %v2766 = vpop.f32.mrf.mxu0
        %v2767 = vadd.f32 %v2273, %v2766
        %v2768 = vpop.f32.mrf.mxu0
        %v2769 = vpop.f32.mrf.mxu0
        %v2770 = vadd.f32 %v2273, %v2769
        %v2771 = vpop.f32.mrf.mxu0
        %2772 = vmatprep.mubr.bf16.mxu0 0
        %2773 = vmatmul.mubr.bf16.gmra.mxu0 %v2394
        %v2774 = vpop.f32.mrf.mxu0
        %v2775 = vadd.f32 %v2273, %v2774
        %v2776 = vpop.f32.mrf.mxu0
        %v2777 = vpop.f32.mrf.mxu0
        %v2778 = vadd.f32 %v2273, %v2777
        %v2779 = vpop.f32.mrf.mxu0
        %2780 = vmatprep.mubr.bf16.mxu0 0
        %2781 = vmatmul.mubr.bf16.gmra.mxu0 %v2397
        %v2782 = vpop.f32.mrf.mxu0
        %v2783 = vadd.f32 %v2273, %v2782
        %v2784 = vpop.f32.mrf.mxu0
        %v2785 = vpop.f32.mrf.mxu0
        %v2786 = vadd.f32 %v2273, %v2785
        %v2787 = vpop.f32.mrf.mxu0
        %2788 = vmatprep.mubr.bf16.mxu0 0
        %2789 = vmatmul.mubr.bf16.gmra.mxu0 %v2400
        %v2790 = vpop.f32.mrf.mxu0
        %v2791 = vadd.f32 %v2273, %v2790
        %v2792 = vpop.f32.mrf.mxu0
        %v2793 = vpop.f32.mrf.mxu0
        %v2794 = vadd.f32 %v2273, %v2793
        %v2795 = vpop.f32.mrf.mxu0
        %2796 = vmatprep.mubr.bf16.mxu0 0
        %2797 = vmatmul.mubr.bf16.gmra.mxu0 %v2403
        %v2798 = vpop.f32.mrf.mxu0
        %v2799 = vadd.f32 %v2273, %v2798
        %v2800 = vpop.f32.mrf.mxu0
        %v2801 = vpop.f32.mrf.mxu0
        %v2802 = vadd.f32 %v2273, %v2801
        %v2803 = vpop.f32.mrf.mxu0
        %2804 = vmatprep.mubr.bf16.mxu0 0
        %2805 = vmatmul.mubr.bf16.gmra.mxu0 %v2406
        %v2806 = vpop.f32.mrf.mxu0
        %v2807 = vadd.f32 %v2273, %v2806
        %v2808 = vpop.f32.mrf.mxu0
        %v2809 = vpop.f32.mrf.mxu0
        %v2810 = vadd.f32 %v2273, %v2809
        %v2811 = vpop.f32.mrf.mxu0
        %2812 = vmatprep.mubr.bf16.mxu0 0
        %2813 = vmatmul.mubr.bf16.gmra.mxu0 %v2409
        %v2814 = vpop.f32.mrf.mxu0
        %v2815 = vadd.f32 %v2273, %v2814
        %v2816 = vpop.f32.mrf.mxu0
        %v2817 = vpop.f32.mrf.mxu0
        %v2818 = vadd.f32 %v2273, %v2817
        %v2819 = vpop.f32.mrf.mxu0
        %2820 = vmatprep.mubr.bf16.mxu0 0
        %2821 = vmatmul.mubr.bf16.gmra.mxu0 %v2412
        %v2822 = vpop.f32.mrf.mxu0
        %v2823 = vadd.f32 %v2273, %v2822
        %v2824 = vpop.f32.mrf.mxu0
        %v2825 = vpop.f32.mrf.mxu0
        %v2826 = vadd.f32 %v2273, %v2825
        %v2827 = vpop.f32.mrf.mxu0
        %2828 = vmatprep.mubr.bf16.mxu0 0
        %2829 = vmatmul.mubr.bf16.gmra.mxu0 %v2415
        %v2830 = vpop.f32.mrf.mxu0
        %v2831 = vadd.f32 %v2273, %v2830
        %v2832 = vpop.f32.mrf.mxu0
        %v2833 = vpop.f32.mrf.mxu0
        %v2834 = vadd.f32 %v2273, %v2833
        %v2835 = vpop.f32.mrf.mxu0
        %2836 = vmatprep.mubr.bf16.mxu0 0
        %2837 = vmatmul.mubr.bf16.gmra.mxu0 %v2418
        %v2838 = vpop.f32.mrf.mxu0
        %v2839 = vadd.f32 %v2273, %v2838
        %v2840 = vpop.f32.mrf.mxu0
        %v2841 = vpop.f32.mrf.mxu0
        %v2842 = vadd.f32 %v2273, %v2841
        %v2843 = vpop.f32.mrf.mxu0
        %2844 = vmatprep.mubr.bf16.mxu0 0
        %2845 = vmatmul.mubr.bf16.gmra.mxu0 %v2421
        %v2846 = vpop.f32.mrf.mxu0
        %v2847 = vadd.f32 %v2273, %v2846
        %v2848 = vpop.f32.mrf.mxu0
        %v2849 = vpop.f32.mrf.mxu0
        %v2850 = vadd.f32 %v2273, %v2849
        %v2851 = vpop.f32.mrf.mxu0
        %2852 = vmatprep.mubr.bf16.mxu0 0
        %2853 = vmatmul.mubr.bf16.gmra.mxu0 %v2424
        %v2854 = vpop.f32.mrf.mxu0
        %v2855 = vadd.f32 %v2273, %v2854
        %v2856 = vpop.f32.mrf.mxu0
        %v2857 = vpop.f32.mrf.mxu0
        %v2858 = vadd.f32 %v2273, %v2857
        %v2859 = vpop.f32.mrf.mxu0
        %2860 = vmatprep.mubr.bf16.mxu0 0
        %2861 = vmatmul.mubr.bf16.gmra.mxu0 %v2427
        %v2862 = vpop.f32.mrf.mxu0
        %v2863 = vadd.f32 %v2273, %v2862
        %v2864 = vpop.f32.mrf.mxu0
        %v2865 = vpop.f32.mrf.mxu0
        %v2866 = vadd.f32 %v2273, %v2865
        %v2867 = vpop.f32.mrf.mxu0
        %2868 = vmatprep.mubr.bf16.mxu0 0
        %2869 = vmatmul.mubr.bf16.gmra.mxu0 %v2430
        %v2870 = vpop.f32.mrf.mxu0
        %v2871 = vadd.f32 %v2273, %v2870
        %v2872 = vpop.f32.mrf.mxu0
        %v2873 = vpop.f32.mrf.mxu0
        %v2874 = vadd.f32 %v2273, %v2873
        %v2875 = vpop.f32.mrf.mxu0
        %2876 = vmatprep.mubr.bf16.mxu0 0
        %2877 = vmatmul.mubr.bf16.gmra.mxu0 %v2433
        %v2878 = vpop.f32.mrf.mxu0
        %v2879 = vadd.f32 %v2273, %v2878
        %v2880 = vpop.f32.mrf.mxu0
        %v2881 = vpop.f32.mrf.mxu0
        %v2882 = vadd.f32 %v2273, %v2881
        %v2883 = vpop.f32.mrf.mxu0
        %2884 = vmatprep.mubr.bf16.mxu0 0
        %2885 = vmatmul.mubr.bf16.gmra.mxu0 %v2436
        %v2886 = vpop.f32.mrf.mxu0
        %v2887 = vadd.f32 %v2273, %v2886
        %v2888 = vpop.f32.mrf.mxu0
        %v2889 = vpop.f32.mrf.mxu0
        %v2890 = vadd.f32 %v2273, %v2889
        %v2891 = vpop.f32.mrf.mxu0
        %2892 = vmatprep.mubr.bf16.mxu0 0
        %2893 = vmatmul.mubr.bf16.gmra.mxu0 %v2439
        %v2894 = vpop.f32.mrf.mxu0
        %v2895 = vadd.f32 %v2273, %v2894
        %v2896 = vpop.f32.mrf.mxu0
        %v2897 = vpop.f32.mrf.mxu0
        %v2898 = vadd.f32 %v2273, %v2897
        %v2899 = vpop.f32.mrf.mxu0
        %2900 = vmatprep.mubr.bf16.mxu0 0
        %2901 = vmatmul.mubr.bf16.gmra.mxu0 %v2442
        %v2902 = vpop.f32.mrf.mxu0
        %v2903 = vadd.f32 %v2273, %v2902
        %v2904 = vpop.f32.mrf.mxu0
        %v2905 = vpop.f32.mrf.mxu0
        %v2906 = vadd.f32 %v2273, %v2905
        %v2907 = vpop.f32.mrf.mxu0
        %2908 = vmatprep.mubr.bf16.mxu0 0
        %2909 = vmatmul.mubr.bf16.gmra.mxu0 %v2445
        %v2910 = vpop.f32.mrf.mxu0
        %v2911 = vadd.f32 %v2273, %v2910
        %v2912 = vpop.f32.mrf.mxu0
        %v2913 = vpop.f32.mrf.mxu0
        %v2914 = vadd.f32 %v2273, %v2913
        %v2915 = vpop.f32.mrf.mxu0
        %2916 = vmatprep.mubr.bf16.mxu0 0
        %2917 = vmatmul.mubr.bf16.gmra.mxu0 %v2448
        %v2918 = vpop.f32.mrf.mxu0
        %v2919 = vadd.f32 %v2273, %v2918
        %v2920 = vpop.f32.mrf.mxu0
        %v2921 = vpop.f32.mrf.mxu0
        %v2922 = vadd.f32 %v2273, %v2921
        %v2923 = vpop.f32.mrf.mxu0
        %2924 = vmatprep.mubr.bf16.mxu0 0
        %2925 = vmatmul.mubr.bf16.gmra.mxu0 %v2451
        %v2926 = vpop.f32.mrf.mxu0
        %v2927 = vadd.f32 %v2273, %v2926
        %v2928 = vpop.f32.mrf.mxu0
        %v2929 = vpop.f32.mrf.mxu0
        %v2930 = vadd.f32 %v2273, %v2929
        %v2931 = vpop.f32.mrf.mxu0
        %2932 = vmatprep.mubr.bf16.mxu0 0
        %2933 = vmatmul.mubr.bf16.gmra.mxu0 %v2454
        %v2934 = vpop.f32.mrf.mxu0
        %v2935 = vadd.f32 %v2273, %v2934
        %v2936 = vpop.f32.mrf.mxu0
        %v2937 = vpop.f32.mrf.mxu0
        %v2938 = vadd.f32 %v2273, %v2937
        %v2939 = vpop.f32.mrf.mxu0
        %2940 = vmatprep.mubr.bf16.mxu0 0
        %2941 = vmatmul.mubr.bf16.gmra.mxu0 %v2457
        %v2942 = vpop.f32.mrf.mxu0
        %v2943 = vadd.f32 %v2273, %v2942
        %v2944 = vpop.f32.mrf.mxu0
        %v2945 = vpop.f32.mrf.mxu0
        %v2946 = vadd.f32 %v2273, %v2945
        %v2947 = vpop.f32.mrf.mxu0
        %2948 = vmatprep.mubr.bf16.mxu0 0
        %2949 = vmatmul.mubr.bf16.gmra.mxu0 %v2460
        %v2950 = vpop.f32.mrf.mxu0
        %v2951 = vadd.f32 %v2273, %v2950
        %v2952 = vpop.f32.mrf.mxu0
        %v2953 = vpop.f32.mrf.mxu0
        %v2954 = vadd.f32 %v2273, %v2953
        %v2955 = vpop.f32.mrf.mxu0
        %2956 = vmatprep.mubr.bf16.mxu0 0
        %2957 = vmatmul.mubr.bf16.gmra.mxu0 %v2463
        %v2958 = vpop.f32.mrf.mxu0
        %v2959 = vadd.f32 %v2273, %v2958
        %v2960 = vpop.f32.mrf.mxu0
        %v2961 = vpop.f32.mrf.mxu0
        %v2962 = vadd.f32 %v2273, %v2961
        %v2963 = vpop.f32.mrf.mxu0
        %2964 = vmatprep.mubr.bf16.mxu0 0
        %2965 = vmatmul.mubr.bf16.gmra.mxu0 %v2466
        %v2966 = vpop.f32.mrf.mxu0
        %v2967 = vadd.f32 %v2273, %v2966
        %v2968 = vpop.f32.mrf.mxu0
        %v2969 = vpop.f32.mrf.mxu0
        %v2970 = vadd.f32 %v2273, %v2969
        %v2971 = vpop.f32.mrf.mxu0
        %2972 = vmatprep.mubr.bf16.mxu0 0
        %2973 = vmatmul.mubr.bf16.gmra.mxu0 %v2469
        %v2974 = vpop.f32.mrf.mxu0
        %v2975 = vadd.f32 %v2273, %v2974
        %v2976 = vpop.f32.mrf.mxu0
        %v2977 = vpop.f32.mrf.mxu0
        %v2978 = vadd.f32 %v2273, %v2977
        %v2979 = vpop.f32.mrf.mxu0
        %2980 = vmatprep.mubr.bf16.mxu0 0
        %2981 = vmatmul.mubr.bf16.gmra.mxu0 %v2472
        %v2982 = vpop.f32.mrf.mxu0
        %v2983 = vadd.f32 %v2273, %v2982
        %v2984 = vpop.f32.mrf.mxu0
        %v2985 = vpop.f32.mrf.mxu0
        %v2986 = vadd.f32 %v2273, %v2985
        %v2987 = vpop.f32.mrf.mxu0
        %2988 = vmatprep.mubr.bf16.mxu0 0
        %2989 = vmatmul.mubr.bf16.gmra.mxu0 %v2475
        %v2990 = vpop.f32.mrf.mxu0
        %v2991 = vadd.f32 %v2273, %v2990
        %v2992 = vpop.f32.mrf.mxu0
        %v2993 = vpop.f32.mrf.mxu0
        %v2994 = vadd.f32 %v2273, %v2993
        %v2995 = vpop.f32.mrf.mxu0
        %2996 = vmatprep.mubr.bf16.mxu0 0
        %2997 = vmatmul.mubr.bf16.gmra.mxu0 %v2478
        %v2998 = vpop.f32.mrf.mxu0
        %v2999 = vadd.f32 %v2273, %v2998
        %v3000 = vpop.f32.mrf.mxu0
        %v3001 = vpop.f32.mrf.mxu0
        %v3002 = vadd.f32 %v2273, %v3001
        %v3003 = vpop.f32.mrf.mxu0
        %3004 = vmatprep.mubr.bf16.mxu0 0
        %3005 = vmatmul.mubr.bf16.gmra.mxu0 %v2481
        %v3006 = vpop.f32.mrf.mxu0
        %v3007 = vadd.f32 %v2273, %v3006
        %v3008 = vpop.f32.mrf.mxu0
        %v3009 = vpop.f32.mrf.mxu0
        %v3010 = vadd.f32 %v2273, %v3009
        %v3011 = vpop.f32.mrf.mxu0
        %3012 = vmatprep.mubr.bf16.mxu0 0
        %3013 = vmatmul.mubr.bf16.gmra.mxu0 %v2484
        %v3014 = vpop.f32.mrf.mxu0
        %v3015 = vadd.f32 %v2273, %v3014
        %v3016 = vpop.f32.mrf.mxu0
        %v3017 = vpop.f32.mrf.mxu0
        %v3018 = vadd.f32 %v2273, %v3017
        %v3019 = vpop.f32.mrf.mxu0
        %3020 = vmatprep.mubr.bf16.mxu0 0
        %3021 = vmatmul.mubr.bf16.gmra.mxu0 %v2487
        %v3022 = vpop.f32.mrf.mxu0
        %v3023 = vadd.f32 %v2273, %v3022
        %v3024 = vpop.f32.mrf.mxu0
        %v3025 = vpop.f32.mrf.mxu0
        %v3026 = vadd.f32 %v2273, %v3025
        %v3027 = vpop.f32.mrf.mxu0
        %3028 = vmatprep.mubr.bf16.mxu0 0
        %3029 = vmatmul.mubr.bf16.gmra.mxu0 %v2490
        %v3030 = vpop.f32.mrf.mxu0
        %v3031 = vadd.f32 %v2273, %v3030
        %v3032 = vpop.f32.mrf.mxu0
        %v3033 = vpop.f32.mrf.mxu0
        %v3034 = vadd.f32 %v2273, %v3033
        %v3035 = vpop.f32.mrf.mxu0
        %3036 = vdwg.mxu0
        %v3037 = vmax.f32 %v2527, 0.0
        %v3038 = vmax.f32 %v2530, 0.0
        %v3039 = vmax.f32 %v2535, 0.0
        %v3040 = vmax.f32 %v2538, 0.0
        %v3041 = vmax.f32 %v2543, 0.0
        %v3042 = vmax.f32 %v2546, 0.0
        %v3043 = vmax.f32 %v2551, 0.0
        %v3044 = vmax.f32 %v2554, 0.0
        %v3045 = vmax.f32 %v2559, 0.0
        %v3046 = vmax.f32 %v2562, 0.0
        %v3047 = vmax.f32 %v2567, 0.0
        %v3048 = vmax.f32 %v2570, 0.0
        %v3049 = vmax.f32 %v2575, 0.0
        %v3050 = vmax.f32 %v2578, 0.0
        %v3051 = vmax.f32 %v2583, 0.0
        %v3052 = vmax.f32 %v2586, 0.0
        %v3053 = vmax.f32 %v2591, 0.0
        %v3054 = vmax.f32 %v2594, 0.0
        %v3055 = vmax.f32 %v2599, 0.0
        %v3056 = vmax.f32 %v2602, 0.0
        %v3057 = vmax.f32 %v2607, 0.0
        %v3058 = vmax.f32 %v2610, 0.0
        %v3059 = vmax.f32 %v2615, 0.0
        %v3060 = vmax.f32 %v2618, 0.0
        %v3061 = vmax.f32 %v2623, 0.0
        %v3062 = vmax.f32 %v2626, 0.0
        %v3063 = vmax.f32 %v2631, 0.0
        %v3064 = vmax.f32 %v2634, 0.0
        %v3065 = vmax.f32 %v2639, 0.0
        %v3066 = vmax.f32 %v2642, 0.0
        %v3067 = vmax.f32 %v2647, 0.0
        %v3068 = vmax.f32 %v2650, 0.0
        %v3069 = vmax.f32 %v2655, 0.0
        %v3070 = vmax.f32 %v2658, 0.0
        %v3071 = vmax.f32 %v2663, 0.0
        %v3072 = vmax.f32 %v2666, 0.0
        %v3073 = vmax.f32 %v2671, 0.0
        %v3074 = vmax.f32 %v2674, 0.0
        %v3075 = vmax.f32 %v2679, 0.0
        %v3076 = vmax.f32 %v2682, 0.0
        %v3077 = vmax.f32 %v2687, 0.0
        %v3078 = vmax.f32 %v2690, 0.0
        %v3079 = vmax.f32 %v2695, 0.0
        %v3080 = vmax.f32 %v2698, 0.0
        %v3081 = vmax.f32 %v2703, 0.0
        %v3082 = vmax.f32 %v2706, 0.0
        %v3083 = vmax.f32 %v2711, 0.0
        %v3084 = vmax.f32 %v2714, 0.0
        %v3085 = vmax.f32 %v2719, 0.0
        %v3086 = vmax.f32 %v2722, 0.0
        %v3087 = vmax.f32 %v2727, 0.0
        %v3088 = vmax.f32 %v2730, 0.0
        %v3089 = vmax.f32 %v2735, 0.0
        %v3090 = vmax.f32 %v2738, 0.0
        %v3091 = vmax.f32 %v2743, 0.0
        %v3092 = vmax.f32 %v2746, 0.0
        %v3093 = vmax.f32 %v2751, 0.0
        %v3094 = vmax.f32 %v2754, 0.0
        %v3095 = vmax.f32 %v2759, 0.0
        %v3096 = vmax.f32 %v2762, 0.0
        %v3097 = vmax.f32 %v2767, 0.0
        %v3098 = vmax.f32 %v2770, 0.0
        %v3099 = vmax.f32 %v2775, 0.0
        %v3100 = vmax.f32 %v2778, 0.0
        %v3101 = vmax.f32 %v2783, 0.0
        %v3102 = vmax.f32 %v2786, 0.0
        %v3103 = vmax.f32 %v2791, 0.0
        %v3104 = vmax.f32 %v2794, 0.0
        %v3105 = vmax.f32 %v2799, 0.0
        %v3106 = vmax.f32 %v2802, 0.0
        %v3107 = vmax.f32 %v2807, 0.0
        %v3108 = vmax.f32 %v2810, 0.0
        %v3109 = vmax.f32 %v2815, 0.0
        %v3110 = vmax.f32 %v2818, 0.0
        %v3111 = vmax.f32 %v2823, 0.0
        %v3112 = vmax.f32 %v2826, 0.0
        %v3113 = vmax.f32 %v2831, 0.0
        %v3114 = vmax.f32 %v2834, 0.0
        %v3115 = vmax.f32 %v2839, 0.0
        %v3116 = vmax.f32 %v2842, 0.0
        %v3117 = vmax.f32 %v2847, 0.0
        %v3118 = vmax.f32 %v2850, 0.0
        %v3119 = vmax.f32 %v2855, 0.0
        %v3120 = vmax.f32 %v2858, 0.0
        %v3121 = vmax.f32 %v2863, 0.0
        %v3122 = vmax.f32 %v2866, 0.0
        %v3123 = vmax.f32 %v2871, 0.0
        %v3124 = vmax.f32 %v2874, 0.0
        %v3125 = vmax.f32 %v2879, 0.0
        %v3126 = vmax.f32 %v2882, 0.0
        %v3127 = vmax.f32 %v2887, 0.0
        %v3128 = vmax.f32 %v2890, 0.0
        %v3129 = vmax.f32 %v2895, 0.0
        %v3130 = vmax.f32 %v2898, 0.0
        %v3131 = vmax.f32 %v2903, 0.0
        %v3132 = vmax.f32 %v2906, 0.0
        %v3133 = vmax.f32 %v2911, 0.0
        %v3134 = vmax.f32 %v2914, 0.0
        %v3135 = vmax.f32 %v2919, 0.0
        %v3136 = vmax.f32 %v2922, 0.0
        %v3137 = vmax.f32 %v2927, 0.0
        %v3138 = vmax.f32 %v2930, 0.0
        %v3139 = vmax.f32 %v2935, 0.0
        %v3140 = vmax.f32 %v2938, 0.0
        %v3141 = vmax.f32 %v2943, 0.0
        %v3142 = vmax.f32 %v2946, 0.0
        %v3143 = vmax.f32 %v2951, 0.0
        %v3144 = vmax.f32 %v2954, 0.0
        %v3145 = vmax.f32 %v2959, 0.0
        %v3146 = vmax.f32 %v2962, 0.0
        %v3147 = vmax.f32 %v2967, 0.0
        %v3148 = vmax.f32 %v2970, 0.0
        %v3149 = vmax.f32 %v2975, 0.0
        %v3150 = vmax.f32 %v2978, 0.0
        %v3151 = vmax.f32 %v2983, 0.0
        %v3152 = vmax.f32 %v2986, 0.0
        %v3153 = vmax.f32 %v2991, 0.0
        %v3154 = vmax.f32 %v2994, 0.0
        %v3155 = vmax.f32 %v2999, 0.0
        %v3156 = vmax.f32 %v3002, 0.0
        %v3157 = vmax.f32 %v3007, 0.0
        %v3158 = vmax.f32 %v3010, 0.0
        %v3159 = vmax.f32 %v3015, 0.0
        %v3160 = vmax.f32 %v3018, 0.0
        %v3161 = vmax.f32 %v3023, 0.0
        %v3162 = vmax.f32 %v3026, 0.0
        %v3163 = vmax.f32 %v3031, 0.0
        %v3164 = vmax.f32 %v3034, 0.0
        %v3165 = vpack.c.bf16 %v3038, %v3037
        %v3166 = vpack.c.bf16 %v3040, %v3039
        %v3167 = vpack.c.bf16 %v3042, %v3041
        %v3168 = vpack.c.bf16 %v3044, %v3043
        %v3169 = vpack.c.bf16 %v3046, %v3045
        %v3170 = vpack.c.bf16 %v3048, %v3047
        %v3171 = vpack.c.bf16 %v3050, %v3049
        %v3172 = vpack.c.bf16 %v3052, %v3051
        %v3173 = vpack.c.bf16 %v3054, %v3053
        %v3174 = vpack.c.bf16 %v3056, %v3055
        %v3175 = vpack.c.bf16 %v3058, %v3057
        %v3176 = vpack.c.bf16 %v3060, %v3059
        %v3177 = vpack.c.bf16 %v3062, %v3061
        %v3178 = vpack.c.bf16 %v3064, %v3063
        %v3179 = vpack.c.bf16 %v3066, %v3065
        %v3180 = vpack.c.bf16 %v3068, %v3067
        %v3181 = vpack.c.bf16 %v3070, %v3069
        %v3182 = vpack.c.bf16 %v3072, %v3071
        %v3183 = vpack.c.bf16 %v3074, %v3073
        %v3184 = vpack.c.bf16 %v3076, %v3075
        %v3185 = vpack.c.bf16 %v3078, %v3077
        %v3186 = vpack.c.bf16 %v3080, %v3079
        %v3187 = vpack.c.bf16 %v3082, %v3081
        %v3188 = vpack.c.bf16 %v3084, %v3083
        %v3189 = vpack.c.bf16 %v3086, %v3085
        %v3190 = vpack.c.bf16 %v3088, %v3087
        %v3191 = vpack.c.bf16 %v3090, %v3089
        %v3192 = vpack.c.bf16 %v3092, %v3091
        %v3193 = vpack.c.bf16 %v3094, %v3093
        %v3194 = vpack.c.bf16 %v3096, %v3095
        %v3195 = vpack.c.bf16 %v3098, %v3097
        %v3196 = vpack.c.bf16 %v3100, %v3099
        %v3197 = vpack.c.bf16 %v3102, %v3101
        %v3198 = vpack.c.bf16 %v3104, %v3103
        %v3199 = vpack.c.bf16 %v3106, %v3105
        %v3200 = vpack.c.bf16 %v3108, %v3107
        %v3201 = vpack.c.bf16 %v3110, %v3109
        %v3202 = vpack.c.bf16 %v3112, %v3111
        %v3203 = vpack.c.bf16 %v3114, %v3113
        %v3204 = vpack.c.bf16 %v3116, %v3115
        %v3205 = vpack.c.bf16 %v3118, %v3117
        %v3206 = vpack.c.bf16 %v3120, %v3119
        %v3207 = vpack.c.bf16 %v3122, %v3121
        %v3208 = vpack.c.bf16 %v3124, %v3123
        %v3209 = vpack.c.bf16 %v3126, %v3125
        %v3210 = vpack.c.bf16 %v3128, %v3127
        %v3211 = vpack.c.bf16 %v3130, %v3129
        %v3212 = vpack.c.bf16 %v3132, %v3131
        %v3213 = vpack.c.bf16 %v3134, %v3133
        %v3214 = vpack.c.bf16 %v3136, %v3135
        %v3215 = vpack.c.bf16 %v3138, %v3137
        %v3216 = vpack.c.bf16 %v3140, %v3139
        %v3217 = vpack.c.bf16 %v3142, %v3141
        %v3218 = vpack.c.bf16 %v3144, %v3143
        %v3219 = vpack.c.bf16 %v3146, %v3145
        %v3220 = vpack.c.bf16 %v3148, %v3147
        %v3221 = vpack.c.bf16 %v3150, %v3149
        %v3222 = vpack.c.bf16 %v3152, %v3151
        %v3223 = vpack.c.bf16 %v3154, %v3153
        %v3224 = vpack.c.bf16 %v3156, %v3155
        %v3225 = vpack.c.bf16 %v3158, %v3157
        %v3226 = vpack.c.bf16 %v3160, %v3159
        %v3227 = vpack.c.bf16 %v3162, %v3161
        %v3228 = vpack.c.bf16 %v3164, %v3163
        %v3229 = vld [vmem:[%s5] sm:$0xff]
        %v3230 = vld [vmem:[%s5 + $0x8] sm:$0xff]
        %v3231 = vld [vmem:[%s5 + $0x10] sm:$0xff]
        %v3232 = vld [vmem:[%s5 + $0x18] sm:$0xff]
        %v3233 = vld [vmem:[%s5 + $0x20] sm:$0xff]
        %v3234 = vld [vmem:[%s5 + $0x28] sm:$0xff]
        %v3235 = vld [vmem:[%s5 + $0x30] sm:$0xff]
        %v3236 = vld [vmem:[%s5 + $0x38] sm:$0xff]
        %v3237 = vld [vmem:[%s5 + $0x40] sm:$0xff]
        %v3238 = vld [vmem:[%s5 + $0x48] sm:$0xff]
        %v3239 = vld [vmem:[%s5 + $0x50] sm:$0xff]
        %v3240 = vld [vmem:[%s5 + $0x58] sm:$0xff]
        %v3241 = vld [vmem:[%s5 + $0x60] sm:$0xff]
        %v3242 = vld [vmem:[%s5 + $0x68] sm:$0xff]
        %v3243 = vld [vmem:[%s5 + $0x70] sm:$0xff]
        %v3244 = vld [vmem:[%s5 + $0x78] sm:$0xff]
        %v3245 = vld [vmem:[%s5 + $0x80] sm:$0xff]
        %v3246 = vld [vmem:[%s5 + $0x88] sm:$0xff]
        %v3247 = vld [vmem:[%s5 + $0x90] sm:$0xff]
        %v3248 = vld [vmem:[%s5 + $0x98] sm:$0xff]
        %v3249 = vld [vmem:[%s5 + $0xa0] sm:$0xff]
        %v3250 = vld [vmem:[%s5 + $0xa8] sm:$0xff]
        %v3251 = vld [vmem:[%s5 + $0xb0] sm:$0xff]
        %v3252 = vld [vmem:[%s5 + $0xb8] sm:$0xff]
        %v3253 = vld [vmem:[%s5 + $0xc0] sm:$0xff]
        %v3254 = vld [vmem:[%s5 + $0xc8] sm:$0xff]
        %v3255 = vld [vmem:[%s5 + $0xd0] sm:$0xff]
        %v3256 = vld [vmem:[%s5 + $0xd8] sm:$0xff]
        %v3257 = vld [vmem:[%s5 + $0xe0] sm:$0xff]
        %v3258 = vld [vmem:[%s5 + $0xe8] sm:$0xff]
        %v3259 = vld [vmem:[%s5 + $0xf0] sm:$0xff]
        %v3260 = vld [vmem:[%s5 + $0xf8] sm:$0xff]
        %v3261 = vld [vmem:[%s5 + $0x100] sm:$0xff]
        %v3262 = vld [vmem:[%s5 + $0x108] sm:$0xff]
        %v3263 = vld [vmem:[%s5 + $0x110] sm:$0xff]
        %v3264 = vld [vmem:[%s5 + $0x118] sm:$0xff]
        %v3265 = vld [vmem:[%s5 + $0x120] sm:$0xff]
        %v3266 = vld [vmem:[%s5 + $0x128] sm:$0xff]
        %v3267 = vld [vmem:[%s5 + $0x130] sm:$0xff]
        %v3268 = vld [vmem:[%s5 + $0x138] sm:$0xff]
        %v3269 = vld [vmem:[%s5 + $0x140] sm:$0xff]
        %v3270 = vld [vmem:[%s5 + $0x148] sm:$0xff]
        %v3271 = vld [vmem:[%s5 + $0x150] sm:$0xff]
        %v3272 = vld [vmem:[%s5 + $0x158] sm:$0xff]
        %v3273 = vld [vmem:[%s5 + $0x160] sm:$0xff]
        %v3274 = vld [vmem:[%s5 + $0x168] sm:$0xff]
        %v3275 = vld [vmem:[%s5 + $0x170] sm:$0xff]
        %v3276 = vld [vmem:[%s5 + $0x178] sm:$0xff]
        %v3277 = vld [vmem:[%s5 + $0x180] sm:$0xff]
        %v3278 = vld [vmem:[%s5 + $0x188] sm:$0xff]
        %v3279 = vld [vmem:[%s5 + $0x190] sm:$0xff]
        %v3280 = vld [vmem:[%s5 + $0x198] sm:$0xff]
        %v3281 = vld [vmem:[%s5 + $0x1a0] sm:$0xff]
        %v3282 = vld [vmem:[%s5 + $0x1a8] sm:$0xff]
        %v3283 = vld [vmem:[%s5 + $0x1b0] sm:$0xff]
        %v3284 = vld [vmem:[%s5 + $0x1b8] sm:$0xff]
        %v3285 = vld [vmem:[%s5 + $0x1c0] sm:$0xff]
        %v3286 = vld [vmem:[%s5 + $0x1c8] sm:$0xff]
        %v3287 = vld [vmem:[%s5 + $0x1d0] sm:$0xff]
        %v3288 = vld [vmem:[%s5 + $0x1d8] sm:$0xff]
        %v3289 = vld [vmem:[%s5 + $0x1e0] sm:$0xff]
        %v3290 = vld [vmem:[%s5 + $0x1e8] sm:$0xff]
        %v3291 = vld [vmem:[%s5 + $0x1f0] sm:$0xff]
        %v3292 = vld [vmem:[%s5 + $0x1f8] sm:$0xff]
        %v3357 = vunpack.c.l.b16 %v3229
        %v3358 = vunpack.c.h.b16 %v3229
        %v3359 = vunpack.c.l.b16 %v3230
        %v3360 = vunpack.c.h.b16 %v3230
        %v3361 = vunpack.c.l.b16 %v3231
        %v3362 = vunpack.c.h.b16 %v3231
        %v3363 = vunpack.c.l.b16 %v3232
        %v3364 = vunpack.c.h.b16 %v3232
        %v3365 = vunpack.c.l.b16 %v3233
        %v3366 = vunpack.c.h.b16 %v3233
        %v3367 = vunpack.c.l.b16 %v3234
        %v3368 = vunpack.c.h.b16 %v3234
        %v3369 = vunpack.c.l.b16 %v3235
        %v3370 = vunpack.c.h.b16 %v3235
        %v3371 = vunpack.c.l.b16 %v3236
        %v3372 = vunpack.c.h.b16 %v3236
        %v3373 = vunpack.c.l.b16 %v3237
        %v3374 = vunpack.c.h.b16 %v3237
        %v3375 = vunpack.c.l.b16 %v3238
        %v3376 = vunpack.c.h.b16 %v3238
        %v3377 = vunpack.c.l.b16 %v3239
        %v3378 = vunpack.c.h.b16 %v3239
        %v3379 = vunpack.c.l.b16 %v3240
        %v3380 = vunpack.c.h.b16 %v3240
        %v3381 = vunpack.c.l.b16 %v3241
        %v3382 = vunpack.c.h.b16 %v3241
        %v3383 = vunpack.c.l.b16 %v3242
        %v3384 = vunpack.c.h.b16 %v3242
        %v3385 = vunpack.c.l.b16 %v3243
        %v3386 = vunpack.c.h.b16 %v3243
        %v3387 = vunpack.c.l.b16 %v3244
        %v3388 = vunpack.c.h.b16 %v3244
        %v3389 = vunpack.c.l.b16 %v3245
        %v3390 = vunpack.c.h.b16 %v3245
        %v3391 = vunpack.c.l.b16 %v3246
        %v3392 = vunpack.c.h.b16 %v3246
        %v3393 = vunpack.c.l.b16 %v3247
        %v3394 = vunpack.c.h.b16 %v3247
        %v3395 = vunpack.c.l.b16 %v3248
        %v3396 = vunpack.c.h.b16 %v3248
        %v3397 = vunpack.c.l.b16 %v3249
        %v3398 = vunpack.c.h.b16 %v3249
        %v3399 = vunpack.c.l.b16 %v3250
        %v3400 = vunpack.c.h.b16 %v3250
        %v3401 = vunpack.c.l.b16 %v3251
        %v3402 = vunpack.c.h.b16 %v3251
        %v3403 = vunpack.c.l.b16 %v3252
        %v3404 = vunpack.c.h.b16 %v3252
        %v3405 = vunpack.c.l.b16 %v3253
        %v3406 = vunpack.c.h.b16 %v3253
        %v3407 = vunpack.c.l.b16 %v3254
        %v3408 = vunpack.c.h.b16 %v3254
        %v3409 = vunpack.c.l.b16 %v3255
        %v3410 = vunpack.c.h.b16 %v3255
        %v3411 = vunpack.c.l.b16 %v3256
        %v3412 = vunpack.c.h.b16 %v3256
        %v3413 = vunpack.c.l.b16 %v3257
        %v3414 = vunpack.c.h.b16 %v3257
        %v3415 = vunpack.c.l.b16 %v3258
        %v3416 = vunpack.c.h.b16 %v3258
        %v3417 = vunpack.c.l.b16 %v3259
        %v3418 = vunpack.c.h.b16 %v3259
        %v3419 = vunpack.c.l.b16 %v3260
        %v3420 = vunpack.c.h.b16 %v3260
        %v3421 = vunpack.c.l.b16 %v3261
        %v3422 = vunpack.c.h.b16 %v3261
        %v3423 = vunpack.c.l.b16 %v3262
        %v3424 = vunpack.c.h.b16 %v3262
        %v3425 = vunpack.c.l.b16 %v3263
        %v3426 = vunpack.c.h.b16 %v3263
        %v3427 = vunpack.c.l.b16 %v3264
        %v3428 = vunpack.c.h.b16 %v3264
        %v3429 = vunpack.c.l.b16 %v3265
        %v3430 = vunpack.c.h.b16 %v3265
        %v3431 = vunpack.c.l.b16 %v3266
        %v3432 = vunpack.c.h.b16 %v3266
        %v3433 = vunpack.c.l.b16 %v3267
        %v3434 = vunpack.c.h.b16 %v3267
        %v3435 = vunpack.c.l.b16 %v3268
        %v3436 = vunpack.c.h.b16 %v3268
        %v3437 = vunpack.c.l.b16 %v3269
        %v3438 = vunpack.c.h.b16 %v3269
        %v3439 = vunpack.c.l.b16 %v3270
        %v3440 = vunpack.c.h.b16 %v3270
        %v3441 = vunpack.c.l.b16 %v3271
        %v3442 = vunpack.c.h.b16 %v3271
        %v3443 = vunpack.c.l.b16 %v3272
        %v3444 = vunpack.c.h.b16 %v3272
        %v3445 = vunpack.c.l.b16 %v3273
        %v3446 = vunpack.c.h.b16 %v3273
        %v3447 = vunpack.c.l.b16 %v3274
        %v3448 = vunpack.c.h.b16 %v3274
        %v3449 = vunpack.c.l.b16 %v3275
        %v3450 = vunpack.c.h.b16 %v3275
        %v3451 = vunpack.c.l.b16 %v3276
        %v3452 = vunpack.c.h.b16 %v3276
        %v3453 = vunpack.c.l.b16 %v3277
        %v3454 = vunpack.c.h.b16 %v3277
        %v3455 = vunpack.c.l.b16 %v3278
        %v3456 = vunpack.c.h.b16 %v3278
        %v3457 = vunpack.c.l.b16 %v3279
        %v3458 = vunpack.c.h.b16 %v3279
        %v3459 = vunpack.c.l.b16 %v3280
        %v3460 = vunpack.c.h.b16 %v3280
        %v3461 = vunpack.c.l.b16 %v3281
        %v3462 = vunpack.c.h.b16 %v3281
        %v3463 = vunpack.c.l.b16 %v3282
        %v3464 = vunpack.c.h.b16 %v3282
        %v3465 = vunpack.c.l.b16 %v3283
        %v3466 = vunpack.c.h.b16 %v3283
        %v3467 = vunpack.c.l.b16 %v3284
        %v3468 = vunpack.c.h.b16 %v3284
        %v3469 = vunpack.c.l.b16 %v3285
        %v3470 = vunpack.c.h.b16 %v3285
        %v3471 = vunpack.c.l.b16 %v3286
        %v3472 = vunpack.c.h.b16 %v3286
        %v3473 = vunpack.c.l.b16 %v3287
        %v3474 = vunpack.c.h.b16 %v3287
        %v3475 = vunpack.c.l.b16 %v3288
        %v3476 = vunpack.c.h.b16 %v3288
        %v3477 = vunpack.c.l.b16 %v3289
        %v3478 = vunpack.c.h.b16 %v3289
        %v3479 = vunpack.c.l.b16 %v3290
        %v3480 = vunpack.c.h.b16 %v3290
        %v3481 = vunpack.c.l.b16 %v3291
        %v3482 = vunpack.c.h.b16 %v3291
        %v3483 = vunpack.c.l.b16 %v3292
        %v3484 = vunpack.c.h.b16 %v3292
        %v3485 = vpack.c.b16 %v3365, %v3357
        %v3486 = vpack.c.b16 %v3366, %v3358
        %v3487 = vpack.c.b16 %v3367, %v3359
        %v3488 = vpack.c.b16 %v3368, %v3360
        %v3489 = vpack.c.b16 %v3369, %v3361
        %v3490 = vpack.c.b16 %v3370, %v3362
        %v3491 = vpack.c.b16 %v3371, %v3363
        %v3492 = vpack.c.b16 %v3372, %v3364
        %v3493 = vpack.c.b16 %v3381, %v3373
        %v3494 = vpack.c.b16 %v3382, %v3374
        %v3495 = vpack.c.b16 %v3383, %v3375
        %v3496 = vpack.c.b16 %v3384, %v3376
        %v3497 = vpack.c.b16 %v3385, %v3377
        %v3498 = vpack.c.b16 %v3386, %v3378
        %v3499 = vpack.c.b16 %v3387, %v3379
        %v3500 = vpack.c.b16 %v3388, %v3380
        %v3501 = vpack.c.b16 %v3397, %v3389
        %v3502 = vpack.c.b16 %v3398, %v3390
        %v3503 = vpack.c.b16 %v3399, %v3391
        %v3504 = vpack.c.b16 %v3400, %v3392
        %v3505 = vpack.c.b16 %v3401, %v3393
        %v3506 = vpack.c.b16 %v3402, %v3394
        %v3507 = vpack.c.b16 %v3403, %v3395
        %v3508 = vpack.c.b16 %v3404, %v3396
        %v3509 = vpack.c.b16 %v3413, %v3405
        %v3510 = vpack.c.b16 %v3414, %v3406
        %v3511 = vpack.c.b16 %v3415, %v3407
        %v3512 = vpack.c.b16 %v3416, %v3408
        %v3513 = vpack.c.b16 %v3417, %v3409
        %v3514 = vpack.c.b16 %v3418, %v3410
        %v3515 = vpack.c.b16 %v3419, %v3411
        %v3516 = vpack.c.b16 %v3420, %v3412
        %v3517 = vpack.c.b16 %v3429, %v3421
        %v3518 = vpack.c.b16 %v3430, %v3422
        %v3519 = vpack.c.b16 %v3431, %v3423
        %v3520 = vpack.c.b16 %v3432, %v3424
        %v3521 = vpack.c.b16 %v3433, %v3425
        %v3522 = vpack.c.b16 %v3434, %v3426
        %v3523 = vpack.c.b16 %v3435, %v3427
        %v3524 = vpack.c.b16 %v3436, %v3428
        %v3525 = vpack.c.b16 %v3445, %v3437
        %v3526 = vpack.c.b16 %v3446, %v3438
        %v3527 = vpack.c.b16 %v3447, %v3439
        %v3528 = vpack.c.b16 %v3448, %v3440
        %v3529 = vpack.c.b16 %v3449, %v3441
        %v3530 = vpack.c.b16 %v3450, %v3442
        %v3531 = vpack.c.b16 %v3451, %v3443
        %v3532 = vpack.c.b16 %v3452, %v3444
        %v3533 = vpack.c.b16 %v3461, %v3453
        %v3534 = vpack.c.b16 %v3462, %v3454
        %v3535 = vpack.c.b16 %v3463, %v3455
        %v3536 = vpack.c.b16 %v3464, %v3456
        %v3537 = vpack.c.b16 %v3465, %v3457
        %v3538 = vpack.c.b16 %v3466, %v3458
        %v3539 = vpack.c.b16 %v3467, %v3459
        %v3540 = vpack.c.b16 %v3468, %v3460
        %v3541 = vpack.c.b16 %v3477, %v3469
        %v3542 = vpack.c.b16 %v3478, %v3470
        %v3543 = vpack.c.b16 %v3479, %v3471
        %v3544 = vpack.c.b16 %v3480, %v3472
        %v3545 = vpack.c.b16 %v3481, %v3473
        %v3546 = vpack.c.b16 %v3482, %v3474
        %v3547 = vpack.c.b16 %v3483, %v3475
        %v3548 = vpack.c.b16 %v3484, %v3476
        %3613 = vmatprep.subr.bf16.mxu0 %v3542
        %3614 = vmatpush1.bf16.msra.mxu0 %v3541
        %3615 = vmatprep.subr.bf16.mxu0 %v3534
        %3616 = vmatpush1.bf16.msra.mxu0 %v3533
        %3617 = vmatprep.subr.bf16.mxu0 %v3526
        %3618 = vmatpush1.bf16.msra.mxu0 %v3525
        %3619 = vmatprep.subr.bf16.mxu0 %v3518
        %3620 = vmatpush1.bf16.msra.mxu0 %v3517
        %3621 = vmatprep.subr.bf16.mxu0 %v3510
        %3622 = vmatpush1.bf16.msra.mxu0 %v3509
        %3623 = vmatprep.subr.bf16.mxu0 %v3502
        %3624 = vmatpush1.bf16.msra.mxu0 %v3501
        %3625 = vmatprep.subr.bf16.mxu0 %v3494
        %3626 = vmatpush1.bf16.msra.mxu0 %v3493
        %3627 = vmatprep.subr.bf16.mxu0 %v3486
        %3628 = vmatpush1.bf16.msra.mxu0 %v3485
        %3629 = vmatprep.subr.bf16.mxu0 0
        %3630 = vmatpush2.bf16.msra.mxu0 0
        %3631 = vmatprep.subr.bf16.mxu0 0
        %3632 = vmatpush2.bf16.msra.mxu0 0
        %3633 = vmatprep.subr.bf16.mxu0 0
        %3634 = vmatpush2.bf16.msra.mxu0 0
        %3635 = vmatprep.subr.bf16.mxu0 0
        %3636 = vmatpush2.bf16.msra.mxu0 0
        %3637 = vmatprep.subr.bf16.mxu0 0
        %3638 = vmatpush2.bf16.msra.mxu0 0
        %3639 = vmatprep.subr.bf16.mxu0 0
        %3640 = vmatpush2.bf16.msra.mxu0 0
        %3641 = vmatprep.subr.bf16.mxu0 0
        %3642 = vmatpush2.bf16.msra.mxu0 0
        %3643 = vmatprep.subr.bf16.mxu0 0
        %3644 = vmatpush2.bf16.msra.mxu0 0
        %3645 = vmatprep.mubr.bf16.mxu0 0
        %3646 = vmatmul.mubr.bf16.gmra.mxu0 %v3165
        %v3647 = vpop.f32.mrf.mxu0
        %v3648 = vadd.f32 0.0, %v3647
        %v3649 = vpop.f32.mrf.mxu0
        %v3650 = vadd.f32 0.0, %v3649
        %v3651 = vpop.f32.mrf.mxu0
        %v3652 = vadd.f32 0.0, %v3651
        %v3653 = vpop.f32.mrf.mxu0
        %v3654 = vadd.f32 0.0, %v3653
        %3655 = vmatprep.mubr.bf16.mxu0 0
        %3656 = vmatmul.mubr.bf16.gmra.mxu0 %v3166
        %v3657 = vpop.f32.mrf.mxu0
        %v3658 = vadd.f32 0.0, %v3657
        %v3659 = vpop.f32.mrf.mxu0
        %v3660 = vadd.f32 0.0, %v3659
        %v3661 = vpop.f32.mrf.mxu0
        %v3662 = vadd.f32 0.0, %v3661
        %v3663 = vpop.f32.mrf.mxu0
        %v3664 = vadd.f32 0.0, %v3663
        %3665 = vmatprep.mubr.bf16.mxu0 0
        %3666 = vmatmul.mubr.bf16.gmra.mxu0 %v3167
        %v3667 = vpop.f32.mrf.mxu0
        %v3668 = vadd.f32 0.0, %v3667
        %v3669 = vpop.f32.mrf.mxu0
        %v3670 = vadd.f32 0.0, %v3669
        %v3671 = vpop.f32.mrf.mxu0
        %v3672 = vadd.f32 0.0, %v3671
        %v3673 = vpop.f32.mrf.mxu0
        %v3674 = vadd.f32 0.0, %v3673
        %3675 = vmatprep.mubr.bf16.mxu0 0
        %3676 = vmatmul.mubr.bf16.gmra.mxu0 %v3168
        %v3677 = vpop.f32.mrf.mxu0
        %v3678 = vadd.f32 0.0, %v3677
        %v3679 = vpop.f32.mrf.mxu0
        %v3680 = vadd.f32 0.0, %v3679
        %v3681 = vpop.f32.mrf.mxu0
        %v3682 = vadd.f32 0.0, %v3681
        %v3683 = vpop.f32.mrf.mxu0
        %v3684 = vadd.f32 0.0, %v3683
        %3685 = vmatprep.mubr.bf16.mxu0 0
        %3686 = vmatmul.mubr.bf16.gmra.mxu0 %v3169
        %v3687 = vpop.f32.mrf.mxu0
        %v3688 = vadd.f32 0.0, %v3687
        %v3689 = vpop.f32.mrf.mxu0
        %v3690 = vadd.f32 0.0, %v3689
        %v3691 = vpop.f32.mrf.mxu0
        %v3692 = vadd.f32 0.0, %v3691
        %v3693 = vpop.f32.mrf.mxu0
        %v3694 = vadd.f32 0.0, %v3693
        %3695 = vmatprep.mubr.bf16.mxu0 0
        %3696 = vmatmul.mubr.bf16.gmra.mxu0 %v3170
        %v3697 = vpop.f32.mrf.mxu0
        %v3698 = vadd.f32 0.0, %v3697
        %v3699 = vpop.f32.mrf.mxu0
        %v3700 = vadd.f32 0.0, %v3699
        %v3701 = vpop.f32.mrf.mxu0
        %v3702 = vadd.f32 0.0, %v3701
        %v3703 = vpop.f32.mrf.mxu0
        %v3704 = vadd.f32 0.0, %v3703
        %3705 = vmatprep.mubr.bf16.mxu0 0
        %3706 = vmatmul.mubr.bf16.gmra.mxu0 %v3171
        %v3707 = vpop.f32.mrf.mxu0
        %v3708 = vadd.f32 0.0, %v3707
        %v3709 = vpop.f32.mrf.mxu0
        %v3710 = vadd.f32 0.0, %v3709
        %v3711 = vpop.f32.mrf.mxu0
        %v3712 = vadd.f32 0.0, %v3711
        %v3713 = vpop.f32.mrf.mxu0
        %v3714 = vadd.f32 0.0, %v3713
        %3715 = vmatprep.mubr.bf16.mxu0 0
        %3716 = vmatmul.mubr.bf16.gmra.mxu0 %v3172
        %v3717 = vpop.f32.mrf.mxu0
        %v3718 = vadd.f32 0.0, %v3717
        %v3719 = vpop.f32.mrf.mxu0
        %v3720 = vadd.f32 0.0, %v3719
        %v3721 = vpop.f32.mrf.mxu0
        %v3722 = vadd.f32 0.0, %v3721
        %v3723 = vpop.f32.mrf.mxu0
        %v3724 = vadd.f32 0.0, %v3723
        %3725 = vmatprep.mubr.bf16.mxu0 0
        %3726 = vmatmul.mubr.bf16.gmra.mxu0 %v3173
        %v3727 = vpop.f32.mrf.mxu0
        %v3728 = vadd.f32 0.0, %v3727
        %v3729 = vpop.f32.mrf.mxu0
        %v3730 = vadd.f32 0.0, %v3729
        %v3731 = vpop.f32.mrf.mxu0
        %v3732 = vadd.f32 0.0, %v3731
        %v3733 = vpop.f32.mrf.mxu0
        %v3734 = vadd.f32 0.0, %v3733
        %3735 = vmatprep.mubr.bf16.mxu0 0
        %3736 = vmatmul.mubr.bf16.gmra.mxu0 %v3174
        %v3737 = vpop.f32.mrf.mxu0
        %v3738 = vadd.f32 0.0, %v3737
        %v3739 = vpop.f32.mrf.mxu0
        %v3740 = vadd.f32 0.0, %v3739
        %v3741 = vpop.f32.mrf.mxu0
        %v3742 = vadd.f32 0.0, %v3741
        %v3743 = vpop.f32.mrf.mxu0
        %v3744 = vadd.f32 0.0, %v3743
        %3745 = vmatprep.mubr.bf16.mxu0 0
        %3746 = vmatmul.mubr.bf16.gmra.mxu0 %v3175
        %v3747 = vpop.f32.mrf.mxu0
        %v3748 = vadd.f32 0.0, %v3747
        %v3749 = vpop.f32.mrf.mxu0
        %v3750 = vadd.f32 0.0, %v3749
        %v3751 = vpop.f32.mrf.mxu0
        %v3752 = vadd.f32 0.0, %v3751
        %v3753 = vpop.f32.mrf.mxu0
        %v3754 = vadd.f32 0.0, %v3753
        %3755 = vmatprep.mubr.bf16.mxu0 0
        %3756 = vmatmul.mubr.bf16.gmra.mxu0 %v3176
        %v3757 = vpop.f32.mrf.mxu0
        %v3758 = vadd.f32 0.0, %v3757
        %v3759 = vpop.f32.mrf.mxu0
        %v3760 = vadd.f32 0.0, %v3759
        %v3761 = vpop.f32.mrf.mxu0
        %v3762 = vadd.f32 0.0, %v3761
        %v3763 = vpop.f32.mrf.mxu0
        %v3764 = vadd.f32 0.0, %v3763
        %3765 = vmatprep.mubr.bf16.mxu0 0
        %3766 = vmatmul.mubr.bf16.gmra.mxu0 %v3177
        %v3767 = vpop.f32.mrf.mxu0
        %v3768 = vadd.f32 0.0, %v3767
        %v3769 = vpop.f32.mrf.mxu0
        %v3770 = vadd.f32 0.0, %v3769
        %v3771 = vpop.f32.mrf.mxu0
        %v3772 = vadd.f32 0.0, %v3771
        %v3773 = vpop.f32.mrf.mxu0
        %v3774 = vadd.f32 0.0, %v3773
        %3775 = vmatprep.mubr.bf16.mxu0 0
        %3776 = vmatmul.mubr.bf16.gmra.mxu0 %v3178
        %v3777 = vpop.f32.mrf.mxu0
        %v3778 = vadd.f32 0.0, %v3777
        %v3779 = vpop.f32.mrf.mxu0
        %v3780 = vadd.f32 0.0, %v3779
        %v3781 = vpop.f32.mrf.mxu0
        %v3782 = vadd.f32 0.0, %v3781
        %v3783 = vpop.f32.mrf.mxu0
        %v3784 = vadd.f32 0.0, %v3783
        %3785 = vmatprep.mubr.bf16.mxu0 0
        %3786 = vmatmul.mubr.bf16.gmra.mxu0 %v3179
        %v3787 = vpop.f32.mrf.mxu0
        %v3788 = vadd.f32 0.0, %v3787
        %v3789 = vpop.f32.mrf.mxu0
        %v3790 = vadd.f32 0.0, %v3789
        %v3791 = vpop.f32.mrf.mxu0
        %v3792 = vadd.f32 0.0, %v3791
        %v3793 = vpop.f32.mrf.mxu0
        %v3794 = vadd.f32 0.0, %v3793
        %3795 = vmatprep.mubr.bf16.mxu0 0
        %3796 = vmatmul.mubr.bf16.gmra.mxu0 %v3180
        %v3797 = vpop.f32.mrf.mxu0
        %v3798 = vadd.f32 0.0, %v3797
        %v3799 = vpop.f32.mrf.mxu0
        %v3800 = vadd.f32 0.0, %v3799
        %v3801 = vpop.f32.mrf.mxu0
        %v3802 = vadd.f32 0.0, %v3801
        %v3803 = vpop.f32.mrf.mxu0
        %v3804 = vadd.f32 0.0, %v3803
        %3805 = vmatprep.mubr.bf16.mxu0 0
        %3806 = vmatmul.mubr.bf16.gmra.mxu0 %v3181
        %v3807 = vpop.f32.mrf.mxu0
        %v3808 = vadd.f32 0.0, %v3807
        %v3809 = vpop.f32.mrf.mxu0
        %v3810 = vadd.f32 0.0, %v3809
        %v3811 = vpop.f32.mrf.mxu0
        %v3812 = vadd.f32 0.0, %v3811
        %v3813 = vpop.f32.mrf.mxu0
        %v3814 = vadd.f32 0.0, %v3813
        %3815 = vmatprep.mubr.bf16.mxu0 0
        %3816 = vmatmul.mubr.bf16.gmra.mxu0 %v3182
        %v3817 = vpop.f32.mrf.mxu0
        %v3818 = vadd.f32 0.0, %v3817
        %v3819 = vpop.f32.mrf.mxu0
        %v3820 = vadd.f32 0.0, %v3819
        %v3821 = vpop.f32.mrf.mxu0
        %v3822 = vadd.f32 0.0, %v3821
        %v3823 = vpop.f32.mrf.mxu0
        %v3824 = vadd.f32 0.0, %v3823
        %3825 = vmatprep.mubr.bf16.mxu0 0
        %3826 = vmatmul.mubr.bf16.gmra.mxu0 %v3183
        %v3827 = vpop.f32.mrf.mxu0
        %v3828 = vadd.f32 0.0, %v3827
        %v3829 = vpop.f32.mrf.mxu0
        %v3830 = vadd.f32 0.0, %v3829
        %v3831 = vpop.f32.mrf.mxu0
        %v3832 = vadd.f32 0.0, %v3831
        %v3833 = vpop.f32.mrf.mxu0
        %v3834 = vadd.f32 0.0, %v3833
        %3835 = vmatprep.mubr.bf16.mxu0 0
        %3836 = vmatmul.mubr.bf16.gmra.mxu0 %v3184
        %v3837 = vpop.f32.mrf.mxu0
        %v3838 = vadd.f32 0.0, %v3837
        %v3839 = vpop.f32.mrf.mxu0
        %v3840 = vadd.f32 0.0, %v3839
        %v3841 = vpop.f32.mrf.mxu0
        %v3842 = vadd.f32 0.0, %v3841
        %v3843 = vpop.f32.mrf.mxu0
        %v3844 = vadd.f32 0.0, %v3843
        %3845 = vmatprep.mubr.bf16.mxu0 0
        %3846 = vmatmul.mubr.bf16.gmra.mxu0 %v3185
        %v3847 = vpop.f32.mrf.mxu0
        %v3848 = vadd.f32 0.0, %v3847
        %v3849 = vpop.f32.mrf.mxu0
        %v3850 = vadd.f32 0.0, %v3849
        %v3851 = vpop.f32.mrf.mxu0
        %v3852 = vadd.f32 0.0, %v3851
        %v3853 = vpop.f32.mrf.mxu0
        %v3854 = vadd.f32 0.0, %v3853
        %3855 = vmatprep.mubr.bf16.mxu0 0
        %3856 = vmatmul.mubr.bf16.gmra.mxu0 %v3186
        %v3857 = vpop.f32.mrf.mxu0
        %v3858 = vadd.f32 0.0, %v3857
        %v3859 = vpop.f32.mrf.mxu0
        %v3860 = vadd.f32 0.0, %v3859
        %v3861 = vpop.f32.mrf.mxu0
        %v3862 = vadd.f32 0.0, %v3861
        %v3863 = vpop.f32.mrf.mxu0
        %v3864 = vadd.f32 0.0, %v3863
        %3865 = vmatprep.mubr.bf16.mxu0 0
        %3866 = vmatmul.mubr.bf16.gmra.mxu0 %v3187
        %v3867 = vpop.f32.mrf.mxu0
        %v3868 = vadd.f32 0.0, %v3867
        %v3869 = vpop.f32.mrf.mxu0
        %v3870 = vadd.f32 0.0, %v3869
        %v3871 = vpop.f32.mrf.mxu0
        %v3872 = vadd.f32 0.0, %v3871
        %v3873 = vpop.f32.mrf.mxu0
        %v3874 = vadd.f32 0.0, %v3873
        %3875 = vmatprep.mubr.bf16.mxu0 0
        %3876 = vmatmul.mubr.bf16.gmra.mxu0 %v3188
        %v3877 = vpop.f32.mrf.mxu0
        %v3878 = vadd.f32 0.0, %v3877
        %v3879 = vpop.f32.mrf.mxu0
        %v3880 = vadd.f32 0.0, %v3879
        %v3881 = vpop.f32.mrf.mxu0
        %v3882 = vadd.f32 0.0, %v3881
        %v3883 = vpop.f32.mrf.mxu0
        %v3884 = vadd.f32 0.0, %v3883
        %3885 = vmatprep.mubr.bf16.mxu0 0
        %3886 = vmatmul.mubr.bf16.gmra.mxu0 %v3189
        %v3887 = vpop.f32.mrf.mxu0
        %v3888 = vadd.f32 0.0, %v3887
        %v3889 = vpop.f32.mrf.mxu0
        %v3890 = vadd.f32 0.0, %v3889
        %v3891 = vpop.f32.mrf.mxu0
        %v3892 = vadd.f32 0.0, %v3891
        %v3893 = vpop.f32.mrf.mxu0
        %v3894 = vadd.f32 0.0, %v3893
        %3895 = vmatprep.mubr.bf16.mxu0 0
        %3896 = vmatmul.mubr.bf16.gmra.mxu0 %v3190
        %v3897 = vpop.f32.mrf.mxu0
        %v3898 = vadd.f32 0.0, %v3897
        %v3899 = vpop.f32.mrf.mxu0
        %v3900 = vadd.f32 0.0, %v3899
        %v3901 = vpop.f32.mrf.mxu0
        %v3902 = vadd.f32 0.0, %v3901
        %v3903 = vpop.f32.mrf.mxu0
        %v3904 = vadd.f32 0.0, %v3903
        %3905 = vmatprep.mubr.bf16.mxu0 0
        %3906 = vmatmul.mubr.bf16.gmra.mxu0 %v3191
        %v3907 = vpop.f32.mrf.mxu0
        %v3908 = vadd.f32 0.0, %v3907
        %v3909 = vpop.f32.mrf.mxu0
        %v3910 = vadd.f32 0.0, %v3909
        %v3911 = vpop.f32.mrf.mxu0
        %v3912 = vadd.f32 0.0, %v3911
        %v3913 = vpop.f32.mrf.mxu0
        %v3914 = vadd.f32 0.0, %v3913
        %3915 = vmatprep.mubr.bf16.mxu0 0
        %3916 = vmatmul.mubr.bf16.gmra.mxu0 %v3192
        %v3917 = vpop.f32.mrf.mxu0
        %v3918 = vadd.f32 0.0, %v3917
        %v3919 = vpop.f32.mrf.mxu0
        %v3920 = vadd.f32 0.0, %v3919
        %v3921 = vpop.f32.mrf.mxu0
        %v3922 = vadd.f32 0.0, %v3921
        %v3923 = vpop.f32.mrf.mxu0
        %v3924 = vadd.f32 0.0, %v3923
        %3925 = vmatprep.mubr.bf16.mxu0 0
        %3926 = vmatmul.mubr.bf16.gmra.mxu0 %v3193
        %v3927 = vpop.f32.mrf.mxu0
        %v3928 = vadd.f32 0.0, %v3927
        %v3929 = vpop.f32.mrf.mxu0
        %v3930 = vadd.f32 0.0, %v3929
        %v3931 = vpop.f32.mrf.mxu0
        %v3932 = vadd.f32 0.0, %v3931
        %v3933 = vpop.f32.mrf.mxu0
        %v3934 = vadd.f32 0.0, %v3933
        %3935 = vmatprep.mubr.bf16.mxu0 0
        %3936 = vmatmul.mubr.bf16.gmra.mxu0 %v3194
        %v3937 = vpop.f32.mrf.mxu0
        %v3938 = vadd.f32 0.0, %v3937
        %v3939 = vpop.f32.mrf.mxu0
        %v3940 = vadd.f32 0.0, %v3939
        %v3941 = vpop.f32.mrf.mxu0
        %v3942 = vadd.f32 0.0, %v3941
        %v3943 = vpop.f32.mrf.mxu0
        %v3944 = vadd.f32 0.0, %v3943
        %3945 = vmatprep.mubr.bf16.mxu0 0
        %3946 = vmatmul.mubr.bf16.gmra.mxu0 %v3195
        %v3947 = vpop.f32.mrf.mxu0
        %v3948 = vadd.f32 0.0, %v3947
        %v3949 = vpop.f32.mrf.mxu0
        %v3950 = vadd.f32 0.0, %v3949
        %v3951 = vpop.f32.mrf.mxu0
        %v3952 = vadd.f32 0.0, %v3951
        %v3953 = vpop.f32.mrf.mxu0
        %v3954 = vadd.f32 0.0, %v3953
        %3955 = vmatprep.mubr.bf16.mxu0 0
        %3956 = vmatmul.mubr.bf16.gmra.mxu0 %v3196
        %v3957 = vpop.f32.mrf.mxu0
        %v3958 = vadd.f32 0.0, %v3957
        %v3959 = vpop.f32.mrf.mxu0
        %v3960 = vadd.f32 0.0, %v3959
        %v3961 = vpop.f32.mrf.mxu0
        %v3962 = vadd.f32 0.0, %v3961
        %v3963 = vpop.f32.mrf.mxu0
        %v3964 = vadd.f32 0.0, %v3963
        %3965 = vmatprep.mubr.bf16.mxu0 0
        %3966 = vmatmul.mubr.bf16.gmra.mxu0 %v3197
        %v3967 = vpop.f32.mrf.mxu0
        %v3968 = vadd.f32 0.0, %v3967
        %v3969 = vpop.f32.mrf.mxu0
        %v3970 = vadd.f32 0.0, %v3969
        %v3971 = vpop.f32.mrf.mxu0
        %v3972 = vadd.f32 0.0, %v3971
        %v3973 = vpop.f32.mrf.mxu0
        %v3974 = vadd.f32 0.0, %v3973
        %3975 = vmatprep.mubr.bf16.mxu0 0
        %3976 = vmatmul.mubr.bf16.gmra.mxu0 %v3198
        %v3977 = vpop.f32.mrf.mxu0
        %v3978 = vadd.f32 0.0, %v3977
        %v3979 = vpop.f32.mrf.mxu0
        %v3980 = vadd.f32 0.0, %v3979
        %v3981 = vpop.f32.mrf.mxu0
        %v3982 = vadd.f32 0.0, %v3981
        %v3983 = vpop.f32.mrf.mxu0
        %v3984 = vadd.f32 0.0, %v3983
        %3985 = vmatprep.mubr.bf16.mxu0 0
        %3986 = vmatmul.mubr.bf16.gmra.mxu0 %v3199
        %v3987 = vpop.f32.mrf.mxu0
        %v3988 = vadd.f32 0.0, %v3987
        %v3989 = vpop.f32.mrf.mxu0
        %v3990 = vadd.f32 0.0, %v3989
        %v3991 = vpop.f32.mrf.mxu0
        %v3992 = vadd.f32 0.0, %v3991
        %v3993 = vpop.f32.mrf.mxu0
        %v3994 = vadd.f32 0.0, %v3993
        %3995 = vmatprep.mubr.bf16.mxu0 0
        %3996 = vmatmul.mubr.bf16.gmra.mxu0 %v3200
        %v3997 = vpop.f32.mrf.mxu0
        %v3998 = vadd.f32 0.0, %v3997
        %v3999 = vpop.f32.mrf.mxu0
        %v4000 = vadd.f32 0.0, %v3999
        %v4001 = vpop.f32.mrf.mxu0
        %v4002 = vadd.f32 0.0, %v4001
        %v4003 = vpop.f32.mrf.mxu0
        %v4004 = vadd.f32 0.0, %v4003
        %4005 = vmatprep.mubr.bf16.mxu0 0
        %4006 = vmatmul.mubr.bf16.gmra.mxu0 %v3201
        %v4007 = vpop.f32.mrf.mxu0
        %v4008 = vadd.f32 0.0, %v4007
        %v4009 = vpop.f32.mrf.mxu0
        %v4010 = vadd.f32 0.0, %v4009
        %v4011 = vpop.f32.mrf.mxu0
        %v4012 = vadd.f32 0.0, %v4011
        %v4013 = vpop.f32.mrf.mxu0
        %v4014 = vadd.f32 0.0, %v4013
        %4015 = vmatprep.mubr.bf16.mxu0 0
        %4016 = vmatmul.mubr.bf16.gmra.mxu0 %v3202
        %v4017 = vpop.f32.mrf.mxu0
        %v4018 = vadd.f32 0.0, %v4017
        %v4019 = vpop.f32.mrf.mxu0
        %v4020 = vadd.f32 0.0, %v4019
        %v4021 = vpop.f32.mrf.mxu0
        %v4022 = vadd.f32 0.0, %v4021
        %v4023 = vpop.f32.mrf.mxu0
        %v4024 = vadd.f32 0.0, %v4023
        %4025 = vmatprep.mubr.bf16.mxu0 0
        %4026 = vmatmul.mubr.bf16.gmra.mxu0 %v3203
        %v4027 = vpop.f32.mrf.mxu0
        %v4028 = vadd.f32 0.0, %v4027
        %v4029 = vpop.f32.mrf.mxu0
        %v4030 = vadd.f32 0.0, %v4029
        %v4031 = vpop.f32.mrf.mxu0
        %v4032 = vadd.f32 0.0, %v4031
        %v4033 = vpop.f32.mrf.mxu0
        %v4034 = vadd.f32 0.0, %v4033
        %4035 = vmatprep.mubr.bf16.mxu0 0
        %4036 = vmatmul.mubr.bf16.gmra.mxu0 %v3204
        %v4037 = vpop.f32.mrf.mxu0
        %v4038 = vadd.f32 0.0, %v4037
        %v4039 = vpop.f32.mrf.mxu0
        %v4040 = vadd.f32 0.0, %v4039
        %v4041 = vpop.f32.mrf.mxu0
        %v4042 = vadd.f32 0.0, %v4041
        %v4043 = vpop.f32.mrf.mxu0
        %v4044 = vadd.f32 0.0, %v4043
        %4045 = vmatprep.mubr.bf16.mxu0 0
        %4046 = vmatmul.mubr.bf16.gmra.mxu0 %v3205
        %v4047 = vpop.f32.mrf.mxu0
        %v4048 = vadd.f32 0.0, %v4047
        %v4049 = vpop.f32.mrf.mxu0
        %v4050 = vadd.f32 0.0, %v4049
        %v4051 = vpop.f32.mrf.mxu0
        %v4052 = vadd.f32 0.0, %v4051
        %v4053 = vpop.f32.mrf.mxu0
        %v4054 = vadd.f32 0.0, %v4053
        %4055 = vmatprep.mubr.bf16.mxu0 0
        %4056 = vmatmul.mubr.bf16.gmra.mxu0 %v3206
        %v4057 = vpop.f32.mrf.mxu0
        %v4058 = vadd.f32 0.0, %v4057
        %v4059 = vpop.f32.mrf.mxu0
        %v4060 = vadd.f32 0.0, %v4059
        %v4061 = vpop.f32.mrf.mxu0
        %v4062 = vadd.f32 0.0, %v4061
        %v4063 = vpop.f32.mrf.mxu0
        %v4064 = vadd.f32 0.0, %v4063
        %4065 = vmatprep.mubr.bf16.mxu0 0
        %4066 = vmatmul.mubr.bf16.gmra.mxu0 %v3207
        %v4067 = vpop.f32.mrf.mxu0
        %v4068 = vadd.f32 0.0, %v4067
        %v4069 = vpop.f32.mrf.mxu0
        %v4070 = vadd.f32 0.0, %v4069
        %v4071 = vpop.f32.mrf.mxu0
        %v4072 = vadd.f32 0.0, %v4071
        %v4073 = vpop.f32.mrf.mxu0
        %v4074 = vadd.f32 0.0, %v4073
        %4075 = vmatprep.mubr.bf16.mxu0 0
        %4076 = vmatmul.mubr.bf16.gmra.mxu0 %v3208
        %v4077 = vpop.f32.mrf.mxu0
        %v4078 = vadd.f32 0.0, %v4077
        %v4079 = vpop.f32.mrf.mxu0
        %v4080 = vadd.f32 0.0, %v4079
        %v4081 = vpop.f32.mrf.mxu0
        %v4082 = vadd.f32 0.0, %v4081
        %v4083 = vpop.f32.mrf.mxu0
        %v4084 = vadd.f32 0.0, %v4083
        %4085 = vmatprep.mubr.bf16.mxu0 0
        %4086 = vmatmul.mubr.bf16.gmra.mxu0 %v3209
        %v4087 = vpop.f32.mrf.mxu0
        %v4088 = vadd.f32 0.0, %v4087
        %v4089 = vpop.f32.mrf.mxu0
        %v4090 = vadd.f32 0.0, %v4089
        %v4091 = vpop.f32.mrf.mxu0
        %v4092 = vadd.f32 0.0, %v4091
        %v4093 = vpop.f32.mrf.mxu0
        %v4094 = vadd.f32 0.0, %v4093
        %4095 = vmatprep.mubr.bf16.mxu0 0
        %4096 = vmatmul.mubr.bf16.gmra.mxu0 %v3210
        %v4097 = vpop.f32.mrf.mxu0
        %v4098 = vadd.f32 0.0, %v4097
        %v4099 = vpop.f32.mrf.mxu0
        %v4100 = vadd.f32 0.0, %v4099
        %v4101 = vpop.f32.mrf.mxu0
        %v4102 = vadd.f32 0.0, %v4101
        %v4103 = vpop.f32.mrf.mxu0
        %v4104 = vadd.f32 0.0, %v4103
        %4105 = vmatprep.mubr.bf16.mxu0 0
        %4106 = vmatmul.mubr.bf16.gmra.mxu0 %v3211
        %v4107 = vpop.f32.mrf.mxu0
        %v4108 = vadd.f32 0.0, %v4107
        %v4109 = vpop.f32.mrf.mxu0
        %v4110 = vadd.f32 0.0, %v4109
        %v4111 = vpop.f32.mrf.mxu0
        %v4112 = vadd.f32 0.0, %v4111
        %v4113 = vpop.f32.mrf.mxu0
        %v4114 = vadd.f32 0.0, %v4113
        %4115 = vmatprep.mubr.bf16.mxu0 0
        %4116 = vmatmul.mubr.bf16.gmra.mxu0 %v3212
        %v4117 = vpop.f32.mrf.mxu0
        %v4118 = vadd.f32 0.0, %v4117
        %v4119 = vpop.f32.mrf.mxu0
        %v4120 = vadd.f32 0.0, %v4119
        %v4121 = vpop.f32.mrf.mxu0
        %v4122 = vadd.f32 0.0, %v4121
        %v4123 = vpop.f32.mrf.mxu0
        %v4124 = vadd.f32 0.0, %v4123
        %4125 = vmatprep.mubr.bf16.mxu0 0
        %4126 = vmatmul.mubr.bf16.gmra.mxu0 %v3213
        %v4127 = vpop.f32.mrf.mxu0
        %v4128 = vadd.f32 0.0, %v4127
        %v4129 = vpop.f32.mrf.mxu0
        %v4130 = vadd.f32 0.0, %v4129
        %v4131 = vpop.f32.mrf.mxu0
        %v4132 = vadd.f32 0.0, %v4131
        %v4133 = vpop.f32.mrf.mxu0
        %v4134 = vadd.f32 0.0, %v4133
        %4135 = vmatprep.mubr.bf16.mxu0 0
        %4136 = vmatmul.mubr.bf16.gmra.mxu0 %v3214
        %v4137 = vpop.f32.mrf.mxu0
        %v4138 = vadd.f32 0.0, %v4137
        %v4139 = vpop.f32.mrf.mxu0
        %v4140 = vadd.f32 0.0, %v4139
        %v4141 = vpop.f32.mrf.mxu0
        %v4142 = vadd.f32 0.0, %v4141
        %v4143 = vpop.f32.mrf.mxu0
        %v4144 = vadd.f32 0.0, %v4143
        %4145 = vmatprep.mubr.bf16.mxu0 0
        %4146 = vmatmul.mubr.bf16.gmra.mxu0 %v3215
        %v4147 = vpop.f32.mrf.mxu0
        %v4148 = vadd.f32 0.0, %v4147
        %v4149 = vpop.f32.mrf.mxu0
        %v4150 = vadd.f32 0.0, %v4149
        %v4151 = vpop.f32.mrf.mxu0
        %v4152 = vadd.f32 0.0, %v4151
        %v4153 = vpop.f32.mrf.mxu0
        %v4154 = vadd.f32 0.0, %v4153
        %4155 = vmatprep.mubr.bf16.mxu0 0
        %4156 = vmatmul.mubr.bf16.gmra.mxu0 %v3216
        %v4157 = vpop.f32.mrf.mxu0
        %v4158 = vadd.f32 0.0, %v4157
        %v4159 = vpop.f32.mrf.mxu0
        %v4160 = vadd.f32 0.0, %v4159
        %v4161 = vpop.f32.mrf.mxu0
        %v4162 = vadd.f32 0.0, %v4161
        %v4163 = vpop.f32.mrf.mxu0
        %v4164 = vadd.f32 0.0, %v4163
        %4165 = vmatprep.mubr.bf16.mxu0 0
        %4166 = vmatmul.mubr.bf16.gmra.mxu0 %v3217
        %v4167 = vpop.f32.mrf.mxu0
        %v4168 = vadd.f32 0.0, %v4167
        %v4169 = vpop.f32.mrf.mxu0
        %v4170 = vadd.f32 0.0, %v4169
        %v4171 = vpop.f32.mrf.mxu0
        %v4172 = vadd.f32 0.0, %v4171
        %v4173 = vpop.f32.mrf.mxu0
        %v4174 = vadd.f32 0.0, %v4173
        %4175 = vmatprep.mubr.bf16.mxu0 0
        %4176 = vmatmul.mubr.bf16.gmra.mxu0 %v3218
        %v4177 = vpop.f32.mrf.mxu0
        %v4178 = vadd.f32 0.0, %v4177
        %v4179 = vpop.f32.mrf.mxu0
        %v4180 = vadd.f32 0.0, %v4179
        %v4181 = vpop.f32.mrf.mxu0
        %v4182 = vadd.f32 0.0, %v4181
        %v4183 = vpop.f32.mrf.mxu0
        %v4184 = vadd.f32 0.0, %v4183
        %4185 = vmatprep.mubr.bf16.mxu0 0
        %4186 = vmatmul.mubr.bf16.gmra.mxu0 %v3219
        %v4187 = vpop.f32.mrf.mxu0
        %v4188 = vadd.f32 0.0, %v4187
        %v4189 = vpop.f32.mrf.mxu0
        %v4190 = vadd.f32 0.0, %v4189
        %v4191 = vpop.f32.mrf.mxu0
        %v4192 = vadd.f32 0.0, %v4191
        %v4193 = vpop.f32.mrf.mxu0
        %v4194 = vadd.f32 0.0, %v4193
        %4195 = vmatprep.mubr.bf16.mxu0 0
        %4196 = vmatmul.mubr.bf16.gmra.mxu0 %v3220
        %v4197 = vpop.f32.mrf.mxu0
        %v4198 = vadd.f32 0.0, %v4197
        %v4199 = vpop.f32.mrf.mxu0
        %v4200 = vadd.f32 0.0, %v4199
        %v4201 = vpop.f32.mrf.mxu0
        %v4202 = vadd.f32 0.0, %v4201
        %v4203 = vpop.f32.mrf.mxu0
        %v4204 = vadd.f32 0.0, %v4203
        %4205 = vmatprep.mubr.bf16.mxu0 0
        %4206 = vmatmul.mubr.bf16.gmra.mxu0 %v3221
        %v4207 = vpop.f32.mrf.mxu0
        %v4208 = vadd.f32 0.0, %v4207
        %v4209 = vpop.f32.mrf.mxu0
        %v4210 = vadd.f32 0.0, %v4209
        %v4211 = vpop.f32.mrf.mxu0
        %v4212 = vadd.f32 0.0, %v4211
        %v4213 = vpop.f32.mrf.mxu0
        %v4214 = vadd.f32 0.0, %v4213
        %4215 = vmatprep.mubr.bf16.mxu0 0
        %4216 = vmatmul.mubr.bf16.gmra.mxu0 %v3222
        %v4217 = vpop.f32.mrf.mxu0
        %v4218 = vadd.f32 0.0, %v4217
        %v4219 = vpop.f32.mrf.mxu0
        %v4220 = vadd.f32 0.0, %v4219
        %v4221 = vpop.f32.mrf.mxu0
        %v4222 = vadd.f32 0.0, %v4221
        %v4223 = vpop.f32.mrf.mxu0
        %v4224 = vadd.f32 0.0, %v4223
        %4225 = vmatprep.mubr.bf16.mxu0 0
        %4226 = vmatmul.mubr.bf16.gmra.mxu0 %v3223
        %v4227 = vpop.f32.mrf.mxu0
        %v4228 = vadd.f32 0.0, %v4227
        %v4229 = vpop.f32.mrf.mxu0
        %v4230 = vadd.f32 0.0, %v4229
        %v4231 = vpop.f32.mrf.mxu0
        %v4232 = vadd.f32 0.0, %v4231
        %v4233 = vpop.f32.mrf.mxu0
        %v4234 = vadd.f32 0.0, %v4233
        %4235 = vmatprep.mubr.bf16.mxu0 0
        %4236 = vmatmul.mubr.bf16.gmra.mxu0 %v3224
        %v4237 = vpop.f32.mrf.mxu0
        %v4238 = vadd.f32 0.0, %v4237
        %v4239 = vpop.f32.mrf.mxu0
        %v4240 = vadd.f32 0.0, %v4239
        %v4241 = vpop.f32.mrf.mxu0
        %v4242 = vadd.f32 0.0, %v4241
        %v4243 = vpop.f32.mrf.mxu0
        %v4244 = vadd.f32 0.0, %v4243
        %4245 = vmatprep.mubr.bf16.mxu0 0
        %4246 = vmatmul.mubr.bf16.gmra.mxu0 %v3225
        %v4247 = vpop.f32.mrf.mxu0
        %v4248 = vadd.f32 0.0, %v4247
        %v4249 = vpop.f32.mrf.mxu0
        %v4250 = vadd.f32 0.0, %v4249
        %v4251 = vpop.f32.mrf.mxu0
        %v4252 = vadd.f32 0.0, %v4251
        %v4253 = vpop.f32.mrf.mxu0
        %v4254 = vadd.f32 0.0, %v4253
        %4255 = vmatprep.mubr.bf16.mxu0 0
        %4256 = vmatmul.mubr.bf16.gmra.mxu0 %v3226
        %v4257 = vpop.f32.mrf.mxu0
        %v4258 = vadd.f32 0.0, %v4257
        %v4259 = vpop.f32.mrf.mxu0
        %v4260 = vadd.f32 0.0, %v4259
        %v4261 = vpop.f32.mrf.mxu0
        %v4262 = vadd.f32 0.0, %v4261
        %v4263 = vpop.f32.mrf.mxu0
        %v4264 = vadd.f32 0.0, %v4263
        %4265 = vmatprep.mubr.bf16.mxu0 0
        %4266 = vmatmul.mubr.bf16.gmra.mxu0 %v3227
        %v4267 = vpop.f32.mrf.mxu0
        %v4268 = vadd.f32 0.0, %v4267
        %v4269 = vpop.f32.mrf.mxu0
        %v4270 = vadd.f32 0.0, %v4269
        %v4271 = vpop.f32.mrf.mxu0
        %v4272 = vadd.f32 0.0, %v4271
        %v4273 = vpop.f32.mrf.mxu0
        %v4274 = vadd.f32 0.0, %v4273
        %4275 = vmatprep.mubr.bf16.mxu0 0
        %4276 = vmatmul.mubr.bf16.gmra.mxu0 %v3228
        %v4277 = vpop.f32.mrf.mxu0
        %v4278 = vadd.f32 0.0, %v4277
        %v4279 = vpop.f32.mrf.mxu0
        %v4280 = vadd.f32 0.0, %v4279
        %v4281 = vpop.f32.mrf.mxu0
        %v4282 = vadd.f32 0.0, %v4281
        %v4283 = vpop.f32.mrf.mxu0
        %v4284 = vadd.f32 0.0, %v4283
        %4285 = vdwg.mxu0
        %4286 = vmatprep.subr.bf16.mxu0 %v3544
        %4287 = vmatpush1.bf16.msra.mxu0 %v3543
        %4288 = vmatprep.subr.bf16.mxu0 %v3536
        %4289 = vmatpush1.bf16.msra.mxu0 %v3535
        %4290 = vmatprep.subr.bf16.mxu0 %v3528
        %4291 = vmatpush1.bf16.msra.mxu0 %v3527
        %4292 = vmatprep.subr.bf16.mxu0 %v3520
        %4293 = vmatpush1.bf16.msra.mxu0 %v3519
        %4294 = vmatprep.subr.bf16.mxu0 %v3512
        %4295 = vmatpush1.bf16.msra.mxu0 %v3511
        %4296 = vmatprep.subr.bf16.mxu0 %v3504
        %4297 = vmatpush1.bf16.msra.mxu0 %v3503
        %4298 = vmatprep.subr.bf16.mxu0 %v3496
        %4299 = vmatpush1.bf16.msra.mxu0 %v3495
        %4300 = vmatprep.subr.bf16.mxu0 %v3488
        %4301 = vmatpush1.bf16.msra.mxu0 %v3487
        %4302 = vmatprep.subr.bf16.mxu0 0
        %4303 = vmatpush2.bf16.msra.mxu0 0
        %4304 = vmatprep.subr.bf16.mxu0 0
        %4305 = vmatpush2.bf16.msra.mxu0 0
        %4306 = vmatprep.subr.bf16.mxu0 0
        %4307 = vmatpush2.bf16.msra.mxu0 0
        %4308 = vmatprep.subr.bf16.mxu0 0
        %4309 = vmatpush2.bf16.msra.mxu0 0
        %4310 = vmatprep.subr.bf16.mxu0 0
        %4311 = vmatpush2.bf16.msra.mxu0 0
        %4312 = vmatprep.subr.bf16.mxu0 0
        %4313 = vmatpush2.bf16.msra.mxu0 0
        %4314 = vmatprep.subr.bf16.mxu0 0
        %4315 = vmatpush2.bf16.msra.mxu0 0
        %4316 = vmatprep.subr.bf16.mxu0 0
        %4317 = vmatpush2.bf16.msra.mxu0 0
        %4318 = vmatprep.mubr.bf16.mxu0 0
        %4319 = vmatmul.mubr.bf16.gmra.mxu0 %v3165
        %v4320 = vpop.f32.mrf.mxu0
        %v4321 = vadd.f32 0.0, %v4320
        %v4322 = vpop.f32.mrf.mxu0
        %v4323 = vadd.f32 0.0, %v4322
        %v4324 = vpop.f32.mrf.mxu0
        %v4325 = vadd.f32 0.0, %v4324
        %v4326 = vpop.f32.mrf.mxu0
        %v4327 = vadd.f32 0.0, %v4326
        %4328 = vmatprep.mubr.bf16.mxu0 0
        %4329 = vmatmul.mubr.bf16.gmra.mxu0 %v3166
        %v4330 = vpop.f32.mrf.mxu0
        %v4331 = vadd.f32 0.0, %v4330
        %v4332 = vpop.f32.mrf.mxu0
        %v4333 = vadd.f32 0.0, %v4332
        %v4334 = vpop.f32.mrf.mxu0
        %v4335 = vadd.f32 0.0, %v4334
        %v4336 = vpop.f32.mrf.mxu0
        %v4337 = vadd.f32 0.0, %v4336
        %4338 = vmatprep.mubr.bf16.mxu0 0
        %4339 = vmatmul.mubr.bf16.gmra.mxu0 %v3167
        %v4340 = vpop.f32.mrf.mxu0
        %v4341 = vadd.f32 0.0, %v4340
        %v4342 = vpop.f32.mrf.mxu0
        %v4343 = vadd.f32 0.0, %v4342
        %v4344 = vpop.f32.mrf.mxu0
        %v4345 = vadd.f32 0.0, %v4344
        %v4346 = vpop.f32.mrf.mxu0
        %v4347 = vadd.f32 0.0, %v4346
        %4348 = vmatprep.mubr.bf16.mxu0 0
        %4349 = vmatmul.mubr.bf16.gmra.mxu0 %v3168
        %v4350 = vpop.f32.mrf.mxu0
        %v4351 = vadd.f32 0.0, %v4350
        %v4352 = vpop.f32.mrf.mxu0
        %v4353 = vadd.f32 0.0, %v4352
        %v4354 = vpop.f32.mrf.mxu0
        %v4355 = vadd.f32 0.0, %v4354
        %v4356 = vpop.f32.mrf.mxu0
        %v4357 = vadd.f32 0.0, %v4356
        %4358 = vmatprep.mubr.bf16.mxu0 0
        %4359 = vmatmul.mubr.bf16.gmra.mxu0 %v3169
        %v4360 = vpop.f32.mrf.mxu0
        %v4361 = vadd.f32 0.0, %v4360
        %v4362 = vpop.f32.mrf.mxu0
        %v4363 = vadd.f32 0.0, %v4362
        %v4364 = vpop.f32.mrf.mxu0
        %v4365 = vadd.f32 0.0, %v4364
        %v4366 = vpop.f32.mrf.mxu0
        %v4367 = vadd.f32 0.0, %v4366
        %4368 = vmatprep.mubr.bf16.mxu0 0
        %4369 = vmatmul.mubr.bf16.gmra.mxu0 %v3170
        %v4370 = vpop.f32.mrf.mxu0
        %v4371 = vadd.f32 0.0, %v4370
        %v4372 = vpop.f32.mrf.mxu0
        %v4373 = vadd.f32 0.0, %v4372
        %v4374 = vpop.f32.mrf.mxu0
        %v4375 = vadd.f32 0.0, %v4374
        %v4376 = vpop.f32.mrf.mxu0
        %v4377 = vadd.f32 0.0, %v4376
        %4378 = vmatprep.mubr.bf16.mxu0 0
        %4379 = vmatmul.mubr.bf16.gmra.mxu0 %v3171
        %v4380 = vpop.f32.mrf.mxu0
        %v4381 = vadd.f32 0.0, %v4380
        %v4382 = vpop.f32.mrf.mxu0
        %v4383 = vadd.f32 0.0, %v4382
        %v4384 = vpop.f32.mrf.mxu0
        %v4385 = vadd.f32 0.0, %v4384
        %v4386 = vpop.f32.mrf.mxu0
        %v4387 = vadd.f32 0.0, %v4386
        %4388 = vmatprep.mubr.bf16.mxu0 0
        %4389 = vmatmul.mubr.bf16.gmra.mxu0 %v3172
        %v4390 = vpop.f32.mrf.mxu0
        %v4391 = vadd.f32 0.0, %v4390
        %v4392 = vpop.f32.mrf.mxu0
        %v4393 = vadd.f32 0.0, %v4392
        %v4394 = vpop.f32.mrf.mxu0
        %v4395 = vadd.f32 0.0, %v4394
        %v4396 = vpop.f32.mrf.mxu0
        %v4397 = vadd.f32 0.0, %v4396
        %4398 = vmatprep.mubr.bf16.mxu0 0
        %4399 = vmatmul.mubr.bf16.gmra.mxu0 %v3173
        %v4400 = vpop.f32.mrf.mxu0
        %v4401 = vadd.f32 0.0, %v4400
        %v4402 = vpop.f32.mrf.mxu0
        %v4403 = vadd.f32 0.0, %v4402
        %v4404 = vpop.f32.mrf.mxu0
        %v4405 = vadd.f32 0.0, %v4404
        %v4406 = vpop.f32.mrf.mxu0
        %v4407 = vadd.f32 0.0, %v4406
        %4408 = vmatprep.mubr.bf16.mxu0 0
        %4409 = vmatmul.mubr.bf16.gmra.mxu0 %v3174
        %v4410 = vpop.f32.mrf.mxu0
        %v4411 = vadd.f32 0.0, %v4410
        %v4412 = vpop.f32.mrf.mxu0
        %v4413 = vadd.f32 0.0, %v4412
        %v4414 = vpop.f32.mrf.mxu0
        %v4415 = vadd.f32 0.0, %v4414
        %v4416 = vpop.f32.mrf.mxu0
        %v4417 = vadd.f32 0.0, %v4416
        %4418 = vmatprep.mubr.bf16.mxu0 0
        %4419 = vmatmul.mubr.bf16.gmra.mxu0 %v3175
        %v4420 = vpop.f32.mrf.mxu0
        %v4421 = vadd.f32 0.0, %v4420
        %v4422 = vpop.f32.mrf.mxu0
        %v4423 = vadd.f32 0.0, %v4422
        %v4424 = vpop.f32.mrf.mxu0
        %v4425 = vadd.f32 0.0, %v4424
        %v4426 = vpop.f32.mrf.mxu0
        %v4427 = vadd.f32 0.0, %v4426
        %4428 = vmatprep.mubr.bf16.mxu0 0
        %4429 = vmatmul.mubr.bf16.gmra.mxu0 %v3176
        %v4430 = vpop.f32.mrf.mxu0
        %v4431 = vadd.f32 0.0, %v4430
        %v4432 = vpop.f32.mrf.mxu0
        %v4433 = vadd.f32 0.0, %v4432
        %v4434 = vpop.f32.mrf.mxu0
        %v4435 = vadd.f32 0.0, %v4434
        %v4436 = vpop.f32.mrf.mxu0
        %v4437 = vadd.f32 0.0, %v4436
        %4438 = vmatprep.mubr.bf16.mxu0 0
        %4439 = vmatmul.mubr.bf16.gmra.mxu0 %v3177
        %v4440 = vpop.f32.mrf.mxu0
        %v4441 = vadd.f32 0.0, %v4440
        %v4442 = vpop.f32.mrf.mxu0
        %v4443 = vadd.f32 0.0, %v4442
        %v4444 = vpop.f32.mrf.mxu0
        %v4445 = vadd.f32 0.0, %v4444
        %v4446 = vpop.f32.mrf.mxu0
        %v4447 = vadd.f32 0.0, %v4446
        %4448 = vmatprep.mubr.bf16.mxu0 0
        %4449 = vmatmul.mubr.bf16.gmra.mxu0 %v3178
        %v4450 = vpop.f32.mrf.mxu0
        %v4451 = vadd.f32 0.0, %v4450
        %v4452 = vpop.f32.mrf.mxu0
        %v4453 = vadd.f32 0.0, %v4452
        %v4454 = vpop.f32.mrf.mxu0
        %v4455 = vadd.f32 0.0, %v4454
        %v4456 = vpop.f32.mrf.mxu0
        %v4457 = vadd.f32 0.0, %v4456
        %4458 = vmatprep.mubr.bf16.mxu0 0
        %4459 = vmatmul.mubr.bf16.gmra.mxu0 %v3179
        %v4460 = vpop.f32.mrf.mxu0
        %v4461 = vadd.f32 0.0, %v4460
        %v4462 = vpop.f32.mrf.mxu0
        %v4463 = vadd.f32 0.0, %v4462
        %v4464 = vpop.f32.mrf.mxu0
        %v4465 = vadd.f32 0.0, %v4464
        %v4466 = vpop.f32.mrf.mxu0
        %v4467 = vadd.f32 0.0, %v4466
        %4468 = vmatprep.mubr.bf16.mxu0 0
        %4469 = vmatmul.mubr.bf16.gmra.mxu0 %v3180
        %v4470 = vpop.f32.mrf.mxu0
        %v4471 = vadd.f32 0.0, %v4470
        %v4472 = vpop.f32.mrf.mxu0
        %v4473 = vadd.f32 0.0, %v4472
        %v4474 = vpop.f32.mrf.mxu0
        %v4475 = vadd.f32 0.0, %v4474
        %v4476 = vpop.f32.mrf.mxu0
        %v4477 = vadd.f32 0.0, %v4476
        %4478 = vmatprep.mubr.bf16.mxu0 0
        %4479 = vmatmul.mubr.bf16.gmra.mxu0 %v3181
        %v4480 = vpop.f32.mrf.mxu0
        %v4481 = vadd.f32 0.0, %v4480
        %v4482 = vpop.f32.mrf.mxu0
        %v4483 = vadd.f32 0.0, %v4482
        %v4484 = vpop.f32.mrf.mxu0
        %v4485 = vadd.f32 0.0, %v4484
        %v4486 = vpop.f32.mrf.mxu0
        %v4487 = vadd.f32 0.0, %v4486
        %4488 = vmatprep.mubr.bf16.mxu0 0
        %4489 = vmatmul.mubr.bf16.gmra.mxu0 %v3182
        %v4490 = vpop.f32.mrf.mxu0
        %v4491 = vadd.f32 0.0, %v4490
        %v4492 = vpop.f32.mrf.mxu0
        %v4493 = vadd.f32 0.0, %v4492
        %v4494 = vpop.f32.mrf.mxu0
        %v4495 = vadd.f32 0.0, %v4494
        %v4496 = vpop.f32.mrf.mxu0
        %v4497 = vadd.f32 0.0, %v4496
        %4498 = vmatprep.mubr.bf16.mxu0 0
        %4499 = vmatmul.mubr.bf16.gmra.mxu0 %v3183
        %v4500 = vpop.f32.mrf.mxu0
        %v4501 = vadd.f32 0.0, %v4500
        %v4502 = vpop.f32.mrf.mxu0
        %v4503 = vadd.f32 0.0, %v4502
        %v4504 = vpop.f32.mrf.mxu0
        %v4505 = vadd.f32 0.0, %v4504
        %v4506 = vpop.f32.mrf.mxu0
        %v4507 = vadd.f32 0.0, %v4506
        %4508 = vmatprep.mubr.bf16.mxu0 0
        %4509 = vmatmul.mubr.bf16.gmra.mxu0 %v3184
        %v4510 = vpop.f32.mrf.mxu0
        %v4511 = vadd.f32 0.0, %v4510
        %v4512 = vpop.f32.mrf.mxu0
        %v4513 = vadd.f32 0.0, %v4512
        %v4514 = vpop.f32.mrf.mxu0
        %v4515 = vadd.f32 0.0, %v4514
        %v4516 = vpop.f32.mrf.mxu0
        %v4517 = vadd.f32 0.0, %v4516
        %4518 = vmatprep.mubr.bf16.mxu0 0
        %4519 = vmatmul.mubr.bf16.gmra.mxu0 %v3185
        %v4520 = vpop.f32.mrf.mxu0
        %v4521 = vadd.f32 0.0, %v4520
        %v4522 = vpop.f32.mrf.mxu0
        %v4523 = vadd.f32 0.0, %v4522
        %v4524 = vpop.f32.mrf.mxu0
        %v4525 = vadd.f32 0.0, %v4524
        %v4526 = vpop.f32.mrf.mxu0
        %v4527 = vadd.f32 0.0, %v4526
        %4528 = vmatprep.mubr.bf16.mxu0 0
        %4529 = vmatmul.mubr.bf16.gmra.mxu0 %v3186
        %v4530 = vpop.f32.mrf.mxu0
        %v4531 = vadd.f32 0.0, %v4530
        %v4532 = vpop.f32.mrf.mxu0
        %v4533 = vadd.f32 0.0, %v4532
        %v4534 = vpop.f32.mrf.mxu0
        %v4535 = vadd.f32 0.0, %v4534
        %v4536 = vpop.f32.mrf.mxu0
        %v4537 = vadd.f32 0.0, %v4536
        %4538 = vmatprep.mubr.bf16.mxu0 0
        %4539 = vmatmul.mubr.bf16.gmra.mxu0 %v3187
        %v4540 = vpop.f32.mrf.mxu0
        %v4541 = vadd.f32 0.0, %v4540
        %v4542 = vpop.f32.mrf.mxu0
        %v4543 = vadd.f32 0.0, %v4542
        %v4544 = vpop.f32.mrf.mxu0
        %v4545 = vadd.f32 0.0, %v4544
        %v4546 = vpop.f32.mrf.mxu0
        %v4547 = vadd.f32 0.0, %v4546
        %4548 = vmatprep.mubr.bf16.mxu0 0
        %4549 = vmatmul.mubr.bf16.gmra.mxu0 %v3188
        %v4550 = vpop.f32.mrf.mxu0
        %v4551 = vadd.f32 0.0, %v4550
        %v4552 = vpop.f32.mrf.mxu0
        %v4553 = vadd.f32 0.0, %v4552
        %v4554 = vpop.f32.mrf.mxu0
        %v4555 = vadd.f32 0.0, %v4554
        %v4556 = vpop.f32.mrf.mxu0
        %v4557 = vadd.f32 0.0, %v4556
        %4558 = vmatprep.mubr.bf16.mxu0 0
        %4559 = vmatmul.mubr.bf16.gmra.mxu0 %v3189
        %v4560 = vpop.f32.mrf.mxu0
        %v4561 = vadd.f32 0.0, %v4560
        %v4562 = vpop.f32.mrf.mxu0
        %v4563 = vadd.f32 0.0, %v4562
        %v4564 = vpop.f32.mrf.mxu0
        %v4565 = vadd.f32 0.0, %v4564
        %v4566 = vpop.f32.mrf.mxu0
        %v4567 = vadd.f32 0.0, %v4566
        %4568 = vmatprep.mubr.bf16.mxu0 0
        %4569 = vmatmul.mubr.bf16.gmra.mxu0 %v3190
        %v4570 = vpop.f32.mrf.mxu0
        %v4571 = vadd.f32 0.0, %v4570
        %v4572 = vpop.f32.mrf.mxu0
        %v4573 = vadd.f32 0.0, %v4572
        %v4574 = vpop.f32.mrf.mxu0
        %v4575 = vadd.f32 0.0, %v4574
        %v4576 = vpop.f32.mrf.mxu0
        %v4577 = vadd.f32 0.0, %v4576
        %4578 = vmatprep.mubr.bf16.mxu0 0
        %4579 = vmatmul.mubr.bf16.gmra.mxu0 %v3191
        %v4580 = vpop.f32.mrf.mxu0
        %v4581 = vadd.f32 0.0, %v4580
        %v4582 = vpop.f32.mrf.mxu0
        %v4583 = vadd.f32 0.0, %v4582
        %v4584 = vpop.f32.mrf.mxu0
        %v4585 = vadd.f32 0.0, %v4584
        %v4586 = vpop.f32.mrf.mxu0
        %v4587 = vadd.f32 0.0, %v4586
        %4588 = vmatprep.mubr.bf16.mxu0 0
        %4589 = vmatmul.mubr.bf16.gmra.mxu0 %v3192
        %v4590 = vpop.f32.mrf.mxu0
        %v4591 = vadd.f32 0.0, %v4590
        %v4592 = vpop.f32.mrf.mxu0
        %v4593 = vadd.f32 0.0, %v4592
        %v4594 = vpop.f32.mrf.mxu0
        %v4595 = vadd.f32 0.0, %v4594
        %v4596 = vpop.f32.mrf.mxu0
        %v4597 = vadd.f32 0.0, %v4596
        %4598 = vmatprep.mubr.bf16.mxu0 0
        %4599 = vmatmul.mubr.bf16.gmra.mxu0 %v3193
        %v4600 = vpop.f32.mrf.mxu0
        %v4601 = vadd.f32 0.0, %v4600
        %v4602 = vpop.f32.mrf.mxu0
        %v4603 = vadd.f32 0.0, %v4602
        %v4604 = vpop.f32.mrf.mxu0
        %v4605 = vadd.f32 0.0, %v4604
        %v4606 = vpop.f32.mrf.mxu0
        %v4607 = vadd.f32 0.0, %v4606
        %4608 = vmatprep.mubr.bf16.mxu0 0
        %4609 = vmatmul.mubr.bf16.gmra.mxu0 %v3194
        %v4610 = vpop.f32.mrf.mxu0
        %v4611 = vadd.f32 0.0, %v4610
        %v4612 = vpop.f32.mrf.mxu0
        %v4613 = vadd.f32 0.0, %v4612
        %v4614 = vpop.f32.mrf.mxu0
        %v4615 = vadd.f32 0.0, %v4614
        %v4616 = vpop.f32.mrf.mxu0
        %v4617 = vadd.f32 0.0, %v4616
        %4618 = vmatprep.mubr.bf16.mxu0 0
        %4619 = vmatmul.mubr.bf16.gmra.mxu0 %v3195
        %v4620 = vpop.f32.mrf.mxu0
        %v4621 = vadd.f32 0.0, %v4620
        %v4622 = vpop.f32.mrf.mxu0
        %v4623 = vadd.f32 0.0, %v4622
        %v4624 = vpop.f32.mrf.mxu0
        %v4625 = vadd.f32 0.0, %v4624
        %v4626 = vpop.f32.mrf.mxu0
        %v4627 = vadd.f32 0.0, %v4626
        %4628 = vmatprep.mubr.bf16.mxu0 0
        %4629 = vmatmul.mubr.bf16.gmra.mxu0 %v3196
        %v4630 = vpop.f32.mrf.mxu0
        %v4631 = vadd.f32 0.0, %v4630
        %v4632 = vpop.f32.mrf.mxu0
        %v4633 = vadd.f32 0.0, %v4632
        %v4634 = vpop.f32.mrf.mxu0
        %v4635 = vadd.f32 0.0, %v4634
        %v4636 = vpop.f32.mrf.mxu0
        %v4637 = vadd.f32 0.0, %v4636
        %4638 = vmatprep.mubr.bf16.mxu0 0
        %4639 = vmatmul.mubr.bf16.gmra.mxu0 %v3197
        %v4640 = vpop.f32.mrf.mxu0
        %v4641 = vadd.f32 0.0, %v4640
        %v4642 = vpop.f32.mrf.mxu0
        %v4643 = vadd.f32 0.0, %v4642
        %v4644 = vpop.f32.mrf.mxu0
        %v4645 = vadd.f32 0.0, %v4644
        %v4646 = vpop.f32.mrf.mxu0
        %v4647 = vadd.f32 0.0, %v4646
        %4648 = vmatprep.mubr.bf16.mxu0 0
        %4649 = vmatmul.mubr.bf16.gmra.mxu0 %v3198
        %v4650 = vpop.f32.mrf.mxu0
        %v4651 = vadd.f32 0.0, %v4650
        %v4652 = vpop.f32.mrf.mxu0
        %v4653 = vadd.f32 0.0, %v4652
        %v4654 = vpop.f32.mrf.mxu0
        %v4655 = vadd.f32 0.0, %v4654
        %v4656 = vpop.f32.mrf.mxu0
        %v4657 = vadd.f32 0.0, %v4656
        %4658 = vmatprep.mubr.bf16.mxu0 0
        %4659 = vmatmul.mubr.bf16.gmra.mxu0 %v3199
        %v4660 = vpop.f32.mrf.mxu0
        %v4661 = vadd.f32 0.0, %v4660
        %v4662 = vpop.f32.mrf.mxu0
        %v4663 = vadd.f32 0.0, %v4662
        %v4664 = vpop.f32.mrf.mxu0
        %v4665 = vadd.f32 0.0, %v4664
        %v4666 = vpop.f32.mrf.mxu0
        %v4667 = vadd.f32 0.0, %v4666
        %4668 = vmatprep.mubr.bf16.mxu0 0
        %4669 = vmatmul.mubr.bf16.gmra.mxu0 %v3200
        %v4670 = vpop.f32.mrf.mxu0
        %v4671 = vadd.f32 0.0, %v4670
        %v4672 = vpop.f32.mrf.mxu0
        %v4673 = vadd.f32 0.0, %v4672
        %v4674 = vpop.f32.mrf.mxu0
        %v4675 = vadd.f32 0.0, %v4674
        %v4676 = vpop.f32.mrf.mxu0
        %v4677 = vadd.f32 0.0, %v4676
        %4678 = vmatprep.mubr.bf16.mxu0 0
        %4679 = vmatmul.mubr.bf16.gmra.mxu0 %v3201
        %v4680 = vpop.f32.mrf.mxu0
        %v4681 = vadd.f32 0.0, %v4680
        %v4682 = vpop.f32.mrf.mxu0
        %v4683 = vadd.f32 0.0, %v4682
        %v4684 = vpop.f32.mrf.mxu0
        %v4685 = vadd.f32 0.0, %v4684
        %v4686 = vpop.f32.mrf.mxu0
        %v4687 = vadd.f32 0.0, %v4686
        %4688 = vmatprep.mubr.bf16.mxu0 0
        %4689 = vmatmul.mubr.bf16.gmra.mxu0 %v3202
        %v4690 = vpop.f32.mrf.mxu0
        %v4691 = vadd.f32 0.0, %v4690
        %v4692 = vpop.f32.mrf.mxu0
        %v4693 = vadd.f32 0.0, %v4692
        %v4694 = vpop.f32.mrf.mxu0
        %v4695 = vadd.f32 0.0, %v4694
        %v4696 = vpop.f32.mrf.mxu0
        %v4697 = vadd.f32 0.0, %v4696
        %4698 = vmatprep.mubr.bf16.mxu0 0
        %4699 = vmatmul.mubr.bf16.gmra.mxu0 %v3203
        %v4700 = vpop.f32.mrf.mxu0
        %v4701 = vadd.f32 0.0, %v4700
        %v4702 = vpop.f32.mrf.mxu0
        %v4703 = vadd.f32 0.0, %v4702
        %v4704 = vpop.f32.mrf.mxu0
        %v4705 = vadd.f32 0.0, %v4704
        %v4706 = vpop.f32.mrf.mxu0
        %v4707 = vadd.f32 0.0, %v4706
        %4708 = vmatprep.mubr.bf16.mxu0 0
        %4709 = vmatmul.mubr.bf16.gmra.mxu0 %v3204
        %v4710 = vpop.f32.mrf.mxu0
        %v4711 = vadd.f32 0.0, %v4710
        %v4712 = vpop.f32.mrf.mxu0
        %v4713 = vadd.f32 0.0, %v4712
        %v4714 = vpop.f32.mrf.mxu0
        %v4715 = vadd.f32 0.0, %v4714
        %v4716 = vpop.f32.mrf.mxu0
        %v4717 = vadd.f32 0.0, %v4716
        %4718 = vmatprep.mubr.bf16.mxu0 0
        %4719 = vmatmul.mubr.bf16.gmra.mxu0 %v3205
        %v4720 = vpop.f32.mrf.mxu0
        %v4721 = vadd.f32 0.0, %v4720
        %v4722 = vpop.f32.mrf.mxu0
        %v4723 = vadd.f32 0.0, %v4722
        %v4724 = vpop.f32.mrf.mxu0
        %v4725 = vadd.f32 0.0, %v4724
        %v4726 = vpop.f32.mrf.mxu0
        %v4727 = vadd.f32 0.0, %v4726
        %4728 = vmatprep.mubr.bf16.mxu0 0
        %4729 = vmatmul.mubr.bf16.gmra.mxu0 %v3206
        %v4730 = vpop.f32.mrf.mxu0
        %v4731 = vadd.f32 0.0, %v4730
        %v4732 = vpop.f32.mrf.mxu0
        %v4733 = vadd.f32 0.0, %v4732
        %v4734 = vpop.f32.mrf.mxu0
        %v4735 = vadd.f32 0.0, %v4734
        %v4736 = vpop.f32.mrf.mxu0
        %v4737 = vadd.f32 0.0, %v4736
        %4738 = vmatprep.mubr.bf16.mxu0 0
        %4739 = vmatmul.mubr.bf16.gmra.mxu0 %v3207
        %v4740 = vpop.f32.mrf.mxu0
        %v4741 = vadd.f32 0.0, %v4740
        %v4742 = vpop.f32.mrf.mxu0
        %v4743 = vadd.f32 0.0, %v4742
        %v4744 = vpop.f32.mrf.mxu0
        %v4745 = vadd.f32 0.0, %v4744
        %v4746 = vpop.f32.mrf.mxu0
        %v4747 = vadd.f32 0.0, %v4746
        %4748 = vmatprep.mubr.bf16.mxu0 0
        %4749 = vmatmul.mubr.bf16.gmra.mxu0 %v3208
        %v4750 = vpop.f32.mrf.mxu0
        %v4751 = vadd.f32 0.0, %v4750
        %v4752 = vpop.f32.mrf.mxu0
        %v4753 = vadd.f32 0.0, %v4752
        %v4754 = vpop.f32.mrf.mxu0
        %v4755 = vadd.f32 0.0, %v4754
        %v4756 = vpop.f32.mrf.mxu0
        %v4757 = vadd.f32 0.0, %v4756
        %4758 = vmatprep.mubr.bf16.mxu0 0
        %4759 = vmatmul.mubr.bf16.gmra.mxu0 %v3209
        %v4760 = vpop.f32.mrf.mxu0
        %v4761 = vadd.f32 0.0, %v4760
        %v4762 = vpop.f32.mrf.mxu0
        %v4763 = vadd.f32 0.0, %v4762
        %v4764 = vpop.f32.mrf.mxu0
        %v4765 = vadd.f32 0.0, %v4764
        %v4766 = vpop.f32.mrf.mxu0
        %v4767 = vadd.f32 0.0, %v4766
        %4768 = vmatprep.mubr.bf16.mxu0 0
        %4769 = vmatmul.mubr.bf16.gmra.mxu0 %v3210
        %v4770 = vpop.f32.mrf.mxu0
        %v4771 = vadd.f32 0.0, %v4770
        %v4772 = vpop.f32.mrf.mxu0
        %v4773 = vadd.f32 0.0, %v4772
        %v4774 = vpop.f32.mrf.mxu0
        %v4775 = vadd.f32 0.0, %v4774
        %v4776 = vpop.f32.mrf.mxu0
        %v4777 = vadd.f32 0.0, %v4776
        %4778 = vmatprep.mubr.bf16.mxu0 0
        %4779 = vmatmul.mubr.bf16.gmra.mxu0 %v3211
        %v4780 = vpop.f32.mrf.mxu0
        %v4781 = vadd.f32 0.0, %v4780
        %v4782 = vpop.f32.mrf.mxu0
        %v4783 = vadd.f32 0.0, %v4782
        %v4784 = vpop.f32.mrf.mxu0
        %v4785 = vadd.f32 0.0, %v4784
        %v4786 = vpop.f32.mrf.mxu0
        %v4787 = vadd.f32 0.0, %v4786
        %4788 = vmatprep.mubr.bf16.mxu0 0
        %4789 = vmatmul.mubr.bf16.gmra.mxu0 %v3212
        %v4790 = vpop.f32.mrf.mxu0
        %v4791 = vadd.f32 0.0, %v4790
        %v4792 = vpop.f32.mrf.mxu0
        %v4793 = vadd.f32 0.0, %v4792
        %v4794 = vpop.f32.mrf.mxu0
        %v4795 = vadd.f32 0.0, %v4794
        %v4796 = vpop.f32.mrf.mxu0
        %v4797 = vadd.f32 0.0, %v4796
        %4798 = vmatprep.mubr.bf16.mxu0 0
        %4799 = vmatmul.mubr.bf16.gmra.mxu0 %v3213
        %v4800 = vpop.f32.mrf.mxu0
        %v4801 = vadd.f32 0.0, %v4800
        %v4802 = vpop.f32.mrf.mxu0
        %v4803 = vadd.f32 0.0, %v4802
        %v4804 = vpop.f32.mrf.mxu0
        %v4805 = vadd.f32 0.0, %v4804
        %v4806 = vpop.f32.mrf.mxu0
        %v4807 = vadd.f32 0.0, %v4806
        %4808 = vmatprep.mubr.bf16.mxu0 0
        %4809 = vmatmul.mubr.bf16.gmra.mxu0 %v3214
        %v4810 = vpop.f32.mrf.mxu0
        %v4811 = vadd.f32 0.0, %v4810
        %v4812 = vpop.f32.mrf.mxu0
        %v4813 = vadd.f32 0.0, %v4812
        %v4814 = vpop.f32.mrf.mxu0
        %v4815 = vadd.f32 0.0, %v4814
        %v4816 = vpop.f32.mrf.mxu0
        %v4817 = vadd.f32 0.0, %v4816
        %4818 = vmatprep.mubr.bf16.mxu0 0
        %4819 = vmatmul.mubr.bf16.gmra.mxu0 %v3215
        %v4820 = vpop.f32.mrf.mxu0
        %v4821 = vadd.f32 0.0, %v4820
        %v4822 = vpop.f32.mrf.mxu0
        %v4823 = vadd.f32 0.0, %v4822
        %v4824 = vpop.f32.mrf.mxu0
        %v4825 = vadd.f32 0.0, %v4824
        %v4826 = vpop.f32.mrf.mxu0
        %v4827 = vadd.f32 0.0, %v4826
        %4828 = vmatprep.mubr.bf16.mxu0 0
        %4829 = vmatmul.mubr.bf16.gmra.mxu0 %v3216
        %v4830 = vpop.f32.mrf.mxu0
        %v4831 = vadd.f32 0.0, %v4830
        %v4832 = vpop.f32.mrf.mxu0
        %v4833 = vadd.f32 0.0, %v4832
        %v4834 = vpop.f32.mrf.mxu0
        %v4835 = vadd.f32 0.0, %v4834
        %v4836 = vpop.f32.mrf.mxu0
        %v4837 = vadd.f32 0.0, %v4836
        %4838 = vmatprep.mubr.bf16.mxu0 0
        %4839 = vmatmul.mubr.bf16.gmra.mxu0 %v3217
        %v4840 = vpop.f32.mrf.mxu0
        %v4841 = vadd.f32 0.0, %v4840
        %v4842 = vpop.f32.mrf.mxu0
        %v4843 = vadd.f32 0.0, %v4842
        %v4844 = vpop.f32.mrf.mxu0
        %v4845 = vadd.f32 0.0, %v4844
        %v4846 = vpop.f32.mrf.mxu0
        %v4847 = vadd.f32 0.0, %v4846
        %4848 = vmatprep.mubr.bf16.mxu0 0
        %4849 = vmatmul.mubr.bf16.gmra.mxu0 %v3218
        %v4850 = vpop.f32.mrf.mxu0
        %v4851 = vadd.f32 0.0, %v4850
        %v4852 = vpop.f32.mrf.mxu0
        %v4853 = vadd.f32 0.0, %v4852
        %v4854 = vpop.f32.mrf.mxu0
        %v4855 = vadd.f32 0.0, %v4854
        %v4856 = vpop.f32.mrf.mxu0
        %v4857 = vadd.f32 0.0, %v4856
        %4858 = vmatprep.mubr.bf16.mxu0 0
        %4859 = vmatmul.mubr.bf16.gmra.mxu0 %v3219
        %v4860 = vpop.f32.mrf.mxu0
        %v4861 = vadd.f32 0.0, %v4860
        %v4862 = vpop.f32.mrf.mxu0
        %v4863 = vadd.f32 0.0, %v4862
        %v4864 = vpop.f32.mrf.mxu0
        %v4865 = vadd.f32 0.0, %v4864
        %v4866 = vpop.f32.mrf.mxu0
        %v4867 = vadd.f32 0.0, %v4866
        %4868 = vmatprep.mubr.bf16.mxu0 0
        %4869 = vmatmul.mubr.bf16.gmra.mxu0 %v3220
        %v4870 = vpop.f32.mrf.mxu0
        %v4871 = vadd.f32 0.0, %v4870
        %v4872 = vpop.f32.mrf.mxu0
        %v4873 = vadd.f32 0.0, %v4872
        %v4874 = vpop.f32.mrf.mxu0
        %v4875 = vadd.f32 0.0, %v4874
        %v4876 = vpop.f32.mrf.mxu0
        %v4877 = vadd.f32 0.0, %v4876
        %4878 = vmatprep.mubr.bf16.mxu0 0
        %4879 = vmatmul.mubr.bf16.gmra.mxu0 %v3221
        %v4880 = vpop.f32.mrf.mxu0
        %v4881 = vadd.f32 0.0, %v4880
        %v4882 = vpop.f32.mrf.mxu0
        %v4883 = vadd.f32 0.0, %v4882
        %v4884 = vpop.f32.mrf.mxu0
        %v4885 = vadd.f32 0.0, %v4884
        %v4886 = vpop.f32.mrf.mxu0
        %v4887 = vadd.f32 0.0, %v4886
        %4888 = vmatprep.mubr.bf16.mxu0 0
        %4889 = vmatmul.mubr.bf16.gmra.mxu0 %v3222
        %v4890 = vpop.f32.mrf.mxu0
        %v4891 = vadd.f32 0.0, %v4890
        %v4892 = vpop.f32.mrf.mxu0
        %v4893 = vadd.f32 0.0, %v4892
        %v4894 = vpop.f32.mrf.mxu0
        %v4895 = vadd.f32 0.0, %v4894
        %v4896 = vpop.f32.mrf.mxu0
        %v4897 = vadd.f32 0.0, %v4896
        %4898 = vmatprep.mubr.bf16.mxu0 0
        %4899 = vmatmul.mubr.bf16.gmra.mxu0 %v3223
        %v4900 = vpop.f32.mrf.mxu0
        %v4901 = vadd.f32 0.0, %v4900
        %v4902 = vpop.f32.mrf.mxu0
        %v4903 = vadd.f32 0.0, %v4902
        %v4904 = vpop.f32.mrf.mxu0
        %v4905 = vadd.f32 0.0, %v4904
        %v4906 = vpop.f32.mrf.mxu0
        %v4907 = vadd.f32 0.0, %v4906
        %4908 = vmatprep.mubr.bf16.mxu0 0
        %4909 = vmatmul.mubr.bf16.gmra.mxu0 %v3224
        %v4910 = vpop.f32.mrf.mxu0
        %v4911 = vadd.f32 0.0, %v4910
        %v4912 = vpop.f32.mrf.mxu0
        %v4913 = vadd.f32 0.0, %v4912
        %v4914 = vpop.f32.mrf.mxu0
        %v4915 = vadd.f32 0.0, %v4914
        %v4916 = vpop.f32.mrf.mxu0
        %v4917 = vadd.f32 0.0, %v4916
        %4918 = vmatprep.mubr.bf16.mxu0 0
        %4919 = vmatmul.mubr.bf16.gmra.mxu0 %v3225
        %v4920 = vpop.f32.mrf.mxu0
        %v4921 = vadd.f32 0.0, %v4920
        %v4922 = vpop.f32.mrf.mxu0
        %v4923 = vadd.f32 0.0, %v4922
        %v4924 = vpop.f32.mrf.mxu0
        %v4925 = vadd.f32 0.0, %v4924
        %v4926 = vpop.f32.mrf.mxu0
        %v4927 = vadd.f32 0.0, %v4926
        %4928 = vmatprep.mubr.bf16.mxu0 0
        %4929 = vmatmul.mubr.bf16.gmra.mxu0 %v3226
        %v4930 = vpop.f32.mrf.mxu0
        %v4931 = vadd.f32 0.0, %v4930
        %v4932 = vpop.f32.mrf.mxu0
        %v4933 = vadd.f32 0.0, %v4932
        %v4934 = vpop.f32.mrf.mxu0
        %v4935 = vadd.f32 0.0, %v4934
        %v4936 = vpop.f32.mrf.mxu0
        %v4937 = vadd.f32 0.0, %v4936
        %4938 = vmatprep.mubr.bf16.mxu0 0
        %4939 = vmatmul.mubr.bf16.gmra.mxu0 %v3227
        %v4940 = vpop.f32.mrf.mxu0
        %v4941 = vadd.f32 0.0, %v4940
        %v4942 = vpop.f32.mrf.mxu0
        %v4943 = vadd.f32 0.0, %v4942
        %v4944 = vpop.f32.mrf.mxu0
        %v4945 = vadd.f32 0.0, %v4944
        %v4946 = vpop.f32.mrf.mxu0
        %v4947 = vadd.f32 0.0, %v4946
        %4948 = vmatprep.mubr.bf16.mxu0 0
        %4949 = vmatmul.mubr.bf16.gmra.mxu0 %v3228
        %v4950 = vpop.f32.mrf.mxu0
        %v4951 = vadd.f32 0.0, %v4950
        %v4952 = vpop.f32.mrf.mxu0
        %v4953 = vadd.f32 0.0, %v4952
        %v4954 = vpop.f32.mrf.mxu0
        %v4955 = vadd.f32 0.0, %v4954
        %v4956 = vpop.f32.mrf.mxu0
        %v4957 = vadd.f32 0.0, %v4956
        %4958 = vdwg.mxu0
        %4959 = vmatprep.subr.bf16.mxu0 %v3546
        %4960 = vmatpush1.bf16.msra.mxu0 %v3545
        %4961 = vmatprep.subr.bf16.mxu0 %v3538
        %4962 = vmatpush1.bf16.msra.mxu0 %v3537
        %4963 = vmatprep.subr.bf16.mxu0 %v3530
        %4964 = vmatpush1.bf16.msra.mxu0 %v3529
        %4965 = vmatprep.subr.bf16.mxu0 %v3522
        %4966 = vmatpush1.bf16.msra.mxu0 %v3521
        %4967 = vmatprep.subr.bf16.mxu0 %v3514
        %4968 = vmatpush1.bf16.msra.mxu0 %v3513
        %4969 = vmatprep.subr.bf16.mxu0 %v3506
        %4970 = vmatpush1.bf16.msra.mxu0 %v3505
        %4971 = vmatprep.subr.bf16.mxu0 %v3498
        %4972 = vmatpush1.bf16.msra.mxu0 %v3497
        %4973 = vmatprep.subr.bf16.mxu0 %v3490
        %4974 = vmatpush1.bf16.msra.mxu0 %v3489
        %4975 = vmatprep.subr.bf16.mxu0 0
        %4976 = vmatpush2.bf16.msra.mxu0 0
        %4977 = vmatprep.subr.bf16.mxu0 0
        %4978 = vmatpush2.bf16.msra.mxu0 0
        %4979 = vmatprep.subr.bf16.mxu0 0
        %4980 = vmatpush2.bf16.msra.mxu0 0
        %4981 = vmatprep.subr.bf16.mxu0 0
        %4982 = vmatpush2.bf16.msra.mxu0 0
        %4983 = vmatprep.subr.bf16.mxu0 0
        %4984 = vmatpush2.bf16.msra.mxu0 0
        %4985 = vmatprep.subr.bf16.mxu0 0
        %4986 = vmatpush2.bf16.msra.mxu0 0
        %4987 = vmatprep.subr.bf16.mxu0 0
        %4988 = vmatpush2.bf16.msra.mxu0 0
        %4989 = vmatprep.subr.bf16.mxu0 0
        %4990 = vmatpush2.bf16.msra.mxu0 0
        %4991 = vmatprep.mubr.bf16.mxu0 0
        %4992 = vmatmul.mubr.bf16.gmra.mxu0 %v3165
        %v4993 = vpop.f32.mrf.mxu0
        %v4994 = vadd.f32 0.0, %v4993
        %v4995 = vpop.f32.mrf.mxu0
        %v4996 = vadd.f32 0.0, %v4995
        %v4997 = vpop.f32.mrf.mxu0
        %v4998 = vadd.f32 0.0, %v4997
        %v4999 = vpop.f32.mrf.mxu0
        %v5000 = vadd.f32 0.0, %v4999
        %5001 = vmatprep.mubr.bf16.mxu0 0
        %5002 = vmatmul.mubr.bf16.gmra.mxu0 %v3166
        %v5003 = vpop.f32.mrf.mxu0
        %v5004 = vadd.f32 0.0, %v5003
        %v5005 = vpop.f32.mrf.mxu0
        %v5006 = vadd.f32 0.0, %v5005
        %v5007 = vpop.f32.mrf.mxu0
        %v5008 = vadd.f32 0.0, %v5007
        %v5009 = vpop.f32.mrf.mxu0
        %v5010 = vadd.f32 0.0, %v5009
        %5011 = vmatprep.mubr.bf16.mxu0 0
        %5012 = vmatmul.mubr.bf16.gmra.mxu0 %v3167
        %v5013 = vpop.f32.mrf.mxu0
        %v5014 = vadd.f32 0.0, %v5013
        %v5015 = vpop.f32.mrf.mxu0
        %v5016 = vadd.f32 0.0, %v5015
        %v5017 = vpop.f32.mrf.mxu0
        %v5018 = vadd.f32 0.0, %v5017
        %v5019 = vpop.f32.mrf.mxu0
        %v5020 = vadd.f32 0.0, %v5019
        %5021 = vmatprep.mubr.bf16.mxu0 0
        %5022 = vmatmul.mubr.bf16.gmra.mxu0 %v3168
        %v5023 = vpop.f32.mrf.mxu0
        %v5024 = vadd.f32 0.0, %v5023
        %v5025 = vpop.f32.mrf.mxu0
        %v5026 = vadd.f32 0.0, %v5025
        %v5027 = vpop.f32.mrf.mxu0
        %v5028 = vadd.f32 0.0, %v5027
        %v5029 = vpop.f32.mrf.mxu0
        %v5030 = vadd.f32 0.0, %v5029
        %5031 = vmatprep.mubr.bf16.mxu0 0
        %5032 = vmatmul.mubr.bf16.gmra.mxu0 %v3169
        %v5033 = vpop.f32.mrf.mxu0
        %v5034 = vadd.f32 0.0, %v5033
        %v5035 = vpop.f32.mrf.mxu0
        %v5036 = vadd.f32 0.0, %v5035
        %v5037 = vpop.f32.mrf.mxu0
        %v5038 = vadd.f32 0.0, %v5037
        %v5039 = vpop.f32.mrf.mxu0
        %v5040 = vadd.f32 0.0, %v5039
        %5041 = vmatprep.mubr.bf16.mxu0 0
        %5042 = vmatmul.mubr.bf16.gmra.mxu0 %v3170
        %v5043 = vpop.f32.mrf.mxu0
        %v5044 = vadd.f32 0.0, %v5043
        %v5045 = vpop.f32.mrf.mxu0
        %v5046 = vadd.f32 0.0, %v5045
        %v5047 = vpop.f32.mrf.mxu0
        %v5048 = vadd.f32 0.0, %v5047
        %v5049 = vpop.f32.mrf.mxu0
        %v5050 = vadd.f32 0.0, %v5049
        %5051 = vmatprep.mubr.bf16.mxu0 0
        %5052 = vmatmul.mubr.bf16.gmra.mxu0 %v3171
        %v5053 = vpop.f32.mrf.mxu0
        %v5054 = vadd.f32 0.0, %v5053
        %v5055 = vpop.f32.mrf.mxu0
        %v5056 = vadd.f32 0.0, %v5055
        %v5057 = vpop.f32.mrf.mxu0
        %v5058 = vadd.f32 0.0, %v5057
        %v5059 = vpop.f32.mrf.mxu0
        %v5060 = vadd.f32 0.0, %v5059
        %5061 = vmatprep.mubr.bf16.mxu0 0
        %5062 = vmatmul.mubr.bf16.gmra.mxu0 %v3172
        %v5063 = vpop.f32.mrf.mxu0
        %v5064 = vadd.f32 0.0, %v5063
        %v5065 = vpop.f32.mrf.mxu0
        %v5066 = vadd.f32 0.0, %v5065
        %v5067 = vpop.f32.mrf.mxu0
        %v5068 = vadd.f32 0.0, %v5067
        %v5069 = vpop.f32.mrf.mxu0
        %v5070 = vadd.f32 0.0, %v5069
        %5071 = vmatprep.mubr.bf16.mxu0 0
        %5072 = vmatmul.mubr.bf16.gmra.mxu0 %v3173
        %v5073 = vpop.f32.mrf.mxu0
        %v5074 = vadd.f32 0.0, %v5073
        %v5075 = vpop.f32.mrf.mxu0
        %v5076 = vadd.f32 0.0, %v5075
        %v5077 = vpop.f32.mrf.mxu0
        %v5078 = vadd.f32 0.0, %v5077
        %v5079 = vpop.f32.mrf.mxu0
        %v5080 = vadd.f32 0.0, %v5079
        %5081 = vmatprep.mubr.bf16.mxu0 0
        %5082 = vmatmul.mubr.bf16.gmra.mxu0 %v3174
        %v5083 = vpop.f32.mrf.mxu0
        %v5084 = vadd.f32 0.0, %v5083
        %v5085 = vpop.f32.mrf.mxu0
        %v5086 = vadd.f32 0.0, %v5085
        %v5087 = vpop.f32.mrf.mxu0
        %v5088 = vadd.f32 0.0, %v5087
        %v5089 = vpop.f32.mrf.mxu0
        %v5090 = vadd.f32 0.0, %v5089
        %5091 = vmatprep.mubr.bf16.mxu0 0
        %5092 = vmatmul.mubr.bf16.gmra.mxu0 %v3175
        %v5093 = vpop.f32.mrf.mxu0
        %v5094 = vadd.f32 0.0, %v5093
        %v5095 = vpop.f32.mrf.mxu0
        %v5096 = vadd.f32 0.0, %v5095
        %v5097 = vpop.f32.mrf.mxu0
        %v5098 = vadd.f32 0.0, %v5097
        %v5099 = vpop.f32.mrf.mxu0
        %v5100 = vadd.f32 0.0, %v5099
        %5101 = vmatprep.mubr.bf16.mxu0 0
        %5102 = vmatmul.mubr.bf16.gmra.mxu0 %v3176
        %v5103 = vpop.f32.mrf.mxu0
        %v5104 = vadd.f32 0.0, %v5103
        %v5105 = vpop.f32.mrf.mxu0
        %v5106 = vadd.f32 0.0, %v5105
        %v5107 = vpop.f32.mrf.mxu0
        %v5108 = vadd.f32 0.0, %v5107
        %v5109 = vpop.f32.mrf.mxu0
        %v5110 = vadd.f32 0.0, %v5109
        %5111 = vmatprep.mubr.bf16.mxu0 0
        %5112 = vmatmul.mubr.bf16.gmra.mxu0 %v3177
        %v5113 = vpop.f32.mrf.mxu0
        %v5114 = vadd.f32 0.0, %v5113
        %v5115 = vpop.f32.mrf.mxu0
        %v5116 = vadd.f32 0.0, %v5115
        %v5117 = vpop.f32.mrf.mxu0
        %v5118 = vadd.f32 0.0, %v5117
        %v5119 = vpop.f32.mrf.mxu0
        %v5120 = vadd.f32 0.0, %v5119
        %5121 = vmatprep.mubr.bf16.mxu0 0
        %5122 = vmatmul.mubr.bf16.gmra.mxu0 %v3178
        %v5123 = vpop.f32.mrf.mxu0
        %v5124 = vadd.f32 0.0, %v5123
        %v5125 = vpop.f32.mrf.mxu0
        %v5126 = vadd.f32 0.0, %v5125
        %v5127 = vpop.f32.mrf.mxu0
        %v5128 = vadd.f32 0.0, %v5127
        %v5129 = vpop.f32.mrf.mxu0
        %v5130 = vadd.f32 0.0, %v5129
        %5131 = vmatprep.mubr.bf16.mxu0 0
        %5132 = vmatmul.mubr.bf16.gmra.mxu0 %v3179
        %v5133 = vpop.f32.mrf.mxu0
        %v5134 = vadd.f32 0.0, %v5133
        %v5135 = vpop.f32.mrf.mxu0
        %v5136 = vadd.f32 0.0, %v5135
        %v5137 = vpop.f32.mrf.mxu0
        %v5138 = vadd.f32 0.0, %v5137
        %v5139 = vpop.f32.mrf.mxu0
        %v5140 = vadd.f32 0.0, %v5139
        %5141 = vmatprep.mubr.bf16.mxu0 0
        %5142 = vmatmul.mubr.bf16.gmra.mxu0 %v3180
        %v5143 = vpop.f32.mrf.mxu0
        %v5144 = vadd.f32 0.0, %v5143
        %v5145 = vpop.f32.mrf.mxu0
        %v5146 = vadd.f32 0.0, %v5145
        %v5147 = vpop.f32.mrf.mxu0
        %v5148 = vadd.f32 0.0, %v5147
        %v5149 = vpop.f32.mrf.mxu0
        %v5150 = vadd.f32 0.0, %v5149
        %5151 = vmatprep.mubr.bf16.mxu0 0
        %5152 = vmatmul.mubr.bf16.gmra.mxu0 %v3181
        %v5153 = vpop.f32.mrf.mxu0
        %v5154 = vadd.f32 0.0, %v5153
        %v5155 = vpop.f32.mrf.mxu0
        %v5156 = vadd.f32 0.0, %v5155
        %v5157 = vpop.f32.mrf.mxu0
        %v5158 = vadd.f32 0.0, %v5157
        %v5159 = vpop.f32.mrf.mxu0
        %v5160 = vadd.f32 0.0, %v5159
        %5161 = vmatprep.mubr.bf16.mxu0 0
        %5162 = vmatmul.mubr.bf16.gmra.mxu0 %v3182
        %v5163 = vpop.f32.mrf.mxu0
        %v5164 = vadd.f32 0.0, %v5163
        %v5165 = vpop.f32.mrf.mxu0
        %v5166 = vadd.f32 0.0, %v5165
        %v5167 = vpop.f32.mrf.mxu0
        %v5168 = vadd.f32 0.0, %v5167
        %v5169 = vpop.f32.mrf.mxu0
        %v5170 = vadd.f32 0.0, %v5169
        %5171 = vmatprep.mubr.bf16.mxu0 0
        %5172 = vmatmul.mubr.bf16.gmra.mxu0 %v3183
        %v5173 = vpop.f32.mrf.mxu0
        %v5174 = vadd.f32 0.0, %v5173
        %v5175 = vpop.f32.mrf.mxu0
        %v5176 = vadd.f32 0.0, %v5175
        %v5177 = vpop.f32.mrf.mxu0
        %v5178 = vadd.f32 0.0, %v5177
        %v5179 = vpop.f32.mrf.mxu0
        %v5180 = vadd.f32 0.0, %v5179
        %5181 = vmatprep.mubr.bf16.mxu0 0
        %5182 = vmatmul.mubr.bf16.gmra.mxu0 %v3184
        %v5183 = vpop.f32.mrf.mxu0
        %v5184 = vadd.f32 0.0, %v5183
        %v5185 = vpop.f32.mrf.mxu0
        %v5186 = vadd.f32 0.0, %v5185
        %v5187 = vpop.f32.mrf.mxu0
        %v5188 = vadd.f32 0.0, %v5187
        %v5189 = vpop.f32.mrf.mxu0
        %v5190 = vadd.f32 0.0, %v5189
        %5191 = vmatprep.mubr.bf16.mxu0 0
        %5192 = vmatmul.mubr.bf16.gmra.mxu0 %v3185
        %v5193 = vpop.f32.mrf.mxu0
        %v5194 = vadd.f32 0.0, %v5193
        %v5195 = vpop.f32.mrf.mxu0
        %v5196 = vadd.f32 0.0, %v5195
        %v5197 = vpop.f32.mrf.mxu0
        %v5198 = vadd.f32 0.0, %v5197
        %v5199 = vpop.f32.mrf.mxu0
        %v5200 = vadd.f32 0.0, %v5199
        %5201 = vmatprep.mubr.bf16.mxu0 0
        %5202 = vmatmul.mubr.bf16.gmra.mxu0 %v3186
        %v5203 = vpop.f32.mrf.mxu0
        %v5204 = vadd.f32 0.0, %v5203
        %v5205 = vpop.f32.mrf.mxu0
        %v5206 = vadd.f32 0.0, %v5205
        %v5207 = vpop.f32.mrf.mxu0
        %v5208 = vadd.f32 0.0, %v5207
        %v5209 = vpop.f32.mrf.mxu0
        %v5210 = vadd.f32 0.0, %v5209
        %5211 = vmatprep.mubr.bf16.mxu0 0
        %5212 = vmatmul.mubr.bf16.gmra.mxu0 %v3187
        %v5213 = vpop.f32.mrf.mxu0
        %v5214 = vadd.f32 0.0, %v5213
        %v5215 = vpop.f32.mrf.mxu0
        %v5216 = vadd.f32 0.0, %v5215
        %v5217 = vpop.f32.mrf.mxu0
        %v5218 = vadd.f32 0.0, %v5217
        %v5219 = vpop.f32.mrf.mxu0
        %v5220 = vadd.f32 0.0, %v5219
        %5221 = vmatprep.mubr.bf16.mxu0 0
        %5222 = vmatmul.mubr.bf16.gmra.mxu0 %v3188
        %v5223 = vpop.f32.mrf.mxu0
        %v5224 = vadd.f32 0.0, %v5223
        %v5225 = vpop.f32.mrf.mxu0
        %v5226 = vadd.f32 0.0, %v5225
        %v5227 = vpop.f32.mrf.mxu0
        %v5228 = vadd.f32 0.0, %v5227
        %v5229 = vpop.f32.mrf.mxu0
        %v5230 = vadd.f32 0.0, %v5229
        %5231 = vmatprep.mubr.bf16.mxu0 0
        %5232 = vmatmul.mubr.bf16.gmra.mxu0 %v3189
        %v5233 = vpop.f32.mrf.mxu0
        %v5234 = vadd.f32 0.0, %v5233
        %v5235 = vpop.f32.mrf.mxu0
        %v5236 = vadd.f32 0.0, %v5235
        %v5237 = vpop.f32.mrf.mxu0
        %v5238 = vadd.f32 0.0, %v5237
        %v5239 = vpop.f32.mrf.mxu0
        %v5240 = vadd.f32 0.0, %v5239
        %5241 = vmatprep.mubr.bf16.mxu0 0
        %5242 = vmatmul.mubr.bf16.gmra.mxu0 %v3190
        %v5243 = vpop.f32.mrf.mxu0
        %v5244 = vadd.f32 0.0, %v5243
        %v5245 = vpop.f32.mrf.mxu0
        %v5246 = vadd.f32 0.0, %v5245
        %v5247 = vpop.f32.mrf.mxu0
        %v5248 = vadd.f32 0.0, %v5247
        %v5249 = vpop.f32.mrf.mxu0
        %v5250 = vadd.f32 0.0, %v5249
        %5251 = vmatprep.mubr.bf16.mxu0 0
        %5252 = vmatmul.mubr.bf16.gmra.mxu0 %v3191
        %v5253 = vpop.f32.mrf.mxu0
        %v5254 = vadd.f32 0.0, %v5253
        %v5255 = vpop.f32.mrf.mxu0
        %v5256 = vadd.f32 0.0, %v5255
        %v5257 = vpop.f32.mrf.mxu0
        %v5258 = vadd.f32 0.0, %v5257
        %v5259 = vpop.f32.mrf.mxu0
        %v5260 = vadd.f32 0.0, %v5259
        %5261 = vmatprep.mubr.bf16.mxu0 0
        %5262 = vmatmul.mubr.bf16.gmra.mxu0 %v3192
        %v5263 = vpop.f32.mrf.mxu0
        %v5264 = vadd.f32 0.0, %v5263
        %v5265 = vpop.f32.mrf.mxu0
        %v5266 = vadd.f32 0.0, %v5265
        %v5267 = vpop.f32.mrf.mxu0
        %v5268 = vadd.f32 0.0, %v5267
        %v5269 = vpop.f32.mrf.mxu0
        %v5270 = vadd.f32 0.0, %v5269
        %5271 = vmatprep.mubr.bf16.mxu0 0
        %5272 = vmatmul.mubr.bf16.gmra.mxu0 %v3193
        %v5273 = vpop.f32.mrf.mxu0
        %v5274 = vadd.f32 0.0, %v5273
        %v5275 = vpop.f32.mrf.mxu0
        %v5276 = vadd.f32 0.0, %v5275
        %v5277 = vpop.f32.mrf.mxu0
        %v5278 = vadd.f32 0.0, %v5277
        %v5279 = vpop.f32.mrf.mxu0
        %v5280 = vadd.f32 0.0, %v5279
        %5281 = vmatprep.mubr.bf16.mxu0 0
        %5282 = vmatmul.mubr.bf16.gmra.mxu0 %v3194
        %v5283 = vpop.f32.mrf.mxu0
        %v5284 = vadd.f32 0.0, %v5283
        %v5285 = vpop.f32.mrf.mxu0
        %v5286 = vadd.f32 0.0, %v5285
        %v5287 = vpop.f32.mrf.mxu0
        %v5288 = vadd.f32 0.0, %v5287
        %v5289 = vpop.f32.mrf.mxu0
        %v5290 = vadd.f32 0.0, %v5289
        %5291 = vmatprep.mubr.bf16.mxu0 0
        %5292 = vmatmul.mubr.bf16.gmra.mxu0 %v3195
        %v5293 = vpop.f32.mrf.mxu0
        %v5294 = vadd.f32 0.0, %v5293
        %v5295 = vpop.f32.mrf.mxu0
        %v5296 = vadd.f32 0.0, %v5295
        %v5297 = vpop.f32.mrf.mxu0
        %v5298 = vadd.f32 0.0, %v5297
        %v5299 = vpop.f32.mrf.mxu0
        %v5300 = vadd.f32 0.0, %v5299
        %5301 = vmatprep.mubr.bf16.mxu0 0
        %5302 = vmatmul.mubr.bf16.gmra.mxu0 %v3196
        %v5303 = vpop.f32.mrf.mxu0
        %v5304 = vadd.f32 0.0, %v5303
        %v5305 = vpop.f32.mrf.mxu0
        %v5306 = vadd.f32 0.0, %v5305
        %v5307 = vpop.f32.mrf.mxu0
        %v5308 = vadd.f32 0.0, %v5307
        %v5309 = vpop.f32.mrf.mxu0
        %v5310 = vadd.f32 0.0, %v5309
        %5311 = vmatprep.mubr.bf16.mxu0 0
        %5312 = vmatmul.mubr.bf16.gmra.mxu0 %v3197
        %v5313 = vpop.f32.mrf.mxu0
        %v5314 = vadd.f32 0.0, %v5313
        %v5315 = vpop.f32.mrf.mxu0
        %v5316 = vadd.f32 0.0, %v5315
        %v5317 = vpop.f32.mrf.mxu0
        %v5318 = vadd.f32 0.0, %v5317
        %v5319 = vpop.f32.mrf.mxu0
        %v5320 = vadd.f32 0.0, %v5319
        %5321 = vmatprep.mubr.bf16.mxu0 0
        %5322 = vmatmul.mubr.bf16.gmra.mxu0 %v3198
        %v5323 = vpop.f32.mrf.mxu0
        %v5324 = vadd.f32 0.0, %v5323
        %v5325 = vpop.f32.mrf.mxu0
        %v5326 = vadd.f32 0.0, %v5325
        %v5327 = vpop.f32.mrf.mxu0
        %v5328 = vadd.f32 0.0, %v5327
        %v5329 = vpop.f32.mrf.mxu0
        %v5330 = vadd.f32 0.0, %v5329
        %5331 = vmatprep.mubr.bf16.mxu0 0
        %5332 = vmatmul.mubr.bf16.gmra.mxu0 %v3199
        %v5333 = vpop.f32.mrf.mxu0
        %v5334 = vadd.f32 0.0, %v5333
        %v5335 = vpop.f32.mrf.mxu0
        %v5336 = vadd.f32 0.0, %v5335
        %v5337 = vpop.f32.mrf.mxu0
        %v5338 = vadd.f32 0.0, %v5337
        %v5339 = vpop.f32.mrf.mxu0
        %v5340 = vadd.f32 0.0, %v5339
        %5341 = vmatprep.mubr.bf16.mxu0 0
        %5342 = vmatmul.mubr.bf16.gmra.mxu0 %v3200
        %v5343 = vpop.f32.mrf.mxu0
        %v5344 = vadd.f32 0.0, %v5343
        %v5345 = vpop.f32.mrf.mxu0
        %v5346 = vadd.f32 0.0, %v5345
        %v5347 = vpop.f32.mrf.mxu0
        %v5348 = vadd.f32 0.0, %v5347
        %v5349 = vpop.f32.mrf.mxu0
        %v5350 = vadd.f32 0.0, %v5349
        %5351 = vmatprep.mubr.bf16.mxu0 0
        %5352 = vmatmul.mubr.bf16.gmra.mxu0 %v3201
        %v5353 = vpop.f32.mrf.mxu0
        %v5354 = vadd.f32 0.0, %v5353
        %v5355 = vpop.f32.mrf.mxu0
        %v5356 = vadd.f32 0.0, %v5355
        %v5357 = vpop.f32.mrf.mxu0
        %v5358 = vadd.f32 0.0, %v5357
        %v5359 = vpop.f32.mrf.mxu0
        %v5360 = vadd.f32 0.0, %v5359
        %5361 = vmatprep.mubr.bf16.mxu0 0
        %5362 = vmatmul.mubr.bf16.gmra.mxu0 %v3202
        %v5363 = vpop.f32.mrf.mxu0
        %v5364 = vadd.f32 0.0, %v5363
        %v5365 = vpop.f32.mrf.mxu0
        %v5366 = vadd.f32 0.0, %v5365
        %v5367 = vpop.f32.mrf.mxu0
        %v5368 = vadd.f32 0.0, %v5367
        %v5369 = vpop.f32.mrf.mxu0
        %v5370 = vadd.f32 0.0, %v5369
        %5371 = vmatprep.mubr.bf16.mxu0 0
        %5372 = vmatmul.mubr.bf16.gmra.mxu0 %v3203
        %v5373 = vpop.f32.mrf.mxu0
        %v5374 = vadd.f32 0.0, %v5373
        %v5375 = vpop.f32.mrf.mxu0
        %v5376 = vadd.f32 0.0, %v5375
        %v5377 = vpop.f32.mrf.mxu0
        %v5378 = vadd.f32 0.0, %v5377
        %v5379 = vpop.f32.mrf.mxu0
        %v5380 = vadd.f32 0.0, %v5379
        %5381 = vmatprep.mubr.bf16.mxu0 0
        %5382 = vmatmul.mubr.bf16.gmra.mxu0 %v3204
        %v5383 = vpop.f32.mrf.mxu0
        %v5384 = vadd.f32 0.0, %v5383
        %v5385 = vpop.f32.mrf.mxu0
        %v5386 = vadd.f32 0.0, %v5385
        %v5387 = vpop.f32.mrf.mxu0
        %v5388 = vadd.f32 0.0, %v5387
        %v5389 = vpop.f32.mrf.mxu0
        %v5390 = vadd.f32 0.0, %v5389
        %5391 = vmatprep.mubr.bf16.mxu0 0
        %5392 = vmatmul.mubr.bf16.gmra.mxu0 %v3205
        %v5393 = vpop.f32.mrf.mxu0
        %v5394 = vadd.f32 0.0, %v5393
        %v5395 = vpop.f32.mrf.mxu0
        %v5396 = vadd.f32 0.0, %v5395
        %v5397 = vpop.f32.mrf.mxu0
        %v5398 = vadd.f32 0.0, %v5397
        %v5399 = vpop.f32.mrf.mxu0
        %v5400 = vadd.f32 0.0, %v5399
        %5401 = vmatprep.mubr.bf16.mxu0 0
        %5402 = vmatmul.mubr.bf16.gmra.mxu0 %v3206
        %v5403 = vpop.f32.mrf.mxu0
        %v5404 = vadd.f32 0.0, %v5403
        %v5405 = vpop.f32.mrf.mxu0
        %v5406 = vadd.f32 0.0, %v5405
        %v5407 = vpop.f32.mrf.mxu0
        %v5408 = vadd.f32 0.0, %v5407
        %v5409 = vpop.f32.mrf.mxu0
        %v5410 = vadd.f32 0.0, %v5409
        %5411 = vmatprep.mubr.bf16.mxu0 0
        %5412 = vmatmul.mubr.bf16.gmra.mxu0 %v3207
        %v5413 = vpop.f32.mrf.mxu0
        %v5414 = vadd.f32 0.0, %v5413
        %v5415 = vpop.f32.mrf.mxu0
        %v5416 = vadd.f32 0.0, %v5415
        %v5417 = vpop.f32.mrf.mxu0
        %v5418 = vadd.f32 0.0, %v5417
        %v5419 = vpop.f32.mrf.mxu0
        %v5420 = vadd.f32 0.0, %v5419
        %5421 = vmatprep.mubr.bf16.mxu0 0
        %5422 = vmatmul.mubr.bf16.gmra.mxu0 %v3208
        %v5423 = vpop.f32.mrf.mxu0
        %v5424 = vadd.f32 0.0, %v5423
        %v5425 = vpop.f32.mrf.mxu0
        %v5426 = vadd.f32 0.0, %v5425
        %v5427 = vpop.f32.mrf.mxu0
        %v5428 = vadd.f32 0.0, %v5427
        %v5429 = vpop.f32.mrf.mxu0
        %v5430 = vadd.f32 0.0, %v5429
        %5431 = vmatprep.mubr.bf16.mxu0 0
        %5432 = vmatmul.mubr.bf16.gmra.mxu0 %v3209
        %v5433 = vpop.f32.mrf.mxu0
        %v5434 = vadd.f32 0.0, %v5433
        %v5435 = vpop.f32.mrf.mxu0
        %v5436 = vadd.f32 0.0, %v5435
        %v5437 = vpop.f32.mrf.mxu0
        %v5438 = vadd.f32 0.0, %v5437
        %v5439 = vpop.f32.mrf.mxu0
        %v5440 = vadd.f32 0.0, %v5439
        %5441 = vmatprep.mubr.bf16.mxu0 0
        %5442 = vmatmul.mubr.bf16.gmra.mxu0 %v3210
        %v5443 = vpop.f32.mrf.mxu0
        %v5444 = vadd.f32 0.0, %v5443
        %v5445 = vpop.f32.mrf.mxu0
        %v5446 = vadd.f32 0.0, %v5445
        %v5447 = vpop.f32.mrf.mxu0
        %v5448 = vadd.f32 0.0, %v5447
        %v5449 = vpop.f32.mrf.mxu0
        %v5450 = vadd.f32 0.0, %v5449
        %5451 = vmatprep.mubr.bf16.mxu0 0
        %5452 = vmatmul.mubr.bf16.gmra.mxu0 %v3211
        %v5453 = vpop.f32.mrf.mxu0
        %v5454 = vadd.f32 0.0, %v5453
        %v5455 = vpop.f32.mrf.mxu0
        %v5456 = vadd.f32 0.0, %v5455
        %v5457 = vpop.f32.mrf.mxu0
        %v5458 = vadd.f32 0.0, %v5457
        %v5459 = vpop.f32.mrf.mxu0
        %v5460 = vadd.f32 0.0, %v5459
        %5461 = vmatprep.mubr.bf16.mxu0 0
        %5462 = vmatmul.mubr.bf16.gmra.mxu0 %v3212
        %v5463 = vpop.f32.mrf.mxu0
        %v5464 = vadd.f32 0.0, %v5463
        %v5465 = vpop.f32.mrf.mxu0
        %v5466 = vadd.f32 0.0, %v5465
        %v5467 = vpop.f32.mrf.mxu0
        %v5468 = vadd.f32 0.0, %v5467
        %v5469 = vpop.f32.mrf.mxu0
        %v5470 = vadd.f32 0.0, %v5469
        %5471 = vmatprep.mubr.bf16.mxu0 0
        %5472 = vmatmul.mubr.bf16.gmra.mxu0 %v3213
        %v5473 = vpop.f32.mrf.mxu0
        %v5474 = vadd.f32 0.0, %v5473
        %v5475 = vpop.f32.mrf.mxu0
        %v5476 = vadd.f32 0.0, %v5475
        %v5477 = vpop.f32.mrf.mxu0
        %v5478 = vadd.f32 0.0, %v5477
        %v5479 = vpop.f32.mrf.mxu0
        %v5480 = vadd.f32 0.0, %v5479
        %5481 = vmatprep.mubr.bf16.mxu0 0
        %5482 = vmatmul.mubr.bf16.gmra.mxu0 %v3214
        %v5483 = vpop.f32.mrf.mxu0
        %v5484 = vadd.f32 0.0, %v5483
        %v5485 = vpop.f32.mrf.mxu0
        %v5486 = vadd.f32 0.0, %v5485
        %v5487 = vpop.f32.mrf.mxu0
        %v5488 = vadd.f32 0.0, %v5487
        %v5489 = vpop.f32.mrf.mxu0
        %v5490 = vadd.f32 0.0, %v5489
        %5491 = vmatprep.mubr.bf16.mxu0 0
        %5492 = vmatmul.mubr.bf16.gmra.mxu0 %v3215
        %v5493 = vpop.f32.mrf.mxu0
        %v5494 = vadd.f32 0.0, %v5493
        %v5495 = vpop.f32.mrf.mxu0
        %v5496 = vadd.f32 0.0, %v5495
        %v5497 = vpop.f32.mrf.mxu0
        %v5498 = vadd.f32 0.0, %v5497
        %v5499 = vpop.f32.mrf.mxu0
        %v5500 = vadd.f32 0.0, %v5499
        %5501 = vmatprep.mubr.bf16.mxu0 0
        %5502 = vmatmul.mubr.bf16.gmra.mxu0 %v3216
        %v5503 = vpop.f32.mrf.mxu0
        %v5504 = vadd.f32 0.0, %v5503
        %v5505 = vpop.f32.mrf.mxu0
        %v5506 = vadd.f32 0.0, %v5505
        %v5507 = vpop.f32.mrf.mxu0
        %v5508 = vadd.f32 0.0, %v5507
        %v5509 = vpop.f32.mrf.mxu0
        %v5510 = vadd.f32 0.0, %v5509
        %5511 = vmatprep.mubr.bf16.mxu0 0
        %5512 = vmatmul.mubr.bf16.gmra.mxu0 %v3217
        %v5513 = vpop.f32.mrf.mxu0
        %v5514 = vadd.f32 0.0, %v5513
        %v5515 = vpop.f32.mrf.mxu0
        %v5516 = vadd.f32 0.0, %v5515
        %v5517 = vpop.f32.mrf.mxu0
        %v5518 = vadd.f32 0.0, %v5517
        %v5519 = vpop.f32.mrf.mxu0
        %v5520 = vadd.f32 0.0, %v5519
        %5521 = vmatprep.mubr.bf16.mxu0 0
        %5522 = vmatmul.mubr.bf16.gmra.mxu0 %v3218
        %v5523 = vpop.f32.mrf.mxu0
        %v5524 = vadd.f32 0.0, %v5523
        %v5525 = vpop.f32.mrf.mxu0
        %v5526 = vadd.f32 0.0, %v5525
        %v5527 = vpop.f32.mrf.mxu0
        %v5528 = vadd.f32 0.0, %v5527
        %v5529 = vpop.f32.mrf.mxu0
        %v5530 = vadd.f32 0.0, %v5529
        %5531 = vmatprep.mubr.bf16.mxu0 0
        %5532 = vmatmul.mubr.bf16.gmra.mxu0 %v3219
        %v5533 = vpop.f32.mrf.mxu0
        %v5534 = vadd.f32 0.0, %v5533
        %v5535 = vpop.f32.mrf.mxu0
        %v5536 = vadd.f32 0.0, %v5535
        %v5537 = vpop.f32.mrf.mxu0
        %v5538 = vadd.f32 0.0, %v5537
        %v5539 = vpop.f32.mrf.mxu0
        %v5540 = vadd.f32 0.0, %v5539
        %5541 = vmatprep.mubr.bf16.mxu0 0
        %5542 = vmatmul.mubr.bf16.gmra.mxu0 %v3220
        %v5543 = vpop.f32.mrf.mxu0
        %v5544 = vadd.f32 0.0, %v5543
        %v5545 = vpop.f32.mrf.mxu0
        %v5546 = vadd.f32 0.0, %v5545
        %v5547 = vpop.f32.mrf.mxu0
        %v5548 = vadd.f32 0.0, %v5547
        %v5549 = vpop.f32.mrf.mxu0
        %v5550 = vadd.f32 0.0, %v5549
        %5551 = vmatprep.mubr.bf16.mxu0 0
        %5552 = vmatmul.mubr.bf16.gmra.mxu0 %v3221
        %v5553 = vpop.f32.mrf.mxu0
        %v5554 = vadd.f32 0.0, %v5553
        %v5555 = vpop.f32.mrf.mxu0
        %v5556 = vadd.f32 0.0, %v5555
        %v5557 = vpop.f32.mrf.mxu0
        %v5558 = vadd.f32 0.0, %v5557
        %v5559 = vpop.f32.mrf.mxu0
        %v5560 = vadd.f32 0.0, %v5559
        %5561 = vmatprep.mubr.bf16.mxu0 0
        %5562 = vmatmul.mubr.bf16.gmra.mxu0 %v3222
        %v5563 = vpop.f32.mrf.mxu0
        %v5564 = vadd.f32 0.0, %v5563
        %v5565 = vpop.f32.mrf.mxu0
        %v5566 = vadd.f32 0.0, %v5565
        %v5567 = vpop.f32.mrf.mxu0
        %v5568 = vadd.f32 0.0, %v5567
        %v5569 = vpop.f32.mrf.mxu0
        %v5570 = vadd.f32 0.0, %v5569
        %5571 = vmatprep.mubr.bf16.mxu0 0
        %5572 = vmatmul.mubr.bf16.gmra.mxu0 %v3223
        %v5573 = vpop.f32.mrf.mxu0
        %v5574 = vadd.f32 0.0, %v5573
        %v5575 = vpop.f32.mrf.mxu0
        %v5576 = vadd.f32 0.0, %v5575
        %v5577 = vpop.f32.mrf.mxu0
        %v5578 = vadd.f32 0.0, %v5577
        %v5579 = vpop.f32.mrf.mxu0
        %v5580 = vadd.f32 0.0, %v5579
        %5581 = vmatprep.mubr.bf16.mxu0 0
        %5582 = vmatmul.mubr.bf16.gmra.mxu0 %v3224
        %v5583 = vpop.f32.mrf.mxu0
        %v5584 = vadd.f32 0.0, %v5583
        %v5585 = vpop.f32.mrf.mxu0
        %v5586 = vadd.f32 0.0, %v5585
        %v5587 = vpop.f32.mrf.mxu0
        %v5588 = vadd.f32 0.0, %v5587
        %v5589 = vpop.f32.mrf.mxu0
        %v5590 = vadd.f32 0.0, %v5589
        %5591 = vmatprep.mubr.bf16.mxu0 0
        %5592 = vmatmul.mubr.bf16.gmra.mxu0 %v3225
        %v5593 = vpop.f32.mrf.mxu0
        %v5594 = vadd.f32 0.0, %v5593
        %v5595 = vpop.f32.mrf.mxu0
        %v5596 = vadd.f32 0.0, %v5595
        %v5597 = vpop.f32.mrf.mxu0
        %v5598 = vadd.f32 0.0, %v5597
        %v5599 = vpop.f32.mrf.mxu0
        %v5600 = vadd.f32 0.0, %v5599
        %5601 = vmatprep.mubr.bf16.mxu0 0
        %5602 = vmatmul.mubr.bf16.gmra.mxu0 %v3226
        %v5603 = vpop.f32.mrf.mxu0
        %v5604 = vadd.f32 0.0, %v5603
        %v5605 = vpop.f32.mrf.mxu0
        %v5606 = vadd.f32 0.0, %v5605
        %v5607 = vpop.f32.mrf.mxu0
        %v5608 = vadd.f32 0.0, %v5607
        %v5609 = vpop.f32.mrf.mxu0
        %v5610 = vadd.f32 0.0, %v5609
        %5611 = vmatprep.mubr.bf16.mxu0 0
        %5612 = vmatmul.mubr.bf16.gmra.mxu0 %v3227
        %v5613 = vpop.f32.mrf.mxu0
        %v5614 = vadd.f32 0.0, %v5613
        %v5615 = vpop.f32.mrf.mxu0
        %v5616 = vadd.f32 0.0, %v5615
        %v5617 = vpop.f32.mrf.mxu0
        %v5618 = vadd.f32 0.0, %v5617
        %v5619 = vpop.f32.mrf.mxu0
        %v5620 = vadd.f32 0.0, %v5619
        %5621 = vmatprep.mubr.bf16.mxu0 0
        %5622 = vmatmul.mubr.bf16.gmra.mxu0 %v3228
        %v5623 = vpop.f32.mrf.mxu0
        %v5624 = vadd.f32 0.0, %v5623
        %v5625 = vpop.f32.mrf.mxu0
        %v5626 = vadd.f32 0.0, %v5625
        %v5627 = vpop.f32.mrf.mxu0
        %v5628 = vadd.f32 0.0, %v5627
        %v5629 = vpop.f32.mrf.mxu0
        %v5630 = vadd.f32 0.0, %v5629
        %5631 = vdwg.mxu0
        %5632 = vmatprep.subr.bf16.mxu0 %v3548
        %5633 = vmatpush1.bf16.msra.mxu0 %v3547
        %5634 = vmatprep.subr.bf16.mxu0 %v3540
        %5635 = vmatpush1.bf16.msra.mxu0 %v3539
        %5636 = vmatprep.subr.bf16.mxu0 %v3532
        %5637 = vmatpush1.bf16.msra.mxu0 %v3531
        %5638 = vmatprep.subr.bf16.mxu0 %v3524
        %5639 = vmatpush1.bf16.msra.mxu0 %v3523
        %5640 = vmatprep.subr.bf16.mxu0 %v3516
        %5641 = vmatpush1.bf16.msra.mxu0 %v3515
        %5642 = vmatprep.subr.bf16.mxu0 %v3508
        %5643 = vmatpush1.bf16.msra.mxu0 %v3507
        %5644 = vmatprep.subr.bf16.mxu0 %v3500
        %5645 = vmatpush1.bf16.msra.mxu0 %v3499
        %5646 = vmatprep.subr.bf16.mxu0 %v3492
        %5647 = vmatpush1.bf16.msra.mxu0 %v3491
        %5648 = vmatprep.subr.bf16.mxu0 0
        %5649 = vmatpush2.bf16.msra.mxu0 0
        %5650 = vmatprep.subr.bf16.mxu0 0
        %5651 = vmatpush2.bf16.msra.mxu0 0
        %5652 = vmatprep.subr.bf16.mxu0 0
        %5653 = vmatpush2.bf16.msra.mxu0 0
        %5654 = vmatprep.subr.bf16.mxu0 0
        %5655 = vmatpush2.bf16.msra.mxu0 0
        %5656 = vmatprep.subr.bf16.mxu0 0
        %5657 = vmatpush2.bf16.msra.mxu0 0
        %5658 = vmatprep.subr.bf16.mxu0 0
        %5659 = vmatpush2.bf16.msra.mxu0 0
        %5660 = vmatprep.subr.bf16.mxu0 0
        %5661 = vmatpush2.bf16.msra.mxu0 0
        %5662 = vmatprep.subr.bf16.mxu0 0
        %5663 = vmatpush2.bf16.msra.mxu0 0
        %5664 = vmatprep.mubr.bf16.mxu0 0
        %5665 = vmatmul.mubr.bf16.gmra.mxu0 %v3165
        %v5666 = vpop.f32.mrf.mxu0
        %v5667 = vadd.f32 0.0, %v5666
        %v5668 = vpop.f32.mrf.mxu0
        %v5669 = vadd.f32 0.0, %v5668
        %v5670 = vpop.f32.mrf.mxu0
        %v5671 = vadd.f32 0.0, %v5670
        %v5672 = vpop.f32.mrf.mxu0
        %v5673 = vadd.f32 0.0, %v5672
        %5674 = vmatprep.mubr.bf16.mxu0 0
        %5675 = vmatmul.mubr.bf16.gmra.mxu0 %v3166
        %v5676 = vpop.f32.mrf.mxu0
        %v5677 = vadd.f32 0.0, %v5676
        %v5678 = vpop.f32.mrf.mxu0
        %v5679 = vadd.f32 0.0, %v5678
        %v5680 = vpop.f32.mrf.mxu0
        %v5681 = vadd.f32 0.0, %v5680
        %v5682 = vpop.f32.mrf.mxu0
        %v5683 = vadd.f32 0.0, %v5682
        %5684 = vmatprep.mubr.bf16.mxu0 0
        %5685 = vmatmul.mubr.bf16.gmra.mxu0 %v3167
        %v5686 = vpop.f32.mrf.mxu0
        %v5687 = vadd.f32 0.0, %v5686
        %v5688 = vpop.f32.mrf.mxu0
        %v5689 = vadd.f32 0.0, %v5688
        %v5690 = vpop.f32.mrf.mxu0
        %v5691 = vadd.f32 0.0, %v5690
        %v5692 = vpop.f32.mrf.mxu0
        %v5693 = vadd.f32 0.0, %v5692
        %5694 = vmatprep.mubr.bf16.mxu0 0
        %5695 = vmatmul.mubr.bf16.gmra.mxu0 %v3168
        %v5696 = vpop.f32.mrf.mxu0
        %v5697 = vadd.f32 0.0, %v5696
        %v5698 = vpop.f32.mrf.mxu0
        %v5699 = vadd.f32 0.0, %v5698
        %v5700 = vpop.f32.mrf.mxu0
        %v5701 = vadd.f32 0.0, %v5700
        %v5702 = vpop.f32.mrf.mxu0
        %v5703 = vadd.f32 0.0, %v5702
        %5704 = vmatprep.mubr.bf16.mxu0 0
        %5705 = vmatmul.mubr.bf16.gmra.mxu0 %v3169
        %v5706 = vpop.f32.mrf.mxu0
        %v5707 = vadd.f32 0.0, %v5706
        %v5708 = vpop.f32.mrf.mxu0
        %v5709 = vadd.f32 0.0, %v5708
        %v5710 = vpop.f32.mrf.mxu0
        %v5711 = vadd.f32 0.0, %v5710
        %v5712 = vpop.f32.mrf.mxu0
        %v5713 = vadd.f32 0.0, %v5712
        %5714 = vmatprep.mubr.bf16.mxu0 0
        %5715 = vmatmul.mubr.bf16.gmra.mxu0 %v3170
        %v5716 = vpop.f32.mrf.mxu0
        %v5717 = vadd.f32 0.0, %v5716
        %v5718 = vpop.f32.mrf.mxu0
        %v5719 = vadd.f32 0.0, %v5718
        %v5720 = vpop.f32.mrf.mxu0
        %v5721 = vadd.f32 0.0, %v5720
        %v5722 = vpop.f32.mrf.mxu0
        %v5723 = vadd.f32 0.0, %v5722
        %5724 = vmatprep.mubr.bf16.mxu0 0
        %5725 = vmatmul.mubr.bf16.gmra.mxu0 %v3171
        %v5726 = vpop.f32.mrf.mxu0
        %v5727 = vadd.f32 0.0, %v5726
        %v5728 = vpop.f32.mrf.mxu0
        %v5729 = vadd.f32 0.0, %v5728
        %v5730 = vpop.f32.mrf.mxu0
        %v5731 = vadd.f32 0.0, %v5730
        %v5732 = vpop.f32.mrf.mxu0
        %v5733 = vadd.f32 0.0, %v5732
        %5734 = vmatprep.mubr.bf16.mxu0 0
        %5735 = vmatmul.mubr.bf16.gmra.mxu0 %v3172
        %v5736 = vpop.f32.mrf.mxu0
        %v5737 = vadd.f32 0.0, %v5736
        %v5738 = vpop.f32.mrf.mxu0
        %v5739 = vadd.f32 0.0, %v5738
        %v5740 = vpop.f32.mrf.mxu0
        %v5741 = vadd.f32 0.0, %v5740
        %v5742 = vpop.f32.mrf.mxu0
        %v5743 = vadd.f32 0.0, %v5742
        %5744 = vmatprep.mubr.bf16.mxu0 0
        %5745 = vmatmul.mubr.bf16.gmra.mxu0 %v3173
        %v5746 = vpop.f32.mrf.mxu0
        %v5747 = vadd.f32 0.0, %v5746
        %v5748 = vpop.f32.mrf.mxu0
        %v5749 = vadd.f32 0.0, %v5748
        %v5750 = vpop.f32.mrf.mxu0
        %v5751 = vadd.f32 0.0, %v5750
        %v5752 = vpop.f32.mrf.mxu0
        %v5753 = vadd.f32 0.0, %v5752
        %5754 = vmatprep.mubr.bf16.mxu0 0
        %5755 = vmatmul.mubr.bf16.gmra.mxu0 %v3174
        %v5756 = vpop.f32.mrf.mxu0
        %v5757 = vadd.f32 0.0, %v5756
        %v5758 = vpop.f32.mrf.mxu0
        %v5759 = vadd.f32 0.0, %v5758
        %v5760 = vpop.f32.mrf.mxu0
        %v5761 = vadd.f32 0.0, %v5760
        %v5762 = vpop.f32.mrf.mxu0
        %v5763 = vadd.f32 0.0, %v5762
        %5764 = vmatprep.mubr.bf16.mxu0 0
        %5765 = vmatmul.mubr.bf16.gmra.mxu0 %v3175
        %v5766 = vpop.f32.mrf.mxu0
        %v5767 = vadd.f32 0.0, %v5766
        %v5768 = vpop.f32.mrf.mxu0
        %v5769 = vadd.f32 0.0, %v5768
        %v5770 = vpop.f32.mrf.mxu0
        %v5771 = vadd.f32 0.0, %v5770
        %v5772 = vpop.f32.mrf.mxu0
        %v5773 = vadd.f32 0.0, %v5772
        %5774 = vmatprep.mubr.bf16.mxu0 0
        %5775 = vmatmul.mubr.bf16.gmra.mxu0 %v3176
        %v5776 = vpop.f32.mrf.mxu0
        %v5777 = vadd.f32 0.0, %v5776
        %v5778 = vpop.f32.mrf.mxu0
        %v5779 = vadd.f32 0.0, %v5778
        %v5780 = vpop.f32.mrf.mxu0
        %v5781 = vadd.f32 0.0, %v5780
        %v5782 = vpop.f32.mrf.mxu0
        %v5783 = vadd.f32 0.0, %v5782
        %5784 = vmatprep.mubr.bf16.mxu0 0
        %5785 = vmatmul.mubr.bf16.gmra.mxu0 %v3177
        %v5786 = vpop.f32.mrf.mxu0
        %v5787 = vadd.f32 0.0, %v5786
        %v5788 = vpop.f32.mrf.mxu0
        %v5789 = vadd.f32 0.0, %v5788
        %v5790 = vpop.f32.mrf.mxu0
        %v5791 = vadd.f32 0.0, %v5790
        %v5792 = vpop.f32.mrf.mxu0
        %v5793 = vadd.f32 0.0, %v5792
        %5794 = vmatprep.mubr.bf16.mxu0 0
        %5795 = vmatmul.mubr.bf16.gmra.mxu0 %v3178
        %v5796 = vpop.f32.mrf.mxu0
        %v5797 = vadd.f32 0.0, %v5796
        %v5798 = vpop.f32.mrf.mxu0
        %v5799 = vadd.f32 0.0, %v5798
        %v5800 = vpop.f32.mrf.mxu0
        %v5801 = vadd.f32 0.0, %v5800
        %v5802 = vpop.f32.mrf.mxu0
        %v5803 = vadd.f32 0.0, %v5802
        %5804 = vmatprep.mubr.bf16.mxu0 0
        %5805 = vmatmul.mubr.bf16.gmra.mxu0 %v3179
        %v5806 = vpop.f32.mrf.mxu0
        %v5807 = vadd.f32 0.0, %v5806
        %v5808 = vpop.f32.mrf.mxu0
        %v5809 = vadd.f32 0.0, %v5808
        %v5810 = vpop.f32.mrf.mxu0
        %v5811 = vadd.f32 0.0, %v5810
        %v5812 = vpop.f32.mrf.mxu0
        %v5813 = vadd.f32 0.0, %v5812
        %5814 = vmatprep.mubr.bf16.mxu0 0
        %5815 = vmatmul.mubr.bf16.gmra.mxu0 %v3180
        %v5816 = vpop.f32.mrf.mxu0
        %v5817 = vadd.f32 0.0, %v5816
        %v5818 = vpop.f32.mrf.mxu0
        %v5819 = vadd.f32 0.0, %v5818
        %v5820 = vpop.f32.mrf.mxu0
        %v5821 = vadd.f32 0.0, %v5820
        %v5822 = vpop.f32.mrf.mxu0
        %v5823 = vadd.f32 0.0, %v5822
        %5824 = vmatprep.mubr.bf16.mxu0 0
        %5825 = vmatmul.mubr.bf16.gmra.mxu0 %v3181
        %v5826 = vpop.f32.mrf.mxu0
        %v5827 = vadd.f32 0.0, %v5826
        %v5828 = vpop.f32.mrf.mxu0
        %v5829 = vadd.f32 0.0, %v5828
        %v5830 = vpop.f32.mrf.mxu0
        %v5831 = vadd.f32 0.0, %v5830
        %v5832 = vpop.f32.mrf.mxu0
        %v5833 = vadd.f32 0.0, %v5832
        %5834 = vmatprep.mubr.bf16.mxu0 0
        %5835 = vmatmul.mubr.bf16.gmra.mxu0 %v3182
        %v5836 = vpop.f32.mrf.mxu0
        %v5837 = vadd.f32 0.0, %v5836
        %v5838 = vpop.f32.mrf.mxu0
        %v5839 = vadd.f32 0.0, %v5838
        %v5840 = vpop.f32.mrf.mxu0
        %v5841 = vadd.f32 0.0, %v5840
        %v5842 = vpop.f32.mrf.mxu0
        %v5843 = vadd.f32 0.0, %v5842
        %5844 = vmatprep.mubr.bf16.mxu0 0
        %5845 = vmatmul.mubr.bf16.gmra.mxu0 %v3183
        %v5846 = vpop.f32.mrf.mxu0
        %v5847 = vadd.f32 0.0, %v5846
        %v5848 = vpop.f32.mrf.mxu0
        %v5849 = vadd.f32 0.0, %v5848
        %v5850 = vpop.f32.mrf.mxu0
        %v5851 = vadd.f32 0.0, %v5850
        %v5852 = vpop.f32.mrf.mxu0
        %v5853 = vadd.f32 0.0, %v5852
        %5854 = vmatprep.mubr.bf16.mxu0 0
        %5855 = vmatmul.mubr.bf16.gmra.mxu0 %v3184
        %v5856 = vpop.f32.mrf.mxu0
        %v5857 = vadd.f32 0.0, %v5856
        %v5858 = vpop.f32.mrf.mxu0
        %v5859 = vadd.f32 0.0, %v5858
        %v5860 = vpop.f32.mrf.mxu0
        %v5861 = vadd.f32 0.0, %v5860
        %v5862 = vpop.f32.mrf.mxu0
        %v5863 = vadd.f32 0.0, %v5862
        %5864 = vmatprep.mubr.bf16.mxu0 0
        %5865 = vmatmul.mubr.bf16.gmra.mxu0 %v3185
        %v5866 = vpop.f32.mrf.mxu0
        %v5867 = vadd.f32 0.0, %v5866
        %v5868 = vpop.f32.mrf.mxu0
        %v5869 = vadd.f32 0.0, %v5868
        %v5870 = vpop.f32.mrf.mxu0
        %v5871 = vadd.f32 0.0, %v5870
        %v5872 = vpop.f32.mrf.mxu0
        %v5873 = vadd.f32 0.0, %v5872
        %5874 = vmatprep.mubr.bf16.mxu0 0
        %5875 = vmatmul.mubr.bf16.gmra.mxu0 %v3186
        %v5876 = vpop.f32.mrf.mxu0
        %v5877 = vadd.f32 0.0, %v5876
        %v5878 = vpop.f32.mrf.mxu0
        %v5879 = vadd.f32 0.0, %v5878
        %v5880 = vpop.f32.mrf.mxu0
        %v5881 = vadd.f32 0.0, %v5880
        %v5882 = vpop.f32.mrf.mxu0
        %v5883 = vadd.f32 0.0, %v5882
        %5884 = vmatprep.mubr.bf16.mxu0 0
        %5885 = vmatmul.mubr.bf16.gmra.mxu0 %v3187
        %v5886 = vpop.f32.mrf.mxu0
        %v5887 = vadd.f32 0.0, %v5886
        %v5888 = vpop.f32.mrf.mxu0
        %v5889 = vadd.f32 0.0, %v5888
        %v5890 = vpop.f32.mrf.mxu0
        %v5891 = vadd.f32 0.0, %v5890
        %v5892 = vpop.f32.mrf.mxu0
        %v5893 = vadd.f32 0.0, %v5892
        %5894 = vmatprep.mubr.bf16.mxu0 0
        %5895 = vmatmul.mubr.bf16.gmra.mxu0 %v3188
        %v5896 = vpop.f32.mrf.mxu0
        %v5897 = vadd.f32 0.0, %v5896
        %v5898 = vpop.f32.mrf.mxu0
        %v5899 = vadd.f32 0.0, %v5898
        %v5900 = vpop.f32.mrf.mxu0
        %v5901 = vadd.f32 0.0, %v5900
        %v5902 = vpop.f32.mrf.mxu0
        %v5903 = vadd.f32 0.0, %v5902
        %5904 = vmatprep.mubr.bf16.mxu0 0
        %5905 = vmatmul.mubr.bf16.gmra.mxu0 %v3189
        %v5906 = vpop.f32.mrf.mxu0
        %v5907 = vadd.f32 0.0, %v5906
        %v5908 = vpop.f32.mrf.mxu0
        %v5909 = vadd.f32 0.0, %v5908
        %v5910 = vpop.f32.mrf.mxu0
        %v5911 = vadd.f32 0.0, %v5910
        %v5912 = vpop.f32.mrf.mxu0
        %v5913 = vadd.f32 0.0, %v5912
        %5914 = vmatprep.mubr.bf16.mxu0 0
        %5915 = vmatmul.mubr.bf16.gmra.mxu0 %v3190
        %v5916 = vpop.f32.mrf.mxu0
        %v5917 = vadd.f32 0.0, %v5916
        %v5918 = vpop.f32.mrf.mxu0
        %v5919 = vadd.f32 0.0, %v5918
        %v5920 = vpop.f32.mrf.mxu0
        %v5921 = vadd.f32 0.0, %v5920
        %v5922 = vpop.f32.mrf.mxu0
        %v5923 = vadd.f32 0.0, %v5922
        %5924 = vmatprep.mubr.bf16.mxu0 0
        %5925 = vmatmul.mubr.bf16.gmra.mxu0 %v3191
        %v5926 = vpop.f32.mrf.mxu0
        %v5927 = vadd.f32 0.0, %v5926
        %v5928 = vpop.f32.mrf.mxu0
        %v5929 = vadd.f32 0.0, %v5928
        %v5930 = vpop.f32.mrf.mxu0
        %v5931 = vadd.f32 0.0, %v5930
        %v5932 = vpop.f32.mrf.mxu0
        %v5933 = vadd.f32 0.0, %v5932
        %5934 = vmatprep.mubr.bf16.mxu0 0
        %5935 = vmatmul.mubr.bf16.gmra.mxu0 %v3192
        %v5936 = vpop.f32.mrf.mxu0
        %v5937 = vadd.f32 0.0, %v5936
        %v5938 = vpop.f32.mrf.mxu0
        %v5939 = vadd.f32 0.0, %v5938
        %v5940 = vpop.f32.mrf.mxu0
        %v5941 = vadd.f32 0.0, %v5940
        %v5942 = vpop.f32.mrf.mxu0
        %v5943 = vadd.f32 0.0, %v5942
        %5944 = vmatprep.mubr.bf16.mxu0 0
        %5945 = vmatmul.mubr.bf16.gmra.mxu0 %v3193
        %v5946 = vpop.f32.mrf.mxu0
        %v5947 = vadd.f32 0.0, %v5946
        %v5948 = vpop.f32.mrf.mxu0
        %v5949 = vadd.f32 0.0, %v5948
        %v5950 = vpop.f32.mrf.mxu0
        %v5951 = vadd.f32 0.0, %v5950
        %v5952 = vpop.f32.mrf.mxu0
        %v5953 = vadd.f32 0.0, %v5952
        %5954 = vmatprep.mubr.bf16.mxu0 0
        %5955 = vmatmul.mubr.bf16.gmra.mxu0 %v3194
        %v5956 = vpop.f32.mrf.mxu0
        %v5957 = vadd.f32 0.0, %v5956
        %v5958 = vpop.f32.mrf.mxu0
        %v5959 = vadd.f32 0.0, %v5958
        %v5960 = vpop.f32.mrf.mxu0
        %v5961 = vadd.f32 0.0, %v5960
        %v5962 = vpop.f32.mrf.mxu0
        %v5963 = vadd.f32 0.0, %v5962
        %5964 = vmatprep.mubr.bf16.mxu0 0
        %5965 = vmatmul.mubr.bf16.gmra.mxu0 %v3195
        %v5966 = vpop.f32.mrf.mxu0
        %v5967 = vadd.f32 0.0, %v5966
        %v5968 = vpop.f32.mrf.mxu0
        %v5969 = vadd.f32 0.0, %v5968
        %v5970 = vpop.f32.mrf.mxu0
        %v5971 = vadd.f32 0.0, %v5970
        %v5972 = vpop.f32.mrf.mxu0
        %v5973 = vadd.f32 0.0, %v5972
        %5974 = vmatprep.mubr.bf16.mxu0 0
        %5975 = vmatmul.mubr.bf16.gmra.mxu0 %v3196
        %v5976 = vpop.f32.mrf.mxu0
        %v5977 = vadd.f32 0.0, %v5976
        %v5978 = vpop.f32.mrf.mxu0
        %v5979 = vadd.f32 0.0, %v5978
        %v5980 = vpop.f32.mrf.mxu0
        %v5981 = vadd.f32 0.0, %v5980
        %v5982 = vpop.f32.mrf.mxu0
        %v5983 = vadd.f32 0.0, %v5982
        %5984 = vmatprep.mubr.bf16.mxu0 0
        %5985 = vmatmul.mubr.bf16.gmra.mxu0 %v3197
        %v5986 = vpop.f32.mrf.mxu0
        %v5987 = vadd.f32 0.0, %v5986
        %v5988 = vpop.f32.mrf.mxu0
        %v5989 = vadd.f32 0.0, %v5988
        %v5990 = vpop.f32.mrf.mxu0
        %v5991 = vadd.f32 0.0, %v5990
        %v5992 = vpop.f32.mrf.mxu0
        %v5993 = vadd.f32 0.0, %v5992
        %5994 = vmatprep.mubr.bf16.mxu0 0
        %5995 = vmatmul.mubr.bf16.gmra.mxu0 %v3198
        %v5996 = vpop.f32.mrf.mxu0
        %v5997 = vadd.f32 0.0, %v5996
        %v5998 = vpop.f32.mrf.mxu0
        %v5999 = vadd.f32 0.0, %v5998
        %v6000 = vpop.f32.mrf.mxu0
        %v6001 = vadd.f32 0.0, %v6000
        %v6002 = vpop.f32.mrf.mxu0
        %v6003 = vadd.f32 0.0, %v6002
        %6004 = vmatprep.mubr.bf16.mxu0 0
        %6005 = vmatmul.mubr.bf16.gmra.mxu0 %v3199
        %v6006 = vpop.f32.mrf.mxu0
        %v6007 = vadd.f32 0.0, %v6006
        %v6008 = vpop.f32.mrf.mxu0
        %v6009 = vadd.f32 0.0, %v6008
        %v6010 = vpop.f32.mrf.mxu0
        %v6011 = vadd.f32 0.0, %v6010
        %v6012 = vpop.f32.mrf.mxu0
        %v6013 = vadd.f32 0.0, %v6012
        %6014 = vmatprep.mubr.bf16.mxu0 0
        %6015 = vmatmul.mubr.bf16.gmra.mxu0 %v3200
        %v6016 = vpop.f32.mrf.mxu0
        %v6017 = vadd.f32 0.0, %v6016
        %v6018 = vpop.f32.mrf.mxu0
        %v6019 = vadd.f32 0.0, %v6018
        %v6020 = vpop.f32.mrf.mxu0
        %v6021 = vadd.f32 0.0, %v6020
        %v6022 = vpop.f32.mrf.mxu0
        %v6023 = vadd.f32 0.0, %v6022
        %6024 = vmatprep.mubr.bf16.mxu0 0
        %6025 = vmatmul.mubr.bf16.gmra.mxu0 %v3201
        %v6026 = vpop.f32.mrf.mxu0
        %v6027 = vadd.f32 0.0, %v6026
        %v6028 = vpop.f32.mrf.mxu0
        %v6029 = vadd.f32 0.0, %v6028
        %v6030 = vpop.f32.mrf.mxu0
        %v6031 = vadd.f32 0.0, %v6030
        %v6032 = vpop.f32.mrf.mxu0
        %v6033 = vadd.f32 0.0, %v6032
        %6034 = vmatprep.mubr.bf16.mxu0 0
        %6035 = vmatmul.mubr.bf16.gmra.mxu0 %v3202
        %v6036 = vpop.f32.mrf.mxu0
        %v6037 = vadd.f32 0.0, %v6036
        %v6038 = vpop.f32.mrf.mxu0
        %v6039 = vadd.f32 0.0, %v6038
        %v6040 = vpop.f32.mrf.mxu0
        %v6041 = vadd.f32 0.0, %v6040
        %v6042 = vpop.f32.mrf.mxu0
        %v6043 = vadd.f32 0.0, %v6042
        %6044 = vmatprep.mubr.bf16.mxu0 0
        %6045 = vmatmul.mubr.bf16.gmra.mxu0 %v3203
        %v6046 = vpop.f32.mrf.mxu0
        %v6047 = vadd.f32 0.0, %v6046
        %v6048 = vpop.f32.mrf.mxu0
        %v6049 = vadd.f32 0.0, %v6048
        %v6050 = vpop.f32.mrf.mxu0
        %v6051 = vadd.f32 0.0, %v6050
        %v6052 = vpop.f32.mrf.mxu0
        %v6053 = vadd.f32 0.0, %v6052
        %6054 = vmatprep.mubr.bf16.mxu0 0
        %6055 = vmatmul.mubr.bf16.gmra.mxu0 %v3204
        %v6056 = vpop.f32.mrf.mxu0
        %v6057 = vadd.f32 0.0, %v6056
        %v6058 = vpop.f32.mrf.mxu0
        %v6059 = vadd.f32 0.0, %v6058
        %v6060 = vpop.f32.mrf.mxu0
        %v6061 = vadd.f32 0.0, %v6060
        %v6062 = vpop.f32.mrf.mxu0
        %v6063 = vadd.f32 0.0, %v6062
        %6064 = vmatprep.mubr.bf16.mxu0 0
        %6065 = vmatmul.mubr.bf16.gmra.mxu0 %v3205
        %v6066 = vpop.f32.mrf.mxu0
        %v6067 = vadd.f32 0.0, %v6066
        %v6068 = vpop.f32.mrf.mxu0
        %v6069 = vadd.f32 0.0, %v6068
        %v6070 = vpop.f32.mrf.mxu0
        %v6071 = vadd.f32 0.0, %v6070
        %v6072 = vpop.f32.mrf.mxu0
        %v6073 = vadd.f32 0.0, %v6072
        %6074 = vmatprep.mubr.bf16.mxu0 0
        %6075 = vmatmul.mubr.bf16.gmra.mxu0 %v3206
        %v6076 = vpop.f32.mrf.mxu0
        %v6077 = vadd.f32 0.0, %v6076
        %v6078 = vpop.f32.mrf.mxu0
        %v6079 = vadd.f32 0.0, %v6078
        %v6080 = vpop.f32.mrf.mxu0
        %v6081 = vadd.f32 0.0, %v6080
        %v6082 = vpop.f32.mrf.mxu0
        %v6083 = vadd.f32 0.0, %v6082
        %6084 = vmatprep.mubr.bf16.mxu0 0
        %6085 = vmatmul.mubr.bf16.gmra.mxu0 %v3207
        %v6086 = vpop.f32.mrf.mxu0
        %v6087 = vadd.f32 0.0, %v6086
        %v6088 = vpop.f32.mrf.mxu0
        %v6089 = vadd.f32 0.0, %v6088
        %v6090 = vpop.f32.mrf.mxu0
        %v6091 = vadd.f32 0.0, %v6090
        %v6092 = vpop.f32.mrf.mxu0
        %v6093 = vadd.f32 0.0, %v6092
        %6094 = vmatprep.mubr.bf16.mxu0 0
        %6095 = vmatmul.mubr.bf16.gmra.mxu0 %v3208
        %v6096 = vpop.f32.mrf.mxu0
        %v6097 = vadd.f32 0.0, %v6096
        %v6098 = vpop.f32.mrf.mxu0
        %v6099 = vadd.f32 0.0, %v6098
        %v6100 = vpop.f32.mrf.mxu0
        %v6101 = vadd.f32 0.0, %v6100
        %v6102 = vpop.f32.mrf.mxu0
        %v6103 = vadd.f32 0.0, %v6102
        %6104 = vmatprep.mubr.bf16.mxu0 0
        %6105 = vmatmul.mubr.bf16.gmra.mxu0 %v3209
        %v6106 = vpop.f32.mrf.mxu0
        %v6107 = vadd.f32 0.0, %v6106
        %v6108 = vpop.f32.mrf.mxu0
        %v6109 = vadd.f32 0.0, %v6108
        %v6110 = vpop.f32.mrf.mxu0
        %v6111 = vadd.f32 0.0, %v6110
        %v6112 = vpop.f32.mrf.mxu0
        %v6113 = vadd.f32 0.0, %v6112
        %6114 = vmatprep.mubr.bf16.mxu0 0
        %6115 = vmatmul.mubr.bf16.gmra.mxu0 %v3210
        %v6116 = vpop.f32.mrf.mxu0
        %v6117 = vadd.f32 0.0, %v6116
        %v6118 = vpop.f32.mrf.mxu0
        %v6119 = vadd.f32 0.0, %v6118
        %v6120 = vpop.f32.mrf.mxu0
        %v6121 = vadd.f32 0.0, %v6120
        %v6122 = vpop.f32.mrf.mxu0
        %v6123 = vadd.f32 0.0, %v6122
        %6124 = vmatprep.mubr.bf16.mxu0 0
        %6125 = vmatmul.mubr.bf16.gmra.mxu0 %v3211
        %v6126 = vpop.f32.mrf.mxu0
        %v6127 = vadd.f32 0.0, %v6126
        %v6128 = vpop.f32.mrf.mxu0
        %v6129 = vadd.f32 0.0, %v6128
        %v6130 = vpop.f32.mrf.mxu0
        %v6131 = vadd.f32 0.0, %v6130
        %v6132 = vpop.f32.mrf.mxu0
        %v6133 = vadd.f32 0.0, %v6132
        %6134 = vmatprep.mubr.bf16.mxu0 0
        %6135 = vmatmul.mubr.bf16.gmra.mxu0 %v3212
        %v6136 = vpop.f32.mrf.mxu0
        %v6137 = vadd.f32 0.0, %v6136
        %v6138 = vpop.f32.mrf.mxu0
        %v6139 = vadd.f32 0.0, %v6138
        %v6140 = vpop.f32.mrf.mxu0
        %v6141 = vadd.f32 0.0, %v6140
        %v6142 = vpop.f32.mrf.mxu0
        %v6143 = vadd.f32 0.0, %v6142
        %6144 = vmatprep.mubr.bf16.mxu0 0
        %6145 = vmatmul.mubr.bf16.gmra.mxu0 %v3213
        %v6146 = vpop.f32.mrf.mxu0
        %v6147 = vadd.f32 0.0, %v6146
        %v6148 = vpop.f32.mrf.mxu0
        %v6149 = vadd.f32 0.0, %v6148
        %v6150 = vpop.f32.mrf.mxu0
        %v6151 = vadd.f32 0.0, %v6150
        %v6152 = vpop.f32.mrf.mxu0
        %v6153 = vadd.f32 0.0, %v6152
        %6154 = vmatprep.mubr.bf16.mxu0 0
        %6155 = vmatmul.mubr.bf16.gmra.mxu0 %v3214
        %v6156 = vpop.f32.mrf.mxu0
        %v6157 = vadd.f32 0.0, %v6156
        %v6158 = vpop.f32.mrf.mxu0
        %v6159 = vadd.f32 0.0, %v6158
        %v6160 = vpop.f32.mrf.mxu0
        %v6161 = vadd.f32 0.0, %v6160
        %v6162 = vpop.f32.mrf.mxu0
        %v6163 = vadd.f32 0.0, %v6162
        %6164 = vmatprep.mubr.bf16.mxu0 0
        %6165 = vmatmul.mubr.bf16.gmra.mxu0 %v3215
        %v6166 = vpop.f32.mrf.mxu0
        %v6167 = vadd.f32 0.0, %v6166
        %v6168 = vpop.f32.mrf.mxu0
        %v6169 = vadd.f32 0.0, %v6168
        %v6170 = vpop.f32.mrf.mxu0
        %v6171 = vadd.f32 0.0, %v6170
        %v6172 = vpop.f32.mrf.mxu0
        %v6173 = vadd.f32 0.0, %v6172
        %6174 = vmatprep.mubr.bf16.mxu0 0
        %6175 = vmatmul.mubr.bf16.gmra.mxu0 %v3216
        %v6176 = vpop.f32.mrf.mxu0
        %v6177 = vadd.f32 0.0, %v6176
        %v6178 = vpop.f32.mrf.mxu0
        %v6179 = vadd.f32 0.0, %v6178
        %v6180 = vpop.f32.mrf.mxu0
        %v6181 = vadd.f32 0.0, %v6180
        %v6182 = vpop.f32.mrf.mxu0
        %v6183 = vadd.f32 0.0, %v6182
        %6184 = vmatprep.mubr.bf16.mxu0 0
        %6185 = vmatmul.mubr.bf16.gmra.mxu0 %v3217
        %v6186 = vpop.f32.mrf.mxu0
        %v6187 = vadd.f32 0.0, %v6186
        %v6188 = vpop.f32.mrf.mxu0
        %v6189 = vadd.f32 0.0, %v6188
        %v6190 = vpop.f32.mrf.mxu0
        %v6191 = vadd.f32 0.0, %v6190
        %v6192 = vpop.f32.mrf.mxu0
        %v6193 = vadd.f32 0.0, %v6192
        %6194 = vmatprep.mubr.bf16.mxu0 0
        %6195 = vmatmul.mubr.bf16.gmra.mxu0 %v3218
        %v6196 = vpop.f32.mrf.mxu0
        %v6197 = vadd.f32 0.0, %v6196
        %v6198 = vpop.f32.mrf.mxu0
        %v6199 = vadd.f32 0.0, %v6198
        %v6200 = vpop.f32.mrf.mxu0
        %v6201 = vadd.f32 0.0, %v6200
        %v6202 = vpop.f32.mrf.mxu0
        %v6203 = vadd.f32 0.0, %v6202
        %6204 = vmatprep.mubr.bf16.mxu0 0
        %6205 = vmatmul.mubr.bf16.gmra.mxu0 %v3219
        %v6206 = vpop.f32.mrf.mxu0
        %v6207 = vadd.f32 0.0, %v6206
        %v6208 = vpop.f32.mrf.mxu0
        %v6209 = vadd.f32 0.0, %v6208
        %v6210 = vpop.f32.mrf.mxu0
        %v6211 = vadd.f32 0.0, %v6210
        %v6212 = vpop.f32.mrf.mxu0
        %v6213 = vadd.f32 0.0, %v6212
        %6214 = vmatprep.mubr.bf16.mxu0 0
        %6215 = vmatmul.mubr.bf16.gmra.mxu0 %v3220
        %v6216 = vpop.f32.mrf.mxu0
        %v6217 = vadd.f32 0.0, %v6216
        %v6218 = vpop.f32.mrf.mxu0
        %v6219 = vadd.f32 0.0, %v6218
        %v6220 = vpop.f32.mrf.mxu0
        %v6221 = vadd.f32 0.0, %v6220
        %v6222 = vpop.f32.mrf.mxu0
        %v6223 = vadd.f32 0.0, %v6222
        %6224 = vmatprep.mubr.bf16.mxu0 0
        %6225 = vmatmul.mubr.bf16.gmra.mxu0 %v3221
        %v6226 = vpop.f32.mrf.mxu0
        %v6227 = vadd.f32 0.0, %v6226
        %v6228 = vpop.f32.mrf.mxu0
        %v6229 = vadd.f32 0.0, %v6228
        %v6230 = vpop.f32.mrf.mxu0
        %v6231 = vadd.f32 0.0, %v6230
        %v6232 = vpop.f32.mrf.mxu0
        %v6233 = vadd.f32 0.0, %v6232
        %6234 = vmatprep.mubr.bf16.mxu0 0
        %6235 = vmatmul.mubr.bf16.gmra.mxu0 %v3222
        %v6236 = vpop.f32.mrf.mxu0
        %v6237 = vadd.f32 0.0, %v6236
        %v6238 = vpop.f32.mrf.mxu0
        %v6239 = vadd.f32 0.0, %v6238
        %v6240 = vpop.f32.mrf.mxu0
        %v6241 = vadd.f32 0.0, %v6240
        %v6242 = vpop.f32.mrf.mxu0
        %v6243 = vadd.f32 0.0, %v6242
        %6244 = vmatprep.mubr.bf16.mxu0 0
        %6245 = vmatmul.mubr.bf16.gmra.mxu0 %v3223
        %v6246 = vpop.f32.mrf.mxu0
        %v6247 = vadd.f32 0.0, %v6246
        %v6248 = vpop.f32.mrf.mxu0
        %v6249 = vadd.f32 0.0, %v6248
        %v6250 = vpop.f32.mrf.mxu0
        %v6251 = vadd.f32 0.0, %v6250
        %v6252 = vpop.f32.mrf.mxu0
        %v6253 = vadd.f32 0.0, %v6252
        %6254 = vmatprep.mubr.bf16.mxu0 0
        %6255 = vmatmul.mubr.bf16.gmra.mxu0 %v3224
        %v6256 = vpop.f32.mrf.mxu0
        %v6257 = vadd.f32 0.0, %v6256
        %v6258 = vpop.f32.mrf.mxu0
        %v6259 = vadd.f32 0.0, %v6258
        %v6260 = vpop.f32.mrf.mxu0
        %v6261 = vadd.f32 0.0, %v6260
        %v6262 = vpop.f32.mrf.mxu0
        %v6263 = vadd.f32 0.0, %v6262
        %6264 = vmatprep.mubr.bf16.mxu0 0
        %6265 = vmatmul.mubr.bf16.gmra.mxu0 %v3225
        %v6266 = vpop.f32.mrf.mxu0
        %v6267 = vadd.f32 0.0, %v6266
        %v6268 = vpop.f32.mrf.mxu0
        %v6269 = vadd.f32 0.0, %v6268
        %v6270 = vpop.f32.mrf.mxu0
        %v6271 = vadd.f32 0.0, %v6270
        %v6272 = vpop.f32.mrf.mxu0
        %v6273 = vadd.f32 0.0, %v6272
        %6274 = vmatprep.mubr.bf16.mxu0 0
        %6275 = vmatmul.mubr.bf16.gmra.mxu0 %v3226
        %v6276 = vpop.f32.mrf.mxu0
        %v6277 = vadd.f32 0.0, %v6276
        %v6278 = vpop.f32.mrf.mxu0
        %v6279 = vadd.f32 0.0, %v6278
        %v6280 = vpop.f32.mrf.mxu0
        %v6281 = vadd.f32 0.0, %v6280
        %v6282 = vpop.f32.mrf.mxu0
        %v6283 = vadd.f32 0.0, %v6282
        %6284 = vmatprep.mubr.bf16.mxu0 0
        %6285 = vmatmul.mubr.bf16.gmra.mxu0 %v3227
        %v6286 = vpop.f32.mrf.mxu0
        %v6287 = vadd.f32 0.0, %v6286
        %v6288 = vpop.f32.mrf.mxu0
        %v6289 = vadd.f32 0.0, %v6288
        %v6290 = vpop.f32.mrf.mxu0
        %v6291 = vadd.f32 0.0, %v6290
        %v6292 = vpop.f32.mrf.mxu0
        %v6293 = vadd.f32 0.0, %v6292
        %6294 = vmatprep.mubr.bf16.mxu0 0
        %6295 = vmatmul.mubr.bf16.gmra.mxu0 %v3228
        %v6296 = vpop.f32.mrf.mxu0
        %v6297 = vadd.f32 0.0, %v6296
        %v6298 = vpop.f32.mrf.mxu0
        %v6299 = vadd.f32 0.0, %v6298
        %v6300 = vpop.f32.mrf.mxu0
        %v6301 = vadd.f32 0.0, %v6300
        %v6302 = vpop.f32.mrf.mxu0
        %v6303 = vadd.f32 0.0, %v6302
        %6304 = vdwg.mxu0
        %v6305 = vpack.c.bf16 %v3652, %v3648
        %v6306 = vpack.c.bf16 %v3654, %v3650
        %v6307 = vpack.c.bf16 %v4325, %v4321
        %v6308 = vpack.c.bf16 %v4327, %v4323
        %v6309 = vpack.c.bf16 %v4998, %v4994
        %v6310 = vpack.c.bf16 %v5000, %v4996
        %v6311 = vpack.c.bf16 %v5671, %v5667
        %v6312 = vpack.c.bf16 %v5673, %v5669
        %v6313 = vpack.c.bf16 %v3662, %v3658
        %v6314 = vpack.c.bf16 %v3664, %v3660
        %v6315 = vpack.c.bf16 %v4335, %v4331
        %v6316 = vpack.c.bf16 %v4337, %v4333
        %v6317 = vpack.c.bf16 %v5008, %v5004
        %v6318 = vpack.c.bf16 %v5010, %v5006
        %v6319 = vpack.c.bf16 %v5681, %v5677
        %v6320 = vpack.c.bf16 %v5683, %v5679
        %v6321 = vpack.c.bf16 %v3672, %v3668
        %v6322 = vpack.c.bf16 %v3674, %v3670
        %v6323 = vpack.c.bf16 %v4345, %v4341
        %v6324 = vpack.c.bf16 %v4347, %v4343
        %v6325 = vpack.c.bf16 %v5018, %v5014
        %v6326 = vpack.c.bf16 %v5020, %v5016
        %v6327 = vpack.c.bf16 %v5691, %v5687
        %v6328 = vpack.c.bf16 %v5693, %v5689
        %v6329 = vpack.c.bf16 %v3682, %v3678
        %v6330 = vpack.c.bf16 %v3684, %v3680
        %v6331 = vpack.c.bf16 %v4355, %v4351
        %v6332 = vpack.c.bf16 %v4357, %v4353
        %v6333 = vpack.c.bf16 %v5028, %v5024
        %v6334 = vpack.c.bf16 %v5030, %v5026
        %v6335 = vpack.c.bf16 %v5701, %v5697
        %v6336 = vpack.c.bf16 %v5703, %v5699
        %v6337 = vpack.c.bf16 %v3692, %v3688
        %v6338 = vpack.c.bf16 %v3694, %v3690
        %v6339 = vpack.c.bf16 %v4365, %v4361
        %v6340 = vpack.c.bf16 %v4367, %v4363
        %v6341 = vpack.c.bf16 %v5038, %v5034
        %v6342 = vpack.c.bf16 %v5040, %v5036
        %v6343 = vpack.c.bf16 %v5711, %v5707
        %v6344 = vpack.c.bf16 %v5713, %v5709
        %v6345 = vpack.c.bf16 %v3702, %v3698
        %v6346 = vpack.c.bf16 %v3704, %v3700
        %v6347 = vpack.c.bf16 %v4375, %v4371
        %v6348 = vpack.c.bf16 %v4377, %v4373
        %v6349 = vpack.c.bf16 %v5048, %v5044
        %v6350 = vpack.c.bf16 %v5050, %v5046
        %v6351 = vpack.c.bf16 %v5721, %v5717
        %v6352 = vpack.c.bf16 %v5723, %v5719
        %v6353 = vpack.c.bf16 %v3712, %v3708
        %v6354 = vpack.c.bf16 %v3714, %v3710
        %v6355 = vpack.c.bf16 %v4385, %v4381
        %v6356 = vpack.c.bf16 %v4387, %v4383
        %v6357 = vpack.c.bf16 %v5058, %v5054
        %v6358 = vpack.c.bf16 %v5060, %v5056
        %v6359 = vpack.c.bf16 %v5731, %v5727
        %v6360 = vpack.c.bf16 %v5733, %v5729
        %v6361 = vpack.c.bf16 %v3722, %v3718
        %v6362 = vpack.c.bf16 %v3724, %v3720
        %v6363 = vpack.c.bf16 %v4395, %v4391
        %v6364 = vpack.c.bf16 %v4397, %v4393
        %v6365 = vpack.c.bf16 %v5068, %v5064
        %v6366 = vpack.c.bf16 %v5070, %v5066
        %v6367 = vpack.c.bf16 %v5741, %v5737
        %v6368 = vpack.c.bf16 %v5743, %v5739
        %v6369 = vpack.c.bf16 %v3732, %v3728
        %v6370 = vpack.c.bf16 %v3734, %v3730
        %v6371 = vpack.c.bf16 %v4405, %v4401
        %v6372 = vpack.c.bf16 %v4407, %v4403
        %v6373 = vpack.c.bf16 %v5078, %v5074
        %v6374 = vpack.c.bf16 %v5080, %v5076
        %v6375 = vpack.c.bf16 %v5751, %v5747
        %v6376 = vpack.c.bf16 %v5753, %v5749
        %v6377 = vpack.c.bf16 %v3742, %v3738
        %v6378 = vpack.c.bf16 %v3744, %v3740
        %v6379 = vpack.c.bf16 %v4415, %v4411
        %v6380 = vpack.c.bf16 %v4417, %v4413
        %v6381 = vpack.c.bf16 %v5088, %v5084
        %v6382 = vpack.c.bf16 %v5090, %v5086
        %v6383 = vpack.c.bf16 %v5761, %v5757
        %v6384 = vpack.c.bf16 %v5763, %v5759
        %v6385 = vpack.c.bf16 %v3752, %v3748
        %v6386 = vpack.c.bf16 %v3754, %v3750
        %v6387 = vpack.c.bf16 %v4425, %v4421
        %v6388 = vpack.c.bf16 %v4427, %v4423
        %v6389 = vpack.c.bf16 %v5098, %v5094
        %v6390 = vpack.c.bf16 %v5100, %v5096
        %v6391 = vpack.c.bf16 %v5771, %v5767
        %v6392 = vpack.c.bf16 %v5773, %v5769
        %v6393 = vpack.c.bf16 %v3762, %v3758
        %v6394 = vpack.c.bf16 %v3764, %v3760
        %v6395 = vpack.c.bf16 %v4435, %v4431
        %v6396 = vpack.c.bf16 %v4437, %v4433
        %v6397 = vpack.c.bf16 %v5108, %v5104
        %v6398 = vpack.c.bf16 %v5110, %v5106
        %v6399 = vpack.c.bf16 %v5781, %v5777
        %v6400 = vpack.c.bf16 %v5783, %v5779
        %v6401 = vpack.c.bf16 %v3772, %v3768
        %v6402 = vpack.c.bf16 %v3774, %v3770
        %v6403 = vpack.c.bf16 %v4445, %v4441
        %v6404 = vpack.c.bf16 %v4447, %v4443
        %v6405 = vpack.c.bf16 %v5118, %v5114
        %v6406 = vpack.c.bf16 %v5120, %v5116
        %v6407 = vpack.c.bf16 %v5791, %v5787
        %v6408 = vpack.c.bf16 %v5793, %v5789
        %v6409 = vpack.c.bf16 %v3782, %v3778
        %v6410 = vpack.c.bf16 %v3784, %v3780
        %v6411 = vpack.c.bf16 %v4455, %v4451
        %v6412 = vpack.c.bf16 %v4457, %v4453
        %v6413 = vpack.c.bf16 %v5128, %v5124
        %v6414 = vpack.c.bf16 %v5130, %v5126
        %v6415 = vpack.c.bf16 %v5801, %v5797
        %v6416 = vpack.c.bf16 %v5803, %v5799
        %v6417 = vpack.c.bf16 %v3792, %v3788
        %v6418 = vpack.c.bf16 %v3794, %v3790
        %v6419 = vpack.c.bf16 %v4465, %v4461
        %v6420 = vpack.c.bf16 %v4467, %v4463
        %v6421 = vpack.c.bf16 %v5138, %v5134
        %v6422 = vpack.c.bf16 %v5140, %v5136
        %v6423 = vpack.c.bf16 %v5811, %v5807
        %v6424 = vpack.c.bf16 %v5813, %v5809
        %v6425 = vpack.c.bf16 %v3802, %v3798
        %v6426 = vpack.c.bf16 %v3804, %v3800
        %v6427 = vpack.c.bf16 %v4475, %v4471
        %v6428 = vpack.c.bf16 %v4477, %v4473
        %v6429 = vpack.c.bf16 %v5148, %v5144
        %v6430 = vpack.c.bf16 %v5150, %v5146
        %v6431 = vpack.c.bf16 %v5821, %v5817
        %v6432 = vpack.c.bf16 %v5823, %v5819
        %v6433 = vpack.c.bf16 %v3812, %v3808
        %v6434 = vpack.c.bf16 %v3814, %v3810
        %v6435 = vpack.c.bf16 %v4485, %v4481
        %v6436 = vpack.c.bf16 %v4487, %v4483
        %v6437 = vpack.c.bf16 %v5158, %v5154
        %v6438 = vpack.c.bf16 %v5160, %v5156
        %v6439 = vpack.c.bf16 %v5831, %v5827
        %v6440 = vpack.c.bf16 %v5833, %v5829
        %v6441 = vpack.c.bf16 %v3822, %v3818
        %v6442 = vpack.c.bf16 %v3824, %v3820
        %v6443 = vpack.c.bf16 %v4495, %v4491
        %v6444 = vpack.c.bf16 %v4497, %v4493
        %v6445 = vpack.c.bf16 %v5168, %v5164
        %v6446 = vpack.c.bf16 %v5170, %v5166
        %v6447 = vpack.c.bf16 %v5841, %v5837
        %v6448 = vpack.c.bf16 %v5843, %v5839
        %v6449 = vpack.c.bf16 %v3832, %v3828
        %v6450 = vpack.c.bf16 %v3834, %v3830
        %v6451 = vpack.c.bf16 %v4505, %v4501
        %v6452 = vpack.c.bf16 %v4507, %v4503
        %v6453 = vpack.c.bf16 %v5178, %v5174
        %v6454 = vpack.c.bf16 %v5180, %v5176
        %v6455 = vpack.c.bf16 %v5851, %v5847
        %v6456 = vpack.c.bf16 %v5853, %v5849
        %v6457 = vpack.c.bf16 %v3842, %v3838
        %v6458 = vpack.c.bf16 %v3844, %v3840
        %v6459 = vpack.c.bf16 %v4515, %v4511
        %v6460 = vpack.c.bf16 %v4517, %v4513
        %v6461 = vpack.c.bf16 %v5188, %v5184
        %v6462 = vpack.c.bf16 %v5190, %v5186
        %v6463 = vpack.c.bf16 %v5861, %v5857
        %v6464 = vpack.c.bf16 %v5863, %v5859
        %v6465 = vpack.c.bf16 %v3852, %v3848
        %v6466 = vpack.c.bf16 %v3854, %v3850
        %v6467 = vpack.c.bf16 %v4525, %v4521
        %v6468 = vpack.c.bf16 %v4527, %v4523
        %v6469 = vpack.c.bf16 %v5198, %v5194
        %v6470 = vpack.c.bf16 %v5200, %v5196
        %v6471 = vpack.c.bf16 %v5871, %v5867
        %v6472 = vpack.c.bf16 %v5873, %v5869
        %v6473 = vpack.c.bf16 %v3862, %v3858
        %v6474 = vpack.c.bf16 %v3864, %v3860
        %v6475 = vpack.c.bf16 %v4535, %v4531
        %v6476 = vpack.c.bf16 %v4537, %v4533
        %v6477 = vpack.c.bf16 %v5208, %v5204
        %v6478 = vpack.c.bf16 %v5210, %v5206
        %v6479 = vpack.c.bf16 %v5881, %v5877
        %v6480 = vpack.c.bf16 %v5883, %v5879
        %v6481 = vpack.c.bf16 %v3872, %v3868
        %v6482 = vpack.c.bf16 %v3874, %v3870
        %v6483 = vpack.c.bf16 %v4545, %v4541
        %v6484 = vpack.c.bf16 %v4547, %v4543
        %v6485 = vpack.c.bf16 %v5218, %v5214
        %v6486 = vpack.c.bf16 %v5220, %v5216
        %v6487 = vpack.c.bf16 %v5891, %v5887
        %v6488 = vpack.c.bf16 %v5893, %v5889
        %v6489 = vpack.c.bf16 %v3882, %v3878
        %v6490 = vpack.c.bf16 %v3884, %v3880
        %v6491 = vpack.c.bf16 %v4555, %v4551
        %v6492 = vpack.c.bf16 %v4557, %v4553
        %v6493 = vpack.c.bf16 %v5228, %v5224
        %v6494 = vpack.c.bf16 %v5230, %v5226
        %v6495 = vpack.c.bf16 %v5901, %v5897
        %v6496 = vpack.c.bf16 %v5903, %v5899
        %v6497 = vpack.c.bf16 %v3892, %v3888
        %v6498 = vpack.c.bf16 %v3894, %v3890
        %v6499 = vpack.c.bf16 %v4565, %v4561
        %v6500 = vpack.c.bf16 %v4567, %v4563
        %v6501 = vpack.c.bf16 %v5238, %v5234
        %v6502 = vpack.c.bf16 %v5240, %v5236
        %v6503 = vpack.c.bf16 %v5911, %v5907
        %v6504 = vpack.c.bf16 %v5913, %v5909
        %v6505 = vpack.c.bf16 %v3902, %v3898
        %v6506 = vpack.c.bf16 %v3904, %v3900
        %v6507 = vpack.c.bf16 %v4575, %v4571
        %v6508 = vpack.c.bf16 %v4577, %v4573
        %v6509 = vpack.c.bf16 %v5248, %v5244
        %v6510 = vpack.c.bf16 %v5250, %v5246
        %v6511 = vpack.c.bf16 %v5921, %v5917
        %v6512 = vpack.c.bf16 %v5923, %v5919
        %v6513 = vpack.c.bf16 %v3912, %v3908
        %v6514 = vpack.c.bf16 %v3914, %v3910
        %v6515 = vpack.c.bf16 %v4585, %v4581
        %v6516 = vpack.c.bf16 %v4587, %v4583
        %v6517 = vpack.c.bf16 %v5258, %v5254
        %v6518 = vpack.c.bf16 %v5260, %v5256
        %v6519 = vpack.c.bf16 %v5931, %v5927
        %v6520 = vpack.c.bf16 %v5933, %v5929
        %v6521 = vpack.c.bf16 %v3922, %v3918
        %v6522 = vpack.c.bf16 %v3924, %v3920
        %v6523 = vpack.c.bf16 %v4595, %v4591
        %v6524 = vpack.c.bf16 %v4597, %v4593
        %v6525 = vpack.c.bf16 %v5268, %v5264
        %v6526 = vpack.c.bf16 %v5270, %v5266
        %v6527 = vpack.c.bf16 %v5941, %v5937
        %v6528 = vpack.c.bf16 %v5943, %v5939
        %v6529 = vpack.c.bf16 %v3932, %v3928
        %v6530 = vpack.c.bf16 %v3934, %v3930
        %v6531 = vpack.c.bf16 %v4605, %v4601
        %v6532 = vpack.c.bf16 %v4607, %v4603
        %v6533 = vpack.c.bf16 %v5278, %v5274
        %v6534 = vpack.c.bf16 %v5280, %v5276
        %v6535 = vpack.c.bf16 %v5951, %v5947
        %v6536 = vpack.c.bf16 %v5953, %v5949
        %v6537 = vpack.c.bf16 %v3942, %v3938
        %v6538 = vpack.c.bf16 %v3944, %v3940
        %v6539 = vpack.c.bf16 %v4615, %v4611
        %v6540 = vpack.c.bf16 %v4617, %v4613
        %v6541 = vpack.c.bf16 %v5288, %v5284
        %v6542 = vpack.c.bf16 %v5290, %v5286
        %v6543 = vpack.c.bf16 %v5961, %v5957
        %v6544 = vpack.c.bf16 %v5963, %v5959
        %v6545 = vpack.c.bf16 %v3952, %v3948
        %v6546 = vpack.c.bf16 %v3954, %v3950
        %v6547 = vpack.c.bf16 %v4625, %v4621
        %v6548 = vpack.c.bf16 %v4627, %v4623
        %v6549 = vpack.c.bf16 %v5298, %v5294
        %v6550 = vpack.c.bf16 %v5300, %v5296
        %v6551 = vpack.c.bf16 %v5971, %v5967
        %v6552 = vpack.c.bf16 %v5973, %v5969
        %v6553 = vpack.c.bf16 %v3962, %v3958
        %v6554 = vpack.c.bf16 %v3964, %v3960
        %v6555 = vpack.c.bf16 %v4635, %v4631
        %v6556 = vpack.c.bf16 %v4637, %v4633
        %v6557 = vpack.c.bf16 %v5308, %v5304
        %v6558 = vpack.c.bf16 %v5310, %v5306
        %v6559 = vpack.c.bf16 %v5981, %v5977
        %v6560 = vpack.c.bf16 %v5983, %v5979
        %v6561 = vpack.c.bf16 %v3972, %v3968
        %v6562 = vpack.c.bf16 %v3974, %v3970
        %v6563 = vpack.c.bf16 %v4645, %v4641
        %v6564 = vpack.c.bf16 %v4647, %v4643
        %v6565 = vpack.c.bf16 %v5318, %v5314
        %v6566 = vpack.c.bf16 %v5320, %v5316
        %v6567 = vpack.c.bf16 %v5991, %v5987
        %v6568 = vpack.c.bf16 %v5993, %v5989
        %v6569 = vpack.c.bf16 %v3982, %v3978
        %v6570 = vpack.c.bf16 %v3984, %v3980
        %v6571 = vpack.c.bf16 %v4655, %v4651
        %v6572 = vpack.c.bf16 %v4657, %v4653
        %v6573 = vpack.c.bf16 %v5328, %v5324
        %v6574 = vpack.c.bf16 %v5330, %v5326
        %v6575 = vpack.c.bf16 %v6001, %v5997
        %v6576 = vpack.c.bf16 %v6003, %v5999
        %v6577 = vpack.c.bf16 %v3992, %v3988
        %v6578 = vpack.c.bf16 %v3994, %v3990
        %v6579 = vpack.c.bf16 %v4665, %v4661
        %v6580 = vpack.c.bf16 %v4667, %v4663
        %v6581 = vpack.c.bf16 %v5338, %v5334
        %v6582 = vpack.c.bf16 %v5340, %v5336
        %v6583 = vpack.c.bf16 %v6011, %v6007
        %v6584 = vpack.c.bf16 %v6013, %v6009
        %v6585 = vpack.c.bf16 %v4002, %v3998
        %v6586 = vpack.c.bf16 %v4004, %v4000
        %v6587 = vpack.c.bf16 %v4675, %v4671
        %v6588 = vpack.c.bf16 %v4677, %v4673
        %v6589 = vpack.c.bf16 %v5348, %v5344
        %v6590 = vpack.c.bf16 %v5350, %v5346
        %v6591 = vpack.c.bf16 %v6021, %v6017
        %v6592 = vpack.c.bf16 %v6023, %v6019
        %v6593 = vpack.c.bf16 %v4012, %v4008
        %v6594 = vpack.c.bf16 %v4014, %v4010
        %v6595 = vpack.c.bf16 %v4685, %v4681
        %v6596 = vpack.c.bf16 %v4687, %v4683
        %v6597 = vpack.c.bf16 %v5358, %v5354
        %v6598 = vpack.c.bf16 %v5360, %v5356
        %v6599 = vpack.c.bf16 %v6031, %v6027
        %v6600 = vpack.c.bf16 %v6033, %v6029
        %v6601 = vpack.c.bf16 %v4022, %v4018
        %v6602 = vpack.c.bf16 %v4024, %v4020
        %v6603 = vpack.c.bf16 %v4695, %v4691
        %v6604 = vpack.c.bf16 %v4697, %v4693
        %v6605 = vpack.c.bf16 %v5368, %v5364
        %v6606 = vpack.c.bf16 %v5370, %v5366
        %v6607 = vpack.c.bf16 %v6041, %v6037
        %v6608 = vpack.c.bf16 %v6043, %v6039
        %v6609 = vpack.c.bf16 %v4032, %v4028
        %v6610 = vpack.c.bf16 %v4034, %v4030
        %v6611 = vpack.c.bf16 %v4705, %v4701
        %v6612 = vpack.c.bf16 %v4707, %v4703
        %v6613 = vpack.c.bf16 %v5378, %v5374
        %v6614 = vpack.c.bf16 %v5380, %v5376
        %v6615 = vpack.c.bf16 %v6051, %v6047
        %v6616 = vpack.c.bf16 %v6053, %v6049
        %v6617 = vpack.c.bf16 %v4042, %v4038
        %v6618 = vpack.c.bf16 %v4044, %v4040
        %v6619 = vpack.c.bf16 %v4715, %v4711
        %v6620 = vpack.c.bf16 %v4717, %v4713
        %v6621 = vpack.c.bf16 %v5388, %v5384
        %v6622 = vpack.c.bf16 %v5390, %v5386
        %v6623 = vpack.c.bf16 %v6061, %v6057
        %v6624 = vpack.c.bf16 %v6063, %v6059
        %v6625 = vpack.c.bf16 %v4052, %v4048
        %v6626 = vpack.c.bf16 %v4054, %v4050
        %v6627 = vpack.c.bf16 %v4725, %v4721
        %v6628 = vpack.c.bf16 %v4727, %v4723
        %v6629 = vpack.c.bf16 %v5398, %v5394
        %v6630 = vpack.c.bf16 %v5400, %v5396
        %v6631 = vpack.c.bf16 %v6071, %v6067
        %v6632 = vpack.c.bf16 %v6073, %v6069
        %v6633 = vpack.c.bf16 %v4062, %v4058
        %v6634 = vpack.c.bf16 %v4064, %v4060
        %v6635 = vpack.c.bf16 %v4735, %v4731
        %v6636 = vpack.c.bf16 %v4737, %v4733
        %v6637 = vpack.c.bf16 %v5408, %v5404
        %v6638 = vpack.c.bf16 %v5410, %v5406
        %v6639 = vpack.c.bf16 %v6081, %v6077
        %v6640 = vpack.c.bf16 %v6083, %v6079
        %v6641 = vpack.c.bf16 %v4072, %v4068
        %v6642 = vpack.c.bf16 %v4074, %v4070
        %v6643 = vpack.c.bf16 %v4745, %v4741
        %v6644 = vpack.c.bf16 %v4747, %v4743
        %v6645 = vpack.c.bf16 %v5418, %v5414
        %v6646 = vpack.c.bf16 %v5420, %v5416
        %v6647 = vpack.c.bf16 %v6091, %v6087
        %v6648 = vpack.c.bf16 %v6093, %v6089
        %v6649 = vpack.c.bf16 %v4082, %v4078
        %v6650 = vpack.c.bf16 %v4084, %v4080
        %v6651 = vpack.c.bf16 %v4755, %v4751
        %v6652 = vpack.c.bf16 %v4757, %v4753
        %v6653 = vpack.c.bf16 %v5428, %v5424
        %v6654 = vpack.c.bf16 %v5430, %v5426
        %v6655 = vpack.c.bf16 %v6101, %v6097
        %v6656 = vpack.c.bf16 %v6103, %v6099
        %v6657 = vpack.c.bf16 %v4092, %v4088
        %v6658 = vpack.c.bf16 %v4094, %v4090
        %v6659 = vpack.c.bf16 %v4765, %v4761
        %v6660 = vpack.c.bf16 %v4767, %v4763
        %v6661 = vpack.c.bf16 %v5438, %v5434
        %v6662 = vpack.c.bf16 %v5440, %v5436
        %v6663 = vpack.c.bf16 %v6111, %v6107
        %v6664 = vpack.c.bf16 %v6113, %v6109
        %v6665 = vpack.c.bf16 %v4102, %v4098
        %v6666 = vpack.c.bf16 %v4104, %v4100
        %v6667 = vpack.c.bf16 %v4775, %v4771
        %v6668 = vpack.c.bf16 %v4777, %v4773
        %v6669 = vpack.c.bf16 %v5448, %v5444
        %v6670 = vpack.c.bf16 %v5450, %v5446
        %v6671 = vpack.c.bf16 %v6121, %v6117
        %v6672 = vpack.c.bf16 %v6123, %v6119
        %v6673 = vpack.c.bf16 %v4112, %v4108
        %v6674 = vpack.c.bf16 %v4114, %v4110
        %v6675 = vpack.c.bf16 %v4785, %v4781
        %v6676 = vpack.c.bf16 %v4787, %v4783
        %v6677 = vpack.c.bf16 %v5458, %v5454
        %v6678 = vpack.c.bf16 %v5460, %v5456
        %v6679 = vpack.c.bf16 %v6131, %v6127
        %v6680 = vpack.c.bf16 %v6133, %v6129
        %v6681 = vpack.c.bf16 %v4122, %v4118
        %v6682 = vpack.c.bf16 %v4124, %v4120
        %v6683 = vpack.c.bf16 %v4795, %v4791
        %v6684 = vpack.c.bf16 %v4797, %v4793
        %v6685 = vpack.c.bf16 %v5468, %v5464
        %v6686 = vpack.c.bf16 %v5470, %v5466
        %v6687 = vpack.c.bf16 %v6141, %v6137
        %v6688 = vpack.c.bf16 %v6143, %v6139
        %v6689 = vpack.c.bf16 %v4132, %v4128
        %v6690 = vpack.c.bf16 %v4134, %v4130
        %v6691 = vpack.c.bf16 %v4805, %v4801
        %v6692 = vpack.c.bf16 %v4807, %v4803
        %v6693 = vpack.c.bf16 %v5478, %v5474
        %v6694 = vpack.c.bf16 %v5480, %v5476
        %v6695 = vpack.c.bf16 %v6151, %v6147
        %v6696 = vpack.c.bf16 %v6153, %v6149
        %v6697 = vpack.c.bf16 %v4142, %v4138
        %v6698 = vpack.c.bf16 %v4144, %v4140
        %v6699 = vpack.c.bf16 %v4815, %v4811
        %v6700 = vpack.c.bf16 %v4817, %v4813
        %v6701 = vpack.c.bf16 %v5488, %v5484
        %v6702 = vpack.c.bf16 %v5490, %v5486
        %v6703 = vpack.c.bf16 %v6161, %v6157
        %v6704 = vpack.c.bf16 %v6163, %v6159
        %v6705 = vpack.c.bf16 %v4152, %v4148
        %v6706 = vpack.c.bf16 %v4154, %v4150
        %v6707 = vpack.c.bf16 %v4825, %v4821
        %v6708 = vpack.c.bf16 %v4827, %v4823
        %v6709 = vpack.c.bf16 %v5498, %v5494
        %v6710 = vpack.c.bf16 %v5500, %v5496
        %v6711 = vpack.c.bf16 %v6171, %v6167
        %v6712 = vpack.c.bf16 %v6173, %v6169
        %v6713 = vpack.c.bf16 %v4162, %v4158
        %v6714 = vpack.c.bf16 %v4164, %v4160
        %v6715 = vpack.c.bf16 %v4835, %v4831
        %v6716 = vpack.c.bf16 %v4837, %v4833
        %v6717 = vpack.c.bf16 %v5508, %v5504
        %v6718 = vpack.c.bf16 %v5510, %v5506
        %v6719 = vpack.c.bf16 %v6181, %v6177
        %v6720 = vpack.c.bf16 %v6183, %v6179
        %v6721 = vpack.c.bf16 %v4172, %v4168
        %v6722 = vpack.c.bf16 %v4174, %v4170
        %v6723 = vpack.c.bf16 %v4845, %v4841
        %v6724 = vpack.c.bf16 %v4847, %v4843
        %v6725 = vpack.c.bf16 %v5518, %v5514
        %v6726 = vpack.c.bf16 %v5520, %v5516
        %v6727 = vpack.c.bf16 %v6191, %v6187
        %v6728 = vpack.c.bf16 %v6193, %v6189
        %v6729 = vpack.c.bf16 %v4182, %v4178
        %v6730 = vpack.c.bf16 %v4184, %v4180
        %v6731 = vpack.c.bf16 %v4855, %v4851
        %v6732 = vpack.c.bf16 %v4857, %v4853
        %v6733 = vpack.c.bf16 %v5528, %v5524
        %v6734 = vpack.c.bf16 %v5530, %v5526
        %v6735 = vpack.c.bf16 %v6201, %v6197
        %v6736 = vpack.c.bf16 %v6203, %v6199
        %v6737 = vpack.c.bf16 %v4192, %v4188
        %v6738 = vpack.c.bf16 %v4194, %v4190
        %v6739 = vpack.c.bf16 %v4865, %v4861
        %v6740 = vpack.c.bf16 %v4867, %v4863
        %v6741 = vpack.c.bf16 %v5538, %v5534
        %v6742 = vpack.c.bf16 %v5540, %v5536
        %v6743 = vpack.c.bf16 %v6211, %v6207
        %v6744 = vpack.c.bf16 %v6213, %v6209
        %v6745 = vpack.c.bf16 %v4202, %v4198
        %v6746 = vpack.c.bf16 %v4204, %v4200
        %v6747 = vpack.c.bf16 %v4875, %v4871
        %v6748 = vpack.c.bf16 %v4877, %v4873
        %v6749 = vpack.c.bf16 %v5548, %v5544
        %v6750 = vpack.c.bf16 %v5550, %v5546
        %v6751 = vpack.c.bf16 %v6221, %v6217
        %v6752 = vpack.c.bf16 %v6223, %v6219
        %v6753 = vpack.c.bf16 %v4212, %v4208
        %v6754 = vpack.c.bf16 %v4214, %v4210
        %v6755 = vpack.c.bf16 %v4885, %v4881
        %v6756 = vpack.c.bf16 %v4887, %v4883
        %v6757 = vpack.c.bf16 %v5558, %v5554
        %v6758 = vpack.c.bf16 %v5560, %v5556
        %v6759 = vpack.c.bf16 %v6231, %v6227
        %v6760 = vpack.c.bf16 %v6233, %v6229
        %v6761 = vpack.c.bf16 %v4222, %v4218
        %v6762 = vpack.c.bf16 %v4224, %v4220
        %v6763 = vpack.c.bf16 %v4895, %v4891
        %v6764 = vpack.c.bf16 %v4897, %v4893
        %v6765 = vpack.c.bf16 %v5568, %v5564
        %v6766 = vpack.c.bf16 %v5570, %v5566
        %v6767 = vpack.c.bf16 %v6241, %v6237
        %v6768 = vpack.c.bf16 %v6243, %v6239
        %v6769 = vpack.c.bf16 %v4232, %v4228
        %v6770 = vpack.c.bf16 %v4234, %v4230
        %v6771 = vpack.c.bf16 %v4905, %v4901
        %v6772 = vpack.c.bf16 %v4907, %v4903
        %v6773 = vpack.c.bf16 %v5578, %v5574
        %v6774 = vpack.c.bf16 %v5580, %v5576
        %v6775 = vpack.c.bf16 %v6251, %v6247
        %v6776 = vpack.c.bf16 %v6253, %v6249
        %v6777 = vpack.c.bf16 %v4242, %v4238
        %v6778 = vpack.c.bf16 %v4244, %v4240
        %v6779 = vpack.c.bf16 %v4915, %v4911
        %v6780 = vpack.c.bf16 %v4917, %v4913
        %v6781 = vpack.c.bf16 %v5588, %v5584
        %v6782 = vpack.c.bf16 %v5590, %v5586
        %v6783 = vpack.c.bf16 %v6261, %v6257
        %v6784 = vpack.c.bf16 %v6263, %v6259
        %v6785 = vpack.c.bf16 %v4252, %v4248
        %v6786 = vpack.c.bf16 %v4254, %v4250
        %v6787 = vpack.c.bf16 %v4925, %v4921
        %v6788 = vpack.c.bf16 %v4927, %v4923
        %v6789 = vpack.c.bf16 %v5598, %v5594
        %v6790 = vpack.c.bf16 %v5600, %v5596
        %v6791 = vpack.c.bf16 %v6271, %v6267
        %v6792 = vpack.c.bf16 %v6273, %v6269
        %v6793 = vpack.c.bf16 %v4262, %v4258
        %v6794 = vpack.c.bf16 %v4264, %v4260
        %v6795 = vpack.c.bf16 %v4935, %v4931
        %v6796 = vpack.c.bf16 %v4937, %v4933
        %v6797 = vpack.c.bf16 %v5608, %v5604
        %v6798 = vpack.c.bf16 %v5610, %v5606
        %v6799 = vpack.c.bf16 %v6281, %v6277
        %v6800 = vpack.c.bf16 %v6283, %v6279
        %v6801 = vpack.c.bf16 %v4272, %v4268
        %v6802 = vpack.c.bf16 %v4274, %v4270
        %v6803 = vpack.c.bf16 %v4945, %v4941
        %v6804 = vpack.c.bf16 %v4947, %v4943
        %v6805 = vpack.c.bf16 %v5618, %v5614
        %v6806 = vpack.c.bf16 %v5620, %v5616
        %v6807 = vpack.c.bf16 %v6291, %v6287
        %v6808 = vpack.c.bf16 %v6293, %v6289
        %v6809 = vpack.c.bf16 %v4282, %v4278
        %v6810 = vpack.c.bf16 %v4284, %v4280
        %v6811 = vpack.c.bf16 %v4955, %v4951
        %v6812 = vpack.c.bf16 %v4957, %v4953
        %v6813 = vpack.c.bf16 %v5628, %v5624
        %v6814 = vpack.c.bf16 %v5630, %v5626
        %v6815 = vpack.c.bf16 %v6301, %v6297
        %v6816 = vpack.c.bf16 %v6303, %v6299
        %v6817 = vmax.bf16 %v6305, %v6313
        %v6818 = vmax.bf16 %v6817, %v6321
        %v6819 = vmax.bf16 %v6818, %v6329
        %v6820 = vmax.bf16 %v6819, %v6337
        %v6821 = vmax.bf16 %v6820, %v6345
        %v6822 = vmax.bf16 %v6821, %v6353
        %v6823 = vmax.bf16 %v6822, %v6361
        %v6824 = vmax.bf16 %v6823, %v6369
        %v6825 = vmax.bf16 %v6824, %v6377
        %v6826 = vmax.bf16 %v6825, %v6385
        %v6827 = vmax.bf16 %v6826, %v6393
        %v6828 = vmax.bf16 %v6827, %v6401
        %v6829 = vmax.bf16 %v6828, %v6409
        %v6830 = vmax.bf16 %v6829, %v6417
        %v6831 = vmax.bf16 %v6830, %v6425
        %v6832 = vmax.bf16 %v6831, %v6433
        %v6833 = vmax.bf16 %v6832, %v6441
        %v6834 = vmax.bf16 %v6833, %v6449
        %v6835 = vmax.bf16 %v6834, %v6457
        %v6836 = vmax.bf16 %v6835, %v6465
        %v6837 = vmax.bf16 %v6836, %v6473
        %v6838 = vmax.bf16 %v6837, %v6481
        %v6839 = vmax.bf16 %v6838, %v6489
        %v6840 = vmax.bf16 %v6839, %v6497
        %v6841 = vmax.bf16 %v6840, %v6505
        %v6842 = vmax.bf16 %v6841, %v6513
        %v6843 = vmax.bf16 %v6842, %v6521
        %v6844 = vmax.bf16 %v6843, %v6529
        %v6845 = vmax.bf16 %v6844, %v6537
        %v6846 = vmax.bf16 %v6845, %v6545
        %v6847 = vmax.bf16 %v6846, %v6553
        %v6848 = vunpack.i.l.bf16 %v6847
        %v6849 = vunpack.i.h.bf16 %v6847
        %v6850 = vmax.f32 %v6848, %v6849
        %v6851 = vrot.slane %v6850, 4
        %v6852 = vmax.f32 %v6850, %v6851
        %v6853 = vrot.slane %v6852, 2
        %v6854 = vmax.f32 %v6852, %v6853
        %v6855 = vrot.slane %v6854, 1
        %v6856 = vmax.f32 %v6854, %v6855
        %v6857 = vpack.i.bf16 %v6856, %v6856
        %v6858 = vmax.bf16 %v6306, %v6314
        %v6859 = vmax.bf16 %v6858, %v6322
        %v6860 = vmax.bf16 %v6859, %v6330
        %v6861 = vmax.bf16 %v6860, %v6338
        %v6862 = vmax.bf16 %v6861, %v6346
        %v6863 = vmax.bf16 %v6862, %v6354
        %v6864 = vmax.bf16 %v6863, %v6362
        %v6865 = vmax.bf16 %v6864, %v6370
        %v6866 = vmax.bf16 %v6865, %v6378
        %v6867 = vmax.bf16 %v6866, %v6386
        %v6868 = vmax.bf16 %v6867, %v6394
        %v6869 = vmax.bf16 %v6868, %v6402
        %v6870 = vmax.bf16 %v6869, %v6410
        %v6871 = vmax.bf16 %v6870, %v6418
        %v6872 = vmax.bf16 %v6871, %v6426
        %v6873 = vmax.bf16 %v6872, %v6434
        %v6874 = vmax.bf16 %v6873, %v6442
        %v6875 = vmax.bf16 %v6874, %v6450
        %v6876 = vmax.bf16 %v6875, %v6458
        %v6877 = vmax.bf16 %v6876, %v6466
        %v6878 = vmax.bf16 %v6877, %v6474
        %v6879 = vmax.bf16 %v6878, %v6482
        %v6880 = vmax.bf16 %v6879, %v6490
        %v6881 = vmax.bf16 %v6880, %v6498
        %v6882 = vmax.bf16 %v6881, %v6506
        %v6883 = vmax.bf16 %v6882, %v6514
        %v6884 = vmax.bf16 %v6883, %v6522
        %v6885 = vmax.bf16 %v6884, %v6530
        %v6886 = vmax.bf16 %v6885, %v6538
        %v6887 = vmax.bf16 %v6886, %v6546
        %v6888 = vmax.bf16 %v6887, %v6554
        %v6889 = vunpack.i.l.bf16 %v6888
        %v6890 = vunpack.i.h.bf16 %v6888
        %v6891 = vmax.f32 %v6889, %v6890
        %v6892 = vrot.slane %v6891, 4
        %v6893 = vmax.f32 %v6891, %v6892
        %v6894 = vrot.slane %v6893, 2
        %v6895 = vmax.f32 %v6893, %v6894
        %v6896 = vrot.slane %v6895, 1
        %v6897 = vmax.f32 %v6895, %v6896
        %v6898 = vpack.i.bf16 %v6897, %v6897
        %v6899 = vmax.bf16 %v6307, %v6315
        %v6900 = vmax.bf16 %v6899, %v6323
        %v6901 = vmax.bf16 %v6900, %v6331
        %v6902 = vmax.bf16 %v6901, %v6339
        %v6903 = vmax.bf16 %v6902, %v6347
        %v6904 = vmax.bf16 %v6903, %v6355
        %v6905 = vmax.bf16 %v6904, %v6363
        %v6906 = vmax.bf16 %v6905, %v6371
        %v6907 = vmax.bf16 %v6906, %v6379
        %v6908 = vmax.bf16 %v6907, %v6387
        %v6909 = vmax.bf16 %v6908, %v6395
        %v6910 = vmax.bf16 %v6909, %v6403
        %v6911 = vmax.bf16 %v6910, %v6411
        %v6912 = vmax.bf16 %v6911, %v6419
        %v6913 = vmax.bf16 %v6912, %v6427
        %v6914 = vmax.bf16 %v6913, %v6435
        %v6915 = vmax.bf16 %v6914, %v6443
        %v6916 = vmax.bf16 %v6915, %v6451
        %v6917 = vmax.bf16 %v6916, %v6459
        %v6918 = vmax.bf16 %v6917, %v6467
        %v6919 = vmax.bf16 %v6918, %v6475
        %v6920 = vmax.bf16 %v6919, %v6483
        %v6921 = vmax.bf16 %v6920, %v6491
        %v6922 = vmax.bf16 %v6921, %v6499
        %v6923 = vmax.bf16 %v6922, %v6507
        %v6924 = vmax.bf16 %v6923, %v6515
        %v6925 = vmax.bf16 %v6924, %v6523
        %v6926 = vmax.bf16 %v6925, %v6531
        %v6927 = vmax.bf16 %v6926, %v6539
        %v6928 = vmax.bf16 %v6927, %v6547
        %v6929 = vmax.bf16 %v6928, %v6555
        %v6930 = vunpack.i.l.bf16 %v6929
        %v6931 = vunpack.i.h.bf16 %v6929
        %v6932 = vmax.f32 %v6930, %v6931
        %v6933 = vrot.slane %v6932, 4
        %v6934 = vmax.f32 %v6932, %v6933
        %v6935 = vrot.slane %v6934, 2
        %v6936 = vmax.f32 %v6934, %v6935
        %v6937 = vrot.slane %v6936, 1
        %v6938 = vmax.f32 %v6936, %v6937
        %v6939 = vpack.i.bf16 %v6938, %v6938
        %v6940 = vmax.bf16 %v6308, %v6316
        %v6941 = vmax.bf16 %v6940, %v6324
        %v6942 = vmax.bf16 %v6941, %v6332
        %v6943 = vmax.bf16 %v6942, %v6340
        %v6944 = vmax.bf16 %v6943, %v6348
        %v6945 = vmax.bf16 %v6944, %v6356
        %v6946 = vmax.bf16 %v6945, %v6364
        %v6947 = vmax.bf16 %v6946, %v6372
        %v6948 = vmax.bf16 %v6947, %v6380
        %v6949 = vmax.bf16 %v6948, %v6388
        %v6950 = vmax.bf16 %v6949, %v6396
        %v6951 = vmax.bf16 %v6950, %v6404
        %v6952 = vmax.bf16 %v6951, %v6412
        %v6953 = vmax.bf16 %v6952, %v6420
        %v6954 = vmax.bf16 %v6953, %v6428
        %v6955 = vmax.bf16 %v6954, %v6436
        %v6956 = vmax.bf16 %v6955, %v6444
        %v6957 = vmax.bf16 %v6956, %v6452
        %v6958 = vmax.bf16 %v6957, %v6460
        %v6959 = vmax.bf16 %v6958, %v6468
        %v6960 = vmax.bf16 %v6959, %v6476
        %v6961 = vmax.bf16 %v6960, %v6484
        %v6962 = vmax.bf16 %v6961, %v6492
        %v6963 = vmax.bf16 %v6962, %v6500
        %v6964 = vmax.bf16 %v6963, %v6508
        %v6965 = vmax.bf16 %v6964, %v6516
        %v6966 = vmax.bf16 %v6965, %v6524
        %v6967 = vmax.bf16 %v6966, %v6532
        %v6968 = vmax.bf16 %v6967, %v6540
        %v6969 = vmax.bf16 %v6968, %v6548
        %v6970 = vmax.bf16 %v6969, %v6556
        %v6971 = vunpack.i.l.bf16 %v6970
        %v6972 = vunpack.i.h.bf16 %v6970
        %v6973 = vmax.f32 %v6971, %v6972
        %v6974 = vrot.slane %v6973, 4
        %v6975 = vmax.f32 %v6973, %v6974
        %v6976 = vrot.slane %v6975, 2
        %v6977 = vmax.f32 %v6975, %v6976
        %v6978 = vrot.slane %v6977, 1
        %v6979 = vmax.f32 %v6977, %v6978
        %v6980 = vpack.i.bf16 %v6979, %v6979
        %v6981 = vmax.bf16 %v6309, %v6317
        %v6982 = vmax.bf16 %v6981, %v6325
        %v6983 = vmax.bf16 %v6982, %v6333
        %v6984 = vmax.bf16 %v6983, %v6341
        %v6985 = vmax.bf16 %v6984, %v6349
        %v6986 = vmax.bf16 %v6985, %v6357
        %v6987 = vmax.bf16 %v6986, %v6365
        %v6988 = vmax.bf16 %v6987, %v6373
        %v6989 = vmax.bf16 %v6988, %v6381
        %v6990 = vmax.bf16 %v6989, %v6389
        %v6991 = vmax.bf16 %v6990, %v6397
        %v6992 = vmax.bf16 %v6991, %v6405
        %v6993 = vmax.bf16 %v6992, %v6413
        %v6994 = vmax.bf16 %v6993, %v6421
        %v6995 = vmax.bf16 %v6994, %v6429
        %v6996 = vmax.bf16 %v6995, %v6437
        %v6997 = vmax.bf16 %v6996, %v6445
        %v6998 = vmax.bf16 %v6997, %v6453
        %v6999 = vmax.bf16 %v6998, %v6461
        %v7000 = vmax.bf16 %v6999, %v6469
        %v7001 = vmax.bf16 %v7000, %v6477
        %v7002 = vmax.bf16 %v7001, %v6485
        %v7003 = vmax.bf16 %v7002, %v6493
        %v7004 = vmax.bf16 %v7003, %v6501
        %v7005 = vmax.bf16 %v7004, %v6509
        %v7006 = vmax.bf16 %v7005, %v6517
        %v7007 = vmax.bf16 %v7006, %v6525
        %v7008 = vmax.bf16 %v7007, %v6533
        %v7009 = vmax.bf16 %v7008, %v6541
        %v7010 = vmax.bf16 %v7009, %v6549
        %v7011 = vmax.bf16 %v7010, %v6557
        %v7012 = vunpack.i.l.bf16 %v7011
        %v7013 = vunpack.i.h.bf16 %v7011
        %v7014 = vmax.f32 %v7012, %v7013
        %v7015 = vrot.slane %v7014, 4
        %v7016 = vmax.f32 %v7014, %v7015
        %v7017 = vrot.slane %v7016, 2
        %v7018 = vmax.f32 %v7016, %v7017
        %v7019 = vrot.slane %v7018, 1
        %v7020 = vmax.f32 %v7018, %v7019
        %v7021 = vpack.i.bf16 %v7020, %v7020
        %v7022 = vmax.bf16 %v6310, %v6318
        %v7023 = vmax.bf16 %v7022, %v6326
        %v7024 = vmax.bf16 %v7023, %v6334
        %v7025 = vmax.bf16 %v7024, %v6342
        %v7026 = vmax.bf16 %v7025, %v6350
        %v7027 = vmax.bf16 %v7026, %v6358
        %v7028 = vmax.bf16 %v7027, %v6366
        %v7029 = vmax.bf16 %v7028, %v6374
        %v7030 = vmax.bf16 %v7029, %v6382
        %v7031 = vmax.bf16 %v7030, %v6390
        %v7032 = vmax.bf16 %v7031, %v6398
        %v7033 = vmax.bf16 %v7032, %v6406
        %v7034 = vmax.bf16 %v7033, %v6414
        %v7035 = vmax.bf16 %v7034, %v6422
        %v7036 = vmax.bf16 %v7035, %v6430
        %v7037 = vmax.bf16 %v7036, %v6438
        %v7038 = vmax.bf16 %v7037, %v6446
        %v7039 = vmax.bf16 %v7038, %v6454
        %v7040 = vmax.bf16 %v7039, %v6462
        %v7041 = vmax.bf16 %v7040, %v6470
        %v7042 = vmax.bf16 %v7041, %v6478
        %v7043 = vmax.bf16 %v7042, %v6486
        %v7044 = vmax.bf16 %v7043, %v6494
        %v7045 = vmax.bf16 %v7044, %v6502
        %v7046 = vmax.bf16 %v7045, %v6510
        %v7047 = vmax.bf16 %v7046, %v6518
        %v7048 = vmax.bf16 %v7047, %v6526
        %v7049 = vmax.bf16 %v7048, %v6534
        %v7050 = vmax.bf16 %v7049, %v6542
        %v7051 = vmax.bf16 %v7050, %v6550
        %v7052 = vmax.bf16 %v7051, %v6558
        %v7053 = vunpack.i.l.bf16 %v7052
        %v7054 = vunpack.i.h.bf16 %v7052
        %v7055 = vmax.f32 %v7053, %v7054
        %v7056 = vrot.slane %v7055, 4
        %v7057 = vmax.f32 %v7055, %v7056
        %v7058 = vrot.slane %v7057, 2
        %v7059 = vmax.f32 %v7057, %v7058
        %v7060 = vrot.slane %v7059, 1
        %v7061 = vmax.f32 %v7059, %v7060
        %v7062 = vpack.i.bf16 %v7061, %v7061
        %v7063 = vmax.bf16 %v6311, %v6319
        %v7064 = vmax.bf16 %v7063, %v6327
        %v7065 = vmax.bf16 %v7064, %v6335
        %v7066 = vmax.bf16 %v7065, %v6343
        %v7067 = vmax.bf16 %v7066, %v6351
        %v7068 = vmax.bf16 %v7067, %v6359
        %v7069 = vmax.bf16 %v7068, %v6367
        %v7070 = vmax.bf16 %v7069, %v6375
        %v7071 = vmax.bf16 %v7070, %v6383
        %v7072 = vmax.bf16 %v7071, %v6391
        %v7073 = vmax.bf16 %v7072, %v6399
        %v7074 = vmax.bf16 %v7073, %v6407
        %v7075 = vmax.bf16 %v7074, %v6415
        %v7076 = vmax.bf16 %v7075, %v6423
        %v7077 = vmax.bf16 %v7076, %v6431
        %v7078 = vmax.bf16 %v7077, %v6439
        %v7079 = vmax.bf16 %v7078, %v6447
        %v7080 = vmax.bf16 %v7079, %v6455
        %v7081 = vmax.bf16 %v7080, %v6463
        %v7082 = vmax.bf16 %v7081, %v6471
        %v7083 = vmax.bf16 %v7082, %v6479
        %v7084 = vmax.bf16 %v7083, %v6487
        %v7085 = vmax.bf16 %v7084, %v6495
        %v7086 = vmax.bf16 %v7085, %v6503
        %v7087 = vmax.bf16 %v7086, %v6511
        %v7088 = vmax.bf16 %v7087, %v6519
        %v7089 = vmax.bf16 %v7088, %v6527
        %v7090 = vmax.bf16 %v7089, %v6535
        %v7091 = vmax.bf16 %v7090, %v6543
        %v7092 = vmax.bf16 %v7091, %v6551
        %v7093 = vmax.bf16 %v7092, %v6559
        %v7094 = vunpack.i.l.bf16 %v7093
        %v7095 = vunpack.i.h.bf16 %v7093
        %v7096 = vmax.f32 %v7094, %v7095
        %v7097 = vrot.slane %v7096, 4
        %v7098 = vmax.f32 %v7096, %v7097
        %v7099 = vrot.slane %v7098, 2
        %v7100 = vmax.f32 %v7098, %v7099
        %v7101 = vrot.slane %v7100, 1
        %v7102 = vmax.f32 %v7100, %v7101
        %v7103 = vpack.i.bf16 %v7102, %v7102
        %v7104 = vmax.bf16 %v6312, %v6320
        %v7105 = vmax.bf16 %v7104, %v6328
        %v7106 = vmax.bf16 %v7105, %v6336
        %v7107 = vmax.bf16 %v7106, %v6344
        %v7108 = vmax.bf16 %v7107, %v6352
        %v7109 = vmax.bf16 %v7108, %v6360
        %v7110 = vmax.bf16 %v7109, %v6368
        %v7111 = vmax.bf16 %v7110, %v6376
        %v7112 = vmax.bf16 %v7111, %v6384
        %v7113 = vmax.bf16 %v7112, %v6392
        %v7114 = vmax.bf16 %v7113, %v6400
        %v7115 = vmax.bf16 %v7114, %v6408
        %v7116 = vmax.bf16 %v7115, %v6416
        %v7117 = vmax.bf16 %v7116, %v6424
        %v7118 = vmax.bf16 %v7117, %v6432
        %v7119 = vmax.bf16 %v7118, %v6440
        %v7120 = vmax.bf16 %v7119, %v6448
        %v7121 = vmax.bf16 %v7120, %v6456
        %v7122 = vmax.bf16 %v7121, %v6464
        %v7123 = vmax.bf16 %v7122, %v6472
        %v7124 = vmax.bf16 %v7123, %v6480
        %v7125 = vmax.bf16 %v7124, %v6488
        %v7126 = vmax.bf16 %v7125, %v6496
        %v7127 = vmax.bf16 %v7126, %v6504
        %v7128 = vmax.bf16 %v7127, %v6512
        %v7129 = vmax.bf16 %v7128, %v6520
        %v7130 = vmax.bf16 %v7129, %v6528
        %v7131 = vmax.bf16 %v7130, %v6536
        %v7132 = vmax.bf16 %v7131, %v6544
        %v7133 = vmax.bf16 %v7132, %v6552
        %v7134 = vmax.bf16 %v7133, %v6560
        %v7135 = vunpack.i.l.bf16 %v7134
        %v7136 = vunpack.i.h.bf16 %v7134
        %v7137 = vmax.f32 %v7135, %v7136
        %v7138 = vrot.slane %v7137, 4
        %v7139 = vmax.f32 %v7137, %v7138
        %v7140 = vrot.slane %v7139, 2
        %v7141 = vmax.f32 %v7139, %v7140
        %v7142 = vrot.slane %v7141, 1
        %v7143 = vmax.f32 %v7141, %v7142
        %v7144 = vpack.i.bf16 %v7143, %v7143
        %v7145 = vmax.bf16 %v6561, %v6569
        %v7146 = vmax.bf16 %v7145, %v6577
        %v7147 = vmax.bf16 %v7146, %v6585
        %v7148 = vmax.bf16 %v7147, %v6593
        %v7149 = vmax.bf16 %v7148, %v6601
        %v7150 = vmax.bf16 %v7149, %v6609
        %v7151 = vmax.bf16 %v7150, %v6617
        %v7152 = vmax.bf16 %v7151, %v6625
        %v7153 = vmax.bf16 %v7152, %v6633
        %v7154 = vmax.bf16 %v7153, %v6641
        %v7155 = vmax.bf16 %v7154, %v6649
        %v7156 = vmax.bf16 %v7155, %v6657
        %v7157 = vmax.bf16 %v7156, %v6665
        %v7158 = vmax.bf16 %v7157, %v6673
        %v7159 = vmax.bf16 %v7158, %v6681
        %v7160 = vmax.bf16 %v7159, %v6689
        %v7161 = vmax.bf16 %v7160, %v6697
        %v7162 = vmax.bf16 %v7161, %v6705
        %v7163 = vmax.bf16 %v7162, %v6713
        %v7164 = vmax.bf16 %v7163, %v6721
        %v7165 = vmax.bf16 %v7164, %v6729
        %v7166 = vmax.bf16 %v7165, %v6737
        %v7167 = vmax.bf16 %v7166, %v6745
        %v7168 = vmax.bf16 %v7167, %v6753
        %v7169 = vmax.bf16 %v7168, %v6761
        %v7170 = vmax.bf16 %v7169, %v6769
        %v7171 = vmax.bf16 %v7170, %v6777
        %v7172 = vmax.bf16 %v7171, %v6785
        %v7173 = vmax.bf16 %v7172, %v6793
        %v7174 = vmax.bf16 %v7173, %v6801
        %v7175 = vmax.bf16 %v7174, %v6809
        %v7176 = vunpack.i.l.bf16 %v7175
        %v7177 = vunpack.i.h.bf16 %v7175
        %v7178 = vmax.f32 %v7176, %v7177
        %v7179 = vrot.slane %v7178, 4
        %v7180 = vmax.f32 %v7178, %v7179
        %v7181 = vrot.slane %v7180, 2
        %v7182 = vmax.f32 %v7180, %v7181
        %v7183 = vrot.slane %v7182, 1
        %v7184 = vmax.f32 %v7182, %v7183
        %v7185 = vpack.i.bf16 %v7184, %v7184
        %v7186 = vmax.bf16 %v6562, %v6570
        %v7187 = vmax.bf16 %v7186, %v6578
        %v7188 = vmax.bf16 %v7187, %v6586
        %v7189 = vmax.bf16 %v7188, %v6594
        %v7190 = vmax.bf16 %v7189, %v6602
        %v7191 = vmax.bf16 %v7190, %v6610
        %v7192 = vmax.bf16 %v7191, %v6618
        %v7193 = vmax.bf16 %v7192, %v6626
        %v7194 = vmax.bf16 %v7193, %v6634
        %v7195 = vmax.bf16 %v7194, %v6642
        %v7196 = vmax.bf16 %v7195, %v6650
        %v7197 = vmax.bf16 %v7196, %v6658
        %v7198 = vmax.bf16 %v7197, %v6666
        %v7199 = vmax.bf16 %v7198, %v6674
        %v7200 = vmax.bf16 %v7199, %v6682
        %v7201 = vmax.bf16 %v7200, %v6690
        %v7202 = vmax.bf16 %v7201, %v6698
        %v7203 = vmax.bf16 %v7202, %v6706
        %v7204 = vmax.bf16 %v7203, %v6714
        %v7205 = vmax.bf16 %v7204, %v6722
        %v7206 = vmax.bf16 %v7205, %v6730
        %v7207 = vmax.bf16 %v7206, %v6738
        %v7208 = vmax.bf16 %v7207, %v6746
        %v7209 = vmax.bf16 %v7208, %v6754
        %v7210 = vmax.bf16 %v7209, %v6762
        %v7211 = vmax.bf16 %v7210, %v6770
        %v7212 = vmax.bf16 %v7211, %v6778
        %v7213 = vmax.bf16 %v7212, %v6786
        %v7214 = vmax.bf16 %v7213, %v6794
        %v7215 = vmax.bf16 %v7214, %v6802
        %v7216 = vmax.bf16 %v7215, %v6810
        %v7217 = vunpack.i.l.bf16 %v7216
        %v7218 = vunpack.i.h.bf16 %v7216
        %v7219 = vmax.f32 %v7217, %v7218
        %v7220 = vrot.slane %v7219, 4
        %v7221 = vmax.f32 %v7219, %v7220
        %v7222 = vrot.slane %v7221, 2
        %v7223 = vmax.f32 %v7221, %v7222
        %v7224 = vrot.slane %v7223, 1
        %v7225 = vmax.f32 %v7223, %v7224
        %v7226 = vpack.i.bf16 %v7225, %v7225
        %v7227 = vmax.bf16 %v6563, %v6571
        %v7228 = vmax.bf16 %v7227, %v6579
        %v7229 = vmax.bf16 %v7228, %v6587
        %v7230 = vmax.bf16 %v7229, %v6595
        %v7231 = vmax.bf16 %v7230, %v6603
        %v7232 = vmax.bf16 %v7231, %v6611
        %v7233 = vmax.bf16 %v7232, %v6619
        %v7234 = vmax.bf16 %v7233, %v6627
        %v7235 = vmax.bf16 %v7234, %v6635
        %v7236 = vmax.bf16 %v7235, %v6643
        %v7237 = vmax.bf16 %v7236, %v6651
        %v7238 = vmax.bf16 %v7237, %v6659
        %v7239 = vmax.bf16 %v7238, %v6667
        %v7240 = vmax.bf16 %v7239, %v6675
        %v7241 = vmax.bf16 %v7240, %v6683
        %v7242 = vmax.bf16 %v7241, %v6691
        %v7243 = vmax.bf16 %v7242, %v6699
        %v7244 = vmax.bf16 %v7243, %v6707
        %v7245 = vmax.bf16 %v7244, %v6715
        %v7246 = vmax.bf16 %v7245, %v6723
        %v7247 = vmax.bf16 %v7246, %v6731
        %v7248 = vmax.bf16 %v7247, %v6739
        %v7249 = vmax.bf16 %v7248, %v6747
        %v7250 = vmax.bf16 %v7249, %v6755
        %v7251 = vmax.bf16 %v7250, %v6763
        %v7252 = vmax.bf16 %v7251, %v6771
        %v7253 = vmax.bf16 %v7252, %v6779
        %v7254 = vmax.bf16 %v7253, %v6787
        %v7255 = vmax.bf16 %v7254, %v6795
        %v7256 = vmax.bf16 %v7255, %v6803
        %v7257 = vmax.bf16 %v7256, %v6811
        %v7258 = vunpack.i.l.bf16 %v7257
        %v7259 = vunpack.i.h.bf16 %v7257
        %v7260 = vmax.f32 %v7258, %v7259
        %v7261 = vrot.slane %v7260, 4
        %v7262 = vmax.f32 %v7260, %v7261
        %v7263 = vrot.slane %v7262, 2
        %v7264 = vmax.f32 %v7262, %v7263
        %v7265 = vrot.slane %v7264, 1
        %v7266 = vmax.f32 %v7264, %v7265
        %v7267 = vpack.i.bf16 %v7266, %v7266
        %v7268 = vmax.bf16 %v6564, %v6572
        %v7269 = vmax.bf16 %v7268, %v6580
        %v7270 = vmax.bf16 %v7269, %v6588
        %v7271 = vmax.bf16 %v7270, %v6596
        %v7272 = vmax.bf16 %v7271, %v6604
        %v7273 = vmax.bf16 %v7272, %v6612
        %v7274 = vmax.bf16 %v7273, %v6620
        %v7275 = vmax.bf16 %v7274, %v6628
        %v7276 = vmax.bf16 %v7275, %v6636
        %v7277 = vmax.bf16 %v7276, %v6644
        %v7278 = vmax.bf16 %v7277, %v6652
        %v7279 = vmax.bf16 %v7278, %v6660
        %v7280 = vmax.bf16 %v7279, %v6668
        %v7281 = vmax.bf16 %v7280, %v6676
        %v7282 = vmax.bf16 %v7281, %v6684
        %v7283 = vmax.bf16 %v7282, %v6692
        %v7284 = vmax.bf16 %v7283, %v6700
        %v7285 = vmax.bf16 %v7284, %v6708
        %v7286 = vmax.bf16 %v7285, %v6716
        %v7287 = vmax.bf16 %v7286, %v6724
        %v7288 = vmax.bf16 %v7287, %v6732
        %v7289 = vmax.bf16 %v7288, %v6740
        %v7290 = vmax.bf16 %v7289, %v6748
        %v7291 = vmax.bf16 %v7290, %v6756
        %v7292 = vmax.bf16 %v7291, %v6764
        %v7293 = vmax.bf16 %v7292, %v6772
        %v7294 = vmax.bf16 %v7293, %v6780
        %v7295 = vmax.bf16 %v7294, %v6788
        %v7296 = vmax.bf16 %v7295, %v6796
        %v7297 = vmax.bf16 %v7296, %v6804
        %v7298 = vmax.bf16 %v7297, %v6812
        %v7299 = vunpack.i.l.bf16 %v7298
        %v7300 = vunpack.i.h.bf16 %v7298
        %v7301 = vmax.f32 %v7299, %v7300
        %v7302 = vrot.slane %v7301, 4
        %v7303 = vmax.f32 %v7301, %v7302
        %v7304 = vrot.slane %v7303, 2
        %v7305 = vmax.f32 %v7303, %v7304
        %v7306 = vrot.slane %v7305, 1
        %v7307 = vmax.f32 %v7305, %v7306
        %v7308 = vpack.i.bf16 %v7307, %v7307
        %v7309 = vmax.bf16 %v6565, %v6573
        %v7310 = vmax.bf16 %v7309, %v6581
        %v7311 = vmax.bf16 %v7310, %v6589
        %v7312 = vmax.bf16 %v7311, %v6597
        %v7313 = vmax.bf16 %v7312, %v6605
        %v7314 = vmax.bf16 %v7313, %v6613
        %v7315 = vmax.bf16 %v7314, %v6621
        %v7316 = vmax.bf16 %v7315, %v6629
        %v7317 = vmax.bf16 %v7316, %v6637
        %v7318 = vmax.bf16 %v7317, %v6645
        %v7319 = vmax.bf16 %v7318, %v6653
        %v7320 = vmax.bf16 %v7319, %v6661
        %v7321 = vmax.bf16 %v7320, %v6669
        %v7322 = vmax.bf16 %v7321, %v6677
        %v7323 = vmax.bf16 %v7322, %v6685
        %v7324 = vmax.bf16 %v7323, %v6693
        %v7325 = vmax.bf16 %v7324, %v6701
        %v7326 = vmax.bf16 %v7325, %v6709
        %v7327 = vmax.bf16 %v7326, %v6717
        %v7328 = vmax.bf16 %v7327, %v6725
        %v7329 = vmax.bf16 %v7328, %v6733
        %v7330 = vmax.bf16 %v7329, %v6741
        %v7331 = vmax.bf16 %v7330, %v6749
        %v7332 = vmax.bf16 %v7331, %v6757
        %v7333 = vmax.bf16 %v7332, %v6765
        %v7334 = vmax.bf16 %v7333, %v6773
        %v7335 = vmax.bf16 %v7334, %v6781
        %v7336 = vmax.bf16 %v7335, %v6789
        %v7337 = vmax.bf16 %v7336, %v6797
        %v7338 = vmax.bf16 %v7337, %v6805
        %v7339 = vmax.bf16 %v7338, %v6813
        %v7340 = vunpack.i.l.bf16 %v7339
        %v7341 = vunpack.i.h.bf16 %v7339
        %v7342 = vmax.f32 %v7340, %v7341
        %v7343 = vrot.slane %v7342, 4
        %v7344 = vmax.f32 %v7342, %v7343
        %v7345 = vrot.slane %v7344, 2
        %v7346 = vmax.f32 %v7344, %v7345
        %v7347 = vrot.slane %v7346, 1
        %v7348 = vmax.f32 %v7346, %v7347
        %v7349 = vpack.i.bf16 %v7348, %v7348
        %v7350 = vmax.bf16 %v6566, %v6574
        %v7351 = vmax.bf16 %v7350, %v6582
        %v7352 = vmax.bf16 %v7351, %v6590
        %v7353 = vmax.bf16 %v7352, %v6598
        %v7354 = vmax.bf16 %v7353, %v6606
        %v7355 = vmax.bf16 %v7354, %v6614
        %v7356 = vmax.bf16 %v7355, %v6622
        %v7357 = vmax.bf16 %v7356, %v6630
        %v7358 = vmax.bf16 %v7357, %v6638
        %v7359 = vmax.bf16 %v7358, %v6646
        %v7360 = vmax.bf16 %v7359, %v6654
        %v7361 = vmax.bf16 %v7360, %v6662
        %v7362 = vmax.bf16 %v7361, %v6670
        %v7363 = vmax.bf16 %v7362, %v6678
        %v7364 = vmax.bf16 %v7363, %v6686
        %v7365 = vmax.bf16 %v7364, %v6694
        %v7366 = vmax.bf16 %v7365, %v6702
        %v7367 = vmax.bf16 %v7366, %v6710
        %v7368 = vmax.bf16 %v7367, %v6718
        %v7369 = vmax.bf16 %v7368, %v6726
        %v7370 = vmax.bf16 %v7369, %v6734
        %v7371 = vmax.bf16 %v7370, %v6742
        %v7372 = vmax.bf16 %v7371, %v6750
        %v7373 = vmax.bf16 %v7372, %v6758
        %v7374 = vmax.bf16 %v7373, %v6766
        %v7375 = vmax.bf16 %v7374, %v6774
        %v7376 = vmax.bf16 %v7375, %v6782
        %v7377 = vmax.bf16 %v7376, %v6790
        %v7378 = vmax.bf16 %v7377, %v6798
        %v7379 = vmax.bf16 %v7378, %v6806
        %v7380 = vmax.bf16 %v7379, %v6814
        %v7381 = vunpack.i.l.bf16 %v7380
        %v7382 = vunpack.i.h.bf16 %v7380
        %v7383 = vmax.f32 %v7381, %v7382
        %v7384 = vrot.slane %v7383, 4
        %v7385 = vmax.f32 %v7383, %v7384
        %v7386 = vrot.slane %v7385, 2
        %v7387 = vmax.f32 %v7385, %v7386
        %v7388 = vrot.slane %v7387, 1
        %v7389 = vmax.f32 %v7387, %v7388
        %v7390 = vpack.i.bf16 %v7389, %v7389
        %v7391 = vmax.bf16 %v6567, %v6575
        %v7392 = vmax.bf16 %v7391, %v6583
        %v7393 = vmax.bf16 %v7392, %v6591
        %v7394 = vmax.bf16 %v7393, %v6599
        %v7395 = vmax.bf16 %v7394, %v6607
        %v7396 = vmax.bf16 %v7395, %v6615
        %v7397 = vmax.bf16 %v7396, %v6623
        %v7398 = vmax.bf16 %v7397, %v6631
        %v7399 = vmax.bf16 %v7398, %v6639
        %v7400 = vmax.bf16 %v7399, %v6647
        %v7401 = vmax.bf16 %v7400, %v6655
        %v7402 = vmax.bf16 %v7401, %v6663
        %v7403 = vmax.bf16 %v7402, %v6671
        %v7404 = vmax.bf16 %v7403, %v6679
        %v7405 = vmax.bf16 %v7404, %v6687
        %v7406 = vmax.bf16 %v7405, %v6695
        %v7407 = vmax.bf16 %v7406, %v6703
        %v7408 = vmax.bf16 %v7407, %v6711
        %v7409 = vmax.bf16 %v7408, %v6719
        %v7410 = vmax.bf16 %v7409, %v6727
        %v7411 = vmax.bf16 %v7410, %v6735
        %v7412 = vmax.bf16 %v7411, %v6743
        %v7413 = vmax.bf16 %v7412, %v6751
        %v7414 = vmax.bf16 %v7413, %v6759
        %v7415 = vmax.bf16 %v7414, %v6767
        %v7416 = vmax.bf16 %v7415, %v6775
        %v7417 = vmax.bf16 %v7416, %v6783
        %v7418 = vmax.bf16 %v7417, %v6791
        %v7419 = vmax.bf16 %v7418, %v6799
        %v7420 = vmax.bf16 %v7419, %v6807
        %v7421 = vmax.bf16 %v7420, %v6815
        %v7422 = vunpack.i.l.bf16 %v7421
        %v7423 = vunpack.i.h.bf16 %v7421
        %v7424 = vmax.f32 %v7422, %v7423
        %v7425 = vrot.slane %v7424, 4
        %v7426 = vmax.f32 %v7424, %v7425
        %v7427 = vrot.slane %v7426, 2
        %v7428 = vmax.f32 %v7426, %v7427
        %v7429 = vrot.slane %v7428, 1
        %v7430 = vmax.f32 %v7428, %v7429
        %v7431 = vpack.i.bf16 %v7430, %v7430
        %v7432 = vmax.bf16 %v6568, %v6576
        %v7433 = vmax.bf16 %v7432, %v6584
        %v7434 = vmax.bf16 %v7433, %v6592
        %v7435 = vmax.bf16 %v7434, %v6600
        %v7436 = vmax.bf16 %v7435, %v6608
        %v7437 = vmax.bf16 %v7436, %v6616
        %v7438 = vmax.bf16 %v7437, %v6624
        %v7439 = vmax.bf16 %v7438, %v6632
        %v7440 = vmax.bf16 %v7439, %v6640
        %v7441 = vmax.bf16 %v7440, %v6648
        %v7442 = vmax.bf16 %v7441, %v6656
        %v7443 = vmax.bf16 %v7442, %v6664
        %v7444 = vmax.bf16 %v7443, %v6672
        %v7445 = vmax.bf16 %v7444, %v6680
        %v7446 = vmax.bf16 %v7445, %v6688
        %v7447 = vmax.bf16 %v7446, %v6696
        %v7448 = vmax.bf16 %v7447, %v6704
        %v7449 = vmax.bf16 %v7448, %v6712
        %v7450 = vmax.bf16 %v7449, %v6720
        %v7451 = vmax.bf16 %v7450, %v6728
        %v7452 = vmax.bf16 %v7451, %v6736
        %v7453 = vmax.bf16 %v7452, %v6744
        %v7454 = vmax.bf16 %v7453, %v6752
        %v7455 = vmax.bf16 %v7454, %v6760
        %v7456 = vmax.bf16 %v7455, %v6768
        %v7457 = vmax.bf16 %v7456, %v6776
        %v7458 = vmax.bf16 %v7457, %v6784
        %v7459 = vmax.bf16 %v7458, %v6792
        %v7460 = vmax.bf16 %v7459, %v6800
        %v7461 = vmax.bf16 %v7460, %v6808
        %v7462 = vmax.bf16 %v7461, %v6816
        %v7463 = vunpack.i.l.bf16 %v7462
        %v7464 = vunpack.i.h.bf16 %v7462
        %v7465 = vmax.f32 %v7463, %v7464
        %v7466 = vrot.slane %v7465, 4
        %v7467 = vmax.f32 %v7465, %v7466
        %v7468 = vrot.slane %v7467, 2
        %v7469 = vmax.f32 %v7467, %v7468
        %v7470 = vrot.slane %v7469, 1
        %v7471 = vmax.f32 %v7469, %v7470
        %v7472 = vpack.i.bf16 %v7471, %v7471
        %v7473 = vld [vmem:[%s822] sm:$0xff]
        %v7474 = vld [vmem:[%s822 + $0x8] sm:$0xff]
        %v7491 = vcombine.low %v6857, %v6898
        %v7492 = vcombine.low %v6939, %v6980
        %v7493 = vcombine.low %v7021, %v7062
        %v7494 = vcombine.low %v7103, %v7144
        %v7496 = vunpack.c.l.s4 1966171168
        %v7497 = vunpack.c.0.s8 %v7496
        %v7498 = vlaneseq
        %v7499 = vshrl.u32 %v7498, 7
        %v7500 = vsub.s32 %v7497, %v7499
        %v7501 = vrot.slane %v7491, %v7500
        %v7503 = vunpack.c.l.s4 1966171168
        %v7504 = vunpack.c.0.s8 %v7503
        %v7505 = vlaneseq
        %v7506 = vshrl.u32 %v7505, 7
        %v7507 = vsub.s32 %v7504, %v7506
        %v7508 = vrot.slane %v7492, %v7507
        %v7510 = vunpack.c.l.s4 1966171168
        %v7511 = vunpack.c.0.s8 %v7510
        %v7512 = vlaneseq
        %v7513 = vshrl.u32 %v7512, 7
        %v7514 = vsub.s32 %v7511, %v7513
        %v7515 = vrot.slane %v7493, %v7514
        %v7517 = vunpack.c.l.s4 1966171168
        %v7518 = vunpack.c.0.s8 %v7517
        %v7519 = vlaneseq
        %v7520 = vshrl.u32 %v7519, 7
        %v7521 = vsub.s32 %v7518, %v7520
        %v7522 = vrot.slane %v7494, %v7521
        %v7523 = vcombine.low %v7501, %v7508
        %v7524 = vcombine.low %v7515, %v7522
        %v7526 = vunpack.c.l.s4 1966171168
        %v7527 = vunpack.c.0.s8 %v7526
        %v7528 = vlaneseq
        %v7529 = vshrl.u32 %v7528, 7
        %v7530 = vsub.s32 %v7527, %v7529
        %v7531 = vrot.slane %v7523, %v7530
        %v7533 = vunpack.c.l.s4 1966171168
        %v7534 = vunpack.c.0.s8 %v7533
        %v7535 = vlaneseq
        %v7536 = vshrl.u32 %v7535, 7
        %v7537 = vsub.s32 %v7534, %v7536
        %v7538 = vrot.slane %v7524, %v7537
        %v7539 = vcombine.low %v7531, %v7538
        %v7540 = vcombine.low %v7185, %v7226
        %v7541 = vcombine.low %v7267, %v7308
        %v7542 = vcombine.low %v7349, %v7390
        %v7543 = vcombine.low %v7431, %v7472
        %v7545 = vunpack.c.l.s4 1966171168
        %v7546 = vunpack.c.0.s8 %v7545
        %v7547 = vlaneseq
        %v7548 = vshrl.u32 %v7547, 7
        %v7549 = vsub.s32 %v7546, %v7548
        %v7550 = vrot.slane %v7540, %v7549
        %v7552 = vunpack.c.l.s4 1966171168
        %v7553 = vunpack.c.0.s8 %v7552
        %v7554 = vlaneseq
        %v7555 = vshrl.u32 %v7554, 7
        %v7556 = vsub.s32 %v7553, %v7555
        %v7557 = vrot.slane %v7541, %v7556
        %v7559 = vunpack.c.l.s4 1966171168
        %v7560 = vunpack.c.0.s8 %v7559
        %v7561 = vlaneseq
        %v7562 = vshrl.u32 %v7561, 7
        %v7563 = vsub.s32 %v7560, %v7562
        %v7564 = vrot.slane %v7542, %v7563
        %v7566 = vunpack.c.l.s4 1966171168
        %v7567 = vunpack.c.0.s8 %v7566
        %v7568 = vlaneseq
        %v7569 = vshrl.u32 %v7568, 7
        %v7570 = vsub.s32 %v7567, %v7569
        %v7571 = vrot.slane %v7543, %v7570
        %v7572 = vcombine.low %v7550, %v7557
        %v7573 = vcombine.low %v7564, %v7571
        %v7575 = vunpack.c.l.s4 1966171168
        %v7576 = vunpack.c.0.s8 %v7575
        %v7577 = vlaneseq
        %v7578 = vshrl.u32 %v7577, 7
        %v7579 = vsub.s32 %v7576, %v7578
        %v7580 = vrot.slane %v7572, %v7579
        %v7582 = vunpack.c.l.s4 1966171168
        %v7583 = vunpack.c.0.s8 %v7582
        %v7584 = vlaneseq
        %v7585 = vshrl.u32 %v7584, 7
        %v7586 = vsub.s32 %v7583, %v7585
        %v7587 = vrot.slane %v7573, %v7586
        %v7588 = vcombine.low %v7580, %v7587
        %v7591 = vmax.bf16 %v7473, %v7539
        %v7592 = vmax.bf16 %v7474, %v7588
        %vm7593 = vcmask 1040384
        %vm7594 = vsmask.f32 256
        %vm7595 = vmand %vm7593, %vm7594
        %vm7596 = vcmask 1041409
        %vm7597 = vsmask.f32 1280
        %vm7598 = vmand %vm7596, %vm7597
        %vm7599 = vmor %vm7598, %vm7595
        %vm7600 = vcmask 1042434
        %vm7601 = vsmask.f32 2304
        %vm7602 = vmand %vm7600, %vm7601
        %vm7603 = vmor %vm7602, %vm7599
        %vm7604 = vcmask 1043459
        %vm7605 = vsmask.f32 3328
        %vm7606 = vmand %vm7604, %vm7605
        %vm7607 = vmor %vm7606, %vm7603
        %vm7608 = vcmask 1044484
        %vm7609 = vsmask.f32 4352
        %vm7610 = vmand %vm7608, %vm7609
        %vm7611 = vmor %vm7610, %vm7607
        %vm7612 = vcmask 1045509
        %vm7613 = vsmask.f32 5376
        %vm7614 = vmand %vm7612, %vm7613
        %vm7615 = vmor %vm7614, %vm7611
        %vm7616 = vcmask 1046534
        %vm7617 = vsmask.f32 6400
        %vm7618 = vmand %vm7616, %vm7617
        %vm7619 = vmor %vm7618, %vm7615
        %vm7620 = vcmask 1047559
        %vm7621 = vsmask.f32 7424
        %vm7622 = vmand %vm7620, %vm7621
        %vm7623 = vmor %vm7622, %vm7619
        %v7624 = vsel %vm7623, %v7591, %v7473
        %7625 = vst [vmem:[%s822] sm:$0xff] %v7624
        %v7626 = vld [vmem:[%s822 + $0x8] sm:$0xff]
        %v7627 = vsel %vm7623, %v7592, %v7626
        %7628 = vst [vmem:[%s822 + $0x8] sm:$0xff] %v7627
        %s7629 = smul.u32 2, %s21
        %p7630 = scmp.lt.s32.totalorder %s7629, 3
        %s7631 = scalar_select %p7630, %s7629, 3
        %s7632 = smul.addr %s7631, 8
        %s7633 = scalar_lea.vmem %s6, %s7632
        // Predicated region
        $region90: #{tpu_custom_call.1} parent=80 // pred_check
          %p7634 = pneg %p180
        $region91: #{tpu_custom_call.1} parent=80 // pred_check_branch
          %7636 = sbr.rel (%p7634) target = $region93
        $region92: #{tpu_custom_call.1} parent=80 // pred_region
          %s7637 = smul.u32 2, %s21
        $region93: #{tpu_custom_call.1} parent=80 // pred_fallthru
          _
      $region81: #{tpu_custom_call.1} parent=5 // pred_fallthru
        _
      %p7638 = scmp.le.s32.totalorder 2, %s12
      // Predicated region
      $region94: #{tpu_custom_call.1} parent=5 // pred_check
        %p7639 = pneg %p7638
      $region95: #{tpu_custom_call.1} parent=5 // pred_check_branch
        %7641 = sbr.rel (%p7639) target = $region97
      $region96: #{tpu_custom_call.1} parent=5 // pred_region
        %s7642 = ssub.s32 %s12, 2
        // Predicated region
        $region98: #{tpu_custom_call.1} parent=96 // pred_check
          %p7643 = pneg %p186
        $region99: #{tpu_custom_call.1} parent=96 // pred_check_branch
          %7645 = sbr.rel (%p7643) target = $region101
        $region100: #{tpu_custom_call.1} parent=96 // pred_region
          %s7646 = smul.u32 2, %s23
          %p7647 = scmp.lt.s32.totalorder %s7646, 3
          %s7648 = scalar_select %p7647, %s7646, 3
          %s7649 = smul.addr %s7648, 8
          %s7650 = scalar_lea.vmem %s6, %s7649
        $region101: #{tpu_custom_call.1} parent=96 // pred_fallthru
          _
      $region97: #{tpu_custom_call.1} parent=5 // pred_fallthru
        _
    $region6: #{tpu_custom_call.1} parent=1 // loop_footer
      %s16 = sadd.s32 1, %s12
    $region7: #{tpu_custom_call.1} parent=1 // loop_footer_branch
      %11 = sbr.rel target = $region3
    $region8: #{tpu_custom_call.1} parent=1 // loop_exit
      _

</llo_original>
